<compile_context>
chip_gen: v7x
topology: tpu7x:2x2x1
jax: 0.10.0
libtpu: 0.0.40
codegen_flags: <defaults>
</compile_context>

<pallas_src>
import numpy as np
import jax
import jax.numpy as jnp
from jax import lax
from jax.experimental import pallas as pl
from jax.experimental.pallas import tpu as pltpu

D_IN = 7     # from module globals
HID = 200    # from module globals
D_OUT = 1    # from module globals
LANE = 128


def _round_up(n, m):
    return (n + m - 1) // m * m


def lstm_fused_kernel(x_ref, w_ih_ref, w_hh_ref, b_ref, w_lin_ref, b_lin_ref,
                      y_ref, h_sc, c_sc):
    """Single-invocation fused LSTM + Linear head.

    x_ref    : (T, B, Dip)   f32   time-major input, lane-padded (zeros)
    w_ih_ref : (Dip, 4*Hp)   f32   fused input->gates weights, zero padded
    w_hh_ref : (Hp, 4*Hp)    bf16  fused hidden->gates weights, zero padded
    b_ref    : (1, 4*Hp)     f32   fused b_ih + b_hh, zero padded
    w_lin_ref: (Hp, Dop)     f32   head weights, zero padded (real col 0)
    b_lin_ref: (1, Dop)      f32   head bias, zero padded
    y_ref    : (T, B, Dop)   f32   lane-dense head output (col 0 is real)
    h_sc,c_sc: (B, Hp)       f32   recurrent carries
    """
    seq_len = x_ref.shape[0]
    hp = h_sc.shape[-1]

    # PyTorch default: h0 = c0 = 0.
    h_sc[...] = jnp.zeros_like(h_sc)
    c_sc[...] = jnp.zeros_like(c_sc)

    def step(t, carry):
        x_t = x_ref[t]                      # (B, Dip)
        h_prev = h_sc[...]                  # (B, Hp) f32
        # Input projection (tiny K) in f32 + one fused recurrent MXU matmul
        # (B, Hp) @ (Hp, 4*Hp) in bf16 with f32 accumulation.
        gates = (jnp.dot(x_t, w_ih_ref[...], preferred_element_type=jnp.float32)
                 + b_ref[...]
                 + jnp.dot(h_prev.astype(jnp.bfloat16), w_hh_ref[...],
                           preferred_element_type=jnp.float32))
        # Gate order matches PyTorch: i, f, g, o. 256-aligned lane slices.
        i_g = jax.nn.sigmoid(gates[:, 0 * hp:1 * hp])
        f_g = jax.nn.sigmoid(gates[:, 1 * hp:2 * hp])
        g_g = jnp.tanh(gates[:, 2 * hp:3 * hp])
        o_g = jax.nn.sigmoid(gates[:, 3 * hp:4 * hp])
        c_new = f_g * c_sc[...] + i_g * g_g
        h_new = o_g * jnp.tanh(c_new)
        c_sc[...] = c_new
        h_sc[...] = h_new
        # Fused Linear head: lane-dense (B, Dop) store (Dop = 128 padded).
        y_ref[t] = (jnp.dot(h_new, w_lin_ref[...],
                            preferred_element_type=jnp.float32)
                    + b_lin_ref[...])
        return carry

    lax.fori_loop(0, seq_len, step, 0, unroll=True)


def pack_params(params, hp, dip, dop):
    """Fuse per-gate params into padded, MXU/lane-friendly layouts."""
    w_ih, w_hh, b, w_lin, b_lin = params   # (4,Din,H),(4,H,H),(4,1,H),(H,Do),(1,Do)
    d_in, h = w_ih.shape[1], w_ih.shape[2]
    d_out = w_lin.shape[1]
    w_ih_f = jnp.zeros((dip, 4 * hp), jnp.float32)
    w_hh_f = jnp.zeros((hp, 4 * hp), jnp.float32)
    b_f = jnp.zeros((1, 4 * hp), jnp.float32)
    for g in range(4):
        w_ih_f = w_ih_f.at[:d_in, g * hp:g * hp + h].set(w_ih[g])
        w_hh_f = w_hh_f.at[:h, g * hp:g * hp + h].set(w_hh[g])
        b_f = b_f.at[:, g * hp:g * hp + h].set(b[g])
    w_lin_p = jnp.zeros((hp, dop), jnp.float32).at[:h, :d_out].set(w_lin)
    b_lin_p = jnp.zeros((1, dop), jnp.float32).at[:, :d_out].set(b_lin)
    return (w_ih_f, w_hh_f.astype(jnp.bfloat16), b_f, w_lin_p, b_lin_p)


def net_forward(x, packed):
    """x: (B, T, D_in) float32, batch_first like the PyTorch module."""
    w_ih_f, w_hh_bf, b_f, w_lin_p, b_lin_p = packed
    B, T, d_in = x.shape
    dip = w_ih_f.shape[0]
    hp = w_hh_bf.shape[0]
    dop = w_lin_p.shape[1]

    # Tiny wrapper-side layout prep: time-major + zero lane-padding of D_in.
    x_tm = jnp.zeros((T, B, dip), jnp.float32).at[:, :, :d_in].set(
        jnp.transpose(x, (1, 0, 2)))

    y = pl.pallas_call(
        lstm_fused_kernel,
        out_shape=jax.ShapeDtypeStruct((T, B, dop), jnp.float32),
        in_specs=[pl.BlockSpec(memory_space=pltpu.MemorySpace.VMEM)] * 6,
        out_specs=pl.BlockSpec(memory_space=pltpu.MemorySpace.VMEM),
        scratch_shapes=[pltpu.VMEM((B, hp), jnp.float32),   # h carry
                        pltpu.VMEM((B, hp), jnp.float32)],  # c carry
    )(x_tm, w_ih_f, w_hh_bf, b_f, w_lin_p, b_lin_p)

    # Real head output lives in lane 0; restore batch-first (B, T, D_out).
    return jnp.transpose(y[:, :, :D_OUT], (1, 0, 2))


def init_params(key, d_in, h, d_out):
    """Deterministic synthetic init, uniform(-1/sqrt(H), 1/sqrt(H)) like PyTorch."""
    k = 1.0 / float(np.sqrt(h))
    keys = jax.random.split(key, 6)
    # Per-gate layout (gate order i, f, g, o), stored transposed for x @ W.
    w_ih = jax.random.uniform(keys[0], (4, d_in, h), jnp.float32, -k, k)
    w_hh = jax.random.uniform(keys[1], (4, h, h), jnp.float32, -k, k)
    b_ih = jax.random.uniform(keys[2], (4, 1, h), jnp.float32, -k, k)
    b_hh = jax.random.uniform(keys[3], (4, 1, h), jnp.float32, -k, k)
    b = b_ih + b_hh
    w_lin = jax.random.uniform(keys[4], (h, d_out), jnp.float32, -k, k)
    b_lin = jax.random.uniform(keys[5], (1, d_out), jnp.float32, -k, k)
    return (w_ih, w_hh, b, w_lin, b_lin)


def net_forward_ref(x, params):
    """Pure-JAX fp32 reference of the PyTorch forward (for correctness check)."""
    w_ih, w_hh, b, w_lin, b_lin = params
    B, T, _ = x.shape
    h = w_hh.shape[-1]
    h_t = jnp.zeros((B, h), jnp.float32)
    c_t = jnp.zeros((B, h), jnp.float32)
    outs = []
    for t in range(T):
        x_t = x[:, t, :]
        def gate(k): return x_t @ w_ih[k] + h_t @ w_hh[k] + b[k]
        i_g = jax.nn.sigmoid(gate(0))
        f_g = jax.nn.sigmoid(gate(1))
        g_g = jnp.tanh(gate(2))
        o_g = jax.nn.sigmoid(gate(3))
        c_t = f_g * c_t + i_g * g_g
        h_t = o_g * jnp.tanh(c_t)
        outs.append(h_t @ w_lin + b_lin)
    return jnp.stack(outs, axis=1)


if __name__ == "__main__":
    B, T = 2, 8
    x = jax.random.normal(jax.random.PRNGKey(0), (B, T, D_IN), jnp.float32)
    params = init_params(jax.random.PRNGKey(42), D_IN, HID, D_OUT)

    hp = _round_up(HID, LANE * 2)     # 200 -> 256 (gate offsets 0/256/512/768)
    dip = _round_up(D_IN, 8)          # 7 -> 8 (sublane-aligned contraction dim)
    dop = _round_up(D_OUT, LANE)      # 1 -> 128 (lane-dense head store)
    packed = pack_params(params, hp, dip, dop)

    fwd = jax.jit(net_forward)
    out = jax.block_until_ready(fwd(x, packed))

    ref = net_forward_ref(x, params)
    assert out.shape == (B, T, D_OUT)
    # Recurrent matmul is bf16 (MXU-native) vs. a full-fp32 reference: loosen
    # tolerance accordingly; carries/nonlinearities/head stay fp32 so drift
    # over T is tiny.
    np.testing.assert_allclose(np.asarray(out), np.asarray(ref),
                               rtol=2e-2, atol=2e-2)

    print("KERNEL_OK")
</pallas_src>

<mosaic_0001>
module attributes {stable_mosaic.version = 11 : i64} {
  func.func @lstm_fused_kernel(%arg0: memref<8x2x8xf32, #tpu.memory_space<vmem>>, %arg1: memref<8x1024xf32, #tpu.memory_space<vmem>>, %arg2: memref<256x1024xbf16, #tpu.memory_space<vmem>>, %arg3: memref<1x1024xf32, #tpu.memory_space<vmem>>, %arg4: memref<256x128xf32, #tpu.memory_space<vmem>>, %arg5: memref<1x128xf32, #tpu.memory_space<vmem>>, %arg6: memref<8x2x128xf32, #tpu.memory_space<vmem>>, %arg7: memref<2x256xf32, #tpu.memory_space<vmem>>, %arg8: memref<2x256xf32, #tpu.memory_space<vmem>>) attributes {dimension_semantics = [], scalar_prefetch = 0 : i64, scratch_operands = 2 : i64, tpu.core_type = #tpu.core_type<tc>} {
    %cst = arith.constant 0.000000e+00 : f32
    %0 = vector.broadcast %cst : f32 to vector<2x256xf32>
    %c0 = arith.constant 0 : index
    %c0_0 = arith.constant 0 : index
    %1 = vector.load %arg7[%c0, %c0_0] : memref<2x256xf32, #tpu.memory_space<vmem>>, vector<2x256xf32>
    tpu.vector_store %arg7[%c0, %c0_0], %0 {strides = array<i32>} : memref<2x256xf32, #tpu.memory_space<vmem>>, vector<2x256xf32>,
    %cst_1 = arith.constant 0.000000e+00 : f32
    %2 = vector.broadcast %cst_1 : f32 to vector<2x256xf32>
    %c0_2 = arith.constant 0 : index
    %c0_3 = arith.constant 0 : index
    %3 = vector.load %arg8[%c0_2, %c0_3] : memref<2x256xf32, #tpu.memory_space<vmem>>, vector<2x256xf32>
    tpu.vector_store %arg8[%c0_2, %c0_3], %2 {strides = array<i32>} : memref<2x256xf32, #tpu.memory_space<vmem>>, vector<2x256xf32>,
    %c0_i32 = arith.constant 0 : i32
    %4 = arith.index_cast %c0_i32 : i32 to index
    %c0_4 = arith.constant 0 : index
    %c0_5 = arith.constant 0 : index
    %5 = vector.load %arg0[%4, %c0_4, %c0_5] : memref<8x2x8xf32, #tpu.memory_space<vmem>>, vector<1x2x8xf32>
    %6 = vector.shape_cast %5 : vector<1x2x8xf32> to vector<2x8xf32>
    %c0_6 = arith.constant 0 : index
    %c0_7 = arith.constant 0 : index
    %7 = vector.load %arg7[%c0_6, %c0_7] : memref<2x256xf32, #tpu.memory_space<vmem>>, vector<2x256xf32>
    %c0_8 = arith.constant 0 : index
    %c0_9 = arith.constant 0 : index
    %8 = vector.load %arg1[%c0_8, %c0_9] : memref<8x1024xf32, #tpu.memory_space<vmem>>, vector<8x1024xf32>
    %cst_10 = arith.constant dense<0.000000e+00> : vector<2x1024xf32>
    %9 = tpu.matmul %6, %8, %cst_10 {dimension_numbers = #tpu.dot_dimension_numbers<[1], [0], [0], [1], [0, 0, 1, 1], [], []>} : vector<2x8xf32>, vector<8x1024xf32>, vector<2x1024xf32> -> vector<2x1024xf32>
    %c0_11 = arith.constant 0 : index
    %c0_12 = arith.constant 0 : index
    %10 = vector.load %arg3[%c0_11, %c0_12] : memref<1x1024xf32, #tpu.memory_space<vmem>>, vector<1x1024xf32>
    %11 = vector.broadcast %10 : vector<1x1024xf32> to vector<2x1024xf32>
    %12 = arith.addf %9, %11 : vector<2x1024xf32>
    %13 = arith.truncf %7 : vector<2x256xf32> to vector<2x256xbf16>
    %c0_13 = arith.constant 0 : index
    %c0_14 = arith.constant 0 : index
    %14 = vector.load %arg2[%c0_13, %c0_14] : memref<256x1024xbf16, #tpu.memory_space<vmem>>, vector<256x1024xbf16>
    %cst_15 = arith.constant dense<0.000000e+00> : vector<2x1024xf32>
    %15 = tpu.matmul %13, %14, %cst_15 {dimension_numbers = #tpu.dot_dimension_numbers<[1], [0], [0], [1], [0, 0, 1, 1], [], []>} : vector<2x256xbf16>, vector<256x1024xbf16>, vector<2x1024xf32> -> vector<2x1024xf32>
    %16 = arith.addf %12, %15 : vector<2x1024xf32>
    %17 = vector.extract_strided_slice %16 {offsets = [0, 0], sizes = [2, 256], strides = [1, 1]} : vector<2x1024xf32> to vector<2x256xf32>
    %18 = arith.negf %17 : vector<2x256xf32>
    %19 = math.exp %18 : vector<2x256xf32>
    %cst_16 = arith.constant 1.000000e+00 : f32
    %20 = vector.broadcast %cst_16 : f32 to vector<2x256xf32>
    %21 = arith.addf %20, %19 : vector<2x256xf32>
    %22 = arith.divf %20, %21 : vector<2x256xf32>
    %23 = vector.extract_strided_slice %16 {offsets = [0, 256], sizes = [2, 256], strides = [1, 1]} : vector<2x1024xf32> to vector<2x256xf32>
    %24 = arith.negf %23 : vector<2x256xf32>
    %25 = math.exp %24 : vector<2x256xf32>
    %cst_17 = arith.constant 1.000000e+00 : f32
    %26 = vector.broadcast %cst_17 : f32 to vector<2x256xf32>
    %27 = arith.addf %26, %25 : vector<2x256xf32>
    %28 = arith.divf %26, %27 : vector<2x256xf32>
    %29 = vector.extract_strided_slice %16 {offsets = [0, 512], sizes = [2, 256], strides = [1, 1]} : vector<2x1024xf32> to vector<2x256xf32>
    %30 = math.tanh %29 : vector<2x256xf32>
    %31 = vector.extract_strided_slice %16 {offsets = [0, 768], sizes = [2, 256], strides = [1, 1]} : vector<2x1024xf32> to vector<2x256xf32>
    %32 = arith.negf %31 : vector<2x256xf32>
    %33 = math.exp %32 : vector<2x256xf32>
    %cst_18 = arith.constant 1.000000e+00 : f32
    %34 = vector.broadcast %cst_18 : f32 to vector<2x256xf32>
    %35 = arith.addf %34, %33 : vector<2x256xf32>
    %36 = arith.divf %34, %35 : vector<2x256xf32>
    %c0_19 = arith.constant 0 : index
    %c0_20 = arith.constant 0 : index
    %37 = vector.load %arg8[%c0_19, %c0_20] : memref<2x256xf32, #tpu.memory_space<vmem>>, vector<2x256xf32>
    %38 = arith.mulf %28, %37 : vector<2x256xf32>
    %39 = arith.mulf %22, %30 : vector<2x256xf32>
    %40 = arith.addf %38, %39 : vector<2x256xf32>
    %41 = math.tanh %40 : vector<2x256xf32>
    %42 = arith.mulf %36, %41 : vector<2x256xf32>
    %c0_21 = arith.constant 0 : index
    %c0_22 = arith.constant 0 : index
    %43 = vector.load %arg8[%c0_21, %c0_22] : memref<2x256xf32, #tpu.memory_space<vmem>>, vector<2x256xf32>
    tpu.vector_store %arg8[%c0_21, %c0_22], %40 {strides = array<i32>} : memref<2x256xf32, #tpu.memory_space<vmem>>, vector<2x256xf32>,
    %c0_23 = arith.constant 0 : index
    %c0_24 = arith.constant 0 : index
    %44 = vector.load %arg7[%c0_23, %c0_24] : memref<2x256xf32, #tpu.memory_space<vmem>>, vector<2x256xf32>
    tpu.vector_store %arg7[%c0_23, %c0_24], %42 {strides = array<i32>} : memref<2x256xf32, #tpu.memory_space<vmem>>, vector<2x256xf32>,
    %c0_25 = arith.constant 0 : index
    %c0_26 = arith.constant 0 : index
    %45 = vector.load %arg4[%c0_25, %c0_26] : memref<256x128xf32, #tpu.memory_space<vmem>>, vector<256x128xf32>
    %cst_27 = arith.constant dense<0.000000e+00> : vector<2x128xf32>
    %46 = tpu.matmul %42, %45, %cst_27 {dimension_numbers = #tpu.dot_dimension_numbers<[1], [0], [0], [1], [0, 0, 1, 1], [], []>} : vector<2x256xf32>, vector<256x128xf32>, vector<2x128xf32> -> vector<2x128xf32>
    %c0_28 = arith.constant 0 : index
    %c0_29 = arith.constant 0 : index
    %47 = vector.load %arg5[%c0_28, %c0_29] : memref<1x128xf32, #tpu.memory_space<vmem>>, vector<1x128xf32>
    %48 = vector.broadcast %47 : vector<1x128xf32> to vector<2x128xf32>
    %49 = arith.addf %46, %48 : vector<2x128xf32>
    %50 = arith.index_cast %c0_i32 : i32 to index
    %c0_30 = arith.constant 0 : index
    %c0_31 = arith.constant 0 : index
    %51 = vector.load %arg6[%50, %c0_30, %c0_31] : memref<8x2x128xf32, #tpu.memory_space<vmem>>, vector<1x2x128xf32>
    %52 = vector.shape_cast %51 : vector<1x2x128xf32> to vector<2x128xf32>
    %53 = vector.shape_cast %49 : vector<2x128xf32> to vector<1x2x128xf32>
    tpu.vector_store %arg6[%50, %c0_30, %c0_31], %53 {strides = array<i32>} : memref<8x2x128xf32, #tpu.memory_space<vmem>>, vector<1x2x128xf32>,
    %c1_i32 = arith.constant 1 : i32
    %54 = arith.index_cast %c1_i32 : i32 to index
    %c0_32 = arith.constant 0 : index
    %c0_33 = arith.constant 0 : index
    %55 = vector.load %arg0[%54, %c0_32, %c0_33] : memref<8x2x8xf32, #tpu.memory_space<vmem>>, vector<1x2x8xf32>
    %56 = vector.shape_cast %55 : vector<1x2x8xf32> to vector<2x8xf32>
    %c0_34 = arith.constant 0 : index
    %c0_35 = arith.constant 0 : index
    %57 = vector.load %arg7[%c0_34, %c0_35] : memref<2x256xf32, #tpu.memory_space<vmem>>, vector<2x256xf32>
    %c0_36 = arith.constant 0 : index
    %c0_37 = arith.constant 0 : index
    %58 = vector.load %arg1[%c0_36, %c0_37] : memref<8x1024xf32, #tpu.memory_space<vmem>>, vector<8x1024xf32>
    %cst_38 = arith.constant dense<0.000000e+00> : vector<2x1024xf32>
    %59 = tpu.matmul %56, %58, %cst_38 {dimension_numbers = #tpu.dot_dimension_numbers<[1], [0], [0], [1], [0, 0, 1, 1], [], []>} : vector<2x8xf32>, vector<8x1024xf32>, vector<2x1024xf32> -> vector<2x1024xf32>
    %c0_39 = arith.constant 0 : index
    %c0_40 = arith.constant 0 : index
    %60 = vector.load %arg3[%c0_39, %c0_40] : memref<1x1024xf32, #tpu.memory_space<vmem>>, vector<1x1024xf32>
    %61 = vector.broadcast %60 : vector<1x1024xf32> to vector<2x1024xf32>
    %62 = arith.addf %59, %61 : vector<2x1024xf32>
    %63 = arith.truncf %57 : vector<2x256xf32> to vector<2x256xbf16>
    %c0_41 = arith.constant 0 : index
    %c0_42 = arith.constant 0 : index
    %64 = vector.load %arg2[%c0_41, %c0_42] : memref<256x1024xbf16, #tpu.memory_space<vmem>>, vector<256x1024xbf16>
    %cst_43 = arith.constant dense<0.000000e+00> : vector<2x1024xf32>
    %65 = tpu.matmul %63, %64, %cst_43 {dimension_numbers = #tpu.dot_dimension_numbers<[1], [0], [0], [1], [0, 0, 1, 1], [], []>} : vector<2x256xbf16>, vector<256x1024xbf16>, vector<2x1024xf32> -> vector<2x1024xf32>
    %66 = arith.addf %62, %65 : vector<2x1024xf32>
    %67 = vector.extract_strided_slice %66 {offsets = [0, 0], sizes = [2, 256], strides = [1, 1]} : vector<2x1024xf32> to vector<2x256xf32>
    %68 = arith.negf %67 : vector<2x256xf32>
    %69 = math.exp %68 : vector<2x256xf32>
    %cst_44 = arith.constant 1.000000e+00 : f32
    %70 = vector.broadcast %cst_44 : f32 to vector<2x256xf32>
    %71 = arith.addf %70, %69 : vector<2x256xf32>
    %72 = arith.divf %70, %71 : vector<2x256xf32>
    %73 = vector.extract_strided_slice %66 {offsets = [0, 256], sizes = [2, 256], strides = [1, 1]} : vector<2x1024xf32> to vector<2x256xf32>
    %74 = arith.negf %73 : vector<2x256xf32>
    %75 = math.exp %74 : vector<2x256xf32>
    %cst_45 = arith.constant 1.000000e+00 : f32
    %76 = vector.broadcast %cst_45 : f32 to vector<2x256xf32>
    %77 = arith.addf %76, %75 : vector<2x256xf32>
    %78 = arith.divf %76, %77 : vector<2x256xf32>
    %79 = vector.extract_strided_slice %66 {offsets = [0, 512], sizes = [2, 256], strides = [1, 1]} : vector<2x1024xf32> to vector<2x256xf32>
    %80 = math.tanh %79 : vector<2x256xf32>
    %81 = vector.extract_strided_slice %66 {offsets = [0, 768], sizes = [2, 256], strides = [1, 1]} : vector<2x1024xf32> to vector<2x256xf32>
    %82 = arith.negf %81 : vector<2x256xf32>
    %83 = math.exp %82 : vector<2x256xf32>
    %cst_46 = arith.constant 1.000000e+00 : f32
    %84 = vector.broadcast %cst_46 : f32 to vector<2x256xf32>
    %85 = arith.addf %84, %83 : vector<2x256xf32>
    %86 = arith.divf %84, %85 : vector<2x256xf32>
    %c0_47 = arith.constant 0 : index
    %c0_48 = arith.constant 0 : index
    %87 = vector.load %arg8[%c0_47, %c0_48] : memref<2x256xf32, #tpu.memory_space<vmem>>, vector<2x256xf32>
    %88 = arith.mulf %78, %87 : vector<2x256xf32>
    %89 = arith.mulf %72, %80 : vector<2x256xf32>
    %90 = arith.addf %88, %89 : vector<2x256xf32>
    %91 = math.tanh %90 : vector<2x256xf32>
    %92 = arith.mulf %86, %91 : vector<2x256xf32>
    %c0_49 = arith.constant 0 : index
    %c0_50 = arith.constant 0 : index
    %93 = vector.load %arg8[%c0_49, %c0_50] : memref<2x256xf32, #tpu.memory_space<vmem>>, vector<2x256xf32>
    tpu.vector_store %arg8[%c0_49, %c0_50], %90 {strides = array<i32>} : memref<2x256xf32, #tpu.memory_space<vmem>>, vector<2x256xf32>,
    %c0_51 = arith.constant 0 : index
    %c0_52 = arith.constant 0 : index
    %94 = vector.load %arg7[%c0_51, %c0_52] : memref<2x256xf32, #tpu.memory_space<vmem>>, vector<2x256xf32>
    tpu.vector_store %arg7[%c0_51, %c0_52], %92 {strides = array<i32>} : memref<2x256xf32, #tpu.memory_space<vmem>>, vector<2x256xf32>,
    %c0_53 = arith.constant 0 : index
    %c0_54 = arith.constant 0 : index
    %95 = vector.load %arg4[%c0_53, %c0_54] : memref<256x128xf32, #tpu.memory_space<vmem>>, vector<256x128xf32>
    %cst_55 = arith.constant dense<0.000000e+00> : vector<2x128xf32>
    %96 = tpu.matmul %92, %95, %cst_55 {dimension_numbers = #tpu.dot_dimension_numbers<[1], [0], [0], [1], [0, 0, 1, 1], [], []>} : vector<2x256xf32>, vector<256x128xf32>, vector<2x128xf32> -> vector<2x128xf32>
    %c0_56 = arith.constant 0 : index
    %c0_57 = arith.constant 0 : index
    %97 = vector.load %arg5[%c0_56, %c0_57] : memref<1x128xf32, #tpu.memory_space<vmem>>, vector<1x128xf32>
    %98 = vector.broadcast %97 : vector<1x128xf32> to vector<2x128xf32>
    %99 = arith.addf %96, %98 : vector<2x128xf32>
    %100 = arith.index_cast %c1_i32 : i32 to index
    %c0_58 = arith.constant 0 : index
    %c0_59 = arith.constant 0 : index
    %101 = vector.load %arg6[%100, %c0_58, %c0_59] : memref<8x2x128xf32, #tpu.memory_space<vmem>>, vector<1x2x128xf32>
    %102 = vector.shape_cast %101 : vector<1x2x128xf32> to vector<2x128xf32>
    %103 = vector.shape_cast %99 : vector<2x128xf32> to vector<1x2x128xf32>
    tpu.vector_store %arg6[%100, %c0_58, %c0_59], %103 {strides = array<i32>} : memref<8x2x128xf32, #tpu.memory_space<vmem>>, vector<1x2x128xf32>,
    %c2_i32 = arith.constant 2 : i32
    %104 = arith.index_cast %c2_i32 : i32 to index
    %c0_60 = arith.constant 0 : index
    %c0_61 = arith.constant 0 : index
    %105 = vector.load %arg0[%104, %c0_60, %c0_61] : memref<8x2x8xf32, #tpu.memory_space<vmem>>, vector<1x2x8xf32>
    %106 = vector.shape_cast %105 : vector<1x2x8xf32> to vector<2x8xf32>
    %c0_62 = arith.constant 0 : index
    %c0_63 = arith.constant 0 : index
    %107 = vector.load %arg7[%c0_62, %c0_63] : memref<2x256xf32, #tpu.memory_space<vmem>>, vector<2x256xf32>
    %c0_64 = arith.constant 0 : index
    %c0_65 = arith.constant 0 : index
    %108 = vector.load %arg1[%c0_64, %c0_65] : memref<8x1024xf32, #tpu.memory_space<vmem>>, vector<8x1024xf32>
    %cst_66 = arith.constant dense<0.000000e+00> : vector<2x1024xf32>
    %109 = tpu.matmul %106, %108, %cst_66 {dimension_numbers = #tpu.dot_dimension_numbers<[1], [0], [0], [1], [0, 0, 1, 1], [], []>} : vector<2x8xf32>, vector<8x1024xf32>, vector<2x1024xf32> -> vector<2x1024xf32>
    %c0_67 = arith.constant 0 : index
    %c0_68 = arith.constant 0 : index
    %110 = vector.load %arg3[%c0_67, %c0_68] : memref<1x1024xf32, #tpu.memory_space<vmem>>, vector<1x1024xf32>
    %111 = vector.broadcast %110 : vector<1x1024xf32> to vector<2x1024xf32>
    %112 = arith.addf %109, %111 : vector<2x1024xf32>
    %113 = arith.truncf %107 : vector<2x256xf32> to vector<2x256xbf16>
    %c0_69 = arith.constant 0 : index
    %c0_70 = arith.constant 0 : index
    %114 = vector.load %arg2[%c0_69, %c0_70] : memref<256x1024xbf16, #tpu.memory_space<vmem>>, vector<256x1024xbf16>
    %cst_71 = arith.constant dense<0.000000e+00> : vector<2x1024xf32>
    %115 = tpu.matmul %113, %114, %cst_71 {dimension_numbers = #tpu.dot_dimension_numbers<[1], [0], [0], [1], [0, 0, 1, 1], [], []>} : vector<2x256xbf16>, vector<256x1024xbf16>, vector<2x1024xf32> -> vector<2x1024xf32>
    %116 = arith.addf %112, %115 : vector<2x1024xf32>
    %117 = vector.extract_strided_slice %116 {offsets = [0, 0], sizes = [2, 256], strides = [1, 1]} : vector<2x1024xf32> to vector<2x256xf32>
    %118 = arith.negf %117 : vector<2x256xf32>
    %119 = math.exp %118 : vector<2x256xf32>
    %cst_72 = arith.constant 1.000000e+00 : f32
    %120 = vector.broadcast %cst_72 : f32 to vector<2x256xf32>
    %121 = arith.addf %120, %119 : vector<2x256xf32>
    %122 = arith.divf %120, %121 : vector<2x256xf32>
    %123 = vector.extract_strided_slice %116 {offsets = [0, 256], sizes = [2, 256], strides = [1, 1]} : vector<2x1024xf32> to vector<2x256xf32>
    %124 = arith.negf %123 : vector<2x256xf32>
    %125 = math.exp %124 : vector<2x256xf32>
    %cst_73 = arith.constant 1.000000e+00 : f32
    %126 = vector.broadcast %cst_73 : f32 to vector<2x256xf32>
    %127 = arith.addf %126, %125 : vector<2x256xf32>
    %128 = arith.divf %126, %127 : vector<2x256xf32>
    %129 = vector.extract_strided_slice %116 {offsets = [0, 512], sizes = [2, 256], strides = [1, 1]} : vector<2x1024xf32> to vector<2x256xf32>
    %130 = math.tanh %129 : vector<2x256xf32>
    %131 = vector.extract_strided_slice %116 {offsets = [0, 768], sizes = [2, 256], strides = [1, 1]} : vector<2x1024xf32> to vector<2x256xf32>
    %132 = arith.negf %131 : vector<2x256xf32>
    %133 = math.exp %132 : vector<2x256xf32>
    %cst_74 = arith.constant 1.000000e+00 : f32
    %134 = vector.broadcast %cst_74 : f32 to vector<2x256xf32>
    %135 = arith.addf %134, %133 : vector<2x256xf32>
    %136 = arith.divf %134, %135 : vector<2x256xf32>
    %c0_75 = arith.constant 0 : index
    %c0_76 = arith.constant 0 : index
    %137 = vector.load %arg8[%c0_75, %c0_76] : memref<2x256xf32, #tpu.memory_space<vmem>>, vector<2x256xf32>
    %138 = arith.mulf %128, %137 : vector<2x256xf32>
    %139 = arith.mulf %122, %130 : vector<2x256xf32>
    %140 = arith.addf %138, %139 : vector<2x256xf32>
    %141 = math.tanh %140 : vector<2x256xf32>
    %142 = arith.mulf %136, %141 : vector<2x256xf32>
    %c0_77 = arith.constant 0 : index
    %c0_78 = arith.constant 0 : index
    %143 = vector.load %arg8[%c0_77, %c0_78] : memref<2x256xf32, #tpu.memory_space<vmem>>, vector<2x256xf32>
    tpu.vector_store %arg8[%c0_77, %c0_78], %140 {strides = array<i32>} : memref<2x256xf32, #tpu.memory_space<vmem>>, vector<2x256xf32>,
    %c0_79 = arith.constant 0 : index
    %c0_80 = arith.constant 0 : index
    %144 = vector.load %arg7[%c0_79, %c0_80] : memref<2x256xf32, #tpu.memory_space<vmem>>, vector<2x256xf32>
    tpu.vector_store %arg7[%c0_79, %c0_80], %142 {strides = array<i32>} : memref<2x256xf32, #tpu.memory_space<vmem>>, vector<2x256xf32>,
    %c0_81 = arith.constant 0 : index
    %c0_82 = arith.constant 0 : index
    %145 = vector.load %arg4[%c0_81, %c0_82] : memref<256x128xf32, #tpu.memory_space<vmem>>, vector<256x128xf32>
    %cst_83 = arith.constant dense<0.000000e+00> : vector<2x128xf32>
    %146 = tpu.matmul %142, %145, %cst_83 {dimension_numbers = #tpu.dot_dimension_numbers<[1], [0], [0], [1], [0, 0, 1, 1], [], []>} : vector<2x256xf32>, vector<256x128xf32>, vector<2x128xf32> -> vector<2x128xf32>
    %c0_84 = arith.constant 0 : index
    %c0_85 = arith.constant 0 : index
    %147 = vector.load %arg5[%c0_84, %c0_85] : memref<1x128xf32, #tpu.memory_space<vmem>>, vector<1x128xf32>
    %148 = vector.broadcast %147 : vector<1x128xf32> to vector<2x128xf32>
    %149 = arith.addf %146, %148 : vector<2x128xf32>
    %150 = arith.index_cast %c2_i32 : i32 to index
    %c0_86 = arith.constant 0 : index
    %c0_87 = arith.constant 0 : index
    %151 = vector.load %arg6[%150, %c0_86, %c0_87] : memref<8x2x128xf32, #tpu.memory_space<vmem>>, vector<1x2x128xf32>
    %152 = vector.shape_cast %151 : vector<1x2x128xf32> to vector<2x128xf32>
    %153 = vector.shape_cast %149 : vector<2x128xf32> to vector<1x2x128xf32>
    tpu.vector_store %arg6[%150, %c0_86, %c0_87], %153 {strides = array<i32>} : memref<8x2x128xf32, #tpu.memory_space<vmem>>, vector<1x2x128xf32>,
    %c3_i32 = arith.constant 3 : i32
    %154 = arith.index_cast %c3_i32 : i32 to index
    %c0_88 = arith.constant 0 : index
    %c0_89 = arith.constant 0 : index
    %155 = vector.load %arg0[%154, %c0_88, %c0_89] : memref<8x2x8xf32, #tpu.memory_space<vmem>>, vector<1x2x8xf32>
    %156 = vector.shape_cast %155 : vector<1x2x8xf32> to vector<2x8xf32>
    %c0_90 = arith.constant 0 : index
    %c0_91 = arith.constant 0 : index
    %157 = vector.load %arg7[%c0_90, %c0_91] : memref<2x256xf32, #tpu.memory_space<vmem>>, vector<2x256xf32>
    %c0_92 = arith.constant 0 : index
    %c0_93 = arith.constant 0 : index
    %158 = vector.load %arg1[%c0_92, %c0_93] : memref<8x1024xf32, #tpu.memory_space<vmem>>, vector<8x1024xf32>
    %cst_94 = arith.constant dense<0.000000e+00> : vector<2x1024xf32>
    %159 = tpu.matmul %156, %158, %cst_94 {dimension_numbers = #tpu.dot_dimension_numbers<[1], [0], [0], [1], [0, 0, 1, 1], [], []>} : vector<2x8xf32>, vector<8x1024xf32>, vector<2x1024xf32> -> vector<2x1024xf32>
    %c0_95 = arith.constant 0 : index
    %c0_96 = arith.constant 0 : index
    %160 = vector.load %arg3[%c0_95, %c0_96] : memref<1x1024xf32, #tpu.memory_space<vmem>>, vector<1x1024xf32>
    %161 = vector.broadcast %160 : vector<1x1024xf32> to vector<2x1024xf32>
    %162 = arith.addf %159, %161 : vector<2x1024xf32>
    %163 = arith.truncf %157 : vector<2x256xf32> to vector<2x256xbf16>
    %c0_97 = arith.constant 0 : index
    %c0_98 = arith.constant 0 : index
    %164 = vector.load %arg2[%c0_97, %c0_98] : memref<256x1024xbf16, #tpu.memory_space<vmem>>, vector<256x1024xbf16>
    %cst_99 = arith.constant dense<0.000000e+00> : vector<2x1024xf32>
    %165 = tpu.matmul %163, %164, %cst_99 {dimension_numbers = #tpu.dot_dimension_numbers<[1], [0], [0], [1], [0, 0, 1, 1], [], []>} : vector<2x256xbf16>, vector<256x1024xbf16>, vector<2x1024xf32> -> vector<2x1024xf32>
    %166 = arith.addf %162, %165 : vector<2x1024xf32>
    %167 = vector.extract_strided_slice %166 {offsets = [0, 0], sizes = [2, 256], strides = [1, 1]} : vector<2x1024xf32> to vector<2x256xf32>
    %168 = arith.negf %167 : vector<2x256xf32>
    %169 = math.exp %168 : vector<2x256xf32>
    %cst_100 = arith.constant 1.000000e+00 : f32
    %170 = vector.broadcast %cst_100 : f32 to vector<2x256xf32>
    %171 = arith.addf %170, %169 : vector<2x256xf32>
    %172 = arith.divf %170, %171 : vector<2x256xf32>
    %173 = vector.extract_strided_slice %166 {offsets = [0, 256], sizes = [2, 256], strides = [1, 1]} : vector<2x1024xf32> to vector<2x256xf32>
    %174 = arith.negf %173 : vector<2x256xf32>
    %175 = math.exp %174 : vector<2x256xf32>
    %cst_101 = arith.constant 1.000000e+00 : f32
    %176 = vector.broadcast %cst_101 : f32 to vector<2x256xf32>
    %177 = arith.addf %176, %175 : vector<2x256xf32>
    %178 = arith.divf %176, %177 : vector<2x256xf32>
    %179 = vector.extract_strided_slice %166 {offsets = [0, 512], sizes = [2, 256], strides = [1, 1]} : vector<2x1024xf32> to vector<2x256xf32>
    %180 = math.tanh %179 : vector<2x256xf32>
    %181 = vector.extract_strided_slice %166 {offsets = [0, 768], sizes = [2, 256], strides = [1, 1]} : vector<2x1024xf32> to vector<2x256xf32>
    %182 = arith.negf %181 : vector<2x256xf32>
    %183 = math.exp %182 : vector<2x256xf32>
    %cst_102 = arith.constant 1.000000e+00 : f32
    %184 = vector.broadcast %cst_102 : f32 to vector<2x256xf32>
    %185 = arith.addf %184, %183 : vector<2x256xf32>
    %186 = arith.divf %184, %185 : vector<2x256xf32>
    %c0_103 = arith.constant 0 : index
    %c0_104 = arith.constant 0 : index
    %187 = vector.load %arg8[%c0_103, %c0_104] : memref<2x256xf32, #tpu.memory_space<vmem>>, vector<2x256xf32>
    %188 = arith.mulf %178, %187 : vector<2x256xf32>
    %189 = arith.mulf %172, %180 : vector<2x256xf32>
    %190 = arith.addf %188, %189 : vector<2x256xf32>
    %191 = math.tanh %190 : vector<2x256xf32>
    %192 = arith.mulf %186, %191 : vector<2x256xf32>
    %c0_105 = arith.constant 0 : index
    %c0_106 = arith.constant 0 : index
    %193 = vector.load %arg8[%c0_105, %c0_106] : memref<2x256xf32, #tpu.memory_space<vmem>>, vector<2x256xf32>
    tpu.vector_store %arg8[%c0_105, %c0_106], %190 {strides = array<i32>} : memref<2x256xf32, #tpu.memory_space<vmem>>, vector<2x256xf32>,
    %c0_107 = arith.constant 0 : index
    %c0_108 = arith.constant 0 : index
    %194 = vector.load %arg7[%c0_107, %c0_108] : memref<2x256xf32, #tpu.memory_space<vmem>>, vector<2x256xf32>
    tpu.vector_store %arg7[%c0_107, %c0_108], %192 {strides = array<i32>} : memref<2x256xf32, #tpu.memory_space<vmem>>, vector<2x256xf32>,
    %c0_109 = arith.constant 0 : index
    %c0_110 = arith.constant 0 : index
    %195 = vector.load %arg4[%c0_109, %c0_110] : memref<256x128xf32, #tpu.memory_space<vmem>>, vector<256x128xf32>
    %cst_111 = arith.constant dense<0.000000e+00> : vector<2x128xf32>
    %196 = tpu.matmul %192, %195, %cst_111 {dimension_numbers = #tpu.dot_dimension_numbers<[1], [0], [0], [1], [0, 0, 1, 1], [], []>} : vector<2x256xf32>, vector<256x128xf32>, vector<2x128xf32> -> vector<2x128xf32>
    %c0_112 = arith.constant 0 : index
    %c0_113 = arith.constant 0 : index
    %197 = vector.load %arg5[%c0_112, %c0_113] : memref<1x128xf32, #tpu.memory_space<vmem>>, vector<1x128xf32>
    %198 = vector.broadcast %197 : vector<1x128xf32> to vector<2x128xf32>
    %199 = arith.addf %196, %198 : vector<2x128xf32>
    %200 = arith.index_cast %c3_i32 : i32 to index
    %c0_114 = arith.constant 0 : index
    %c0_115 = arith.constant 0 : index
    %201 = vector.load %arg6[%200, %c0_114, %c0_115] : memref<8x2x128xf32, #tpu.memory_space<vmem>>, vector<1x2x128xf32>
    %202 = vector.shape_cast %201 : vector<1x2x128xf32> to vector<2x128xf32>
    %203 = vector.shape_cast %199 : vector<2x128xf32> to vector<1x2x128xf32>
    tpu.vector_store %arg6[%200, %c0_114, %c0_115], %203 {strides = array<i32>} : memref<8x2x128xf32, #tpu.memory_space<vmem>>, vector<1x2x128xf32>,
    %c4_i32 = arith.constant 4 : i32
    %204 = arith.index_cast %c4_i32 : i32 to index
    %c0_116 = arith.constant 0 : index
    %c0_117 = arith.constant 0 : index
    %205 = vector.load %arg0[%204, %c0_116, %c0_117] : memref<8x2x8xf32, #tpu.memory_space<vmem>>, vector<1x2x8xf32>
    %206 = vector.shape_cast %205 : vector<1x2x8xf32> to vector<2x8xf32>
    %c0_118 = arith.constant 0 : index
    %c0_119 = arith.constant 0 : index
    %207 = vector.load %arg7[%c0_118, %c0_119] : memref<2x256xf32, #tpu.memory_space<vmem>>, vector<2x256xf32>
    %c0_120 = arith.constant 0 : index
    %c0_121 = arith.constant 0 : index
    %208 = vector.load %arg1[%c0_120, %c0_121] : memref<8x1024xf32, #tpu.memory_space<vmem>>, vector<8x1024xf32>
    %cst_122 = arith.constant dense<0.000000e+00> : vector<2x1024xf32>
    %209 = tpu.matmul %206, %208, %cst_122 {dimension_numbers = #tpu.dot_dimension_numbers<[1], [0], [0], [1], [0, 0, 1, 1], [], []>} : vector<2x8xf32>, vector<8x1024xf32>, vector<2x1024xf32> -> vector<2x1024xf32>
    %c0_123 = arith.constant 0 : index
    %c0_124 = arith.constant 0 : index
    %210 = vector.load %arg3[%c0_123, %c0_124] : memref<1x1024xf32, #tpu.memory_space<vmem>>, vector<1x1024xf32>
    %211 = vector.broadcast %210 : vector<1x1024xf32> to vector<2x1024xf32>
    %212 = arith.addf %209, %211 : vector<2x1024xf32>
    %213 = arith.truncf %207 : vector<2x256xf32> to vector<2x256xbf16>
    %c0_125 = arith.constant 0 : index
    %c0_126 = arith.constant 0 : index
    %214 = vector.load %arg2[%c0_125, %c0_126] : memref<256x1024xbf16, #tpu.memory_space<vmem>>, vector<256x1024xbf16>
    %cst_127 = arith.constant dense<0.000000e+00> : vector<2x1024xf32>
    %215 = tpu.matmul %213, %214, %cst_127 {dimension_numbers = #tpu.dot_dimension_numbers<[1], [0], [0], [1], [0, 0, 1, 1], [], []>} : vector<2x256xbf16>, vector<256x1024xbf16>, vector<2x1024xf32> -> vector<2x1024xf32>
    %216 = arith.addf %212, %215 : vector<2x1024xf32>
    %217 = vector.extract_strided_slice %216 {offsets = [0, 0], sizes = [2, 256], strides = [1, 1]} : vector<2x1024xf32> to vector<2x256xf32>
    %218 = arith.negf %217 : vector<2x256xf32>
    %219 = math.exp %218 : vector<2x256xf32>
    %cst_128 = arith.constant 1.000000e+00 : f32
    %220 = vector.broadcast %cst_128 : f32 to vector<2x256xf32>
    %221 = arith.addf %220, %219 : vector<2x256xf32>
    %222 = arith.divf %220, %221 : vector<2x256xf32>
    %223 = vector.extract_strided_slice %216 {offsets = [0, 256], sizes = [2, 256], strides = [1, 1]} : vector<2x1024xf32> to vector<2x256xf32>
    %224 = arith.negf %223 : vector<2x256xf32>
    %225 = math.exp %224 : vector<2x256xf32>
    %cst_129 = arith.constant 1.000000e+00 : f32
    %226 = vector.broadcast %cst_129 : f32 to vector<2x256xf32>
    %227 = arith.addf %226, %225 : vector<2x256xf32>
    %228 = arith.divf %226, %227 : vector<2x256xf32>
    %229 = vector.extract_strided_slice %216 {offsets = [0, 512], sizes = [2, 256], strides = [1, 1]} : vector<2x1024xf32> to vector<2x256xf32>
    %230 = math.tanh %229 : vector<2x256xf32>
    %231 = vector.extract_strided_slice %216 {offsets = [0, 768], sizes = [2, 256], strides = [1, 1]} : vector<2x1024xf32> to vector<2x256xf32>
    %232 = arith.negf %231 : vector<2x256xf32>
    %233 = math.exp %232 : vector<2x256xf32>
    %cst_130 = arith.constant 1.000000e+00 : f32
    %234 = vector.broadcast %cst_130 : f32 to vector<2x256xf32>
    %235 = arith.addf %234, %233 : vector<2x256xf32>
    %236 = arith.divf %234, %235 : vector<2x256xf32>
    %c0_131 = arith.constant 0 : index
    %c0_132 = arith.constant 0 : index
    %237 = vector.load %arg8[%c0_131, %c0_132] : memref<2x256xf32, #tpu.memory_space<vmem>>, vector<2x256xf32>
    %238 = arith.mulf %228, %237 : vector<2x256xf32>
    %239 = arith.mulf %222, %230 : vector<2x256xf32>
    %240 = arith.addf %238, %239 : vector<2x256xf32>
    %241 = math.tanh %240 : vector<2x256xf32>
    %242 = arith.mulf %236, %241 : vector<2x256xf32>
    %c0_133 = arith.constant 0 : index
    %c0_134 = arith.constant 0 : index
    %243 = vector.load %arg8[%c0_133, %c0_134] : memref<2x256xf32, #tpu.memory_space<vmem>>, vector<2x256xf32>
    tpu.vector_store %arg8[%c0_133, %c0_134], %240 {strides = array<i32>} : memref<2x256xf32, #tpu.memory_space<vmem>>, vector<2x256xf32>,
    %c0_135 = arith.constant 0 : index
    %c0_136 = arith.constant 0 : index
    %244 = vector.load %arg7[%c0_135, %c0_136] : memref<2x256xf32, #tpu.memory_space<vmem>>, vector<2x256xf32>
    tpu.vector_store %arg7[%c0_135, %c0_136], %242 {strides = array<i32>} : memref<2x256xf32, #tpu.memory_space<vmem>>, vector<2x256xf32>,
    %c0_137 = arith.constant 0 : index
    %c0_138 = arith.constant 0 : index
    %245 = vector.load %arg4[%c0_137, %c0_138] : memref<256x128xf32, #tpu.memory_space<vmem>>, vector<256x128xf32>
    %cst_139 = arith.constant dense<0.000000e+00> : vector<2x128xf32>
    %246 = tpu.matmul %242, %245, %cst_139 {dimension_numbers = #tpu.dot_dimension_numbers<[1], [0], [0], [1], [0, 0, 1, 1], [], []>} : vector<2x256xf32>, vector<256x128xf32>, vector<2x128xf32> -> vector<2x128xf32>
    %c0_140 = arith.constant 0 : index
    %c0_141 = arith.constant 0 : index
    %247 = vector.load %arg5[%c0_140, %c0_141] : memref<1x128xf32, #tpu.memory_space<vmem>>, vector<1x128xf32>
    %248 = vector.broadcast %247 : vector<1x128xf32> to vector<2x128xf32>
    %249 = arith.addf %246, %248 : vector<2x128xf32>
    %250 = arith.index_cast %c4_i32 : i32 to index
    %c0_142 = arith.constant 0 : index
    %c0_143 = arith.constant 0 : index
    %251 = vector.load %arg6[%250, %c0_142, %c0_143] : memref<8x2x128xf32, #tpu.memory_space<vmem>>, vector<1x2x128xf32>
    %252 = vector.shape_cast %251 : vector<1x2x128xf32> to vector<2x128xf32>
    %253 = vector.shape_cast %249 : vector<2x128xf32> to vector<1x2x128xf32>
    tpu.vector_store %arg6[%250, %c0_142, %c0_143], %253 {strides = array<i32>} : memref<8x2x128xf32, #tpu.memory_space<vmem>>, vector<1x2x128xf32>,
    %c5_i32 = arith.constant 5 : i32
    %254 = arith.index_cast %c5_i32 : i32 to index
    %c0_144 = arith.constant 0 : index
    %c0_145 = arith.constant 0 : index
    %255 = vector.load %arg0[%254, %c0_144, %c0_145] : memref<8x2x8xf32, #tpu.memory_space<vmem>>, vector<1x2x8xf32>
    %256 = vector.shape_cast %255 : vector<1x2x8xf32> to vector<2x8xf32>
    %c0_146 = arith.constant 0 : index
    %c0_147 = arith.constant 0 : index
    %257 = vector.load %arg7[%c0_146, %c0_147] : memref<2x256xf32, #tpu.memory_space<vmem>>, vector<2x256xf32>
    %c0_148 = arith.constant 0 : index
    %c0_149 = arith.constant 0 : index
    %258 = vector.load %arg1[%c0_148, %c0_149] : memref<8x1024xf32, #tpu.memory_space<vmem>>, vector<8x1024xf32>
    %cst_150 = arith.constant dense<0.000000e+00> : vector<2x1024xf32>
    %259 = tpu.matmul %256, %258, %cst_150 {dimension_numbers = #tpu.dot_dimension_numbers<[1], [0], [0], [1], [0, 0, 1, 1], [], []>} : vector<2x8xf32>, vector<8x1024xf32>, vector<2x1024xf32> -> vector<2x1024xf32>
    %c0_151 = arith.constant 0 : index
    %c0_152 = arith.constant 0 : index
    %260 = vector.load %arg3[%c0_151, %c0_152] : memref<1x1024xf32, #tpu.memory_space<vmem>>, vector<1x1024xf32>
    %261 = vector.broadcast %260 : vector<1x1024xf32> to vector<2x1024xf32>
    %262 = arith.addf %259, %261 : vector<2x1024xf32>
    %263 = arith.truncf %257 : vector<2x256xf32> to vector<2x256xbf16>
    %c0_153 = arith.constant 0 : index
    %c0_154 = arith.constant 0 : index
    %264 = vector.load %arg2[%c0_153, %c0_154] : memref<256x1024xbf16, #tpu.memory_space<vmem>>, vector<256x1024xbf16>
    %cst_155 = arith.constant dense<0.000000e+00> : vector<2x1024xf32>
    %265 = tpu.matmul %263, %264, %cst_155 {dimension_numbers = #tpu.dot_dimension_numbers<[1], [0], [0], [1], [0, 0, 1, 1], [], []>} : vector<2x256xbf16>, vector<256x1024xbf16>, vector<2x1024xf32> -> vector<2x1024xf32>
    %266 = arith.addf %262, %265 : vector<2x1024xf32>
    %267 = vector.extract_strided_slice %266 {offsets = [0, 0], sizes = [2, 256], strides = [1, 1]} : vector<2x1024xf32> to vector<2x256xf32>
    %268 = arith.negf %267 : vector<2x256xf32>
    %269 = math.exp %268 : vector<2x256xf32>
    %cst_156 = arith.constant 1.000000e+00 : f32
    %270 = vector.broadcast %cst_156 : f32 to vector<2x256xf32>
    %271 = arith.addf %270, %269 : vector<2x256xf32>
    %272 = arith.divf %270, %271 : vector<2x256xf32>
    %273 = vector.extract_strided_slice %266 {offsets = [0, 256], sizes = [2, 256], strides = [1, 1]} : vector<2x1024xf32> to vector<2x256xf32>
    %274 = arith.negf %273 : vector<2x256xf32>
    %275 = math.exp %274 : vector<2x256xf32>
    %cst_157 = arith.constant 1.000000e+00 : f32
    %276 = vector.broadcast %cst_157 : f32 to vector<2x256xf32>
    %277 = arith.addf %276, %275 : vector<2x256xf32>
    %278 = arith.divf %276, %277 : vector<2x256xf32>
    %279 = vector.extract_strided_slice %266 {offsets = [0, 512], sizes = [2, 256], strides = [1, 1]} : vector<2x1024xf32> to vector<2x256xf32>
    %280 = math.tanh %279 : vector<2x256xf32>
    %281 = vector.extract_strided_slice %266 {offsets = [0, 768], sizes = [2, 256], strides = [1, 1]} : vector<2x1024xf32> to vector<2x256xf32>
    %282 = arith.negf %281 : vector<2x256xf32>
    %283 = math.exp %282 : vector<2x256xf32>
    %cst_158 = arith.constant 1.000000e+00 : f32
    %284 = vector.broadcast %cst_158 : f32 to vector<2x256xf32>
    %285 = arith.addf %284, %283 : vector<2x256xf32>
    %286 = arith.divf %284, %285 : vector<2x256xf32>
    %c0_159 = arith.constant 0 : index
    %c0_160 = arith.constant 0 : index
    %287 = vector.load %arg8[%c0_159, %c0_160] : memref<2x256xf32, #tpu.memory_space<vmem>>, vector<2x256xf32>
    %288 = arith.mulf %278, %287 : vector<2x256xf32>
    %289 = arith.mulf %272, %280 : vector<2x256xf32>
    %290 = arith.addf %288, %289 : vector<2x256xf32>
    %291 = math.tanh %290 : vector<2x256xf32>
    %292 = arith.mulf %286, %291 : vector<2x256xf32>
    %c0_161 = arith.constant 0 : index
    %c0_162 = arith.constant 0 : index
    %293 = vector.load %arg8[%c0_161, %c0_162] : memref<2x256xf32, #tpu.memory_space<vmem>>, vector<2x256xf32>
    tpu.vector_store %arg8[%c0_161, %c0_162], %290 {strides = array<i32>} : memref<2x256xf32, #tpu.memory_space<vmem>>, vector<2x256xf32>,
    %c0_163 = arith.constant 0 : index
    %c0_164 = arith.constant 0 : index
    %294 = vector.load %arg7[%c0_163, %c0_164] : memref<2x256xf32, #tpu.memory_space<vmem>>, vector<2x256xf32>
    tpu.vector_store %arg7[%c0_163, %c0_164], %292 {strides = array<i32>} : memref<2x256xf32, #tpu.memory_space<vmem>>, vector<2x256xf32>,
    %c0_165 = arith.constant 0 : index
    %c0_166 = arith.constant 0 : index
    %295 = vector.load %arg4[%c0_165, %c0_166] : memref<256x128xf32, #tpu.memory_space<vmem>>, vector<256x128xf32>
    %cst_167 = arith.constant dense<0.000000e+00> : vector<2x128xf32>
    %296 = tpu.matmul %292, %295, %cst_167 {dimension_numbers = #tpu.dot_dimension_numbers<[1], [0], [0], [1], [0, 0, 1, 1], [], []>} : vector<2x256xf32>, vector<256x128xf32>, vector<2x128xf32> -> vector<2x128xf32>
    %c0_168 = arith.constant 0 : index
    %c0_169 = arith.constant 0 : index
    %297 = vector.load %arg5[%c0_168, %c0_169] : memref<1x128xf32, #tpu.memory_space<vmem>>, vector<1x128xf32>
    %298 = vector.broadcast %297 : vector<1x128xf32> to vector<2x128xf32>
    %299 = arith.addf %296, %298 : vector<2x128xf32>
    %300 = arith.index_cast %c5_i32 : i32 to index
    %c0_170 = arith.constant 0 : index
    %c0_171 = arith.constant 0 : index
    %301 = vector.load %arg6[%300, %c0_170, %c0_171] : memref<8x2x128xf32, #tpu.memory_space<vmem>>, vector<1x2x128xf32>
    %302 = vector.shape_cast %301 : vector<1x2x128xf32> to vector<2x128xf32>
    %303 = vector.shape_cast %299 : vector<2x128xf32> to vector<1x2x128xf32>
    tpu.vector_store %arg6[%300, %c0_170, %c0_171], %303 {strides = array<i32>} : memref<8x2x128xf32, #tpu.memory_space<vmem>>, vector<1x2x128xf32>,
    %c6_i32 = arith.constant 6 : i32
    %304 = arith.index_cast %c6_i32 : i32 to index
    %c0_172 = arith.constant 0 : index
    %c0_173 = arith.constant 0 : index
    %305 = vector.load %arg0[%304, %c0_172, %c0_173] : memref<8x2x8xf32, #tpu.memory_space<vmem>>, vector<1x2x8xf32>
    %306 = vector.shape_cast %305 : vector<1x2x8xf32> to vector<2x8xf32>
    %c0_174 = arith.constant 0 : index
    %c0_175 = arith.constant 0 : index
    %307 = vector.load %arg7[%c0_174, %c0_175] : memref<2x256xf32, #tpu.memory_space<vmem>>, vector<2x256xf32>
    %c0_176 = arith.constant 0 : index
    %c0_177 = arith.constant 0 : index
    %308 = vector.load %arg1[%c0_176, %c0_177] : memref<8x1024xf32, #tpu.memory_space<vmem>>, vector<8x1024xf32>
    %cst_178 = arith.constant dense<0.000000e+00> : vector<2x1024xf32>
    %309 = tpu.matmul %306, %308, %cst_178 {dimension_numbers = #tpu.dot_dimension_numbers<[1], [0], [0], [1], [0, 0, 1, 1], [], []>} : vector<2x8xf32>, vector<8x1024xf32>, vector<2x1024xf32> -> vector<2x1024xf32>
    %c0_179 = arith.constant 0 : index
    %c0_180 = arith.constant 0 : index
    %310 = vector.load %arg3[%c0_179, %c0_180] : memref<1x1024xf32, #tpu.memory_space<vmem>>, vector<1x1024xf32>
    %311 = vector.broadcast %310 : vector<1x1024xf32> to vector<2x1024xf32>
    %312 = arith.addf %309, %311 : vector<2x1024xf32>
    %313 = arith.truncf %307 : vector<2x256xf32> to vector<2x256xbf16>
    %c0_181 = arith.constant 0 : index
    %c0_182 = arith.constant 0 : index
    %314 = vector.load %arg2[%c0_181, %c0_182] : memref<256x1024xbf16, #tpu.memory_space<vmem>>, vector<256x1024xbf16>
    %cst_183 = arith.constant dense<0.000000e+00> : vector<2x1024xf32>
    %315 = tpu.matmul %313, %314, %cst_183 {dimension_numbers = #tpu.dot_dimension_numbers<[1], [0], [0], [1], [0, 0, 1, 1], [], []>} : vector<2x256xbf16>, vector<256x1024xbf16>, vector<2x1024xf32> -> vector<2x1024xf32>
    %316 = arith.addf %312, %315 : vector<2x1024xf32>
    %317 = vector.extract_strided_slice %316 {offsets = [0, 0], sizes = [2, 256], strides = [1, 1]} : vector<2x1024xf32> to vector<2x256xf32>
    %318 = arith.negf %317 : vector<2x256xf32>
    %319 = math.exp %318 : vector<2x256xf32>
    %cst_184 = arith.constant 1.000000e+00 : f32
    %320 = vector.broadcast %cst_184 : f32 to vector<2x256xf32>
    %321 = arith.addf %320, %319 : vector<2x256xf32>
    %322 = arith.divf %320, %321 : vector<2x256xf32>
    %323 = vector.extract_strided_slice %316 {offsets = [0, 256], sizes = [2, 256], strides = [1, 1]} : vector<2x1024xf32> to vector<2x256xf32>
    %324 = arith.negf %323 : vector<2x256xf32>
    %325 = math.exp %324 : vector<2x256xf32>
    %cst_185 = arith.constant 1.000000e+00 : f32
    %326 = vector.broadcast %cst_185 : f32 to vector<2x256xf32>
    %327 = arith.addf %326, %325 : vector<2x256xf32>
    %328 = arith.divf %326, %327 : vector<2x256xf32>
    %329 = vector.extract_strided_slice %316 {offsets = [0, 512], sizes = [2, 256], strides = [1, 1]} : vector<2x1024xf32> to vector<2x256xf32>
    %330 = math.tanh %329 : vector<2x256xf32>
    %331 = vector.extract_strided_slice %316 {offsets = [0, 768], sizes = [2, 256], strides = [1, 1]} : vector<2x1024xf32> to vector<2x256xf32>
    %332 = arith.negf %331 : vector<2x256xf32>
    %333 = math.exp %332 : vector<2x256xf32>
    %cst_186 = arith.constant 1.000000e+00 : f32
    %334 = vector.broadcast %cst_186 : f32 to vector<2x256xf32>
    %335 = arith.addf %334, %333 : vector<2x256xf32>
    %336 = arith.divf %334, %335 : vector<2x256xf32>
    %c0_187 = arith.constant 0 : index
    %c0_188 = arith.constant 0 : index
    %337 = vector.load %arg8[%c0_187, %c0_188] : memref<2x256xf32, #tpu.memory_space<vmem>>, vector<2x256xf32>
    %338 = arith.mulf %328, %337 : vector<2x256xf32>
    %339 = arith.mulf %322, %330 : vector<2x256xf32>
    %340 = arith.addf %338, %339 : vector<2x256xf32>
    %341 = math.tanh %340 : vector<2x256xf32>
    %342 = arith.mulf %336, %341 : vector<2x256xf32>
    %c0_189 = arith.constant 0 : index
    %c0_190 = arith.constant 0 : index
    %343 = vector.load %arg8[%c0_189, %c0_190] : memref<2x256xf32, #tpu.memory_space<vmem>>, vector<2x256xf32>
    tpu.vector_store %arg8[%c0_189, %c0_190], %340 {strides = array<i32>} : memref<2x256xf32, #tpu.memory_space<vmem>>, vector<2x256xf32>,
    %c0_191 = arith.constant 0 : index
    %c0_192 = arith.constant 0 : index
    %344 = vector.load %arg7[%c0_191, %c0_192] : memref<2x256xf32, #tpu.memory_space<vmem>>, vector<2x256xf32>
    tpu.vector_store %arg7[%c0_191, %c0_192], %342 {strides = array<i32>} : memref<2x256xf32, #tpu.memory_space<vmem>>, vector<2x256xf32>,
    %c0_193 = arith.constant 0 : index
    %c0_194 = arith.constant 0 : index
    %345 = vector.load %arg4[%c0_193, %c0_194] : memref<256x128xf32, #tpu.memory_space<vmem>>, vector<256x128xf32>
    %cst_195 = arith.constant dense<0.000000e+00> : vector<2x128xf32>
    %346 = tpu.matmul %342, %345, %cst_195 {dimension_numbers = #tpu.dot_dimension_numbers<[1], [0], [0], [1], [0, 0, 1, 1], [], []>} : vector<2x256xf32>, vector<256x128xf32>, vector<2x128xf32> -> vector<2x128xf32>
    %c0_196 = arith.constant 0 : index
    %c0_197 = arith.constant 0 : index
    %347 = vector.load %arg5[%c0_196, %c0_197] : memref<1x128xf32, #tpu.memory_space<vmem>>, vector<1x128xf32>
    %348 = vector.broadcast %347 : vector<1x128xf32> to vector<2x128xf32>
    %349 = arith.addf %346, %348 : vector<2x128xf32>
    %350 = arith.index_cast %c6_i32 : i32 to index
    %c0_198 = arith.constant 0 : index
    %c0_199 = arith.constant 0 : index
    %351 = vector.load %arg6[%350, %c0_198, %c0_199] : memref<8x2x128xf32, #tpu.memory_space<vmem>>, vector<1x2x128xf32>
    %352 = vector.shape_cast %351 : vector<1x2x128xf32> to vector<2x128xf32>
    %353 = vector.shape_cast %349 : vector<2x128xf32> to vector<1x2x128xf32>
    tpu.vector_store %arg6[%350, %c0_198, %c0_199], %353 {strides = array<i32>} : memref<8x2x128xf32, #tpu.memory_space<vmem>>, vector<1x2x128xf32>,
    %c7_i32 = arith.constant 7 : i32
    %354 = arith.index_cast %c7_i32 : i32 to index
    %c0_200 = arith.constant 0 : index
    %c0_201 = arith.constant 0 : index
    %355 = vector.load %arg0[%354, %c0_200, %c0_201] : memref<8x2x8xf32, #tpu.memory_space<vmem>>, vector<1x2x8xf32>
    %356 = vector.shape_cast %355 : vector<1x2x8xf32> to vector<2x8xf32>
    %c0_202 = arith.constant 0 : index
    %c0_203 = arith.constant 0 : index
    %357 = vector.load %arg7[%c0_202, %c0_203] : memref<2x256xf32, #tpu.memory_space<vmem>>, vector<2x256xf32>
    %c0_204 = arith.constant 0 : index
    %c0_205 = arith.constant 0 : index
    %358 = vector.load %arg1[%c0_204, %c0_205] : memref<8x1024xf32, #tpu.memory_space<vmem>>, vector<8x1024xf32>
    %cst_206 = arith.constant dense<0.000000e+00> : vector<2x1024xf32>
    %359 = tpu.matmul %356, %358, %cst_206 {dimension_numbers = #tpu.dot_dimension_numbers<[1], [0], [0], [1], [0, 0, 1, 1], [], []>} : vector<2x8xf32>, vector<8x1024xf32>, vector<2x1024xf32> -> vector<2x1024xf32>
    %c0_207 = arith.constant 0 : index
    %c0_208 = arith.constant 0 : index
    %360 = vector.load %arg3[%c0_207, %c0_208] : memref<1x1024xf32, #tpu.memory_space<vmem>>, vector<1x1024xf32>
    %361 = vector.broadcast %360 : vector<1x1024xf32> to vector<2x1024xf32>
    %362 = arith.addf %359, %361 : vector<2x1024xf32>
    %363 = arith.truncf %357 : vector<2x256xf32> to vector<2x256xbf16>
    %c0_209 = arith.constant 0 : index
    %c0_210 = arith.constant 0 : index
    %364 = vector.load %arg2[%c0_209, %c0_210] : memref<256x1024xbf16, #tpu.memory_space<vmem>>, vector<256x1024xbf16>
    %cst_211 = arith.constant dense<0.000000e+00> : vector<2x1024xf32>
    %365 = tpu.matmul %363, %364, %cst_211 {dimension_numbers = #tpu.dot_dimension_numbers<[1], [0], [0], [1], [0, 0, 1, 1], [], []>} : vector<2x256xbf16>, vector<256x1024xbf16>, vector<2x1024xf32> -> vector<2x1024xf32>
    %366 = arith.addf %362, %365 : vector<2x1024xf32>
    %367 = vector.extract_strided_slice %366 {offsets = [0, 0], sizes = [2, 256], strides = [1, 1]} : vector<2x1024xf32> to vector<2x256xf32>
    %368 = arith.negf %367 : vector<2x256xf32>
    %369 = math.exp %368 : vector<2x256xf32>
    %cst_212 = arith.constant 1.000000e+00 : f32
    %370 = vector.broadcast %cst_212 : f32 to vector<2x256xf32>
    %371 = arith.addf %370, %369 : vector<2x256xf32>
    %372 = arith.divf %370, %371 : vector<2x256xf32>
    %373 = vector.extract_strided_slice %366 {offsets = [0, 256], sizes = [2, 256], strides = [1, 1]} : vector<2x1024xf32> to vector<2x256xf32>
    %374 = arith.negf %373 : vector<2x256xf32>
    %375 = math.exp %374 : vector<2x256xf32>
    %cst_213 = arith.constant 1.000000e+00 : f32
    %376 = vector.broadcast %cst_213 : f32 to vector<2x256xf32>
    %377 = arith.addf %376, %375 : vector<2x256xf32>
    %378 = arith.divf %376, %377 : vector<2x256xf32>
    %379 = vector.extract_strided_slice %366 {offsets = [0, 512], sizes = [2, 256], strides = [1, 1]} : vector<2x1024xf32> to vector<2x256xf32>
    %380 = math.tanh %379 : vector<2x256xf32>
    %381 = vector.extract_strided_slice %366 {offsets = [0, 768], sizes = [2, 256], strides = [1, 1]} : vector<2x1024xf32> to vector<2x256xf32>
    %382 = arith.negf %381 : vector<2x256xf32>
    %383 = math.exp %382 : vector<2x256xf32>
    %cst_214 = arith.constant 1.000000e+00 : f32
    %384 = vector.broadcast %cst_214 : f32 to vector<2x256xf32>
    %385 = arith.addf %384, %383 : vector<2x256xf32>
    %386 = arith.divf %384, %385 : vector<2x256xf32>
    %c0_215 = arith.constant 0 : index
    %c0_216 = arith.constant 0 : index
    %387 = vector.load %arg8[%c0_215, %c0_216] : memref<2x256xf32, #tpu.memory_space<vmem>>, vector<2x256xf32>
    %388 = arith.mulf %378, %387 : vector<2x256xf32>
    %389 = arith.mulf %372, %380 : vector<2x256xf32>
    %390 = arith.addf %388, %389 : vector<2x256xf32>
    %391 = math.tanh %390 : vector<2x256xf32>
    %392 = arith.mulf %386, %391 : vector<2x256xf32>
    %c0_217 = arith.constant 0 : index
    %c0_218 = arith.constant 0 : index
    %393 = vector.load %arg8[%c0_217, %c0_218] : memref<2x256xf32, #tpu.memory_space<vmem>>, vector<2x256xf32>
    tpu.vector_store %arg8[%c0_217, %c0_218], %390 {strides = array<i32>} : memref<2x256xf32, #tpu.memory_space<vmem>>, vector<2x256xf32>,
    %c0_219 = arith.constant 0 : index
    %c0_220 = arith.constant 0 : index
    %394 = vector.load %arg7[%c0_219, %c0_220] : memref<2x256xf32, #tpu.memory_space<vmem>>, vector<2x256xf32>
    tpu.vector_store %arg7[%c0_219, %c0_220], %392 {strides = array<i32>} : memref<2x256xf32, #tpu.memory_space<vmem>>, vector<2x256xf32>,
    %c0_221 = arith.constant 0 : index
    %c0_222 = arith.constant 0 : index
    %395 = vector.load %arg4[%c0_221, %c0_222] : memref<256x128xf32, #tpu.memory_space<vmem>>, vector<256x128xf32>
    %cst_223 = arith.constant dense<0.000000e+00> : vector<2x128xf32>
    %396 = tpu.matmul %392, %395, %cst_223 {dimension_numbers = #tpu.dot_dimension_numbers<[1], [0], [0], [1], [0, 0, 1, 1], [], []>} : vector<2x256xf32>, vector<256x128xf32>, vector<2x128xf32> -> vector<2x128xf32>
    %c0_224 = arith.constant 0 : index
    %c0_225 = arith.constant 0 : index
    %397 = vector.load %arg5[%c0_224, %c0_225] : memref<1x128xf32, #tpu.memory_space<vmem>>, vector<1x128xf32>
    %398 = vector.broadcast %397 : vector<1x128xf32> to vector<2x128xf32>
    %399 = arith.addf %396, %398 : vector<2x128xf32>
    %400 = arith.index_cast %c7_i32 : i32 to index
    %c0_226 = arith.constant 0 : index
    %c0_227 = arith.constant 0 : index
    %401 = vector.load %arg6[%400, %c0_226, %c0_227] : memref<8x2x128xf32, #tpu.memory_space<vmem>>, vector<1x2x128xf32>
    %402 = vector.shape_cast %401 : vector<1x2x128xf32> to vector<2x128xf32>
    %403 = vector.shape_cast %399 : vector<2x128xf32> to vector<1x2x128xf32>
    tpu.vector_store %arg6[%400, %c0_226, %c0_227], %403 {strides = array<i32>} : memref<8x2x128xf32, #tpu.memory_space<vmem>>, vector<1x2x128xf32>,
    %c8_i32 = arith.constant 8 : i32
    return
  }
}

</mosaic_0001>

<llo_original>
// kernel: net_forward.1
$region0: #{net_forward.1}
  #allocation0 [shape = 'u32[]', space=smem, size = 0x4, offset = 0x4, fixed_abs, tag = 'smem constant byte address 0x4 - core index']
  #allocation1 [shape = 'u32[144,128]{1,0:T(1,128)}', space=vmem, size = 0x12000, scoped, tag = 'internal scratch']
  #allocation2 [shape = 'f32[2,256]{1,0:T(2,128)}', space=vmem, size = 0x800, scoped, tag = 'scratch operand']
  #allocation3 [shape = 'f32[2,256]{1,0:T(2,128)}', space=vmem, size = 0x800, scoped, tag = 'scratch operand']
  %s0 = inlined_call_operand.vmem [shape: f32[8,2,8], index: 0, kind: input, shape index: {}]
  %s1 = inlined_call_operand.vmem [shape: f32[8,1024], index: 1, kind: input, shape index: {}]
  %s2 = inlined_call_operand.hbm [shape: bf16[256,1024], index: 2, kind: input, shape index: {}]
  %s3 = inlined_call_operand.vmem [shape: f32[1,1024], index: 3, kind: input, shape index: {}]
  %s4 = inlined_call_operand.hbm [shape: f32[256,128], index: 4, kind: input, shape index: {}]
  %s5 = inlined_call_operand.vmem [shape: f32[1,128], index: 5, kind: input, shape index: {}]
  %s6 = inlined_call_operand.vmem [shape: f32[8,2,128], index: 6, kind: output, shape index: {}]
  %s7 = sld [smem:[#allocation0]]
  $region42: #{net_forward.1} parent=0
    _
  %s9 = ssub.s32 1, %s7
  %s10 = scalar_select 0, %s9, %s7
  $region1: #{net_forward.1} parent=0
    #allocation4 [shape = 'u8[524288]{0}', space=vmem, size = 0x80000, scoped, tag = 'input window, operand 2, single buffered']
    #allocation5 [shape = 's32[1]{0}', space=sflag, size = 0x4, scoped, tag = 'scoped memory for net_forward.1']
    #allocation6 [shape = 'u8[131072]{0}', space=vmem, size = 0x20000, scoped, tag = 'input window, operand 4, single buffered']
    #allocation7 [shape = 's32[1]{0}', space=sflag, size = 0x4, scoped, tag = 'scoped memory for net_forward.1']
    %11 = vsyncpa [#allocation5], 0
    %12 = vsyncpa [#allocation7], 0
    // Predicated region
    $region2: #{net_forward.1} parent=1 // pred_check
      _
    $region3: #{net_forward.1} parent=1 // pred_check_branch
      %14 = sbr.rel (0) target = $region5
    $region4: #{net_forward.1} parent=1 // pred_region
      _
    $region5: #{net_forward.1} parent=1 // pred_fallthru
      _
    // Predicated region
    $region6: #{net_forward.1} parent=1 // pred_check
      _
    $region7: #{net_forward.1} parent=1 // pred_check_branch
      %16 = sbr.rel (0) target = $region9
    $region8: #{net_forward.1} parent=1 // pred_region
      _
    $region9: #{net_forward.1} parent=1 // pred_fallthru
      _
    // Predicated region
    $region10: #{net_forward.1} parent=1 // pred_check
      _
    $region11: #{net_forward.1} parent=1 // pred_check_branch
      %18 = sbr.rel (0) target = $region13
    $region12: #{net_forward.1} parent=1 // pred_region
      %s20 = ssub.s32 16384, 16384
      %21 = vsyncadd [#allocation5], %s20
      %s22 = sshll.u32 [#allocation4], 4
      %s23 = int_to_ptr.vmem [resolvable:$true] %s22
      %28 = dma.hbm_to_vmem [thread:$0]  %s2, 16384, %s23, [#allocation5], 512, 512, 32
    $region13: #{net_forward.1} parent=1 // pred_fallthru
      _
    // Predicated region
    $region14: #{net_forward.1} parent=1 // pred_check
      _
    $region15: #{net_forward.1} parent=1 // pred_check_branch
      %30 = sbr.rel (0) target = $region17
    $region16: #{net_forward.1} parent=1 // pred_region
      _
    $region17: #{net_forward.1} parent=1 // pred_fallthru
      _
    // Predicated region
    $region18: #{net_forward.1} parent=1 // pred_check
      _
    $region19: #{net_forward.1} parent=1 // pred_check_branch
      %32 = sbr.rel (0) target = $region21
    $region20: #{net_forward.1} parent=1 // pred_region
      %s34 = ssub.s32 4096, 4096
      %35 = vsyncadd [#allocation7], %s34
      %s36 = sshll.u32 [#allocation6], 4
      %s37 = int_to_ptr.vmem [resolvable:$true] %s36
      %42 = dma.hbm_to_vmem [thread:$0]  %s4, 4096, %s37, [#allocation7], 128, 128, 8
    $region21: #{net_forward.1} parent=1 // pred_fallthru
      _
    // Predicated region
    $region22: #{net_forward.1} parent=1 // pred_check
      _
    $region23: #{net_forward.1} parent=1 // pred_check_branch
      %44 = sbr.rel (0) target = $region25
    $region24: #{net_forward.1} parent=1 // pred_region
      _
    $region25: #{net_forward.1} parent=1 // pred_fallthru
      _
    // Predicated region
    $region26: #{net_forward.1} parent=1 // pred_check
      _
    $region27: #{net_forward.1} parent=1 // pred_check_branch
      %46 = sbr.rel (0) target = $region29
    $region28: #{net_forward.1} parent=1 // pred_region
      %47 = dma.done [#allocation5], 16384
    $region29: #{net_forward.1} parent=1 // pred_fallthru
      _
    // Predicated region
    $region30: #{net_forward.1} parent=1 // pred_check
      _
    $region31: #{net_forward.1} parent=1 // pred_check_branch
      %49 = sbr.rel (0) target = $region33
    $region32: #{net_forward.1} parent=1 // pred_region
      %50 = dma.done [#allocation7], 4096
    $region33: #{net_forward.1} parent=1 // pred_fallthru
      _
    %51 = vst [vmem:[#allocation2] sm:$0xf] 0.0
    %52 = vst [vmem:[#allocation3] sm:$0xf] 0.0
    %v53 = vld [vmem:[%s0] sm:$0x3]
    %v54 = vld [vmem:[#allocation2] sm:$0xf]
    %v55 = vld [vmem:[%s1] sm:$0xff]
    %v56 = vld [vmem:[%s1 + $0x8] sm:$0xff]
    %v57 = vld [vmem:[%s1 + $0x10] sm:$0xff]
    %v58 = vld [vmem:[%s1 + $0x18] sm:$0xff]
    %v59 = vld [vmem:[%s1 + $0x20] sm:$0xff]
    %v60 = vld [vmem:[%s1 + $0x28] sm:$0xff]
    %v61 = vld [vmem:[%s1 + $0x30] sm:$0xff]
    %v62 = vld [vmem:[%s1 + $0x38] sm:$0xff]
    %v63 = vld [vmem:[%s3] sm:$0xff]
    %v65 = vlaneseq
    %v66 = vshrl.u32 %v65, 7
    %v67 = vsub.s32 0, %v66
    %v68 = vrot.slane %v63, %v67
    %v69 = vlaneseq
    %v70 = vshrl.u32 %v69, 7
    %v71 = vsub.s32 1, %v70
    %v72 = vrot.slane %v63, %v71
    %v73 = vlaneseq
    %v74 = vshrl.u32 %v73, 7
    %v75 = vsub.s32 2, %v74
    %v76 = vrot.slane %v63, %v75
    %v77 = vlaneseq
    %v78 = vshrl.u32 %v77, 7
    %v79 = vsub.s32 3, %v78
    %v80 = vrot.slane %v63, %v79
    %v81 = vlaneseq
    %v82 = vshrl.u32 %v81, 7
    %v83 = vsub.s32 4, %v82
    %v84 = vrot.slane %v63, %v83
    %v85 = vlaneseq
    %v86 = vshrl.u32 %v85, 7
    %v87 = vsub.s32 5, %v86
    %v88 = vrot.slane %v63, %v87
    %v89 = vlaneseq
    %v90 = vshrl.u32 %v89, 7
    %v91 = vsub.s32 6, %v90
    %v92 = vrot.slane %v63, %v91
    %v93 = vlaneseq
    %v94 = vshrl.u32 %v93, 7
    %v95 = vsub.s32 7, %v94
    %v96 = vrot.slane %v63, %v95
    %vm105 = vcmask 64512
    %v107 = vsel %vm105, %v53, 0
    %109 = vmatprep.subr.mxu0 %v56
    %110 = vmatpush1.msra.mxu0 %v55
    %111 = vmatprep.subr.mxu0 0.0
    %112 = vmatpush1.msra.mxu0 0.0
    %113 = vmatprep.subr.mxu0 0.0
    %114 = vmatpush1.msra.mxu0 0.0
    %115 = vmatprep.subr.mxu0 0.0
    %116 = vmatpush1.msra.mxu0 0.0
    %117 = vmatprep.subr.mxu0 0.0
    %118 = vmatpush1.msra.mxu0 0.0
    %119 = vmatprep.subr.mxu0 0.0
    %120 = vmatpush1.msra.mxu0 0.0
    %121 = vmatprep.subr.mxu0 0.0
    %122 = vmatpush1.msra.mxu0 0.0
    %123 = vmatprep.subr.mxu0 0.0
    %124 = vmatpush1.msra.mxu0 0.0
    %125 = vmatprep.subr.mxu0 0.0
    %126 = vmatpush1.msra.mxu0 0.0
    %127 = vmatprep.subr.mxu0 0.0
    %128 = vmatpush1.msra.mxu0 0.0
    %129 = vmatprep.subr.mxu0 0.0
    %130 = vmatpush1.msra.mxu0 0.0
    %131 = vmatprep.subr.mxu0 0.0
    %132 = vmatpush1.msra.mxu0 0.0
    %133 = vmatprep.subr.mxu0 0.0
    %134 = vmatpush1.msra.mxu0 0.0
    %135 = vmatprep.subr.mxu0 0.0
    %136 = vmatpush1.msra.mxu0 0.0
    %137 = vmatprep.subr.mxu0 0.0
    %138 = vmatpush1.msra.mxu0 0.0
    %139 = vmatprep.subr.mxu0 0.0
    %140 = vmatpush1.msra.mxu0 0.0
    %141 = vmatprep.subr.mxu0 0.0
    %142 = vmatpush1.msra.mxu0 0.0
    %143 = vmatprep.subr.mxu0 0.0
    %144 = vmatpush1.msra.mxu0 0.0
    %145 = vmatprep.subr.mxu0 0.0
    %146 = vmatpush1.msra.mxu0 0.0
    %147 = vmatprep.subr.mxu0 0.0
    %148 = vmatpush1.msra.mxu0 0.0
    %149 = vmatprep.subr.mxu0 0.0
    %150 = vmatpush1.msra.mxu0 0.0
    %151 = vmatprep.subr.mxu0 0.0
    %152 = vmatpush1.msra.mxu0 0.0
    %153 = vmatprep.subr.mxu0 0.0
    %154 = vmatpush1.msra.mxu0 0.0
    %155 = vmatprep.subr.mxu0 0.0
    %156 = vmatpush1.msra.mxu0 0.0
    %157 = vmatprep.subr.mxu0 0.0
    %158 = vmatpush1.msra.mxu0 0.0
    %159 = vmatprep.subr.mxu0 0.0
    %160 = vmatpush1.msra.mxu0 0.0
    %161 = vmatprep.subr.mxu0 0.0
    %162 = vmatpush1.msra.mxu0 0.0
    %163 = vmatprep.subr.mxu0 0.0
    %164 = vmatpush1.msra.mxu0 0.0
    %165 = vmatprep.subr.mxu0 0.0
    %166 = vmatpush1.msra.mxu0 0.0
    %167 = vmatprep.subr.mxu0 0.0
    %168 = vmatpush1.msra.mxu0 0.0
    %169 = vmatprep.subr.mxu0 0.0
    %170 = vmatpush1.msra.mxu0 0.0
    %171 = vmatprep.subr.mxu0 0.0
    %172 = vmatpush1.msra.mxu0 0.0
    %173 = vmatprep.mubr.f32.mxu0 0.0
    %174 = vmatmul.mubr.f32.gmra.mrb[0].mxu0 %v107
    %v175 = vpop.f32.mrb[0].mxu0
    %v176 = vadd.f32 %v68, %v175
    %v177 = vpop.f32.mrb[0].mxu0
    %v178 = vadd.f32 %v72, %v177
    %179 = vdwg.mxu0
    %180 = vmatprep.subr.mxu0 %v58
    %181 = vmatpush1.msra.mxu0 %v57
    %182 = vmatprep.subr.mxu0 0.0
    %183 = vmatpush1.msra.mxu0 0.0
    %184 = vmatprep.subr.mxu0 0.0
    %185 = vmatpush1.msra.mxu0 0.0
    %186 = vmatprep.subr.mxu0 0.0
    %187 = vmatpush1.msra.mxu0 0.0
    %188 = vmatprep.subr.mxu0 0.0
    %189 = vmatpush1.msra.mxu0 0.0
    %190 = vmatprep.subr.mxu0 0.0
    %191 = vmatpush1.msra.mxu0 0.0
    %192 = vmatprep.subr.mxu0 0.0
    %193 = vmatpush1.msra.mxu0 0.0
    %194 = vmatprep.subr.mxu0 0.0
    %195 = vmatpush1.msra.mxu0 0.0
    %196 = vmatprep.subr.mxu0 0.0
    %197 = vmatpush1.msra.mxu0 0.0
    %198 = vmatprep.subr.mxu0 0.0
    %199 = vmatpush1.msra.mxu0 0.0
    %200 = vmatprep.subr.mxu0 0.0
    %201 = vmatpush1.msra.mxu0 0.0
    %202 = vmatprep.subr.mxu0 0.0
    %203 = vmatpush1.msra.mxu0 0.0
    %204 = vmatprep.subr.mxu0 0.0
    %205 = vmatpush1.msra.mxu0 0.0
    %206 = vmatprep.subr.mxu0 0.0
    %207 = vmatpush1.msra.mxu0 0.0
    %208 = vmatprep.subr.mxu0 0.0
    %209 = vmatpush1.msra.mxu0 0.0
    %210 = vmatprep.subr.mxu0 0.0
    %211 = vmatpush1.msra.mxu0 0.0
    %212 = vmatprep.subr.mxu0 0.0
    %213 = vmatpush1.msra.mxu0 0.0
    %214 = vmatprep.subr.mxu0 0.0
    %215 = vmatpush1.msra.mxu0 0.0
    %216 = vmatprep.subr.mxu0 0.0
    %217 = vmatpush1.msra.mxu0 0.0
    %218 = vmatprep.subr.mxu0 0.0
    %219 = vmatpush1.msra.mxu0 0.0
    %220 = vmatprep.subr.mxu0 0.0
    %221 = vmatpush1.msra.mxu0 0.0
    %222 = vmatprep.subr.mxu0 0.0
    %223 = vmatpush1.msra.mxu0 0.0
    %224 = vmatprep.subr.mxu0 0.0
    %225 = vmatpush1.msra.mxu0 0.0
    %226 = vmatprep.subr.mxu0 0.0
    %227 = vmatpush1.msra.mxu0 0.0
    %228 = vmatprep.subr.mxu0 0.0
    %229 = vmatpush1.msra.mxu0 0.0
    %230 = vmatprep.subr.mxu0 0.0
    %231 = vmatpush1.msra.mxu0 0.0
    %232 = vmatprep.subr.mxu0 0.0
    %233 = vmatpush1.msra.mxu0 0.0
    %234 = vmatprep.subr.mxu0 0.0
    %235 = vmatpush1.msra.mxu0 0.0
    %236 = vmatprep.subr.mxu0 0.0
    %237 = vmatpush1.msra.mxu0 0.0
    %238 = vmatprep.subr.mxu0 0.0
    %239 = vmatpush1.msra.mxu0 0.0
    %240 = vmatprep.subr.mxu0 0.0
    %241 = vmatpush1.msra.mxu0 0.0
    %242 = vmatprep.subr.mxu0 0.0
    %243 = vmatpush1.msra.mxu0 0.0
    %244 = vmatprep.mubr.f32.mxu0 0.0
    %245 = vmatmul.mubr.f32.gmra.mrb[0].mxu0 %v107
    %v246 = vpop.f32.mrb[0].mxu0
    %v247 = vadd.f32 %v76, %v246
    %v248 = vpop.f32.mrb[0].mxu0
    %v249 = vadd.f32 %v80, %v248
    %250 = vdwg.mxu0
    %251 = vmatprep.subr.mxu0 %v60
    %252 = vmatpush1.msra.mxu0 %v59
    %253 = vmatprep.subr.mxu0 0.0
    %254 = vmatpush1.msra.mxu0 0.0
    %255 = vmatprep.subr.mxu0 0.0
    %256 = vmatpush1.msra.mxu0 0.0
    %257 = vmatprep.subr.mxu0 0.0
    %258 = vmatpush1.msra.mxu0 0.0
    %259 = vmatprep.subr.mxu0 0.0
    %260 = vmatpush1.msra.mxu0 0.0
    %261 = vmatprep.subr.mxu0 0.0
    %262 = vmatpush1.msra.mxu0 0.0
    %263 = vmatprep.subr.mxu0 0.0
    %264 = vmatpush1.msra.mxu0 0.0
    %265 = vmatprep.subr.mxu0 0.0
    %266 = vmatpush1.msra.mxu0 0.0
    %267 = vmatprep.subr.mxu0 0.0
    %268 = vmatpush1.msra.mxu0 0.0
    %269 = vmatprep.subr.mxu0 0.0
    %270 = vmatpush1.msra.mxu0 0.0
    %271 = vmatprep.subr.mxu0 0.0
    %272 = vmatpush1.msra.mxu0 0.0
    %273 = vmatprep.subr.mxu0 0.0
    %274 = vmatpush1.msra.mxu0 0.0
    %275 = vmatprep.subr.mxu0 0.0
    %276 = vmatpush1.msra.mxu0 0.0
    %277 = vmatprep.subr.mxu0 0.0
    %278 = vmatpush1.msra.mxu0 0.0
    %279 = vmatprep.subr.mxu0 0.0
    %280 = vmatpush1.msra.mxu0 0.0
    %281 = vmatprep.subr.mxu0 0.0
    %282 = vmatpush1.msra.mxu0 0.0
    %283 = vmatprep.subr.mxu0 0.0
    %284 = vmatpush1.msra.mxu0 0.0
    %285 = vmatprep.subr.mxu0 0.0
    %286 = vmatpush1.msra.mxu0 0.0
    %287 = vmatprep.subr.mxu0 0.0
    %288 = vmatpush1.msra.mxu0 0.0
    %289 = vmatprep.subr.mxu0 0.0
    %290 = vmatpush1.msra.mxu0 0.0
    %291 = vmatprep.subr.mxu0 0.0
    %292 = vmatpush1.msra.mxu0 0.0
    %293 = vmatprep.subr.mxu0 0.0
    %294 = vmatpush1.msra.mxu0 0.0
    %295 = vmatprep.subr.mxu0 0.0
    %296 = vmatpush1.msra.mxu0 0.0
    %297 = vmatprep.subr.mxu0 0.0
    %298 = vmatpush1.msra.mxu0 0.0
    %299 = vmatprep.subr.mxu0 0.0
    %300 = vmatpush1.msra.mxu0 0.0
    %301 = vmatprep.subr.mxu0 0.0
    %302 = vmatpush1.msra.mxu0 0.0
    %303 = vmatprep.subr.mxu0 0.0
    %304 = vmatpush1.msra.mxu0 0.0
    %305 = vmatprep.subr.mxu0 0.0
    %306 = vmatpush1.msra.mxu0 0.0
    %307 = vmatprep.subr.mxu0 0.0
    %308 = vmatpush1.msra.mxu0 0.0
    %309 = vmatprep.subr.mxu0 0.0
    %310 = vmatpush1.msra.mxu0 0.0
    %311 = vmatprep.subr.mxu0 0.0
    %312 = vmatpush1.msra.mxu0 0.0
    %313 = vmatprep.subr.mxu0 0.0
    %314 = vmatpush1.msra.mxu0 0.0
    %315 = vmatprep.mubr.f32.mxu0 0.0
    %316 = vmatmul.mubr.f32.gmra.mrb[0].mxu0 %v107
    %v317 = vpop.f32.mrb[0].mxu0
    %v318 = vadd.f32 %v84, %v317
    %v319 = vpop.f32.mrb[0].mxu0
    %v320 = vadd.f32 %v88, %v319
    %321 = vdwg.mxu0
    %322 = vmatprep.subr.mxu0 %v62
    %323 = vmatpush1.msra.mxu0 %v61
    %324 = vmatprep.subr.mxu0 0.0
    %325 = vmatpush1.msra.mxu0 0.0
    %326 = vmatprep.subr.mxu0 0.0
    %327 = vmatpush1.msra.mxu0 0.0
    %328 = vmatprep.subr.mxu0 0.0
    %329 = vmatpush1.msra.mxu0 0.0
    %330 = vmatprep.subr.mxu0 0.0
    %331 = vmatpush1.msra.mxu0 0.0
    %332 = vmatprep.subr.mxu0 0.0
    %333 = vmatpush1.msra.mxu0 0.0
    %334 = vmatprep.subr.mxu0 0.0
    %335 = vmatpush1.msra.mxu0 0.0
    %336 = vmatprep.subr.mxu0 0.0
    %337 = vmatpush1.msra.mxu0 0.0
    %338 = vmatprep.subr.mxu0 0.0
    %339 = vmatpush1.msra.mxu0 0.0
    %340 = vmatprep.subr.mxu0 0.0
    %341 = vmatpush1.msra.mxu0 0.0
    %342 = vmatprep.subr.mxu0 0.0
    %343 = vmatpush1.msra.mxu0 0.0
    %344 = vmatprep.subr.mxu0 0.0
    %345 = vmatpush1.msra.mxu0 0.0
    %346 = vmatprep.subr.mxu0 0.0
    %347 = vmatpush1.msra.mxu0 0.0
    %348 = vmatprep.subr.mxu0 0.0
    %349 = vmatpush1.msra.mxu0 0.0
    %350 = vmatprep.subr.mxu0 0.0
    %351 = vmatpush1.msra.mxu0 0.0
    %352 = vmatprep.subr.mxu0 0.0
    %353 = vmatpush1.msra.mxu0 0.0
    %354 = vmatprep.subr.mxu0 0.0
    %355 = vmatpush1.msra.mxu0 0.0
    %356 = vmatprep.subr.mxu0 0.0
    %357 = vmatpush1.msra.mxu0 0.0
    %358 = vmatprep.subr.mxu0 0.0
    %359 = vmatpush1.msra.mxu0 0.0
    %360 = vmatprep.subr.mxu0 0.0
    %361 = vmatpush1.msra.mxu0 0.0
    %362 = vmatprep.subr.mxu0 0.0
    %363 = vmatpush1.msra.mxu0 0.0
    %364 = vmatprep.subr.mxu0 0.0
    %365 = vmatpush1.msra.mxu0 0.0
    %366 = vmatprep.subr.mxu0 0.0
    %367 = vmatpush1.msra.mxu0 0.0
    %368 = vmatprep.subr.mxu0 0.0
    %369 = vmatpush1.msra.mxu0 0.0
    %370 = vmatprep.subr.mxu0 0.0
    %371 = vmatpush1.msra.mxu0 0.0
    %372 = vmatprep.subr.mxu0 0.0
    %373 = vmatpush1.msra.mxu0 0.0
    %374 = vmatprep.subr.mxu0 0.0
    %375 = vmatpush1.msra.mxu0 0.0
    %376 = vmatprep.subr.mxu0 0.0
    %377 = vmatpush1.msra.mxu0 0.0
    %378 = vmatprep.subr.mxu0 0.0
    %379 = vmatpush1.msra.mxu0 0.0
    %380 = vmatprep.subr.mxu0 0.0
    %381 = vmatpush1.msra.mxu0 0.0
    %382 = vmatprep.subr.mxu0 0.0
    %383 = vmatpush1.msra.mxu0 0.0
    %384 = vmatprep.subr.mxu0 0.0
    %385 = vmatpush1.msra.mxu0 0.0
    %386 = vmatprep.mubr.f32.mxu0 0.0
    %387 = vmatmul.mubr.f32.gmra.mrb[0].mxu0 %v107
    %v388 = vpop.f32.mrb[0].mxu0
    %v389 = vadd.f32 %v92, %v388
    %v390 = vpop.f32.mrb[0].mxu0
    %v391 = vadd.f32 %v96, %v390
    %392 = vdwg.mxu0
    %v395 = vunpack.c.l.s4 1983009808
    %v396 = vunpack.c.0.s8 %v395
    %v397 = vlaneseq
    %v398 = vshrl.u32 %v397, 7
    %v399 = vsub.s32 %v396, %v398
    %v400 = vrot.slane %v54, %v399
    %v401 = vcombine.high %v400, %v400
    %v404 = vpack.c.bf16 %v400, %v400
    %v405 = vpack.c.bf16 %v401, %v401
    %v406 = vld [vmem:[#allocation4] sm:$0xff]
    %v407 = vld [vmem:[#allocation4 + $0x8] sm:$0xff]
    %v408 = vld [vmem:[#allocation4 + $0x10] sm:$0xff]
    %v409 = vld [vmem:[#allocation4 + $0x18] sm:$0xff]
    %v410 = vld [vmem:[#allocation4 + $0x20] sm:$0xff]
    %v411 = vld [vmem:[#allocation4 + $0x28] sm:$0xff]
    %v412 = vld [vmem:[#allocation4 + $0x30] sm:$0xff]
    %v413 = vld [vmem:[#allocation4 + $0x38] sm:$0xff]
    %v414 = vld [vmem:[#allocation4 + $0x40] sm:$0xff]
    %v415 = vld [vmem:[#allocation4 + $0x48] sm:$0xff]
    %v416 = vld [vmem:[#allocation4 + $0x50] sm:$0xff]
    %v417 = vld [vmem:[#allocation4 + $0x58] sm:$0xff]
    %v418 = vld [vmem:[#allocation4 + $0x60] sm:$0xff]
    %v419 = vld [vmem:[#allocation4 + $0x68] sm:$0xff]
    %v420 = vld [vmem:[#allocation4 + $0x70] sm:$0xff]
    %v421 = vld [vmem:[#allocation4 + $0x78] sm:$0xff]
    %v422 = vld [vmem:[#allocation4 + $0x80] sm:$0xff]
    %v423 = vld [vmem:[#allocation4 + $0x88] sm:$0xff]
    %v424 = vld [vmem:[#allocation4 + $0x90] sm:$0xff]
    %v425 = vld [vmem:[#allocation4 + $0x98] sm:$0xff]
    %v426 = vld [vmem:[#allocation4 + $0xa0] sm:$0xff]
    %v427 = vld [vmem:[#allocation4 + $0xa8] sm:$0xff]
    %v428 = vld [vmem:[#allocation4 + $0xb0] sm:$0xff]
    %v429 = vld [vmem:[#allocation4 + $0xb8] sm:$0xff]
    %v430 = vld [vmem:[#allocation4 + $0xc0] sm:$0xff]
    %v431 = vld [vmem:[#allocation4 + $0xc8] sm:$0xff]
    %v432 = vld [vmem:[#allocation4 + $0xd0] sm:$0xff]
    %v433 = vld [vmem:[#allocation4 + $0xd8] sm:$0xff]
    %v434 = vld [vmem:[#allocation4 + $0xe0] sm:$0xff]
    %v435 = vld [vmem:[#allocation4 + $0xe8] sm:$0xff]
    %v436 = vld [vmem:[#allocation4 + $0xf0] sm:$0xff]
    %v437 = vld [vmem:[#allocation4 + $0xf8] sm:$0xff]
    %v438 = vld [vmem:[#allocation4 + $0x100] sm:$0xff]
    %v439 = vld [vmem:[#allocation4 + $0x108] sm:$0xff]
    %v440 = vld [vmem:[#allocation4 + $0x110] sm:$0xff]
    %v441 = vld [vmem:[#allocation4 + $0x118] sm:$0xff]
    %v442 = vld [vmem:[#allocation4 + $0x120] sm:$0xff]
    %v443 = vld [vmem:[#allocation4 + $0x128] sm:$0xff]
    %v444 = vld [vmem:[#allocation4 + $0x130] sm:$0xff]
    %v445 = vld [vmem:[#allocation4 + $0x138] sm:$0xff]
    %v446 = vld [vmem:[#allocation4 + $0x140] sm:$0xff]
    %v447 = vld [vmem:[#allocation4 + $0x148] sm:$0xff]
    %v448 = vld [vmem:[#allocation4 + $0x150] sm:$0xff]
    %v449 = vld [vmem:[#allocation4 + $0x158] sm:$0xff]
    %v450 = vld [vmem:[#allocation4 + $0x160] sm:$0xff]
    %v451 = vld [vmem:[#allocation4 + $0x168] sm:$0xff]
    %v452 = vld [vmem:[#allocation4 + $0x170] sm:$0xff]
    %v453 = vld [vmem:[#allocation4 + $0x178] sm:$0xff]
    %v454 = vld [vmem:[#allocation4 + $0x180] sm:$0xff]
    %v455 = vld [vmem:[#allocation4 + $0x188] sm:$0xff]
    %v456 = vld [vmem:[#allocation4 + $0x190] sm:$0xff]
    %v457 = vld [vmem:[#allocation4 + $0x198] sm:$0xff]
    %v458 = vld [vmem:[#allocation4 + $0x1a0] sm:$0xff]
    %v459 = vld [vmem:[#allocation4 + $0x1a8] sm:$0xff]
    %v460 = vld [vmem:[#allocation4 + $0x1b0] sm:$0xff]
    %v461 = vld [vmem:[#allocation4 + $0x1b8] sm:$0xff]
    %v462 = vld [vmem:[#allocation4 + $0x1c0] sm:$0xff]
    %v463 = vld [vmem:[#allocation4 + $0x1c8] sm:$0xff]
    %v464 = vld [vmem:[#allocation4 + $0x1d0] sm:$0xff]
    %v465 = vld [vmem:[#allocation4 + $0x1d8] sm:$0xff]
    %v466 = vld [vmem:[#allocation4 + $0x1e0] sm:$0xff]
    %v467 = vld [vmem:[#allocation4 + $0x1e8] sm:$0xff]
    %v468 = vld [vmem:[#allocation4 + $0x1f0] sm:$0xff]
    %v469 = vld [vmem:[#allocation4 + $0x1f8] sm:$0xff]
    %v470 = vld [vmem:[#allocation4 + $0x200] sm:$0xff]
    %v471 = vld [vmem:[#allocation4 + $0x208] sm:$0xff]
    %v472 = vld [vmem:[#allocation4 + $0x210] sm:$0xff]
    %v473 = vld [vmem:[#allocation4 + $0x218] sm:$0xff]
    %v474 = vld [vmem:[#allocation4 + $0x220] sm:$0xff]
    %v475 = vld [vmem:[#allocation4 + $0x228] sm:$0xff]
    %v476 = vld [vmem:[#allocation4 + $0x230] sm:$0xff]
    %v477 = vld [vmem:[#allocation4 + $0x238] sm:$0xff]
    %v478 = vld [vmem:[#allocation4 + $0x240] sm:$0xff]
    %v479 = vld [vmem:[#allocation4 + $0x248] sm:$0xff]
    %v480 = vld [vmem:[#allocation4 + $0x250] sm:$0xff]
    %v481 = vld [vmem:[#allocation4 + $0x258] sm:$0xff]
    %v482 = vld [vmem:[#allocation4 + $0x260] sm:$0xff]
    %v483 = vld [vmem:[#allocation4 + $0x268] sm:$0xff]
    %v484 = vld [vmem:[#allocation4 + $0x270] sm:$0xff]
    %v485 = vld [vmem:[#allocation4 + $0x278] sm:$0xff]
    %v486 = vld [vmem:[#allocation4 + $0x280] sm:$0xff]
    %v487 = vld [vmem:[#allocation4 + $0x288] sm:$0xff]
    %v488 = vld [vmem:[#allocation4 + $0x290] sm:$0xff]
    %v489 = vld [vmem:[#allocation4 + $0x298] sm:$0xff]
    %v490 = vld [vmem:[#allocation4 + $0x2a0] sm:$0xff]
    %v491 = vld [vmem:[#allocation4 + $0x2a8] sm:$0xff]
    %v492 = vld [vmem:[#allocation4 + $0x2b0] sm:$0xff]
    %v493 = vld [vmem:[#allocation4 + $0x2b8] sm:$0xff]
    %v494 = vld [vmem:[#allocation4 + $0x2c0] sm:$0xff]
    %v495 = vld [vmem:[#allocation4 + $0x2c8] sm:$0xff]
    %v496 = vld [vmem:[#allocation4 + $0x2d0] sm:$0xff]
    %v497 = vld [vmem:[#allocation4 + $0x2d8] sm:$0xff]
    %v498 = vld [vmem:[#allocation4 + $0x2e0] sm:$0xff]
    %v499 = vld [vmem:[#allocation4 + $0x2e8] sm:$0xff]
    %v500 = vld [vmem:[#allocation4 + $0x2f0] sm:$0xff]
    %v501 = vld [vmem:[#allocation4 + $0x2f8] sm:$0xff]
    %v502 = vld [vmem:[#allocation4 + $0x300] sm:$0xff]
    %v503 = vld [vmem:[#allocation4 + $0x308] sm:$0xff]
    %v504 = vld [vmem:[#allocation4 + $0x310] sm:$0xff]
    %v505 = vld [vmem:[#allocation4 + $0x318] sm:$0xff]
    %v506 = vld [vmem:[#allocation4 + $0x320] sm:$0xff]
    %v507 = vld [vmem:[#allocation4 + $0x328] sm:$0xff]
    %v508 = vld [vmem:[#allocation4 + $0x330] sm:$0xff]
    %v509 = vld [vmem:[#allocation4 + $0x338] sm:$0xff]
    %v510 = vld [vmem:[#allocation4 + $0x340] sm:$0xff]
    %v511 = vld [vmem:[#allocation4 + $0x348] sm:$0xff]
    %v512 = vld [vmem:[#allocation4 + $0x350] sm:$0xff]
    %v513 = vld [vmem:[#allocation4 + $0x358] sm:$0xff]
    %v514 = vld [vmem:[#allocation4 + $0x360] sm:$0xff]
    %v515 = vld [vmem:[#allocation4 + $0x368] sm:$0xff]
    %v516 = vld [vmem:[#allocation4 + $0x370] sm:$0xff]
    %v517 = vld [vmem:[#allocation4 + $0x378] sm:$0xff]
    %v518 = vld [vmem:[#allocation4 + $0x380] sm:$0xff]
    %v519 = vld [vmem:[#allocation4 + $0x388] sm:$0xff]
    %v520 = vld [vmem:[#allocation4 + $0x390] sm:$0xff]
    %v521 = vld [vmem:[#allocation4 + $0x398] sm:$0xff]
    %v522 = vld [vmem:[#allocation4 + $0x3a0] sm:$0xff]
    %v523 = vld [vmem:[#allocation4 + $0x3a8] sm:$0xff]
    %v524 = vld [vmem:[#allocation4 + $0x3b0] sm:$0xff]
    %v525 = vld [vmem:[#allocation4 + $0x3b8] sm:$0xff]
    %v526 = vld [vmem:[#allocation4 + $0x3c0] sm:$0xff]
    %v527 = vld [vmem:[#allocation4 + $0x3c8] sm:$0xff]
    %v528 = vld [vmem:[#allocation4 + $0x3d0] sm:$0xff]
    %v529 = vld [vmem:[#allocation4 + $0x3d8] sm:$0xff]
    %v530 = vld [vmem:[#allocation4 + $0x3e0] sm:$0xff]
    %v531 = vld [vmem:[#allocation4 + $0x3e8] sm:$0xff]
    %v532 = vld [vmem:[#allocation4 + $0x3f0] sm:$0xff]
    %v533 = vld [vmem:[#allocation4 + $0x3f8] sm:$0xff]
    %v662 = vunpack.c.l.b16 %v406
    %v663 = vunpack.c.h.b16 %v406
    %v664 = vunpack.c.l.b16 %v407
    %v665 = vunpack.c.h.b16 %v407
    %v666 = vunpack.c.l.b16 %v408
    %v667 = vunpack.c.h.b16 %v408
    %v668 = vunpack.c.l.b16 %v409
    %v669 = vunpack.c.h.b16 %v409
    %v670 = vunpack.c.l.b16 %v410
    %v671 = vunpack.c.h.b16 %v410
    %v672 = vunpack.c.l.b16 %v411
    %v673 = vunpack.c.h.b16 %v411
    %v674 = vunpack.c.l.b16 %v412
    %v675 = vunpack.c.h.b16 %v412
    %v676 = vunpack.c.l.b16 %v413
    %v677 = vunpack.c.h.b16 %v413
    %v678 = vunpack.c.l.b16 %v414
    %v679 = vunpack.c.h.b16 %v414
    %v680 = vunpack.c.l.b16 %v415
    %v681 = vunpack.c.h.b16 %v415
    %v682 = vunpack.c.l.b16 %v416
    %v683 = vunpack.c.h.b16 %v416
    %v684 = vunpack.c.l.b16 %v417
    %v685 = vunpack.c.h.b16 %v417
    %v686 = vunpack.c.l.b16 %v418
    %v687 = vunpack.c.h.b16 %v418
    %v688 = vunpack.c.l.b16 %v419
    %v689 = vunpack.c.h.b16 %v419
    %v690 = vunpack.c.l.b16 %v420
    %v691 = vunpack.c.h.b16 %v420
    %v692 = vunpack.c.l.b16 %v421
    %v693 = vunpack.c.h.b16 %v421
    %v694 = vunpack.c.l.b16 %v422
    %v695 = vunpack.c.h.b16 %v422
    %v696 = vunpack.c.l.b16 %v423
    %v697 = vunpack.c.h.b16 %v423
    %v698 = vunpack.c.l.b16 %v424
    %v699 = vunpack.c.h.b16 %v424
    %v700 = vunpack.c.l.b16 %v425
    %v701 = vunpack.c.h.b16 %v425
    %v702 = vunpack.c.l.b16 %v426
    %v703 = vunpack.c.h.b16 %v426
    %v704 = vunpack.c.l.b16 %v427
    %v705 = vunpack.c.h.b16 %v427
    %v706 = vunpack.c.l.b16 %v428
    %v707 = vunpack.c.h.b16 %v428
    %v708 = vunpack.c.l.b16 %v429
    %v709 = vunpack.c.h.b16 %v429
    %v710 = vunpack.c.l.b16 %v430
    %v711 = vunpack.c.h.b16 %v430
    %v712 = vunpack.c.l.b16 %v431
    %v713 = vunpack.c.h.b16 %v431
    %v714 = vunpack.c.l.b16 %v432
    %v715 = vunpack.c.h.b16 %v432
    %v716 = vunpack.c.l.b16 %v433
    %v717 = vunpack.c.h.b16 %v433
    %v718 = vunpack.c.l.b16 %v434
    %v719 = vunpack.c.h.b16 %v434
    %v720 = vunpack.c.l.b16 %v435
    %v721 = vunpack.c.h.b16 %v435
    %v722 = vunpack.c.l.b16 %v436
    %v723 = vunpack.c.h.b16 %v436
    %v724 = vunpack.c.l.b16 %v437
    %v725 = vunpack.c.h.b16 %v437
    %v726 = vunpack.c.l.b16 %v438
    %v727 = vunpack.c.h.b16 %v438
    %v728 = vunpack.c.l.b16 %v439
    %v729 = vunpack.c.h.b16 %v439
    %v730 = vunpack.c.l.b16 %v440
    %v731 = vunpack.c.h.b16 %v440
    %v732 = vunpack.c.l.b16 %v441
    %v733 = vunpack.c.h.b16 %v441
    %v734 = vunpack.c.l.b16 %v442
    %v735 = vunpack.c.h.b16 %v442
    %v736 = vunpack.c.l.b16 %v443
    %v737 = vunpack.c.h.b16 %v443
    %v738 = vunpack.c.l.b16 %v444
    %v739 = vunpack.c.h.b16 %v444
    %v740 = vunpack.c.l.b16 %v445
    %v741 = vunpack.c.h.b16 %v445
    %v742 = vunpack.c.l.b16 %v446
    %v743 = vunpack.c.h.b16 %v446
    %v744 = vunpack.c.l.b16 %v447
    %v745 = vunpack.c.h.b16 %v447
    %v746 = vunpack.c.l.b16 %v448
    %v747 = vunpack.c.h.b16 %v448
    %v748 = vunpack.c.l.b16 %v449
    %v749 = vunpack.c.h.b16 %v449
    %v750 = vunpack.c.l.b16 %v450
    %v751 = vunpack.c.h.b16 %v450
    %v752 = vunpack.c.l.b16 %v451
    %v753 = vunpack.c.h.b16 %v451
    %v754 = vunpack.c.l.b16 %v452
    %v755 = vunpack.c.h.b16 %v452
    %v756 = vunpack.c.l.b16 %v453
    %v757 = vunpack.c.h.b16 %v453
    %v758 = vunpack.c.l.b16 %v454
    %v759 = vunpack.c.h.b16 %v454
    %v760 = vunpack.c.l.b16 %v455
    %v761 = vunpack.c.h.b16 %v455
    %v762 = vunpack.c.l.b16 %v456
    %v763 = vunpack.c.h.b16 %v456
    %v764 = vunpack.c.l.b16 %v457
    %v765 = vunpack.c.h.b16 %v457
    %v766 = vunpack.c.l.b16 %v458
    %v767 = vunpack.c.h.b16 %v458
    %v768 = vunpack.c.l.b16 %v459
    %v769 = vunpack.c.h.b16 %v459
    %v770 = vunpack.c.l.b16 %v460
    %v771 = vunpack.c.h.b16 %v460
    %v772 = vunpack.c.l.b16 %v461
    %v773 = vunpack.c.h.b16 %v461
    %v774 = vunpack.c.l.b16 %v462
    %v775 = vunpack.c.h.b16 %v462
    %v776 = vunpack.c.l.b16 %v463
    %v777 = vunpack.c.h.b16 %v463
    %v778 = vunpack.c.l.b16 %v464
    %v779 = vunpack.c.h.b16 %v464
    %v780 = vunpack.c.l.b16 %v465
    %v781 = vunpack.c.h.b16 %v465
    %v782 = vunpack.c.l.b16 %v466
    %v783 = vunpack.c.h.b16 %v466
    %v784 = vunpack.c.l.b16 %v467
    %v785 = vunpack.c.h.b16 %v467
    %v786 = vunpack.c.l.b16 %v468
    %v787 = vunpack.c.h.b16 %v468
    %v788 = vunpack.c.l.b16 %v469
    %v789 = vunpack.c.h.b16 %v469
    %v790 = vunpack.c.l.b16 %v470
    %v791 = vunpack.c.h.b16 %v470
    %v792 = vunpack.c.l.b16 %v471
    %v793 = vunpack.c.h.b16 %v471
    %v794 = vunpack.c.l.b16 %v472
    %v795 = vunpack.c.h.b16 %v472
    %v796 = vunpack.c.l.b16 %v473
    %v797 = vunpack.c.h.b16 %v473
    %v798 = vunpack.c.l.b16 %v474
    %v799 = vunpack.c.h.b16 %v474
    %v800 = vunpack.c.l.b16 %v475
    %v801 = vunpack.c.h.b16 %v475
    %v802 = vunpack.c.l.b16 %v476
    %v803 = vunpack.c.h.b16 %v476
    %v804 = vunpack.c.l.b16 %v477
    %v805 = vunpack.c.h.b16 %v477
    %v806 = vunpack.c.l.b16 %v478
    %v807 = vunpack.c.h.b16 %v478
    %v808 = vunpack.c.l.b16 %v479
    %v809 = vunpack.c.h.b16 %v479
    %v810 = vunpack.c.l.b16 %v480
    %v811 = vunpack.c.h.b16 %v480
    %v812 = vunpack.c.l.b16 %v481
    %v813 = vunpack.c.h.b16 %v481
    %v814 = vunpack.c.l.b16 %v482
    %v815 = vunpack.c.h.b16 %v482
    %v816 = vunpack.c.l.b16 %v483
    %v817 = vunpack.c.h.b16 %v483
    %v818 = vunpack.c.l.b16 %v484
    %v819 = vunpack.c.h.b16 %v484
    %v820 = vunpack.c.l.b16 %v485
    %v821 = vunpack.c.h.b16 %v485
    %v822 = vunpack.c.l.b16 %v486
    %v823 = vunpack.c.h.b16 %v486
    %v824 = vunpack.c.l.b16 %v487
    %v825 = vunpack.c.h.b16 %v487
    %v826 = vunpack.c.l.b16 %v488
    %v827 = vunpack.c.h.b16 %v488
    %v828 = vunpack.c.l.b16 %v489
    %v829 = vunpack.c.h.b16 %v489
    %v830 = vunpack.c.l.b16 %v490
    %v831 = vunpack.c.h.b16 %v490
    %v832 = vunpack.c.l.b16 %v491
    %v833 = vunpack.c.h.b16 %v491
    %v834 = vunpack.c.l.b16 %v492
    %v835 = vunpack.c.h.b16 %v492
    %v836 = vunpack.c.l.b16 %v493
    %v837 = vunpack.c.h.b16 %v493
    %v838 = vunpack.c.l.b16 %v494
    %v839 = vunpack.c.h.b16 %v494
    %v840 = vunpack.c.l.b16 %v495
    %v841 = vunpack.c.h.b16 %v495
    %v842 = vunpack.c.l.b16 %v496
    %v843 = vunpack.c.h.b16 %v496
    %v844 = vunpack.c.l.b16 %v497
    %v845 = vunpack.c.h.b16 %v497
    %v846 = vunpack.c.l.b16 %v498
    %v847 = vunpack.c.h.b16 %v498
    %v848 = vunpack.c.l.b16 %v499
    %v849 = vunpack.c.h.b16 %v499
    %v850 = vunpack.c.l.b16 %v500
    %v851 = vunpack.c.h.b16 %v500
    %v852 = vunpack.c.l.b16 %v501
    %v853 = vunpack.c.h.b16 %v501
    %v854 = vunpack.c.l.b16 %v502
    %v855 = vunpack.c.h.b16 %v502
    %v856 = vunpack.c.l.b16 %v503
    %v857 = vunpack.c.h.b16 %v503
    %v858 = vunpack.c.l.b16 %v504
    %v859 = vunpack.c.h.b16 %v504
    %v860 = vunpack.c.l.b16 %v505
    %v861 = vunpack.c.h.b16 %v505
    %v862 = vunpack.c.l.b16 %v506
    %v863 = vunpack.c.h.b16 %v506
    %v864 = vunpack.c.l.b16 %v507
    %v865 = vunpack.c.h.b16 %v507
    %v866 = vunpack.c.l.b16 %v508
    %v867 = vunpack.c.h.b16 %v508
    %v868 = vunpack.c.l.b16 %v509
    %v869 = vunpack.c.h.b16 %v509
    %v870 = vunpack.c.l.b16 %v510
    %v871 = vunpack.c.h.b16 %v510
    %v872 = vunpack.c.l.b16 %v511
    %v873 = vunpack.c.h.b16 %v511
    %v874 = vunpack.c.l.b16 %v512
    %v875 = vunpack.c.h.b16 %v512
    %v876 = vunpack.c.l.b16 %v513
    %v877 = vunpack.c.h.b16 %v513
    %v878 = vunpack.c.l.b16 %v514
    %v879 = vunpack.c.h.b16 %v514
    %v880 = vunpack.c.l.b16 %v515
    %v881 = vunpack.c.h.b16 %v515
    %v882 = vunpack.c.l.b16 %v516
    %v883 = vunpack.c.h.b16 %v516
    %v884 = vunpack.c.l.b16 %v517
    %v885 = vunpack.c.h.b16 %v517
    %v886 = vunpack.c.l.b16 %v518
    %v887 = vunpack.c.h.b16 %v518
    %v888 = vunpack.c.l.b16 %v519
    %v889 = vunpack.c.h.b16 %v519
    %v890 = vunpack.c.l.b16 %v520
    %v891 = vunpack.c.h.b16 %v520
    %v892 = vunpack.c.l.b16 %v521
    %v893 = vunpack.c.h.b16 %v521
    %v894 = vunpack.c.l.b16 %v522
    %v895 = vunpack.c.h.b16 %v522
    %v896 = vunpack.c.l.b16 %v523
    %v897 = vunpack.c.h.b16 %v523
    %v898 = vunpack.c.l.b16 %v524
    %v899 = vunpack.c.h.b16 %v524
    %v900 = vunpack.c.l.b16 %v525
    %v901 = vunpack.c.h.b16 %v525
    %v902 = vunpack.c.l.b16 %v526
    %v903 = vunpack.c.h.b16 %v526
    %v904 = vunpack.c.l.b16 %v527
    %v905 = vunpack.c.h.b16 %v527
    %v906 = vunpack.c.l.b16 %v528
    %v907 = vunpack.c.h.b16 %v528
    %v908 = vunpack.c.l.b16 %v529
    %v909 = vunpack.c.h.b16 %v529
    %v910 = vunpack.c.l.b16 %v530
    %v911 = vunpack.c.h.b16 %v530
    %v912 = vunpack.c.l.b16 %v531
    %v913 = vunpack.c.h.b16 %v531
    %v914 = vunpack.c.l.b16 %v532
    %v915 = vunpack.c.h.b16 %v532
    %v916 = vunpack.c.l.b16 %v533
    %v917 = vunpack.c.h.b16 %v533
    %v918 = vpack.c.b16 %v670, %v662
    %v919 = vpack.c.b16 %v671, %v663
    %v920 = vpack.c.b16 %v672, %v664
    %v921 = vpack.c.b16 %v673, %v665
    %v922 = vpack.c.b16 %v674, %v666
    %v923 = vpack.c.b16 %v675, %v667
    %v924 = vpack.c.b16 %v676, %v668
    %v925 = vpack.c.b16 %v677, %v669
    %v926 = vpack.c.b16 %v686, %v678
    %v927 = vpack.c.b16 %v687, %v679
    %v928 = vpack.c.b16 %v688, %v680
    %v929 = vpack.c.b16 %v689, %v681
    %v930 = vpack.c.b16 %v690, %v682
    %v931 = vpack.c.b16 %v691, %v683
    %v932 = vpack.c.b16 %v692, %v684
    %v933 = vpack.c.b16 %v693, %v685
    %v934 = vpack.c.b16 %v702, %v694
    %v935 = vpack.c.b16 %v703, %v695
    %v936 = vpack.c.b16 %v704, %v696
    %v937 = vpack.c.b16 %v705, %v697
    %v938 = vpack.c.b16 %v706, %v698
    %v939 = vpack.c.b16 %v707, %v699
    %v940 = vpack.c.b16 %v708, %v700
    %v941 = vpack.c.b16 %v709, %v701
    %v942 = vpack.c.b16 %v718, %v710
    %v943 = vpack.c.b16 %v719, %v711
    %v944 = vpack.c.b16 %v720, %v712
    %v945 = vpack.c.b16 %v721, %v713
    %v946 = vpack.c.b16 %v722, %v714
    %v947 = vpack.c.b16 %v723, %v715
    %v948 = vpack.c.b16 %v724, %v716
    %v949 = vpack.c.b16 %v725, %v717
    %v950 = vpack.c.b16 %v734, %v726
    %v951 = vpack.c.b16 %v735, %v727
    %v952 = vpack.c.b16 %v736, %v728
    %v953 = vpack.c.b16 %v737, %v729
    %v954 = vpack.c.b16 %v738, %v730
    %v955 = vpack.c.b16 %v739, %v731
    %v956 = vpack.c.b16 %v740, %v732
    %v957 = vpack.c.b16 %v741, %v733
    %v958 = vpack.c.b16 %v750, %v742
    %v959 = vpack.c.b16 %v751, %v743
    %v960 = vpack.c.b16 %v752, %v744
    %v961 = vpack.c.b16 %v753, %v745
    %v962 = vpack.c.b16 %v754, %v746
    %v963 = vpack.c.b16 %v755, %v747
    %v964 = vpack.c.b16 %v756, %v748
    %v965 = vpack.c.b16 %v757, %v749
    %v966 = vpack.c.b16 %v766, %v758
    %v967 = vpack.c.b16 %v767, %v759
    %v968 = vpack.c.b16 %v768, %v760
    %v969 = vpack.c.b16 %v769, %v761
    %v970 = vpack.c.b16 %v770, %v762
    %v971 = vpack.c.b16 %v771, %v763
    %v972 = vpack.c.b16 %v772, %v764
    %v973 = vpack.c.b16 %v773, %v765
    %v974 = vpack.c.b16 %v782, %v774
    %v975 = vpack.c.b16 %v783, %v775
    %v976 = vpack.c.b16 %v784, %v776
    %v977 = vpack.c.b16 %v785, %v777
    %v978 = vpack.c.b16 %v786, %v778
    %v979 = vpack.c.b16 %v787, %v779
    %v980 = vpack.c.b16 %v788, %v780
    %v981 = vpack.c.b16 %v789, %v781
    %v982 = vpack.c.b16 %v798, %v790
    %v983 = vpack.c.b16 %v799, %v791
    %v984 = vpack.c.b16 %v800, %v792
    %v985 = vpack.c.b16 %v801, %v793
    %v986 = vpack.c.b16 %v802, %v794
    %v987 = vpack.c.b16 %v803, %v795
    %v988 = vpack.c.b16 %v804, %v796
    %v989 = vpack.c.b16 %v805, %v797
    %v990 = vpack.c.b16 %v814, %v806
    %v991 = vpack.c.b16 %v815, %v807
    %v992 = vpack.c.b16 %v816, %v808
    %v993 = vpack.c.b16 %v817, %v809
    %v994 = vpack.c.b16 %v818, %v810
    %v995 = vpack.c.b16 %v819, %v811
    %v996 = vpack.c.b16 %v820, %v812
    %v997 = vpack.c.b16 %v821, %v813
    %v998 = vpack.c.b16 %v830, %v822
    %v999 = vpack.c.b16 %v831, %v823
    %v1000 = vpack.c.b16 %v832, %v824
    %v1001 = vpack.c.b16 %v833, %v825
    %v1002 = vpack.c.b16 %v834, %v826
    %v1003 = vpack.c.b16 %v835, %v827
    %v1004 = vpack.c.b16 %v836, %v828
    %v1005 = vpack.c.b16 %v837, %v829
    %v1006 = vpack.c.b16 %v846, %v838
    %v1007 = vpack.c.b16 %v847, %v839
    %v1008 = vpack.c.b16 %v848, %v840
    %v1009 = vpack.c.b16 %v849, %v841
    %v1010 = vpack.c.b16 %v850, %v842
    %v1011 = vpack.c.b16 %v851, %v843
    %v1012 = vpack.c.b16 %v852, %v844
    %v1013 = vpack.c.b16 %v853, %v845
    %v1014 = vpack.c.b16 %v862, %v854
    %v1015 = vpack.c.b16 %v863, %v855
    %v1016 = vpack.c.b16 %v864, %v856
    %v1017 = vpack.c.b16 %v865, %v857
    %v1018 = vpack.c.b16 %v866, %v858
    %v1019 = vpack.c.b16 %v867, %v859
    %v1020 = vpack.c.b16 %v868, %v860
    %v1021 = vpack.c.b16 %v869, %v861
    %v1022 = vpack.c.b16 %v878, %v870
    %v1023 = vpack.c.b16 %v879, %v871
    %v1024 = vpack.c.b16 %v880, %v872
    %v1025 = vpack.c.b16 %v881, %v873
    %v1026 = vpack.c.b16 %v882, %v874
    %v1027 = vpack.c.b16 %v883, %v875
    %v1028 = vpack.c.b16 %v884, %v876
    %v1029 = vpack.c.b16 %v885, %v877
    %v1030 = vpack.c.b16 %v894, %v886
    %v1031 = vpack.c.b16 %v895, %v887
    %v1032 = vpack.c.b16 %v896, %v888
    %v1033 = vpack.c.b16 %v897, %v889
    %v1034 = vpack.c.b16 %v898, %v890
    %v1035 = vpack.c.b16 %v899, %v891
    %v1036 = vpack.c.b16 %v900, %v892
    %v1037 = vpack.c.b16 %v901, %v893
    %v1038 = vpack.c.b16 %v910, %v902
    %v1039 = vpack.c.b16 %v911, %v903
    %v1040 = vpack.c.b16 %v912, %v904
    %v1041 = vpack.c.b16 %v913, %v905
    %v1042 = vpack.c.b16 %v914, %v906
    %v1043 = vpack.c.b16 %v915, %v907
    %v1044 = vpack.c.b16 %v916, %v908
    %v1045 = vpack.c.b16 %v917, %v909
    %1174 = vmatprep.subr.bf16.mxu0 %v919
    %1175 = vmatpush1.bf16.msra.mxu0 %v918
    %1176 = vmatprep.subr.bf16.mxu0 %v927
    %1177 = vmatpush1.bf16.msra.mxu0 %v926
    %1178 = vmatprep.subr.bf16.mxu0 %v935
    %1179 = vmatpush1.bf16.msra.mxu0 %v934
    %1180 = vmatprep.subr.bf16.mxu0 %v943
    %1181 = vmatpush1.bf16.msra.mxu0 %v942
    %1182 = vmatprep.subr.bf16.mxu0 %v951
    %1183 = vmatpush1.bf16.msra.mxu0 %v950
    %1184 = vmatprep.subr.bf16.mxu0 %v959
    %1185 = vmatpush1.bf16.msra.mxu0 %v958
    %1186 = vmatprep.subr.bf16.mxu0 %v967
    %1187 = vmatpush1.bf16.msra.mxu0 %v966
    %1188 = vmatprep.subr.bf16.mxu0 %v975
    %1189 = vmatpush1.bf16.msra.mxu0 %v974
    %1190 = vmatprep.subr.bf16.mxu0 %v983
    %1191 = vmatpush1.bf16.msra.mxu0 %v982
    %1192 = vmatprep.subr.bf16.mxu0 %v991
    %1193 = vmatpush1.bf16.msra.mxu0 %v990
    %1194 = vmatprep.subr.bf16.mxu0 %v999
    %1195 = vmatpush1.bf16.msra.mxu0 %v998
    %1196 = vmatprep.subr.bf16.mxu0 %v1007
    %1197 = vmatpush1.bf16.msra.mxu0 %v1006
    %1198 = vmatprep.subr.bf16.mxu0 %v1015
    %1199 = vmatpush1.bf16.msra.mxu0 %v1014
    %1200 = vmatprep.subr.bf16.mxu0 %v1023
    %1201 = vmatpush1.bf16.msra.mxu0 %v1022
    %1202 = vmatprep.subr.bf16.mxu0 %v1031
    %1203 = vmatpush1.bf16.msra.mxu0 %v1030
    %1204 = vmatprep.subr.bf16.mxu0 %v1039
    %1205 = vmatpush1.bf16.msra.mxu0 %v1038
    %1206 = vmatprep.mubr.bf16.mxu0 %v405
    %1207 = vmatmul.mubr.bf16.gmra.mrb[0].mxu0 %v404
    %v1208 = vpop.f32.mrb[0].mxu0
    %v1209 = vadd.f32 0.0, %v1208
    %v1210 = vpop.f32.mrb[0].mxu0
    %v1211 = vadd.f32 0.0, %v1210
    %v1212 = vpop.f32.mrb[0].mxu0
    %v1213 = vpop.f32.mrb[0].mxu0
    %1214 = vdwg.mxu0
    %1215 = vmatprep.subr.bf16.mxu0 %v921
    %1216 = vmatpush1.bf16.msra.mxu0 %v920
    %1217 = vmatprep.subr.bf16.mxu0 %v929
    %1218 = vmatpush1.bf16.msra.mxu0 %v928
    %1219 = vmatprep.subr.bf16.mxu0 %v937
    %1220 = vmatpush1.bf16.msra.mxu0 %v936
    %1221 = vmatprep.subr.bf16.mxu0 %v945
    %1222 = vmatpush1.bf16.msra.mxu0 %v944
    %1223 = vmatprep.subr.bf16.mxu0 %v953
    %1224 = vmatpush1.bf16.msra.mxu0 %v952
    %1225 = vmatprep.subr.bf16.mxu0 %v961
    %1226 = vmatpush1.bf16.msra.mxu0 %v960
    %1227 = vmatprep.subr.bf16.mxu0 %v969
    %1228 = vmatpush1.bf16.msra.mxu0 %v968
    %1229 = vmatprep.subr.bf16.mxu0 %v977
    %1230 = vmatpush1.bf16.msra.mxu0 %v976
    %1231 = vmatprep.subr.bf16.mxu0 %v985
    %1232 = vmatpush1.bf16.msra.mxu0 %v984
    %1233 = vmatprep.subr.bf16.mxu0 %v993
    %1234 = vmatpush1.bf16.msra.mxu0 %v992
    %1235 = vmatprep.subr.bf16.mxu0 %v1001
    %1236 = vmatpush1.bf16.msra.mxu0 %v1000
    %1237 = vmatprep.subr.bf16.mxu0 %v1009
    %1238 = vmatpush1.bf16.msra.mxu0 %v1008
    %1239 = vmatprep.subr.bf16.mxu0 %v1017
    %1240 = vmatpush1.bf16.msra.mxu0 %v1016
    %1241 = vmatprep.subr.bf16.mxu0 %v1025
    %1242 = vmatpush1.bf16.msra.mxu0 %v1024
    %1243 = vmatprep.subr.bf16.mxu0 %v1033
    %1244 = vmatpush1.bf16.msra.mxu0 %v1032
    %1245 = vmatprep.subr.bf16.mxu0 %v1041
    %1246 = vmatpush1.bf16.msra.mxu0 %v1040
    %1247 = vmatprep.mubr.bf16.mxu0 %v405
    %1248 = vmatmul.mubr.bf16.gmra.mrb[0].mxu0 %v404
    %v1249 = vpop.f32.mrb[0].mxu0
    %v1250 = vadd.f32 0.0, %v1249
    %v1251 = vpop.f32.mrb[0].mxu0
    %v1252 = vadd.f32 0.0, %v1251
    %v1253 = vpop.f32.mrb[0].mxu0
    %v1254 = vpop.f32.mrb[0].mxu0
    %1255 = vdwg.mxu0
    %1256 = vmatprep.subr.bf16.mxu0 %v923
    %1257 = vmatpush1.bf16.msra.mxu0 %v922
    %1258 = vmatprep.subr.bf16.mxu0 %v931
    %1259 = vmatpush1.bf16.msra.mxu0 %v930
    %1260 = vmatprep.subr.bf16.mxu0 %v939
    %1261 = vmatpush1.bf16.msra.mxu0 %v938
    %1262 = vmatprep.subr.bf16.mxu0 %v947
    %1263 = vmatpush1.bf16.msra.mxu0 %v946
    %1264 = vmatprep.subr.bf16.mxu0 %v955
    %1265 = vmatpush1.bf16.msra.mxu0 %v954
    %1266 = vmatprep.subr.bf16.mxu0 %v963
    %1267 = vmatpush1.bf16.msra.mxu0 %v962
    %1268 = vmatprep.subr.bf16.mxu0 %v971
    %1269 = vmatpush1.bf16.msra.mxu0 %v970
    %1270 = vmatprep.subr.bf16.mxu0 %v979
    %1271 = vmatpush1.bf16.msra.mxu0 %v978
    %1272 = vmatprep.subr.bf16.mxu0 %v987
    %1273 = vmatpush1.bf16.msra.mxu0 %v986
    %1274 = vmatprep.subr.bf16.mxu0 %v995
    %1275 = vmatpush1.bf16.msra.mxu0 %v994
    %1276 = vmatprep.subr.bf16.mxu0 %v1003
    %1277 = vmatpush1.bf16.msra.mxu0 %v1002
    %1278 = vmatprep.subr.bf16.mxu0 %v1011
    %1279 = vmatpush1.bf16.msra.mxu0 %v1010
    %1280 = vmatprep.subr.bf16.mxu0 %v1019
    %1281 = vmatpush1.bf16.msra.mxu0 %v1018
    %1282 = vmatprep.subr.bf16.mxu0 %v1027
    %1283 = vmatpush1.bf16.msra.mxu0 %v1026
    %1284 = vmatprep.subr.bf16.mxu0 %v1035
    %1285 = vmatpush1.bf16.msra.mxu0 %v1034
    %1286 = vmatprep.subr.bf16.mxu0 %v1043
    %1287 = vmatpush1.bf16.msra.mxu0 %v1042
    %1288 = vmatprep.mubr.bf16.mxu0 %v405
    %1289 = vmatmul.mubr.bf16.gmra.mrb[0].mxu0 %v404
    %v1290 = vpop.f32.mrb[0].mxu0
    %v1291 = vadd.f32 0.0, %v1290
    %v1292 = vpop.f32.mrb[0].mxu0
    %v1293 = vadd.f32 0.0, %v1292
    %v1294 = vpop.f32.mrb[0].mxu0
    %v1295 = vpop.f32.mrb[0].mxu0
    %1296 = vdwg.mxu0
    %1297 = vmatprep.subr.bf16.mxu0 %v925
    %1298 = vmatpush1.bf16.msra.mxu0 %v924
    %1299 = vmatprep.subr.bf16.mxu0 %v933
    %1300 = vmatpush1.bf16.msra.mxu0 %v932
    %1301 = vmatprep.subr.bf16.mxu0 %v941
    %1302 = vmatpush1.bf16.msra.mxu0 %v940
    %1303 = vmatprep.subr.bf16.mxu0 %v949
    %1304 = vmatpush1.bf16.msra.mxu0 %v948
    %1305 = vmatprep.subr.bf16.mxu0 %v957
    %1306 = vmatpush1.bf16.msra.mxu0 %v956
    %1307 = vmatprep.subr.bf16.mxu0 %v965
    %1308 = vmatpush1.bf16.msra.mxu0 %v964
    %1309 = vmatprep.subr.bf16.mxu0 %v973
    %1310 = vmatpush1.bf16.msra.mxu0 %v972
    %1311 = vmatprep.subr.bf16.mxu0 %v981
    %1312 = vmatpush1.bf16.msra.mxu0 %v980
    %1313 = vmatprep.subr.bf16.mxu0 %v989
    %1314 = vmatpush1.bf16.msra.mxu0 %v988
    %1315 = vmatprep.subr.bf16.mxu0 %v997
    %1316 = vmatpush1.bf16.msra.mxu0 %v996
    %1317 = vmatprep.subr.bf16.mxu0 %v1005
    %1318 = vmatpush1.bf16.msra.mxu0 %v1004
    %1319 = vmatprep.subr.bf16.mxu0 %v1013
    %1320 = vmatpush1.bf16.msra.mxu0 %v1012
    %1321 = vmatprep.subr.bf16.mxu0 %v1021
    %1322 = vmatpush1.bf16.msra.mxu0 %v1020
    %1323 = vmatprep.subr.bf16.mxu0 %v1029
    %1324 = vmatpush1.bf16.msra.mxu0 %v1028
    %1325 = vmatprep.subr.bf16.mxu0 %v1037
    %1326 = vmatpush1.bf16.msra.mxu0 %v1036
    %1327 = vmatprep.subr.bf16.mxu0 %v1045
    %1328 = vmatpush1.bf16.msra.mxu0 %v1044
    %1329 = vmatprep.mubr.bf16.mxu0 %v405
    %1330 = vmatmul.mubr.bf16.gmra.mrb[0].mxu0 %v404
    %v1331 = vpop.f32.mrb[0].mxu0
    %v1332 = vadd.f32 0.0, %v1331
    %v1333 = vpop.f32.mrb[0].mxu0
    %v1334 = vadd.f32 0.0, %v1333
    %v1335 = vpop.f32.mrb[0].mxu0
    %v1336 = vpop.f32.mrb[0].mxu0
    %1337 = vdwg.mxu0
    %v1338 = vadd.f32 %v176, %v1209
    %v1339 = vadd.f32 %v178, %v1211
    %v1340 = vadd.f32 %v247, %v1250
    %v1341 = vadd.f32 %v249, %v1252
    %v1342 = vadd.f32 %v318, %v1291
    %v1343 = vadd.f32 %v320, %v1293
    %v1344 = vadd.f32 %v389, %v1332
    %v1345 = vadd.f32 %v391, %v1334
    %v1346 = vxor.u32 %v1338, 2147483648
    %v1347 = vxor.u32 %v1339, 2147483648
    %v1348 = vmul.f32 %v1346, 1.442695
    %v1349 = vpow.pop %v1348
    %v1350 = vmul.f32 %v1347, 1.442695
    %v1351 = vpow.pop %v1350
    %v1352 = vadd.f32 %v1349, 1.0
    %v1353 = vadd.f32 %v1351, 1.0
    %v1354 = vrcp.pop %v1352
    %v1355 = vmul.f32 1.0, %v1354
    %v1356 = vrcp.pop %v1353
    %v1357 = vmul.f32 1.0, %v1356
    %v1358 = vxor.u32 %v1340, 2147483648
    %v1359 = vxor.u32 %v1341, 2147483648
    %v1360 = vmul.f32 %v1358, 1.442695
    %v1361 = vpow.pop %v1360
    %v1362 = vmul.f32 %v1359, 1.442695
    %v1363 = vpow.pop %v1362
    %v1364 = vadd.f32 %v1361, 1.0
    %v1365 = vadd.f32 %v1363, 1.0
    %v1366 = vrcp.pop %v1364
    %v1367 = vmul.f32 1.0, %v1366
    %v1368 = vrcp.pop %v1365
    %v1369 = vmul.f32 1.0, %v1368
    %v1370 = vtanh.pop %v1342
    %v1371 = vtanh.pop %v1343
    %v1372 = vxor.u32 %v1344, 2147483648
    %v1373 = vxor.u32 %v1345, 2147483648
    %v1374 = vmul.f32 %v1372, 1.442695
    %v1375 = vpow.pop %v1374
    %v1376 = vmul.f32 %v1373, 1.442695
    %v1377 = vpow.pop %v1376
    %v1378 = vadd.f32 %v1375, 1.0
    %v1379 = vadd.f32 %v1377, 1.0
    %v1380 = vrcp.pop %v1378
    %v1381 = vmul.f32 1.0, %v1380
    %v1382 = vrcp.pop %v1379
    %v1383 = vmul.f32 1.0, %v1382
    %v1384 = vld [vmem:[#allocation3] sm:$0xf]
    %v1387 = vunpack.c.l.s4 1983009808
    %v1388 = vunpack.c.0.s8 %v1387
    %v1389 = vlaneseq
    %v1390 = vshrl.u32 %v1389, 7
    %v1391 = vsub.s32 %v1388, %v1390
    %v1392 = vrot.slane %v1384, %v1391
    %v1393 = vcombine.high %v1392, %v1392
    %v1396 = vmul.f32 %v1367, %v1392
    %v1397 = vmul.f32 %v1369, %v1393
    %v1398 = vmul.f32 %v1355, %v1370
    %v1399 = vmul.f32 %v1357, %v1371
    %v1400 = vadd.f32 %v1396, %v1398
    %v1401 = vadd.f32 %v1397, %v1399
    %v1402 = vtanh.pop %v1400
    %v1403 = vtanh.pop %v1401
    %v1404 = vmul.f32 %v1381, %v1402
    %v1405 = vmul.f32 %v1383, %v1403
    %v1408 = vcombine.low %v1400, %v1401
    %v1410 = vunpack.c.l.s4 1983009808
    %v1411 = vunpack.c.0.s8 %v1410
    %v1412 = vlaneseq
    %v1413 = vshrl.u32 %v1412, 7
    %v1414 = vsub.s32 %v1411, %v1413
    %v1415 = vrot.slane %v1408, %v1414
    %1417 = vst [vmem:[#allocation3] sm:$0xf] %v1415
    %v1420 = vcombine.low %v1404, %v1405
    %v1422 = vunpack.c.l.s4 1983009808
    %v1423 = vunpack.c.0.s8 %v1422
    %v1424 = vlaneseq
    %v1425 = vshrl.u32 %v1424, 7
    %v1426 = vsub.s32 %v1423, %v1425
    %v1427 = vrot.slane %v1420, %v1426
    %1429 = vst [vmem:[#allocation2] sm:$0xf] %v1427
    %v1430 = vld [vmem:[#allocation6] sm:$0xff]
    %v1431 = vld [vmem:[#allocation6 + $0x8] sm:$0xff]
    %v1432 = vld [vmem:[#allocation6 + $0x10] sm:$0xff]
    %v1433 = vld [vmem:[#allocation6 + $0x18] sm:$0xff]
    %v1434 = vld [vmem:[#allocation6 + $0x20] sm:$0xff]
    %v1435 = vld [vmem:[#allocation6 + $0x28] sm:$0xff]
    %v1436 = vld [vmem:[#allocation6 + $0x30] sm:$0xff]
    %v1437 = vld [vmem:[#allocation6 + $0x38] sm:$0xff]
    %v1438 = vld [vmem:[#allocation6 + $0x40] sm:$0xff]
    %v1439 = vld [vmem:[#allocation6 + $0x48] sm:$0xff]
    %v1440 = vld [vmem:[#allocation6 + $0x50] sm:$0xff]
    %v1441 = vld [vmem:[#allocation6 + $0x58] sm:$0xff]
    %v1442 = vld [vmem:[#allocation6 + $0x60] sm:$0xff]
    %v1443 = vld [vmem:[#allocation6 + $0x68] sm:$0xff]
    %v1444 = vld [vmem:[#allocation6 + $0x70] sm:$0xff]
    %v1445 = vld [vmem:[#allocation6 + $0x78] sm:$0xff]
    %v1446 = vld [vmem:[#allocation6 + $0x80] sm:$0xff]
    %v1447 = vld [vmem:[#allocation6 + $0x88] sm:$0xff]
    %v1448 = vld [vmem:[#allocation6 + $0x90] sm:$0xff]
    %v1449 = vld [vmem:[#allocation6 + $0x98] sm:$0xff]
    %v1450 = vld [vmem:[#allocation6 + $0xa0] sm:$0xff]
    %v1451 = vld [vmem:[#allocation6 + $0xa8] sm:$0xff]
    %v1452 = vld [vmem:[#allocation6 + $0xb0] sm:$0xff]
    %v1453 = vld [vmem:[#allocation6 + $0xb8] sm:$0xff]
    %v1454 = vld [vmem:[#allocation6 + $0xc0] sm:$0xff]
    %v1455 = vld [vmem:[#allocation6 + $0xc8] sm:$0xff]
    %v1456 = vld [vmem:[#allocation6 + $0xd0] sm:$0xff]
    %v1457 = vld [vmem:[#allocation6 + $0xd8] sm:$0xff]
    %v1458 = vld [vmem:[#allocation6 + $0xe0] sm:$0xff]
    %v1459 = vld [vmem:[#allocation6 + $0xe8] sm:$0xff]
    %v1460 = vld [vmem:[#allocation6 + $0xf0] sm:$0xff]
    %v1461 = vld [vmem:[#allocation6 + $0xf8] sm:$0xff]
    %v1462 = vld [vmem:[%s5] sm:$0x1]
    %v1464 = vlaneseq
    %v1465 = vshrl.u32 %v1464, 7
    %v1466 = vsub.s32 0, %v1465
    %v1467 = vrot.slane %v1462, %v1466
    %1469 = vmatprep.subr.mxu0 0.0
    %1470 = vmatpush1.msra.mxu0 %v1430
    %1471 = vmatprep.subr.mxu0 0.0
    %1472 = vmatpush1.msra.mxu0 %v1431
    %1473 = vmatprep.subr.mxu0 0.0
    %1474 = vmatpush1.msra.mxu0 %v1432
    %1475 = vmatprep.subr.mxu0 0.0
    %1476 = vmatpush1.msra.mxu0 %v1433
    %1477 = vmatprep.subr.mxu0 0.0
    %1478 = vmatpush1.msra.mxu0 %v1434
    %1479 = vmatprep.subr.mxu0 0.0
    %1480 = vmatpush1.msra.mxu0 %v1435
    %1481 = vmatprep.subr.mxu0 0.0
    %1482 = vmatpush1.msra.mxu0 %v1436
    %1483 = vmatprep.subr.mxu0 0.0
    %1484 = vmatpush1.msra.mxu0 %v1437
    %1485 = vmatprep.subr.mxu0 0.0
    %1486 = vmatpush1.msra.mxu0 %v1438
    %1487 = vmatprep.subr.mxu0 0.0
    %1488 = vmatpush1.msra.mxu0 %v1439
    %1489 = vmatprep.subr.mxu0 0.0
    %1490 = vmatpush1.msra.mxu0 %v1440
    %1491 = vmatprep.subr.mxu0 0.0
    %1492 = vmatpush1.msra.mxu0 %v1441
    %1493 = vmatprep.subr.mxu0 0.0
    %1494 = vmatpush1.msra.mxu0 %v1442
    %1495 = vmatprep.subr.mxu0 0.0
    %1496 = vmatpush1.msra.mxu0 %v1443
    %1497 = vmatprep.subr.mxu0 0.0
    %1498 = vmatpush1.msra.mxu0 %v1444
    %1499 = vmatprep.subr.mxu0 0.0
    %1500 = vmatpush1.msra.mxu0 %v1445
    %1501 = vmatprep.subr.mxu0 0.0
    %1502 = vmatpush1.msra.mxu0 %v1446
    %1503 = vmatprep.subr.mxu0 0.0
    %1504 = vmatpush1.msra.mxu0 %v1447
    %1505 = vmatprep.subr.mxu0 0.0
    %1506 = vmatpush1.msra.mxu0 %v1448
    %1507 = vmatprep.subr.mxu0 0.0
    %1508 = vmatpush1.msra.mxu0 %v1449
    %1509 = vmatprep.subr.mxu0 0.0
    %1510 = vmatpush1.msra.mxu0 %v1450
    %1511 = vmatprep.subr.mxu0 0.0
    %1512 = vmatpush1.msra.mxu0 %v1451
    %1513 = vmatprep.subr.mxu0 0.0
    %1514 = vmatpush1.msra.mxu0 %v1452
    %1515 = vmatprep.subr.mxu0 0.0
    %1516 = vmatpush1.msra.mxu0 %v1453
    %1517 = vmatprep.subr.mxu0 0.0
    %1518 = vmatpush1.msra.mxu0 %v1454
    %1519 = vmatprep.subr.mxu0 0.0
    %1520 = vmatpush1.msra.mxu0 %v1455
    %1521 = vmatprep.subr.mxu0 0.0
    %1522 = vmatpush1.msra.mxu0 %v1456
    %1523 = vmatprep.subr.mxu0 0.0
    %1524 = vmatpush1.msra.mxu0 %v1457
    %1525 = vmatprep.subr.mxu0 0.0
    %1526 = vmatpush1.msra.mxu0 %v1458
    %1527 = vmatprep.subr.mxu0 0.0
    %1528 = vmatpush1.msra.mxu0 %v1459
    %1529 = vmatprep.subr.mxu0 0.0
    %1530 = vmatpush1.msra.mxu0 %v1460
    %1531 = vmatprep.subr.mxu0 0.0
    %1532 = vmatpush1.msra.mxu0 %v1461
    %1533 = vmatprep.mubr.f32.mxu0 %v1405
    %1534 = vmatmul.mubr.f32.gmra.mrb[0].mxu0 %v1404
    %v1535 = vpop.f32.mrb[0].mxu0
    %v1536 = vadd.f32 %v1467, %v1535
    %v1537 = vpop.f32.mrb[0].mxu0
    %1538 = vdwg.mxu0
    %1539 = vst [vmem:[%s6] sm:$0x3] %v1536
    %s1540 = scalar_lea.vmem %s0, 2
    %v1541 = vld [vmem:[%s1540] sm:$0x3]
    %v1542 = vld [vmem:[#allocation2] sm:$0xf]
    %v1543 = vld [vmem:[%s1] sm:$0xff]
    %v1544 = vld [vmem:[%s1 + $0x8] sm:$0xff]
    %v1545 = vld [vmem:[%s1 + $0x10] sm:$0xff]
    %v1546 = vld [vmem:[%s1 + $0x18] sm:$0xff]
    %v1547 = vld [vmem:[%s1 + $0x20] sm:$0xff]
    %v1548 = vld [vmem:[%s1 + $0x28] sm:$0xff]
    %v1549 = vld [vmem:[%s1 + $0x30] sm:$0xff]
    %v1550 = vld [vmem:[%s1 + $0x38] sm:$0xff]
    %v1551 = vld [vmem:[%s3] sm:$0xff]
    %v1553 = vlaneseq
    %v1554 = vshrl.u32 %v1553, 7
    %v1555 = vsub.s32 0, %v1554
    %v1556 = vrot.slane %v1551, %v1555
    %v1557 = vlaneseq
    %v1558 = vshrl.u32 %v1557, 7
    %v1559 = vsub.s32 1, %v1558
    %v1560 = vrot.slane %v1551, %v1559
    %v1561 = vlaneseq
    %v1562 = vshrl.u32 %v1561, 7
    %v1563 = vsub.s32 2, %v1562
    %v1564 = vrot.slane %v1551, %v1563
    %v1565 = vlaneseq
    %v1566 = vshrl.u32 %v1565, 7
    %v1567 = vsub.s32 3, %v1566
    %v1568 = vrot.slane %v1551, %v1567
    %v1569 = vlaneseq
    %v1570 = vshrl.u32 %v1569, 7
    %v1571 = vsub.s32 4, %v1570
    %v1572 = vrot.slane %v1551, %v1571
    %v1573 = vlaneseq
    %v1574 = vshrl.u32 %v1573, 7
    %v1575 = vsub.s32 5, %v1574
    %v1576 = vrot.slane %v1551, %v1575
    %v1577 = vlaneseq
    %v1578 = vshrl.u32 %v1577, 7
    %v1579 = vsub.s32 6, %v1578
    %v1580 = vrot.slane %v1551, %v1579
    %v1581 = vlaneseq
    %v1582 = vshrl.u32 %v1581, 7
    %v1583 = vsub.s32 7, %v1582
    %v1584 = vrot.slane %v1551, %v1583
    %v1594 = vsel %vm105, %v1541, 0
    %1596 = vmatprep.subr.mxu0 %v1544
    %1597 = vmatpush1.msra.mxu0 %v1543
    %1598 = vmatprep.subr.mxu0 0.0
    %1599 = vmatpush1.msra.mxu0 0.0
    %1600 = vmatprep.subr.mxu0 0.0
    %1601 = vmatpush1.msra.mxu0 0.0
    %1602 = vmatprep.subr.mxu0 0.0
    %1603 = vmatpush1.msra.mxu0 0.0
    %1604 = vmatprep.subr.mxu0 0.0
    %1605 = vmatpush1.msra.mxu0 0.0
    %1606 = vmatprep.subr.mxu0 0.0
    %1607 = vmatpush1.msra.mxu0 0.0
    %1608 = vmatprep.subr.mxu0 0.0
    %1609 = vmatpush1.msra.mxu0 0.0
    %1610 = vmatprep.subr.mxu0 0.0
    %1611 = vmatpush1.msra.mxu0 0.0
    %1612 = vmatprep.subr.mxu0 0.0
    %1613 = vmatpush1.msra.mxu0 0.0
    %1614 = vmatprep.subr.mxu0 0.0
    %1615 = vmatpush1.msra.mxu0 0.0
    %1616 = vmatprep.subr.mxu0 0.0
    %1617 = vmatpush1.msra.mxu0 0.0
    %1618 = vmatprep.subr.mxu0 0.0
    %1619 = vmatpush1.msra.mxu0 0.0
    %1620 = vmatprep.subr.mxu0 0.0
    %1621 = vmatpush1.msra.mxu0 0.0
    %1622 = vmatprep.subr.mxu0 0.0
    %1623 = vmatpush1.msra.mxu0 0.0
    %1624 = vmatprep.subr.mxu0 0.0
    %1625 = vmatpush1.msra.mxu0 0.0
    %1626 = vmatprep.subr.mxu0 0.0
    %1627 = vmatpush1.msra.mxu0 0.0
    %1628 = vmatprep.subr.mxu0 0.0
    %1629 = vmatpush1.msra.mxu0 0.0
    %1630 = vmatprep.subr.mxu0 0.0
    %1631 = vmatpush1.msra.mxu0 0.0
    %1632 = vmatprep.subr.mxu0 0.0
    %1633 = vmatpush1.msra.mxu0 0.0
    %1634 = vmatprep.subr.mxu0 0.0
    %1635 = vmatpush1.msra.mxu0 0.0
    %1636 = vmatprep.subr.mxu0 0.0
    %1637 = vmatpush1.msra.mxu0 0.0
    %1638 = vmatprep.subr.mxu0 0.0
    %1639 = vmatpush1.msra.mxu0 0.0
    %1640 = vmatprep.subr.mxu0 0.0
    %1641 = vmatpush1.msra.mxu0 0.0
    %1642 = vmatprep.subr.mxu0 0.0
    %1643 = vmatpush1.msra.mxu0 0.0
    %1644 = vmatprep.subr.mxu0 0.0
    %1645 = vmatpush1.msra.mxu0 0.0
    %1646 = vmatprep.subr.mxu0 0.0
    %1647 = vmatpush1.msra.mxu0 0.0
    %1648 = vmatprep.subr.mxu0 0.0
    %1649 = vmatpush1.msra.mxu0 0.0
    %1650 = vmatprep.subr.mxu0 0.0
    %1651 = vmatpush1.msra.mxu0 0.0
    %1652 = vmatprep.subr.mxu0 0.0
    %1653 = vmatpush1.msra.mxu0 0.0
    %1654 = vmatprep.subr.mxu0 0.0
    %1655 = vmatpush1.msra.mxu0 0.0
    %1656 = vmatprep.subr.mxu0 0.0
    %1657 = vmatpush1.msra.mxu0 0.0
    %1658 = vmatprep.subr.mxu0 0.0
    %1659 = vmatpush1.msra.mxu0 0.0
    %1660 = vmatprep.mubr.f32.mxu0 0.0
    %1661 = vmatmul.mubr.f32.gmra.mrb[0].mxu0 %v1594
    %v1662 = vpop.f32.mrb[0].mxu0
    %v1663 = vadd.f32 %v1556, %v1662
    %v1664 = vpop.f32.mrb[0].mxu0
    %v1665 = vadd.f32 %v1560, %v1664
    %1666 = vdwg.mxu0
    %1667 = vmatprep.subr.mxu0 %v1546
    %1668 = vmatpush1.msra.mxu0 %v1545
    %1669 = vmatprep.subr.mxu0 0.0
    %1670 = vmatpush1.msra.mxu0 0.0
    %1671 = vmatprep.subr.mxu0 0.0
    %1672 = vmatpush1.msra.mxu0 0.0
    %1673 = vmatprep.subr.mxu0 0.0
    %1674 = vmatpush1.msra.mxu0 0.0
    %1675 = vmatprep.subr.mxu0 0.0
    %1676 = vmatpush1.msra.mxu0 0.0
    %1677 = vmatprep.subr.mxu0 0.0
    %1678 = vmatpush1.msra.mxu0 0.0
    %1679 = vmatprep.subr.mxu0 0.0
    %1680 = vmatpush1.msra.mxu0 0.0
    %1681 = vmatprep.subr.mxu0 0.0
    %1682 = vmatpush1.msra.mxu0 0.0
    %1683 = vmatprep.subr.mxu0 0.0
    %1684 = vmatpush1.msra.mxu0 0.0
    %1685 = vmatprep.subr.mxu0 0.0
    %1686 = vmatpush1.msra.mxu0 0.0
    %1687 = vmatprep.subr.mxu0 0.0
    %1688 = vmatpush1.msra.mxu0 0.0
    %1689 = vmatprep.subr.mxu0 0.0
    %1690 = vmatpush1.msra.mxu0 0.0
    %1691 = vmatprep.subr.mxu0 0.0
    %1692 = vmatpush1.msra.mxu0 0.0
    %1693 = vmatprep.subr.mxu0 0.0
    %1694 = vmatpush1.msra.mxu0 0.0
    %1695 = vmatprep.subr.mxu0 0.0
    %1696 = vmatpush1.msra.mxu0 0.0
    %1697 = vmatprep.subr.mxu0 0.0
    %1698 = vmatpush1.msra.mxu0 0.0
    %1699 = vmatprep.subr.mxu0 0.0
    %1700 = vmatpush1.msra.mxu0 0.0
    %1701 = vmatprep.subr.mxu0 0.0
    %1702 = vmatpush1.msra.mxu0 0.0
    %1703 = vmatprep.subr.mxu0 0.0
    %1704 = vmatpush1.msra.mxu0 0.0
    %1705 = vmatprep.subr.mxu0 0.0
    %1706 = vmatpush1.msra.mxu0 0.0
    %1707 = vmatprep.subr.mxu0 0.0
    %1708 = vmatpush1.msra.mxu0 0.0
    %1709 = vmatprep.subr.mxu0 0.0
    %1710 = vmatpush1.msra.mxu0 0.0
    %1711 = vmatprep.subr.mxu0 0.0
    %1712 = vmatpush1.msra.mxu0 0.0
    %1713 = vmatprep.subr.mxu0 0.0
    %1714 = vmatpush1.msra.mxu0 0.0
    %1715 = vmatprep.subr.mxu0 0.0
    %1716 = vmatpush1.msra.mxu0 0.0
    %1717 = vmatprep.subr.mxu0 0.0
    %1718 = vmatpush1.msra.mxu0 0.0
    %1719 = vmatprep.subr.mxu0 0.0
    %1720 = vmatpush1.msra.mxu0 0.0
    %1721 = vmatprep.subr.mxu0 0.0
    %1722 = vmatpush1.msra.mxu0 0.0
    %1723 = vmatprep.subr.mxu0 0.0
    %1724 = vmatpush1.msra.mxu0 0.0
    %1725 = vmatprep.subr.mxu0 0.0
    %1726 = vmatpush1.msra.mxu0 0.0
    %1727 = vmatprep.subr.mxu0 0.0
    %1728 = vmatpush1.msra.mxu0 0.0
    %1729 = vmatprep.subr.mxu0 0.0
    %1730 = vmatpush1.msra.mxu0 0.0
    %1731 = vmatprep.mubr.f32.mxu0 0.0
    %1732 = vmatmul.mubr.f32.gmra.mrb[0].mxu0 %v1594
    %v1733 = vpop.f32.mrb[0].mxu0
    %v1734 = vadd.f32 %v1564, %v1733
    %v1735 = vpop.f32.mrb[0].mxu0
    %v1736 = vadd.f32 %v1568, %v1735
    %1737 = vdwg.mxu0
    %1738 = vmatprep.subr.mxu0 %v1548
    %1739 = vmatpush1.msra.mxu0 %v1547
    %1740 = vmatprep.subr.mxu0 0.0
    %1741 = vmatpush1.msra.mxu0 0.0
    %1742 = vmatprep.subr.mxu0 0.0
    %1743 = vmatpush1.msra.mxu0 0.0
    %1744 = vmatprep.subr.mxu0 0.0
    %1745 = vmatpush1.msra.mxu0 0.0
    %1746 = vmatprep.subr.mxu0 0.0
    %1747 = vmatpush1.msra.mxu0 0.0
    %1748 = vmatprep.subr.mxu0 0.0
    %1749 = vmatpush1.msra.mxu0 0.0
    %1750 = vmatprep.subr.mxu0 0.0
    %1751 = vmatpush1.msra.mxu0 0.0
    %1752 = vmatprep.subr.mxu0 0.0
    %1753 = vmatpush1.msra.mxu0 0.0
    %1754 = vmatprep.subr.mxu0 0.0
    %1755 = vmatpush1.msra.mxu0 0.0
    %1756 = vmatprep.subr.mxu0 0.0
    %1757 = vmatpush1.msra.mxu0 0.0
    %1758 = vmatprep.subr.mxu0 0.0
    %1759 = vmatpush1.msra.mxu0 0.0
    %1760 = vmatprep.subr.mxu0 0.0
    %1761 = vmatpush1.msra.mxu0 0.0
    %1762 = vmatprep.subr.mxu0 0.0
    %1763 = vmatpush1.msra.mxu0 0.0
    %1764 = vmatprep.subr.mxu0 0.0
    %1765 = vmatpush1.msra.mxu0 0.0
    %1766 = vmatprep.subr.mxu0 0.0
    %1767 = vmatpush1.msra.mxu0 0.0
    %1768 = vmatprep.subr.mxu0 0.0
    %1769 = vmatpush1.msra.mxu0 0.0
    %1770 = vmatprep.subr.mxu0 0.0
    %1771 = vmatpush1.msra.mxu0 0.0
    %1772 = vmatprep.subr.mxu0 0.0
    %1773 = vmatpush1.msra.mxu0 0.0
    %1774 = vmatprep.subr.mxu0 0.0
    %1775 = vmatpush1.msra.mxu0 0.0
    %1776 = vmatprep.subr.mxu0 0.0
    %1777 = vmatpush1.msra.mxu0 0.0
    %1778 = vmatprep.subr.mxu0 0.0
    %1779 = vmatpush1.msra.mxu0 0.0
    %1780 = vmatprep.subr.mxu0 0.0
    %1781 = vmatpush1.msra.mxu0 0.0
    %1782 = vmatprep.subr.mxu0 0.0
    %1783 = vmatpush1.msra.mxu0 0.0
    %1784 = vmatprep.subr.mxu0 0.0
    %1785 = vmatpush1.msra.mxu0 0.0
    %1786 = vmatprep.subr.mxu0 0.0
    %1787 = vmatpush1.msra.mxu0 0.0
    %1788 = vmatprep.subr.mxu0 0.0
    %1789 = vmatpush1.msra.mxu0 0.0
    %1790 = vmatprep.subr.mxu0 0.0
    %1791 = vmatpush1.msra.mxu0 0.0
    %1792 = vmatprep.subr.mxu0 0.0
    %1793 = vmatpush1.msra.mxu0 0.0
    %1794 = vmatprep.subr.mxu0 0.0
    %1795 = vmatpush1.msra.mxu0 0.0
    %1796 = vmatprep.subr.mxu0 0.0
    %1797 = vmatpush1.msra.mxu0 0.0
    %1798 = vmatprep.subr.mxu0 0.0
    %1799 = vmatpush1.msra.mxu0 0.0
    %1800 = vmatprep.subr.mxu0 0.0
    %1801 = vmatpush1.msra.mxu0 0.0
    %1802 = vmatprep.mubr.f32.mxu0 0.0
    %1803 = vmatmul.mubr.f32.gmra.mrb[0].mxu0 %v1594
    %v1804 = vpop.f32.mrb[0].mxu0
    %v1805 = vadd.f32 %v1572, %v1804
    %v1806 = vpop.f32.mrb[0].mxu0
    %v1807 = vadd.f32 %v1576, %v1806
    %1808 = vdwg.mxu0
    %1809 = vmatprep.subr.mxu0 %v1550
    %1810 = vmatpush1.msra.mxu0 %v1549
    %1811 = vmatprep.subr.mxu0 0.0
    %1812 = vmatpush1.msra.mxu0 0.0
    %1813 = vmatprep.subr.mxu0 0.0
    %1814 = vmatpush1.msra.mxu0 0.0
    %1815 = vmatprep.subr.mxu0 0.0
    %1816 = vmatpush1.msra.mxu0 0.0
    %1817 = vmatprep.subr.mxu0 0.0
    %1818 = vmatpush1.msra.mxu0 0.0
    %1819 = vmatprep.subr.mxu0 0.0
    %1820 = vmatpush1.msra.mxu0 0.0
    %1821 = vmatprep.subr.mxu0 0.0
    %1822 = vmatpush1.msra.mxu0 0.0
    %1823 = vmatprep.subr.mxu0 0.0
    %1824 = vmatpush1.msra.mxu0 0.0
    %1825 = vmatprep.subr.mxu0 0.0
    %1826 = vmatpush1.msra.mxu0 0.0
    %1827 = vmatprep.subr.mxu0 0.0
    %1828 = vmatpush1.msra.mxu0 0.0
    %1829 = vmatprep.subr.mxu0 0.0
    %1830 = vmatpush1.msra.mxu0 0.0
    %1831 = vmatprep.subr.mxu0 0.0
    %1832 = vmatpush1.msra.mxu0 0.0
    %1833 = vmatprep.subr.mxu0 0.0
    %1834 = vmatpush1.msra.mxu0 0.0
    %1835 = vmatprep.subr.mxu0 0.0
    %1836 = vmatpush1.msra.mxu0 0.0
    %1837 = vmatprep.subr.mxu0 0.0
    %1838 = vmatpush1.msra.mxu0 0.0
    %1839 = vmatprep.subr.mxu0 0.0
    %1840 = vmatpush1.msra.mxu0 0.0
    %1841 = vmatprep.subr.mxu0 0.0
    %1842 = vmatpush1.msra.mxu0 0.0
    %1843 = vmatprep.subr.mxu0 0.0
    %1844 = vmatpush1.msra.mxu0 0.0
    %1845 = vmatprep.subr.mxu0 0.0
    %1846 = vmatpush1.msra.mxu0 0.0
    %1847 = vmatprep.subr.mxu0 0.0
    %1848 = vmatpush1.msra.mxu0 0.0
    %1849 = vmatprep.subr.mxu0 0.0
    %1850 = vmatpush1.msra.mxu0 0.0
    %1851 = vmatprep.subr.mxu0 0.0
    %1852 = vmatpush1.msra.mxu0 0.0
    %1853 = vmatprep.subr.mxu0 0.0
    %1854 = vmatpush1.msra.mxu0 0.0
    %1855 = vmatprep.subr.mxu0 0.0
    %1856 = vmatpush1.msra.mxu0 0.0
    %1857 = vmatprep.subr.mxu0 0.0
    %1858 = vmatpush1.msra.mxu0 0.0
    %1859 = vmatprep.subr.mxu0 0.0
    %1860 = vmatpush1.msra.mxu0 0.0
    %1861 = vmatprep.subr.mxu0 0.0
    %1862 = vmatpush1.msra.mxu0 0.0
    %1863 = vmatprep.subr.mxu0 0.0
    %1864 = vmatpush1.msra.mxu0 0.0
    %1865 = vmatprep.subr.mxu0 0.0
    %1866 = vmatpush1.msra.mxu0 0.0
    %1867 = vmatprep.subr.mxu0 0.0
    %1868 = vmatpush1.msra.mxu0 0.0
    %1869 = vmatprep.subr.mxu0 0.0
    %1870 = vmatpush1.msra.mxu0 0.0
    %1871 = vmatprep.subr.mxu0 0.0
    %1872 = vmatpush1.msra.mxu0 0.0
    %1873 = vmatprep.mubr.f32.mxu0 0.0
    %1874 = vmatmul.mubr.f32.gmra.mrb[0].mxu0 %v1594
    %v1875 = vpop.f32.mrb[0].mxu0
    %v1876 = vadd.f32 %v1580, %v1875
    %v1877 = vpop.f32.mrb[0].mxu0
    %v1878 = vadd.f32 %v1584, %v1877
    %1879 = vdwg.mxu0
    %v1882 = vunpack.c.l.s4 1983009808
    %v1883 = vunpack.c.0.s8 %v1882
    %v1884 = vlaneseq
    %v1885 = vshrl.u32 %v1884, 7
    %v1886 = vsub.s32 %v1883, %v1885
    %v1887 = vrot.slane %v1542, %v1886
    %v1888 = vcombine.high %v1887, %v1887
    %v1891 = vpack.c.bf16 %v1887, %v1887
    %v1892 = vpack.c.bf16 %v1888, %v1888
    %v1893 = vld [vmem:[#allocation4] sm:$0xff]
    %v1894 = vld [vmem:[#allocation4 + $0x8] sm:$0xff]
    %v1895 = vld [vmem:[#allocation4 + $0x10] sm:$0xff]
    %v1896 = vld [vmem:[#allocation4 + $0x18] sm:$0xff]
    %v1897 = vld [vmem:[#allocation4 + $0x20] sm:$0xff]
    %v1898 = vld [vmem:[#allocation4 + $0x28] sm:$0xff]
    %v1899 = vld [vmem:[#allocation4 + $0x30] sm:$0xff]
    %v1900 = vld [vmem:[#allocation4 + $0x38] sm:$0xff]
    %v1901 = vld [vmem:[#allocation4 + $0x40] sm:$0xff]
    %v1902 = vld [vmem:[#allocation4 + $0x48] sm:$0xff]
    %v1903 = vld [vmem:[#allocation4 + $0x50] sm:$0xff]
    %v1904 = vld [vmem:[#allocation4 + $0x58] sm:$0xff]
    %v1905 = vld [vmem:[#allocation4 + $0x60] sm:$0xff]
    %v1906 = vld [vmem:[#allocation4 + $0x68] sm:$0xff]
    %v1907 = vld [vmem:[#allocation4 + $0x70] sm:$0xff]
    %v1908 = vld [vmem:[#allocation4 + $0x78] sm:$0xff]
    %v1909 = vld [vmem:[#allocation4 + $0x80] sm:$0xff]
    %v1910 = vld [vmem:[#allocation4 + $0x88] sm:$0xff]
    %v1911 = vld [vmem:[#allocation4 + $0x90] sm:$0xff]
    %v1912 = vld [vmem:[#allocation4 + $0x98] sm:$0xff]
    %v1913 = vld [vmem:[#allocation4 + $0xa0] sm:$0xff]
    %v1914 = vld [vmem:[#allocation4 + $0xa8] sm:$0xff]
    %v1915 = vld [vmem:[#allocation4 + $0xb0] sm:$0xff]
    %v1916 = vld [vmem:[#allocation4 + $0xb8] sm:$0xff]
    %v1917 = vld [vmem:[#allocation4 + $0xc0] sm:$0xff]
    %v1918 = vld [vmem:[#allocation4 + $0xc8] sm:$0xff]
    %v1919 = vld [vmem:[#allocation4 + $0xd0] sm:$0xff]
    %v1920 = vld [vmem:[#allocation4 + $0xd8] sm:$0xff]
    %v1921 = vld [vmem:[#allocation4 + $0xe0] sm:$0xff]
    %v1922 = vld [vmem:[#allocation4 + $0xe8] sm:$0xff]
    %v1923 = vld [vmem:[#allocation4 + $0xf0] sm:$0xff]
    %v1924 = vld [vmem:[#allocation4 + $0xf8] sm:$0xff]
    %v1925 = vld [vmem:[#allocation4 + $0x100] sm:$0xff]
    %v1926 = vld [vmem:[#allocation4 + $0x108] sm:$0xff]
    %v1927 = vld [vmem:[#allocation4 + $0x110] sm:$0xff]
    %v1928 = vld [vmem:[#allocation4 + $0x118] sm:$0xff]
    %v1929 = vld [vmem:[#allocation4 + $0x120] sm:$0xff]
    %v1930 = vld [vmem:[#allocation4 + $0x128] sm:$0xff]
    %v1931 = vld [vmem:[#allocation4 + $0x130] sm:$0xff]
    %v1932 = vld [vmem:[#allocation4 + $0x138] sm:$0xff]
    %v1933 = vld [vmem:[#allocation4 + $0x140] sm:$0xff]
    %v1934 = vld [vmem:[#allocation4 + $0x148] sm:$0xff]
    %v1935 = vld [vmem:[#allocation4 + $0x150] sm:$0xff]
    %v1936 = vld [vmem:[#allocation4 + $0x158] sm:$0xff]
    %v1937 = vld [vmem:[#allocation4 + $0x160] sm:$0xff]
    %v1938 = vld [vmem:[#allocation4 + $0x168] sm:$0xff]
    %v1939 = vld [vmem:[#allocation4 + $0x170] sm:$0xff]
    %v1940 = vld [vmem:[#allocation4 + $0x178] sm:$0xff]
    %v1941 = vld [vmem:[#allocation4 + $0x180] sm:$0xff]
    %v1942 = vld [vmem:[#allocation4 + $0x188] sm:$0xff]
    %v1943 = vld [vmem:[#allocation4 + $0x190] sm:$0xff]
    %v1944 = vld [vmem:[#allocation4 + $0x198] sm:$0xff]
    %v1945 = vld [vmem:[#allocation4 + $0x1a0] sm:$0xff]
    %v1946 = vld [vmem:[#allocation4 + $0x1a8] sm:$0xff]
    %v1947 = vld [vmem:[#allocation4 + $0x1b0] sm:$0xff]
    %v1948 = vld [vmem:[#allocation4 + $0x1b8] sm:$0xff]
    %v1949 = vld [vmem:[#allocation4 + $0x1c0] sm:$0xff]
    %v1950 = vld [vmem:[#allocation4 + $0x1c8] sm:$0xff]
    %v1951 = vld [vmem:[#allocation4 + $0x1d0] sm:$0xff]
    %v1952 = vld [vmem:[#allocation4 + $0x1d8] sm:$0xff]
    %v1953 = vld [vmem:[#allocation4 + $0x1e0] sm:$0xff]
    %v1954 = vld [vmem:[#allocation4 + $0x1e8] sm:$0xff]
    %v1955 = vld [vmem:[#allocation4 + $0x1f0] sm:$0xff]
    %v1956 = vld [vmem:[#allocation4 + $0x1f8] sm:$0xff]
    %v1957 = vld [vmem:[#allocation4 + $0x200] sm:$0xff]
    %v1958 = vld [vmem:[#allocation4 + $0x208] sm:$0xff]
    %v1959 = vld [vmem:[#allocation4 + $0x210] sm:$0xff]
    %v1960 = vld [vmem:[#allocation4 + $0x218] sm:$0xff]
    %v1961 = vld [vmem:[#allocation4 + $0x220] sm:$0xff]
    %v1962 = vld [vmem:[#allocation4 + $0x228] sm:$0xff]
    %v1963 = vld [vmem:[#allocation4 + $0x230] sm:$0xff]
    %v1964 = vld [vmem:[#allocation4 + $0x238] sm:$0xff]
    %v1965 = vld [vmem:[#allocation4 + $0x240] sm:$0xff]
    %v1966 = vld [vmem:[#allocation4 + $0x248] sm:$0xff]
    %v1967 = vld [vmem:[#allocation4 + $0x250] sm:$0xff]
    %v1968 = vld [vmem:[#allocation4 + $0x258] sm:$0xff]
    %v1969 = vld [vmem:[#allocation4 + $0x260] sm:$0xff]
    %v1970 = vld [vmem:[#allocation4 + $0x268] sm:$0xff]
    %v1971 = vld [vmem:[#allocation4 + $0x270] sm:$0xff]
    %v1972 = vld [vmem:[#allocation4 + $0x278] sm:$0xff]
    %v1973 = vld [vmem:[#allocation4 + $0x280] sm:$0xff]
    %v1974 = vld [vmem:[#allocation4 + $0x288] sm:$0xff]
    %v1975 = vld [vmem:[#allocation4 + $0x290] sm:$0xff]
    %v1976 = vld [vmem:[#allocation4 + $0x298] sm:$0xff]
    %v1977 = vld [vmem:[#allocation4 + $0x2a0] sm:$0xff]
    %v1978 = vld [vmem:[#allocation4 + $0x2a8] sm:$0xff]
    %v1979 = vld [vmem:[#allocation4 + $0x2b0] sm:$0xff]
    %v1980 = vld [vmem:[#allocation4 + $0x2b8] sm:$0xff]
    %v1981 = vld [vmem:[#allocation4 + $0x2c0] sm:$0xff]
    %v1982 = vld [vmem:[#allocation4 + $0x2c8] sm:$0xff]
    %v1983 = vld [vmem:[#allocation4 + $0x2d0] sm:$0xff]
    %v1984 = vld [vmem:[#allocation4 + $0x2d8] sm:$0xff]
    %v1985 = vld [vmem:[#allocation4 + $0x2e0] sm:$0xff]
    %v1986 = vld [vmem:[#allocation4 + $0x2e8] sm:$0xff]
    %v1987 = vld [vmem:[#allocation4 + $0x2f0] sm:$0xff]
    %v1988 = vld [vmem:[#allocation4 + $0x2f8] sm:$0xff]
    %v1989 = vld [vmem:[#allocation4 + $0x300] sm:$0xff]
    %v1990 = vld [vmem:[#allocation4 + $0x308] sm:$0xff]
    %v1991 = vld [vmem:[#allocation4 + $0x310] sm:$0xff]
    %v1992 = vld [vmem:[#allocation4 + $0x318] sm:$0xff]
    %v1993 = vld [vmem:[#allocation4 + $0x320] sm:$0xff]
    %v1994 = vld [vmem:[#allocation4 + $0x328] sm:$0xff]
    %v1995 = vld [vmem:[#allocation4 + $0x330] sm:$0xff]
    %v1996 = vld [vmem:[#allocation4 + $0x338] sm:$0xff]
    %v1997 = vld [vmem:[#allocation4 + $0x340] sm:$0xff]
    %v1998 = vld [vmem:[#allocation4 + $0x348] sm:$0xff]
    %v1999 = vld [vmem:[#allocation4 + $0x350] sm:$0xff]
    %v2000 = vld [vmem:[#allocation4 + $0x358] sm:$0xff]
    %v2001 = vld [vmem:[#allocation4 + $0x360] sm:$0xff]
    %v2002 = vld [vmem:[#allocation4 + $0x368] sm:$0xff]
    %v2003 = vld [vmem:[#allocation4 + $0x370] sm:$0xff]
    %v2004 = vld [vmem:[#allocation4 + $0x378] sm:$0xff]
    %v2005 = vld [vmem:[#allocation4 + $0x380] sm:$0xff]
    %v2006 = vld [vmem:[#allocation4 + $0x388] sm:$0xff]
    %v2007 = vld [vmem:[#allocation4 + $0x390] sm:$0xff]
    %v2008 = vld [vmem:[#allocation4 + $0x398] sm:$0xff]
    %v2009 = vld [vmem:[#allocation4 + $0x3a0] sm:$0xff]
    %v2010 = vld [vmem:[#allocation4 + $0x3a8] sm:$0xff]
    %v2011 = vld [vmem:[#allocation4 + $0x3b0] sm:$0xff]
    %v2012 = vld [vmem:[#allocation4 + $0x3b8] sm:$0xff]
    %v2013 = vld [vmem:[#allocation4 + $0x3c0] sm:$0xff]
    %v2014 = vld [vmem:[#allocation4 + $0x3c8] sm:$0xff]
    %v2015 = vld [vmem:[#allocation4 + $0x3d0] sm:$0xff]
    %v2016 = vld [vmem:[#allocation4 + $0x3d8] sm:$0xff]
    %v2017 = vld [vmem:[#allocation4 + $0x3e0] sm:$0xff]
    %v2018 = vld [vmem:[#allocation4 + $0x3e8] sm:$0xff]
    %v2019 = vld [vmem:[#allocation4 + $0x3f0] sm:$0xff]
    %v2020 = vld [vmem:[#allocation4 + $0x3f8] sm:$0xff]
    %v2149 = vunpack.c.l.b16 %v1893
    %v2150 = vunpack.c.h.b16 %v1893
    %v2151 = vunpack.c.l.b16 %v1894
    %v2152 = vunpack.c.h.b16 %v1894
    %v2153 = vunpack.c.l.b16 %v1895
    %v2154 = vunpack.c.h.b16 %v1895
    %v2155 = vunpack.c.l.b16 %v1896
    %v2156 = vunpack.c.h.b16 %v1896
    %v2157 = vunpack.c.l.b16 %v1897
    %v2158 = vunpack.c.h.b16 %v1897
    %v2159 = vunpack.c.l.b16 %v1898
    %v2160 = vunpack.c.h.b16 %v1898
    %v2161 = vunpack.c.l.b16 %v1899
    %v2162 = vunpack.c.h.b16 %v1899
    %v2163 = vunpack.c.l.b16 %v1900
    %v2164 = vunpack.c.h.b16 %v1900
    %v2165 = vunpack.c.l.b16 %v1901
    %v2166 = vunpack.c.h.b16 %v1901
    %v2167 = vunpack.c.l.b16 %v1902
    %v2168 = vunpack.c.h.b16 %v1902
    %v2169 = vunpack.c.l.b16 %v1903
    %v2170 = vunpack.c.h.b16 %v1903
    %v2171 = vunpack.c.l.b16 %v1904
    %v2172 = vunpack.c.h.b16 %v1904
    %v2173 = vunpack.c.l.b16 %v1905
    %v2174 = vunpack.c.h.b16 %v1905
    %v2175 = vunpack.c.l.b16 %v1906
    %v2176 = vunpack.c.h.b16 %v1906
    %v2177 = vunpack.c.l.b16 %v1907
    %v2178 = vunpack.c.h.b16 %v1907
    %v2179 = vunpack.c.l.b16 %v1908
    %v2180 = vunpack.c.h.b16 %v1908
    %v2181 = vunpack.c.l.b16 %v1909
    %v2182 = vunpack.c.h.b16 %v1909
    %v2183 = vunpack.c.l.b16 %v1910
    %v2184 = vunpack.c.h.b16 %v1910
    %v2185 = vunpack.c.l.b16 %v1911
    %v2186 = vunpack.c.h.b16 %v1911
    %v2187 = vunpack.c.l.b16 %v1912
    %v2188 = vunpack.c.h.b16 %v1912
    %v2189 = vunpack.c.l.b16 %v1913
    %v2190 = vunpack.c.h.b16 %v1913
    %v2191 = vunpack.c.l.b16 %v1914
    %v2192 = vunpack.c.h.b16 %v1914
    %v2193 = vunpack.c.l.b16 %v1915
    %v2194 = vunpack.c.h.b16 %v1915
    %v2195 = vunpack.c.l.b16 %v1916
    %v2196 = vunpack.c.h.b16 %v1916
    %v2197 = vunpack.c.l.b16 %v1917
    %v2198 = vunpack.c.h.b16 %v1917
    %v2199 = vunpack.c.l.b16 %v1918
    %v2200 = vunpack.c.h.b16 %v1918
    %v2201 = vunpack.c.l.b16 %v1919
    %v2202 = vunpack.c.h.b16 %v1919
    %v2203 = vunpack.c.l.b16 %v1920
    %v2204 = vunpack.c.h.b16 %v1920
    %v2205 = vunpack.c.l.b16 %v1921
    %v2206 = vunpack.c.h.b16 %v1921
    %v2207 = vunpack.c.l.b16 %v1922
    %v2208 = vunpack.c.h.b16 %v1922
    %v2209 = vunpack.c.l.b16 %v1923
    %v2210 = vunpack.c.h.b16 %v1923
    %v2211 = vunpack.c.l.b16 %v1924
    %v2212 = vunpack.c.h.b16 %v1924
    %v2213 = vunpack.c.l.b16 %v1925
    %v2214 = vunpack.c.h.b16 %v1925
    %v2215 = vunpack.c.l.b16 %v1926
    %v2216 = vunpack.c.h.b16 %v1926
    %v2217 = vunpack.c.l.b16 %v1927
    %v2218 = vunpack.c.h.b16 %v1927
    %v2219 = vunpack.c.l.b16 %v1928
    %v2220 = vunpack.c.h.b16 %v1928
    %v2221 = vunpack.c.l.b16 %v1929
    %v2222 = vunpack.c.h.b16 %v1929
    %v2223 = vunpack.c.l.b16 %v1930
    %v2224 = vunpack.c.h.b16 %v1930
    %v2225 = vunpack.c.l.b16 %v1931
    %v2226 = vunpack.c.h.b16 %v1931
    %v2227 = vunpack.c.l.b16 %v1932
    %v2228 = vunpack.c.h.b16 %v1932
    %v2229 = vunpack.c.l.b16 %v1933
    %v2230 = vunpack.c.h.b16 %v1933
    %v2231 = vunpack.c.l.b16 %v1934
    %v2232 = vunpack.c.h.b16 %v1934
    %v2233 = vunpack.c.l.b16 %v1935
    %v2234 = vunpack.c.h.b16 %v1935
    %v2235 = vunpack.c.l.b16 %v1936
    %v2236 = vunpack.c.h.b16 %v1936
    %v2237 = vunpack.c.l.b16 %v1937
    %v2238 = vunpack.c.h.b16 %v1937
    %v2239 = vunpack.c.l.b16 %v1938
    %v2240 = vunpack.c.h.b16 %v1938
    %v2241 = vunpack.c.l.b16 %v1939
    %v2242 = vunpack.c.h.b16 %v1939
    %v2243 = vunpack.c.l.b16 %v1940
    %v2244 = vunpack.c.h.b16 %v1940
    %v2245 = vunpack.c.l.b16 %v1941
    %v2246 = vunpack.c.h.b16 %v1941
    %v2247 = vunpack.c.l.b16 %v1942
    %v2248 = vunpack.c.h.b16 %v1942
    %v2249 = vunpack.c.l.b16 %v1943
    %v2250 = vunpack.c.h.b16 %v1943
    %v2251 = vunpack.c.l.b16 %v1944
    %v2252 = vunpack.c.h.b16 %v1944
    %v2253 = vunpack.c.l.b16 %v1945
    %v2254 = vunpack.c.h.b16 %v1945
    %v2255 = vunpack.c.l.b16 %v1946
    %v2256 = vunpack.c.h.b16 %v1946
    %v2257 = vunpack.c.l.b16 %v1947
    %v2258 = vunpack.c.h.b16 %v1947
    %v2259 = vunpack.c.l.b16 %v1948
    %v2260 = vunpack.c.h.b16 %v1948
    %v2261 = vunpack.c.l.b16 %v1949
    %v2262 = vunpack.c.h.b16 %v1949
    %v2263 = vunpack.c.l.b16 %v1950
    %v2264 = vunpack.c.h.b16 %v1950
    %v2265 = vunpack.c.l.b16 %v1951
    %v2266 = vunpack.c.h.b16 %v1951
    %v2267 = vunpack.c.l.b16 %v1952
    %v2268 = vunpack.c.h.b16 %v1952
    %v2269 = vunpack.c.l.b16 %v1953
    %v2270 = vunpack.c.h.b16 %v1953
    %v2271 = vunpack.c.l.b16 %v1954
    %v2272 = vunpack.c.h.b16 %v1954
    %v2273 = vunpack.c.l.b16 %v1955
    %v2274 = vunpack.c.h.b16 %v1955
    %v2275 = vunpack.c.l.b16 %v1956
    %v2276 = vunpack.c.h.b16 %v1956
    %v2277 = vunpack.c.l.b16 %v1957
    %v2278 = vunpack.c.h.b16 %v1957
    %v2279 = vunpack.c.l.b16 %v1958
    %v2280 = vunpack.c.h.b16 %v1958
    %v2281 = vunpack.c.l.b16 %v1959
    %v2282 = vunpack.c.h.b16 %v1959
    %v2283 = vunpack.c.l.b16 %v1960
    %v2284 = vunpack.c.h.b16 %v1960
    %v2285 = vunpack.c.l.b16 %v1961
    %v2286 = vunpack.c.h.b16 %v1961
    %v2287 = vunpack.c.l.b16 %v1962
    %v2288 = vunpack.c.h.b16 %v1962
    %v2289 = vunpack.c.l.b16 %v1963
    %v2290 = vunpack.c.h.b16 %v1963
    %v2291 = vunpack.c.l.b16 %v1964
    %v2292 = vunpack.c.h.b16 %v1964
    %v2293 = vunpack.c.l.b16 %v1965
    %v2294 = vunpack.c.h.b16 %v1965
    %v2295 = vunpack.c.l.b16 %v1966
    %v2296 = vunpack.c.h.b16 %v1966
    %v2297 = vunpack.c.l.b16 %v1967
    %v2298 = vunpack.c.h.b16 %v1967
    %v2299 = vunpack.c.l.b16 %v1968
    %v2300 = vunpack.c.h.b16 %v1968
    %v2301 = vunpack.c.l.b16 %v1969
    %v2302 = vunpack.c.h.b16 %v1969
    %v2303 = vunpack.c.l.b16 %v1970
    %v2304 = vunpack.c.h.b16 %v1970
    %v2305 = vunpack.c.l.b16 %v1971
    %v2306 = vunpack.c.h.b16 %v1971
    %v2307 = vunpack.c.l.b16 %v1972
    %v2308 = vunpack.c.h.b16 %v1972
    %v2309 = vunpack.c.l.b16 %v1973
    %v2310 = vunpack.c.h.b16 %v1973
    %v2311 = vunpack.c.l.b16 %v1974
    %v2312 = vunpack.c.h.b16 %v1974
    %v2313 = vunpack.c.l.b16 %v1975
    %v2314 = vunpack.c.h.b16 %v1975
    %v2315 = vunpack.c.l.b16 %v1976
    %v2316 = vunpack.c.h.b16 %v1976
    %v2317 = vunpack.c.l.b16 %v1977
    %v2318 = vunpack.c.h.b16 %v1977
    %v2319 = vunpack.c.l.b16 %v1978
    %v2320 = vunpack.c.h.b16 %v1978
    %v2321 = vunpack.c.l.b16 %v1979
    %v2322 = vunpack.c.h.b16 %v1979
    %v2323 = vunpack.c.l.b16 %v1980
    %v2324 = vunpack.c.h.b16 %v1980
    %v2325 = vunpack.c.l.b16 %v1981
    %v2326 = vunpack.c.h.b16 %v1981
    %v2327 = vunpack.c.l.b16 %v1982
    %v2328 = vunpack.c.h.b16 %v1982
    %v2329 = vunpack.c.l.b16 %v1983
    %v2330 = vunpack.c.h.b16 %v1983
    %v2331 = vunpack.c.l.b16 %v1984
    %v2332 = vunpack.c.h.b16 %v1984
    %v2333 = vunpack.c.l.b16 %v1985
    %v2334 = vunpack.c.h.b16 %v1985
    %v2335 = vunpack.c.l.b16 %v1986
    %v2336 = vunpack.c.h.b16 %v1986
    %v2337 = vunpack.c.l.b16 %v1987
    %v2338 = vunpack.c.h.b16 %v1987
    %v2339 = vunpack.c.l.b16 %v1988
    %v2340 = vunpack.c.h.b16 %v1988
    %v2341 = vunpack.c.l.b16 %v1989
    %v2342 = vunpack.c.h.b16 %v1989
    %v2343 = vunpack.c.l.b16 %v1990
    %v2344 = vunpack.c.h.b16 %v1990
    %v2345 = vunpack.c.l.b16 %v1991
    %v2346 = vunpack.c.h.b16 %v1991
    %v2347 = vunpack.c.l.b16 %v1992
    %v2348 = vunpack.c.h.b16 %v1992
    %v2349 = vunpack.c.l.b16 %v1993
    %v2350 = vunpack.c.h.b16 %v1993
    %v2351 = vunpack.c.l.b16 %v1994
    %v2352 = vunpack.c.h.b16 %v1994
    %v2353 = vunpack.c.l.b16 %v1995
    %v2354 = vunpack.c.h.b16 %v1995
    %v2355 = vunpack.c.l.b16 %v1996
    %v2356 = vunpack.c.h.b16 %v1996
    %v2357 = vunpack.c.l.b16 %v1997
    %v2358 = vunpack.c.h.b16 %v1997
    %v2359 = vunpack.c.l.b16 %v1998
    %v2360 = vunpack.c.h.b16 %v1998
    %v2361 = vunpack.c.l.b16 %v1999
    %v2362 = vunpack.c.h.b16 %v1999
    %v2363 = vunpack.c.l.b16 %v2000
    %v2364 = vunpack.c.h.b16 %v2000
    %v2365 = vunpack.c.l.b16 %v2001
    %v2366 = vunpack.c.h.b16 %v2001
    %v2367 = vunpack.c.l.b16 %v2002
    %v2368 = vunpack.c.h.b16 %v2002
    %v2369 = vunpack.c.l.b16 %v2003
    %v2370 = vunpack.c.h.b16 %v2003
    %v2371 = vunpack.c.l.b16 %v2004
    %v2372 = vunpack.c.h.b16 %v2004
    %v2373 = vunpack.c.l.b16 %v2005
    %v2374 = vunpack.c.h.b16 %v2005
    %v2375 = vunpack.c.l.b16 %v2006
    %v2376 = vunpack.c.h.b16 %v2006
    %v2377 = vunpack.c.l.b16 %v2007
    %v2378 = vunpack.c.h.b16 %v2007
    %v2379 = vunpack.c.l.b16 %v2008
    %v2380 = vunpack.c.h.b16 %v2008
    %v2381 = vunpack.c.l.b16 %v2009
    %v2382 = vunpack.c.h.b16 %v2009
    %v2383 = vunpack.c.l.b16 %v2010
    %v2384 = vunpack.c.h.b16 %v2010
    %v2385 = vunpack.c.l.b16 %v2011
    %v2386 = vunpack.c.h.b16 %v2011
    %v2387 = vunpack.c.l.b16 %v2012
    %v2388 = vunpack.c.h.b16 %v2012
    %v2389 = vunpack.c.l.b16 %v2013
    %v2390 = vunpack.c.h.b16 %v2013
    %v2391 = vunpack.c.l.b16 %v2014
    %v2392 = vunpack.c.h.b16 %v2014
    %v2393 = vunpack.c.l.b16 %v2015
    %v2394 = vunpack.c.h.b16 %v2015
    %v2395 = vunpack.c.l.b16 %v2016
    %v2396 = vunpack.c.h.b16 %v2016
    %v2397 = vunpack.c.l.b16 %v2017
    %v2398 = vunpack.c.h.b16 %v2017
    %v2399 = vunpack.c.l.b16 %v2018
    %v2400 = vunpack.c.h.b16 %v2018
    %v2401 = vunpack.c.l.b16 %v2019
    %v2402 = vunpack.c.h.b16 %v2019
    %v2403 = vunpack.c.l.b16 %v2020
    %v2404 = vunpack.c.h.b16 %v2020
    %v2405 = vpack.c.b16 %v2157, %v2149
    %v2406 = vpack.c.b16 %v2158, %v2150
    %v2407 = vpack.c.b16 %v2159, %v2151
    %v2408 = vpack.c.b16 %v2160, %v2152
    %v2409 = vpack.c.b16 %v2161, %v2153
    %v2410 = vpack.c.b16 %v2162, %v2154
    %v2411 = vpack.c.b16 %v2163, %v2155
    %v2412 = vpack.c.b16 %v2164, %v2156
    %v2413 = vpack.c.b16 %v2173, %v2165
    %v2414 = vpack.c.b16 %v2174, %v2166
    %v2415 = vpack.c.b16 %v2175, %v2167
    %v2416 = vpack.c.b16 %v2176, %v2168
    %v2417 = vpack.c.b16 %v2177, %v2169
    %v2418 = vpack.c.b16 %v2178, %v2170
    %v2419 = vpack.c.b16 %v2179, %v2171
    %v2420 = vpack.c.b16 %v2180, %v2172
    %v2421 = vpack.c.b16 %v2189, %v2181
    %v2422 = vpack.c.b16 %v2190, %v2182
    %v2423 = vpack.c.b16 %v2191, %v2183
    %v2424 = vpack.c.b16 %v2192, %v2184
    %v2425 = vpack.c.b16 %v2193, %v2185
    %v2426 = vpack.c.b16 %v2194, %v2186
    %v2427 = vpack.c.b16 %v2195, %v2187
    %v2428 = vpack.c.b16 %v2196, %v2188
    %v2429 = vpack.c.b16 %v2205, %v2197
    %v2430 = vpack.c.b16 %v2206, %v2198
    %v2431 = vpack.c.b16 %v2207, %v2199
    %v2432 = vpack.c.b16 %v2208, %v2200
    %v2433 = vpack.c.b16 %v2209, %v2201
    %v2434 = vpack.c.b16 %v2210, %v2202
    %v2435 = vpack.c.b16 %v2211, %v2203
    %v2436 = vpack.c.b16 %v2212, %v2204
    %v2437 = vpack.c.b16 %v2221, %v2213
    %v2438 = vpack.c.b16 %v2222, %v2214
    %v2439 = vpack.c.b16 %v2223, %v2215
    %v2440 = vpack.c.b16 %v2224, %v2216
    %v2441 = vpack.c.b16 %v2225, %v2217
    %v2442 = vpack.c.b16 %v2226, %v2218
    %v2443 = vpack.c.b16 %v2227, %v2219
    %v2444 = vpack.c.b16 %v2228, %v2220
    %v2445 = vpack.c.b16 %v2237, %v2229
    %v2446 = vpack.c.b16 %v2238, %v2230
    %v2447 = vpack.c.b16 %v2239, %v2231
    %v2448 = vpack.c.b16 %v2240, %v2232
    %v2449 = vpack.c.b16 %v2241, %v2233
    %v2450 = vpack.c.b16 %v2242, %v2234
    %v2451 = vpack.c.b16 %v2243, %v2235
    %v2452 = vpack.c.b16 %v2244, %v2236
    %v2453 = vpack.c.b16 %v2253, %v2245
    %v2454 = vpack.c.b16 %v2254, %v2246
    %v2455 = vpack.c.b16 %v2255, %v2247
    %v2456 = vpack.c.b16 %v2256, %v2248
    %v2457 = vpack.c.b16 %v2257, %v2249
    %v2458 = vpack.c.b16 %v2258, %v2250
    %v2459 = vpack.c.b16 %v2259, %v2251
    %v2460 = vpack.c.b16 %v2260, %v2252
    %v2461 = vpack.c.b16 %v2269, %v2261
    %v2462 = vpack.c.b16 %v2270, %v2262
    %v2463 = vpack.c.b16 %v2271, %v2263
    %v2464 = vpack.c.b16 %v2272, %v2264
    %v2465 = vpack.c.b16 %v2273, %v2265
    %v2466 = vpack.c.b16 %v2274, %v2266
    %v2467 = vpack.c.b16 %v2275, %v2267
    %v2468 = vpack.c.b16 %v2276, %v2268
    %v2469 = vpack.c.b16 %v2285, %v2277
    %v2470 = vpack.c.b16 %v2286, %v2278
    %v2471 = vpack.c.b16 %v2287, %v2279
    %v2472 = vpack.c.b16 %v2288, %v2280
    %v2473 = vpack.c.b16 %v2289, %v2281
    %v2474 = vpack.c.b16 %v2290, %v2282
    %v2475 = vpack.c.b16 %v2291, %v2283
    %v2476 = vpack.c.b16 %v2292, %v2284
    %v2477 = vpack.c.b16 %v2301, %v2293
    %v2478 = vpack.c.b16 %v2302, %v2294
    %v2479 = vpack.c.b16 %v2303, %v2295
    %v2480 = vpack.c.b16 %v2304, %v2296
    %v2481 = vpack.c.b16 %v2305, %v2297
    %v2482 = vpack.c.b16 %v2306, %v2298
    %v2483 = vpack.c.b16 %v2307, %v2299
    %v2484 = vpack.c.b16 %v2308, %v2300
    %v2485 = vpack.c.b16 %v2317, %v2309
    %v2486 = vpack.c.b16 %v2318, %v2310
    %v2487 = vpack.c.b16 %v2319, %v2311
    %v2488 = vpack.c.b16 %v2320, %v2312
    %v2489 = vpack.c.b16 %v2321, %v2313
    %v2490 = vpack.c.b16 %v2322, %v2314
    %v2491 = vpack.c.b16 %v2323, %v2315
    %v2492 = vpack.c.b16 %v2324, %v2316
    %v2493 = vpack.c.b16 %v2333, %v2325
    %v2494 = vpack.c.b16 %v2334, %v2326
    %v2495 = vpack.c.b16 %v2335, %v2327
    %v2496 = vpack.c.b16 %v2336, %v2328
    %v2497 = vpack.c.b16 %v2337, %v2329
    %v2498 = vpack.c.b16 %v2338, %v2330
    %v2499 = vpack.c.b16 %v2339, %v2331
    %v2500 = vpack.c.b16 %v2340, %v2332
    %v2501 = vpack.c.b16 %v2349, %v2341
    %v2502 = vpack.c.b16 %v2350, %v2342
    %v2503 = vpack.c.b16 %v2351, %v2343
    %v2504 = vpack.c.b16 %v2352, %v2344
    %v2505 = vpack.c.b16 %v2353, %v2345
    %v2506 = vpack.c.b16 %v2354, %v2346
    %v2507 = vpack.c.b16 %v2355, %v2347
    %v2508 = vpack.c.b16 %v2356, %v2348
    %v2509 = vpack.c.b16 %v2365, %v2357
    %v2510 = vpack.c.b16 %v2366, %v2358
    %v2511 = vpack.c.b16 %v2367, %v2359
    %v2512 = vpack.c.b16 %v2368, %v2360
    %v2513 = vpack.c.b16 %v2369, %v2361
    %v2514 = vpack.c.b16 %v2370, %v2362
    %v2515 = vpack.c.b16 %v2371, %v2363
    %v2516 = vpack.c.b16 %v2372, %v2364
    %v2517 = vpack.c.b16 %v2381, %v2373
    %v2518 = vpack.c.b16 %v2382, %v2374
    %v2519 = vpack.c.b16 %v2383, %v2375
    %v2520 = vpack.c.b16 %v2384, %v2376
    %v2521 = vpack.c.b16 %v2385, %v2377
    %v2522 = vpack.c.b16 %v2386, %v2378
    %v2523 = vpack.c.b16 %v2387, %v2379
    %v2524 = vpack.c.b16 %v2388, %v2380
    %v2525 = vpack.c.b16 %v2397, %v2389
    %v2526 = vpack.c.b16 %v2398, %v2390
    %v2527 = vpack.c.b16 %v2399, %v2391
    %v2528 = vpack.c.b16 %v2400, %v2392
    %v2529 = vpack.c.b16 %v2401, %v2393
    %v2530 = vpack.c.b16 %v2402, %v2394
    %v2531 = vpack.c.b16 %v2403, %v2395
    %v2532 = vpack.c.b16 %v2404, %v2396
    %2661 = vmatprep.subr.bf16.mxu0 %v2406
    %2662 = vmatpush1.bf16.msra.mxu0 %v2405
    %2663 = vmatprep.subr.bf16.mxu0 %v2414
    %2664 = vmatpush1.bf16.msra.mxu0 %v2413
    %2665 = vmatprep.subr.bf16.mxu0 %v2422
    %2666 = vmatpush1.bf16.msra.mxu0 %v2421
    %2667 = vmatprep.subr.bf16.mxu0 %v2430
    %2668 = vmatpush1.bf16.msra.mxu0 %v2429
    %2669 = vmatprep.subr.bf16.mxu0 %v2438
    %2670 = vmatpush1.bf16.msra.mxu0 %v2437
    %2671 = vmatprep.subr.bf16.mxu0 %v2446
    %2672 = vmatpush1.bf16.msra.mxu0 %v2445
    %2673 = vmatprep.subr.bf16.mxu0 %v2454
    %2674 = vmatpush1.bf16.msra.mxu0 %v2453
    %2675 = vmatprep.subr.bf16.mxu0 %v2462
    %2676 = vmatpush1.bf16.msra.mxu0 %v2461
    %2677 = vmatprep.subr.bf16.mxu0 %v2470
    %2678 = vmatpush1.bf16.msra.mxu0 %v2469
    %2679 = vmatprep.subr.bf16.mxu0 %v2478
    %2680 = vmatpush1.bf16.msra.mxu0 %v2477
    %2681 = vmatprep.subr.bf16.mxu0 %v2486
    %2682 = vmatpush1.bf16.msra.mxu0 %v2485
    %2683 = vmatprep.subr.bf16.mxu0 %v2494
    %2684 = vmatpush1.bf16.msra.mxu0 %v2493
    %2685 = vmatprep.subr.bf16.mxu0 %v2502
    %2686 = vmatpush1.bf16.msra.mxu0 %v2501
    %2687 = vmatprep.subr.bf16.mxu0 %v2510
    %2688 = vmatpush1.bf16.msra.mxu0 %v2509
    %2689 = vmatprep.subr.bf16.mxu0 %v2518
    %2690 = vmatpush1.bf16.msra.mxu0 %v2517
    %2691 = vmatprep.subr.bf16.mxu0 %v2526
    %2692 = vmatpush1.bf16.msra.mxu0 %v2525
    %2693 = vmatprep.mubr.bf16.mxu0 %v1892
    %2694 = vmatmul.mubr.bf16.gmra.mrb[0].mxu0 %v1891
    %v2695 = vpop.f32.mrb[0].mxu0
    %v2696 = vadd.f32 0.0, %v2695
    %v2697 = vpop.f32.mrb[0].mxu0
    %v2698 = vadd.f32 0.0, %v2697
    %v2699 = vpop.f32.mrb[0].mxu0
    %v2700 = vpop.f32.mrb[0].mxu0
    %2701 = vdwg.mxu0
    %2702 = vmatprep.subr.bf16.mxu0 %v2408
    %2703 = vmatpush1.bf16.msra.mxu0 %v2407
    %2704 = vmatprep.subr.bf16.mxu0 %v2416
    %2705 = vmatpush1.bf16.msra.mxu0 %v2415
    %2706 = vmatprep.subr.bf16.mxu0 %v2424
    %2707 = vmatpush1.bf16.msra.mxu0 %v2423
    %2708 = vmatprep.subr.bf16.mxu0 %v2432
    %2709 = vmatpush1.bf16.msra.mxu0 %v2431
    %2710 = vmatprep.subr.bf16.mxu0 %v2440
    %2711 = vmatpush1.bf16.msra.mxu0 %v2439
    %2712 = vmatprep.subr.bf16.mxu0 %v2448
    %2713 = vmatpush1.bf16.msra.mxu0 %v2447
    %2714 = vmatprep.subr.bf16.mxu0 %v2456
    %2715 = vmatpush1.bf16.msra.mxu0 %v2455
    %2716 = vmatprep.subr.bf16.mxu0 %v2464
    %2717 = vmatpush1.bf16.msra.mxu0 %v2463
    %2718 = vmatprep.subr.bf16.mxu0 %v2472
    %2719 = vmatpush1.bf16.msra.mxu0 %v2471
    %2720 = vmatprep.subr.bf16.mxu0 %v2480
    %2721 = vmatpush1.bf16.msra.mxu0 %v2479
    %2722 = vmatprep.subr.bf16.mxu0 %v2488
    %2723 = vmatpush1.bf16.msra.mxu0 %v2487
    %2724 = vmatprep.subr.bf16.mxu0 %v2496
    %2725 = vmatpush1.bf16.msra.mxu0 %v2495
    %2726 = vmatprep.subr.bf16.mxu0 %v2504
    %2727 = vmatpush1.bf16.msra.mxu0 %v2503
    %2728 = vmatprep.subr.bf16.mxu0 %v2512
    %2729 = vmatpush1.bf16.msra.mxu0 %v2511
    %2730 = vmatprep.subr.bf16.mxu0 %v2520
    %2731 = vmatpush1.bf16.msra.mxu0 %v2519
    %2732 = vmatprep.subr.bf16.mxu0 %v2528
    %2733 = vmatpush1.bf16.msra.mxu0 %v2527
    %2734 = vmatprep.mubr.bf16.mxu0 %v1892
    %2735 = vmatmul.mubr.bf16.gmra.mrb[0].mxu0 %v1891
    %v2736 = vpop.f32.mrb[0].mxu0
    %v2737 = vadd.f32 0.0, %v2736
    %v2738 = vpop.f32.mrb[0].mxu0
    %v2739 = vadd.f32 0.0, %v2738
    %v2740 = vpop.f32.mrb[0].mxu0
    %v2741 = vpop.f32.mrb[0].mxu0
    %2742 = vdwg.mxu0
    %2743 = vmatprep.subr.bf16.mxu0 %v2410
    %2744 = vmatpush1.bf16.msra.mxu0 %v2409
    %2745 = vmatprep.subr.bf16.mxu0 %v2418
    %2746 = vmatpush1.bf16.msra.mxu0 %v2417
    %2747 = vmatprep.subr.bf16.mxu0 %v2426
    %2748 = vmatpush1.bf16.msra.mxu0 %v2425
    %2749 = vmatprep.subr.bf16.mxu0 %v2434
    %2750 = vmatpush1.bf16.msra.mxu0 %v2433
    %2751 = vmatprep.subr.bf16.mxu0 %v2442
    %2752 = vmatpush1.bf16.msra.mxu0 %v2441
    %2753 = vmatprep.subr.bf16.mxu0 %v2450
    %2754 = vmatpush1.bf16.msra.mxu0 %v2449
    %2755 = vmatprep.subr.bf16.mxu0 %v2458
    %2756 = vmatpush1.bf16.msra.mxu0 %v2457
    %2757 = vmatprep.subr.bf16.mxu0 %v2466
    %2758 = vmatpush1.bf16.msra.mxu0 %v2465
    %2759 = vmatprep.subr.bf16.mxu0 %v2474
    %2760 = vmatpush1.bf16.msra.mxu0 %v2473
    %2761 = vmatprep.subr.bf16.mxu0 %v2482
    %2762 = vmatpush1.bf16.msra.mxu0 %v2481
    %2763 = vmatprep.subr.bf16.mxu0 %v2490
    %2764 = vmatpush1.bf16.msra.mxu0 %v2489
    %2765 = vmatprep.subr.bf16.mxu0 %v2498
    %2766 = vmatpush1.bf16.msra.mxu0 %v2497
    %2767 = vmatprep.subr.bf16.mxu0 %v2506
    %2768 = vmatpush1.bf16.msra.mxu0 %v2505
    %2769 = vmatprep.subr.bf16.mxu0 %v2514
    %2770 = vmatpush1.bf16.msra.mxu0 %v2513
    %2771 = vmatprep.subr.bf16.mxu0 %v2522
    %2772 = vmatpush1.bf16.msra.mxu0 %v2521
    %2773 = vmatprep.subr.bf16.mxu0 %v2530
    %2774 = vmatpush1.bf16.msra.mxu0 %v2529
    %2775 = vmatprep.mubr.bf16.mxu0 %v1892
    %2776 = vmatmul.mubr.bf16.gmra.mrb[0].mxu0 %v1891
    %v2777 = vpop.f32.mrb[0].mxu0
    %v2778 = vadd.f32 0.0, %v2777
    %v2779 = vpop.f32.mrb[0].mxu0
    %v2780 = vadd.f32 0.0, %v2779
    %v2781 = vpop.f32.mrb[0].mxu0
    %v2782 = vpop.f32.mrb[0].mxu0
    %2783 = vdwg.mxu0
    %2784 = vmatprep.subr.bf16.mxu0 %v2412
    %2785 = vmatpush1.bf16.msra.mxu0 %v2411
    %2786 = vmatprep.subr.bf16.mxu0 %v2420
    %2787 = vmatpush1.bf16.msra.mxu0 %v2419
    %2788 = vmatprep.subr.bf16.mxu0 %v2428
    %2789 = vmatpush1.bf16.msra.mxu0 %v2427
    %2790 = vmatprep.subr.bf16.mxu0 %v2436
    %2791 = vmatpush1.bf16.msra.mxu0 %v2435
    %2792 = vmatprep.subr.bf16.mxu0 %v2444
    %2793 = vmatpush1.bf16.msra.mxu0 %v2443
    %2794 = vmatprep.subr.bf16.mxu0 %v2452
    %2795 = vmatpush1.bf16.msra.mxu0 %v2451
    %2796 = vmatprep.subr.bf16.mxu0 %v2460
    %2797 = vmatpush1.bf16.msra.mxu0 %v2459
    %2798 = vmatprep.subr.bf16.mxu0 %v2468
    %2799 = vmatpush1.bf16.msra.mxu0 %v2467
    %2800 = vmatprep.subr.bf16.mxu0 %v2476
    %2801 = vmatpush1.bf16.msra.mxu0 %v2475
    %2802 = vmatprep.subr.bf16.mxu0 %v2484
    %2803 = vmatpush1.bf16.msra.mxu0 %v2483
    %2804 = vmatprep.subr.bf16.mxu0 %v2492
    %2805 = vmatpush1.bf16.msra.mxu0 %v2491
    %2806 = vmatprep.subr.bf16.mxu0 %v2500
    %2807 = vmatpush1.bf16.msra.mxu0 %v2499
    %2808 = vmatprep.subr.bf16.mxu0 %v2508
    %2809 = vmatpush1.bf16.msra.mxu0 %v2507
    %2810 = vmatprep.subr.bf16.mxu0 %v2516
    %2811 = vmatpush1.bf16.msra.mxu0 %v2515
    %2812 = vmatprep.subr.bf16.mxu0 %v2524
    %2813 = vmatpush1.bf16.msra.mxu0 %v2523
    %2814 = vmatprep.subr.bf16.mxu0 %v2532
    %2815 = vmatpush1.bf16.msra.mxu0 %v2531
    %2816 = vmatprep.mubr.bf16.mxu0 %v1892
    %2817 = vmatmul.mubr.bf16.gmra.mrb[0].mxu0 %v1891
    %v2818 = vpop.f32.mrb[0].mxu0
    %v2819 = vadd.f32 0.0, %v2818
    %v2820 = vpop.f32.mrb[0].mxu0
    %v2821 = vadd.f32 0.0, %v2820
    %v2822 = vpop.f32.mrb[0].mxu0
    %v2823 = vpop.f32.mrb[0].mxu0
    %2824 = vdwg.mxu0
    %v2825 = vadd.f32 %v1663, %v2696
    %v2826 = vadd.f32 %v1665, %v2698
    %v2827 = vadd.f32 %v1734, %v2737
    %v2828 = vadd.f32 %v1736, %v2739
    %v2829 = vadd.f32 %v1805, %v2778
    %v2830 = vadd.f32 %v1807, %v2780
    %v2831 = vadd.f32 %v1876, %v2819
    %v2832 = vadd.f32 %v1878, %v2821
    %v2833 = vxor.u32 %v2825, 2147483648
    %v2834 = vxor.u32 %v2826, 2147483648
    %v2835 = vmul.f32 %v2833, 1.442695
    %v2836 = vpow.pop %v2835
    %v2837 = vmul.f32 %v2834, 1.442695
    %v2838 = vpow.pop %v2837
    %v2839 = vadd.f32 %v2836, 1.0
    %v2840 = vadd.f32 %v2838, 1.0
    %v2841 = vrcp.pop %v2839
    %v2842 = vmul.f32 1.0, %v2841
    %v2843 = vrcp.pop %v2840
    %v2844 = vmul.f32 1.0, %v2843
    %v2845 = vxor.u32 %v2827, 2147483648
    %v2846 = vxor.u32 %v2828, 2147483648
    %v2847 = vmul.f32 %v2845, 1.442695
    %v2848 = vpow.pop %v2847
    %v2849 = vmul.f32 %v2846, 1.442695
    %v2850 = vpow.pop %v2849
    %v2851 = vadd.f32 %v2848, 1.0
    %v2852 = vadd.f32 %v2850, 1.0
    %v2853 = vrcp.pop %v2851
    %v2854 = vmul.f32 1.0, %v2853
    %v2855 = vrcp.pop %v2852
    %v2856 = vmul.f32 1.0, %v2855
    %v2857 = vtanh.pop %v2829
    %v2858 = vtanh.pop %v2830
    %v2859 = vxor.u32 %v2831, 2147483648
    %v2860 = vxor.u32 %v2832, 2147483648
    %v2861 = vmul.f32 %v2859, 1.442695
    %v2862 = vpow.pop %v2861
    %v2863 = vmul.f32 %v2860, 1.442695
    %v2864 = vpow.pop %v2863
    %v2865 = vadd.f32 %v2862, 1.0
    %v2866 = vadd.f32 %v2864, 1.0
    %v2867 = vrcp.pop %v2865
    %v2868 = vmul.f32 1.0, %v2867
    %v2869 = vrcp.pop %v2866
    %v2870 = vmul.f32 1.0, %v2869
    %v2871 = vld [vmem:[#allocation3] sm:$0xf]
    %v2874 = vunpack.c.l.s4 1983009808
    %v2875 = vunpack.c.0.s8 %v2874
    %v2876 = vlaneseq
    %v2877 = vshrl.u32 %v2876, 7
    %v2878 = vsub.s32 %v2875, %v2877
    %v2879 = vrot.slane %v2871, %v2878
    %v2880 = vcombine.high %v2879, %v2879
    %v2883 = vmul.f32 %v2854, %v2879
    %v2884 = vmul.f32 %v2856, %v2880
    %v2885 = vmul.f32 %v2842, %v2857
    %v2886 = vmul.f32 %v2844, %v2858
    %v2887 = vadd.f32 %v2883, %v2885
    %v2888 = vadd.f32 %v2884, %v2886
    %v2889 = vtanh.pop %v2887
    %v2890 = vtanh.pop %v2888
    %v2891 = vmul.f32 %v2868, %v2889
    %v2892 = vmul.f32 %v2870, %v2890
    %v2895 = vcombine.low %v2887, %v2888
    %v2897 = vunpack.c.l.s4 1983009808
    %v2898 = vunpack.c.0.s8 %v2897
    %v2899 = vlaneseq
    %v2900 = vshrl.u32 %v2899, 7
    %v2901 = vsub.s32 %v2898, %v2900
    %v2902 = vrot.slane %v2895, %v2901
    %2904 = vst [vmem:[#allocation3] sm:$0xf] %v2902
    %v2907 = vcombine.low %v2891, %v2892
    %v2909 = vunpack.c.l.s4 1983009808
    %v2910 = vunpack.c.0.s8 %v2909
    %v2911 = vlaneseq
    %v2912 = vshrl.u32 %v2911, 7
    %v2913 = vsub.s32 %v2910, %v2912
    %v2914 = vrot.slane %v2907, %v2913
    %2916 = vst [vmem:[#allocation2] sm:$0xf] %v2914
    %v2917 = vld [vmem:[#allocation6] sm:$0xff]
    %v2918 = vld [vmem:[#allocation6 + $0x8] sm:$0xff]
    %v2919 = vld [vmem:[#allocation6 + $0x10] sm:$0xff]
    %v2920 = vld [vmem:[#allocation6 + $0x18] sm:$0xff]
    %v2921 = vld [vmem:[#allocation6 + $0x20] sm:$0xff]
    %v2922 = vld [vmem:[#allocation6 + $0x28] sm:$0xff]
    %v2923 = vld [vmem:[#allocation6 + $0x30] sm:$0xff]
    %v2924 = vld [vmem:[#allocation6 + $0x38] sm:$0xff]
    %v2925 = vld [vmem:[#allocation6 + $0x40] sm:$0xff]
    %v2926 = vld [vmem:[#allocation6 + $0x48] sm:$0xff]
    %v2927 = vld [vmem:[#allocation6 + $0x50] sm:$0xff]
    %v2928 = vld [vmem:[#allocation6 + $0x58] sm:$0xff]
    %v2929 = vld [vmem:[#allocation6 + $0x60] sm:$0xff]
    %v2930 = vld [vmem:[#allocation6 + $0x68] sm:$0xff]
    %v2931 = vld [vmem:[#allocation6 + $0x70] sm:$0xff]
    %v2932 = vld [vmem:[#allocation6 + $0x78] sm:$0xff]
    %v2933 = vld [vmem:[#allocation6 + $0x80] sm:$0xff]
    %v2934 = vld [vmem:[#allocation6 + $0x88] sm:$0xff]
    %v2935 = vld [vmem:[#allocation6 + $0x90] sm:$0xff]
    %v2936 = vld [vmem:[#allocation6 + $0x98] sm:$0xff]
    %v2937 = vld [vmem:[#allocation6 + $0xa0] sm:$0xff]
    %v2938 = vld [vmem:[#allocation6 + $0xa8] sm:$0xff]
    %v2939 = vld [vmem:[#allocation6 + $0xb0] sm:$0xff]
    %v2940 = vld [vmem:[#allocation6 + $0xb8] sm:$0xff]
    %v2941 = vld [vmem:[#allocation6 + $0xc0] sm:$0xff]
    %v2942 = vld [vmem:[#allocation6 + $0xc8] sm:$0xff]
    %v2943 = vld [vmem:[#allocation6 + $0xd0] sm:$0xff]
    %v2944 = vld [vmem:[#allocation6 + $0xd8] sm:$0xff]
    %v2945 = vld [vmem:[#allocation6 + $0xe0] sm:$0xff]
    %v2946 = vld [vmem:[#allocation6 + $0xe8] sm:$0xff]
    %v2947 = vld [vmem:[#allocation6 + $0xf0] sm:$0xff]
    %v2948 = vld [vmem:[#allocation6 + $0xf8] sm:$0xff]
    %v2949 = vld [vmem:[%s5] sm:$0x1]
    %v2951 = vlaneseq
    %v2952 = vshrl.u32 %v2951, 7
    %v2953 = vsub.s32 0, %v2952
    %v2954 = vrot.slane %v2949, %v2953
    %2956 = vmatprep.subr.mxu0 0.0
    %2957 = vmatpush1.msra.mxu0 %v2917
    %2958 = vmatprep.subr.mxu0 0.0
    %2959 = vmatpush1.msra.mxu0 %v2918
    %2960 = vmatprep.subr.mxu0 0.0
    %2961 = vmatpush1.msra.mxu0 %v2919
    %2962 = vmatprep.subr.mxu0 0.0
    %2963 = vmatpush1.msra.mxu0 %v2920
    %2964 = vmatprep.subr.mxu0 0.0
    %2965 = vmatpush1.msra.mxu0 %v2921
    %2966 = vmatprep.subr.mxu0 0.0
    %2967 = vmatpush1.msra.mxu0 %v2922
    %2968 = vmatprep.subr.mxu0 0.0
    %2969 = vmatpush1.msra.mxu0 %v2923
    %2970 = vmatprep.subr.mxu0 0.0
    %2971 = vmatpush1.msra.mxu0 %v2924
    %2972 = vmatprep.subr.mxu0 0.0
    %2973 = vmatpush1.msra.mxu0 %v2925
    %2974 = vmatprep.subr.mxu0 0.0
    %2975 = vmatpush1.msra.mxu0 %v2926
    %2976 = vmatprep.subr.mxu0 0.0
    %2977 = vmatpush1.msra.mxu0 %v2927
    %2978 = vmatprep.subr.mxu0 0.0
    %2979 = vmatpush1.msra.mxu0 %v2928
    %2980 = vmatprep.subr.mxu0 0.0
    %2981 = vmatpush1.msra.mxu0 %v2929
    %2982 = vmatprep.subr.mxu0 0.0
    %2983 = vmatpush1.msra.mxu0 %v2930
    %2984 = vmatprep.subr.mxu0 0.0
    %2985 = vmatpush1.msra.mxu0 %v2931
    %2986 = vmatprep.subr.mxu0 0.0
    %2987 = vmatpush1.msra.mxu0 %v2932
    %2988 = vmatprep.subr.mxu0 0.0
    %2989 = vmatpush1.msra.mxu0 %v2933
    %2990 = vmatprep.subr.mxu0 0.0
    %2991 = vmatpush1.msra.mxu0 %v2934
    %2992 = vmatprep.subr.mxu0 0.0
    %2993 = vmatpush1.msra.mxu0 %v2935
    %2994 = vmatprep.subr.mxu0 0.0
    %2995 = vmatpush1.msra.mxu0 %v2936
    %2996 = vmatprep.subr.mxu0 0.0
    %2997 = vmatpush1.msra.mxu0 %v2937
    %2998 = vmatprep.subr.mxu0 0.0
    %2999 = vmatpush1.msra.mxu0 %v2938
    %3000 = vmatprep.subr.mxu0 0.0
    %3001 = vmatpush1.msra.mxu0 %v2939
    %3002 = vmatprep.subr.mxu0 0.0
    %3003 = vmatpush1.msra.mxu0 %v2940
    %3004 = vmatprep.subr.mxu0 0.0
    %3005 = vmatpush1.msra.mxu0 %v2941
    %3006 = vmatprep.subr.mxu0 0.0
    %3007 = vmatpush1.msra.mxu0 %v2942
    %3008 = vmatprep.subr.mxu0 0.0
    %3009 = vmatpush1.msra.mxu0 %v2943
    %3010 = vmatprep.subr.mxu0 0.0
    %3011 = vmatpush1.msra.mxu0 %v2944
    %3012 = vmatprep.subr.mxu0 0.0
    %3013 = vmatpush1.msra.mxu0 %v2945
    %3014 = vmatprep.subr.mxu0 0.0
    %3015 = vmatpush1.msra.mxu0 %v2946
    %3016 = vmatprep.subr.mxu0 0.0
    %3017 = vmatpush1.msra.mxu0 %v2947
    %3018 = vmatprep.subr.mxu0 0.0
    %3019 = vmatpush1.msra.mxu0 %v2948
    %3020 = vmatprep.mubr.f32.mxu0 %v2892
    %3021 = vmatmul.mubr.f32.gmra.mrb[0].mxu0 %v2891
    %v3022 = vpop.f32.mrb[0].mxu0
    %v3023 = vadd.f32 %v2954, %v3022
    %v3024 = vpop.f32.mrb[0].mxu0
    %3025 = vdwg.mxu0
    %s3026 = scalar_lea.vmem %s6, 2
    %3027 = vst [vmem:[%s3026] sm:$0x3] %v3023
    %s3028 = scalar_lea.vmem %s0, 4
    %v3029 = vld [vmem:[%s3028] sm:$0x3]
    %v3030 = vld [vmem:[#allocation2] sm:$0xf]
    %v3031 = vld [vmem:[%s1] sm:$0xff]
    %v3032 = vld [vmem:[%s1 + $0x8] sm:$0xff]
    %v3033 = vld [vmem:[%s1 + $0x10] sm:$0xff]
    %v3034 = vld [vmem:[%s1 + $0x18] sm:$0xff]
    %v3035 = vld [vmem:[%s1 + $0x20] sm:$0xff]
    %v3036 = vld [vmem:[%s1 + $0x28] sm:$0xff]
    %v3037 = vld [vmem:[%s1 + $0x30] sm:$0xff]
    %v3038 = vld [vmem:[%s1 + $0x38] sm:$0xff]
    %v3039 = vld [vmem:[%s3] sm:$0xff]
    %v3041 = vlaneseq
    %v3042 = vshrl.u32 %v3041, 7
    %v3043 = vsub.s32 0, %v3042
    %v3044 = vrot.slane %v3039, %v3043
    %v3045 = vlaneseq
    %v3046 = vshrl.u32 %v3045, 7
    %v3047 = vsub.s32 1, %v3046
    %v3048 = vrot.slane %v3039, %v3047
    %v3049 = vlaneseq
    %v3050 = vshrl.u32 %v3049, 7
    %v3051 = vsub.s32 2, %v3050
    %v3052 = vrot.slane %v3039, %v3051
    %v3053 = vlaneseq
    %v3054 = vshrl.u32 %v3053, 7
    %v3055 = vsub.s32 3, %v3054
    %v3056 = vrot.slane %v3039, %v3055
    %v3057 = vlaneseq
    %v3058 = vshrl.u32 %v3057, 7
    %v3059 = vsub.s32 4, %v3058
    %v3060 = vrot.slane %v3039, %v3059
    %v3061 = vlaneseq
    %v3062 = vshrl.u32 %v3061, 7
    %v3063 = vsub.s32 5, %v3062
    %v3064 = vrot.slane %v3039, %v3063
    %v3065 = vlaneseq
    %v3066 = vshrl.u32 %v3065, 7
    %v3067 = vsub.s32 6, %v3066
    %v3068 = vrot.slane %v3039, %v3067
    %v3069 = vlaneseq
    %v3070 = vshrl.u32 %v3069, 7
    %v3071 = vsub.s32 7, %v3070
    %v3072 = vrot.slane %v3039, %v3071
    %v3082 = vsel %vm105, %v3029, 0
    %3084 = vmatprep.subr.mxu0 %v3032
    %3085 = vmatpush1.msra.mxu0 %v3031
    %3086 = vmatprep.subr.mxu0 0.0
    %3087 = vmatpush1.msra.mxu0 0.0
    %3088 = vmatprep.subr.mxu0 0.0
    %3089 = vmatpush1.msra.mxu0 0.0
    %3090 = vmatprep.subr.mxu0 0.0
    %3091 = vmatpush1.msra.mxu0 0.0
    %3092 = vmatprep.subr.mxu0 0.0
    %3093 = vmatpush1.msra.mxu0 0.0
    %3094 = vmatprep.subr.mxu0 0.0
    %3095 = vmatpush1.msra.mxu0 0.0
    %3096 = vmatprep.subr.mxu0 0.0
    %3097 = vmatpush1.msra.mxu0 0.0
    %3098 = vmatprep.subr.mxu0 0.0
    %3099 = vmatpush1.msra.mxu0 0.0
    %3100 = vmatprep.subr.mxu0 0.0
    %3101 = vmatpush1.msra.mxu0 0.0
    %3102 = vmatprep.subr.mxu0 0.0
    %3103 = vmatpush1.msra.mxu0 0.0
    %3104 = vmatprep.subr.mxu0 0.0
    %3105 = vmatpush1.msra.mxu0 0.0
    %3106 = vmatprep.subr.mxu0 0.0
    %3107 = vmatpush1.msra.mxu0 0.0
    %3108 = vmatprep.subr.mxu0 0.0
    %3109 = vmatpush1.msra.mxu0 0.0
    %3110 = vmatprep.subr.mxu0 0.0
    %3111 = vmatpush1.msra.mxu0 0.0
    %3112 = vmatprep.subr.mxu0 0.0
    %3113 = vmatpush1.msra.mxu0 0.0
    %3114 = vmatprep.subr.mxu0 0.0
    %3115 = vmatpush1.msra.mxu0 0.0
    %3116 = vmatprep.subr.mxu0 0.0
    %3117 = vmatpush1.msra.mxu0 0.0
    %3118 = vmatprep.subr.mxu0 0.0
    %3119 = vmatpush1.msra.mxu0 0.0
    %3120 = vmatprep.subr.mxu0 0.0
    %3121 = vmatpush1.msra.mxu0 0.0
    %3122 = vmatprep.subr.mxu0 0.0
    %3123 = vmatpush1.msra.mxu0 0.0
    %3124 = vmatprep.subr.mxu0 0.0
    %3125 = vmatpush1.msra.mxu0 0.0
    %3126 = vmatprep.subr.mxu0 0.0
    %3127 = vmatpush1.msra.mxu0 0.0
    %3128 = vmatprep.subr.mxu0 0.0
    %3129 = vmatpush1.msra.mxu0 0.0
    %3130 = vmatprep.subr.mxu0 0.0
    %3131 = vmatpush1.msra.mxu0 0.0
    %3132 = vmatprep.subr.mxu0 0.0
    %3133 = vmatpush1.msra.mxu0 0.0
    %3134 = vmatprep.subr.mxu0 0.0
    %3135 = vmatpush1.msra.mxu0 0.0
    %3136 = vmatprep.subr.mxu0 0.0
    %3137 = vmatpush1.msra.mxu0 0.0
    %3138 = vmatprep.subr.mxu0 0.0
    %3139 = vmatpush1.msra.mxu0 0.0
    %3140 = vmatprep.subr.mxu0 0.0
    %3141 = vmatpush1.msra.mxu0 0.0
    %3142 = vmatprep.subr.mxu0 0.0
    %3143 = vmatpush1.msra.mxu0 0.0
    %3144 = vmatprep.subr.mxu0 0.0
    %3145 = vmatpush1.msra.mxu0 0.0
    %3146 = vmatprep.subr.mxu0 0.0
    %3147 = vmatpush1.msra.mxu0 0.0
    %3148 = vmatprep.mubr.f32.mxu0 0.0
    %3149 = vmatmul.mubr.f32.gmra.mrb[0].mxu0 %v3082
    %v3150 = vpop.f32.mrb[0].mxu0
    %v3151 = vadd.f32 %v3044, %v3150
    %v3152 = vpop.f32.mrb[0].mxu0
    %v3153 = vadd.f32 %v3048, %v3152
    %3154 = vdwg.mxu0
    %3155 = vmatprep.subr.mxu0 %v3034
    %3156 = vmatpush1.msra.mxu0 %v3033
    %3157 = vmatprep.subr.mxu0 0.0
    %3158 = vmatpush1.msra.mxu0 0.0
    %3159 = vmatprep.subr.mxu0 0.0
    %3160 = vmatpush1.msra.mxu0 0.0
    %3161 = vmatprep.subr.mxu0 0.0
    %3162 = vmatpush1.msra.mxu0 0.0
    %3163 = vmatprep.subr.mxu0 0.0
    %3164 = vmatpush1.msra.mxu0 0.0
    %3165 = vmatprep.subr.mxu0 0.0
    %3166 = vmatpush1.msra.mxu0 0.0
    %3167 = vmatprep.subr.mxu0 0.0
    %3168 = vmatpush1.msra.mxu0 0.0
    %3169 = vmatprep.subr.mxu0 0.0
    %3170 = vmatpush1.msra.mxu0 0.0
    %3171 = vmatprep.subr.mxu0 0.0
    %3172 = vmatpush1.msra.mxu0 0.0
    %3173 = vmatprep.subr.mxu0 0.0
    %3174 = vmatpush1.msra.mxu0 0.0
    %3175 = vmatprep.subr.mxu0 0.0
    %3176 = vmatpush1.msra.mxu0 0.0
    %3177 = vmatprep.subr.mxu0 0.0
    %3178 = vmatpush1.msra.mxu0 0.0
    %3179 = vmatprep.subr.mxu0 0.0
    %3180 = vmatpush1.msra.mxu0 0.0
    %3181 = vmatprep.subr.mxu0 0.0
    %3182 = vmatpush1.msra.mxu0 0.0
    %3183 = vmatprep.subr.mxu0 0.0
    %3184 = vmatpush1.msra.mxu0 0.0
    %3185 = vmatprep.subr.mxu0 0.0
    %3186 = vmatpush1.msra.mxu0 0.0
    %3187 = vmatprep.subr.mxu0 0.0
    %3188 = vmatpush1.msra.mxu0 0.0
    %3189 = vmatprep.subr.mxu0 0.0
    %3190 = vmatpush1.msra.mxu0 0.0
    %3191 = vmatprep.subr.mxu0 0.0
    %3192 = vmatpush1.msra.mxu0 0.0
    %3193 = vmatprep.subr.mxu0 0.0
    %3194 = vmatpush1.msra.mxu0 0.0
    %3195 = vmatprep.subr.mxu0 0.0
    %3196 = vmatpush1.msra.mxu0 0.0
    %3197 = vmatprep.subr.mxu0 0.0
    %3198 = vmatpush1.msra.mxu0 0.0
    %3199 = vmatprep.subr.mxu0 0.0
    %3200 = vmatpush1.msra.mxu0 0.0
    %3201 = vmatprep.subr.mxu0 0.0
    %3202 = vmatpush1.msra.mxu0 0.0
    %3203 = vmatprep.subr.mxu0 0.0
    %3204 = vmatpush1.msra.mxu0 0.0
    %3205 = vmatprep.subr.mxu0 0.0
    %3206 = vmatpush1.msra.mxu0 0.0
    %3207 = vmatprep.subr.mxu0 0.0
    %3208 = vmatpush1.msra.mxu0 0.0
    %3209 = vmatprep.subr.mxu0 0.0
    %3210 = vmatpush1.msra.mxu0 0.0
    %3211 = vmatprep.subr.mxu0 0.0
    %3212 = vmatpush1.msra.mxu0 0.0
    %3213 = vmatprep.subr.mxu0 0.0
    %3214 = vmatpush1.msra.mxu0 0.0
    %3215 = vmatprep.subr.mxu0 0.0
    %3216 = vmatpush1.msra.mxu0 0.0
    %3217 = vmatprep.subr.mxu0 0.0
    %3218 = vmatpush1.msra.mxu0 0.0
    %3219 = vmatprep.mubr.f32.mxu0 0.0
    %3220 = vmatmul.mubr.f32.gmra.mrb[0].mxu0 %v3082
    %v3221 = vpop.f32.mrb[0].mxu0
    %v3222 = vadd.f32 %v3052, %v3221
    %v3223 = vpop.f32.mrb[0].mxu0
    %v3224 = vadd.f32 %v3056, %v3223
    %3225 = vdwg.mxu0
    %3226 = vmatprep.subr.mxu0 %v3036
    %3227 = vmatpush1.msra.mxu0 %v3035
    %3228 = vmatprep.subr.mxu0 0.0
    %3229 = vmatpush1.msra.mxu0 0.0
    %3230 = vmatprep.subr.mxu0 0.0
    %3231 = vmatpush1.msra.mxu0 0.0
    %3232 = vmatprep.subr.mxu0 0.0
    %3233 = vmatpush1.msra.mxu0 0.0
    %3234 = vmatprep.subr.mxu0 0.0
    %3235 = vmatpush1.msra.mxu0 0.0
    %3236 = vmatprep.subr.mxu0 0.0
    %3237 = vmatpush1.msra.mxu0 0.0
    %3238 = vmatprep.subr.mxu0 0.0
    %3239 = vmatpush1.msra.mxu0 0.0
    %3240 = vmatprep.subr.mxu0 0.0
    %3241 = vmatpush1.msra.mxu0 0.0
    %3242 = vmatprep.subr.mxu0 0.0
    %3243 = vmatpush1.msra.mxu0 0.0
    %3244 = vmatprep.subr.mxu0 0.0
    %3245 = vmatpush1.msra.mxu0 0.0
    %3246 = vmatprep.subr.mxu0 0.0
    %3247 = vmatpush1.msra.mxu0 0.0
    %3248 = vmatprep.subr.mxu0 0.0
    %3249 = vmatpush1.msra.mxu0 0.0
    %3250 = vmatprep.subr.mxu0 0.0
    %3251 = vmatpush1.msra.mxu0 0.0
    %3252 = vmatprep.subr.mxu0 0.0
    %3253 = vmatpush1.msra.mxu0 0.0
    %3254 = vmatprep.subr.mxu0 0.0
    %3255 = vmatpush1.msra.mxu0 0.0
    %3256 = vmatprep.subr.mxu0 0.0
    %3257 = vmatpush1.msra.mxu0 0.0
    %3258 = vmatprep.subr.mxu0 0.0
    %3259 = vmatpush1.msra.mxu0 0.0
    %3260 = vmatprep.subr.mxu0 0.0
    %3261 = vmatpush1.msra.mxu0 0.0
    %3262 = vmatprep.subr.mxu0 0.0
    %3263 = vmatpush1.msra.mxu0 0.0
    %3264 = vmatprep.subr.mxu0 0.0
    %3265 = vmatpush1.msra.mxu0 0.0
    %3266 = vmatprep.subr.mxu0 0.0
    %3267 = vmatpush1.msra.mxu0 0.0
    %3268 = vmatprep.subr.mxu0 0.0
    %3269 = vmatpush1.msra.mxu0 0.0
    %3270 = vmatprep.subr.mxu0 0.0
    %3271 = vmatpush1.msra.mxu0 0.0
    %3272 = vmatprep.subr.mxu0 0.0
    %3273 = vmatpush1.msra.mxu0 0.0
    %3274 = vmatprep.subr.mxu0 0.0
    %3275 = vmatpush1.msra.mxu0 0.0
    %3276 = vmatprep.subr.mxu0 0.0
    %3277 = vmatpush1.msra.mxu0 0.0
    %3278 = vmatprep.subr.mxu0 0.0
    %3279 = vmatpush1.msra.mxu0 0.0
    %3280 = vmatprep.subr.mxu0 0.0
    %3281 = vmatpush1.msra.mxu0 0.0
    %3282 = vmatprep.subr.mxu0 0.0
    %3283 = vmatpush1.msra.mxu0 0.0
    %3284 = vmatprep.subr.mxu0 0.0
    %3285 = vmatpush1.msra.mxu0 0.0
    %3286 = vmatprep.subr.mxu0 0.0
    %3287 = vmatpush1.msra.mxu0 0.0
    %3288 = vmatprep.subr.mxu0 0.0
    %3289 = vmatpush1.msra.mxu0 0.0
    %3290 = vmatprep.mubr.f32.mxu0 0.0
    %3291 = vmatmul.mubr.f32.gmra.mrb[0].mxu0 %v3082
    %v3292 = vpop.f32.mrb[0].mxu0
    %v3293 = vadd.f32 %v3060, %v3292
    %v3294 = vpop.f32.mrb[0].mxu0
    %v3295 = vadd.f32 %v3064, %v3294
    %3296 = vdwg.mxu0
    %3297 = vmatprep.subr.mxu0 %v3038
    %3298 = vmatpush1.msra.mxu0 %v3037
    %3299 = vmatprep.subr.mxu0 0.0
    %3300 = vmatpush1.msra.mxu0 0.0
    %3301 = vmatprep.subr.mxu0 0.0
    %3302 = vmatpush1.msra.mxu0 0.0
    %3303 = vmatprep.subr.mxu0 0.0
    %3304 = vmatpush1.msra.mxu0 0.0
    %3305 = vmatprep.subr.mxu0 0.0
    %3306 = vmatpush1.msra.mxu0 0.0
    %3307 = vmatprep.subr.mxu0 0.0
    %3308 = vmatpush1.msra.mxu0 0.0
    %3309 = vmatprep.subr.mxu0 0.0
    %3310 = vmatpush1.msra.mxu0 0.0
    %3311 = vmatprep.subr.mxu0 0.0
    %3312 = vmatpush1.msra.mxu0 0.0
    %3313 = vmatprep.subr.mxu0 0.0
    %3314 = vmatpush1.msra.mxu0 0.0
    %3315 = vmatprep.subr.mxu0 0.0
    %3316 = vmatpush1.msra.mxu0 0.0
    %3317 = vmatprep.subr.mxu0 0.0
    %3318 = vmatpush1.msra.mxu0 0.0
    %3319 = vmatprep.subr.mxu0 0.0
    %3320 = vmatpush1.msra.mxu0 0.0
    %3321 = vmatprep.subr.mxu0 0.0
    %3322 = vmatpush1.msra.mxu0 0.0
    %3323 = vmatprep.subr.mxu0 0.0
    %3324 = vmatpush1.msra.mxu0 0.0
    %3325 = vmatprep.subr.mxu0 0.0
    %3326 = vmatpush1.msra.mxu0 0.0
    %3327 = vmatprep.subr.mxu0 0.0
    %3328 = vmatpush1.msra.mxu0 0.0
    %3329 = vmatprep.subr.mxu0 0.0
    %3330 = vmatpush1.msra.mxu0 0.0
    %3331 = vmatprep.subr.mxu0 0.0
    %3332 = vmatpush1.msra.mxu0 0.0
    %3333 = vmatprep.subr.mxu0 0.0
    %3334 = vmatpush1.msra.mxu0 0.0
    %3335 = vmatprep.subr.mxu0 0.0
    %3336 = vmatpush1.msra.mxu0 0.0
    %3337 = vmatprep.subr.mxu0 0.0
    %3338 = vmatpush1.msra.mxu0 0.0
    %3339 = vmatprep.subr.mxu0 0.0
    %3340 = vmatpush1.msra.mxu0 0.0
    %3341 = vmatprep.subr.mxu0 0.0
    %3342 = vmatpush1.msra.mxu0 0.0
    %3343 = vmatprep.subr.mxu0 0.0
    %3344 = vmatpush1.msra.mxu0 0.0
    %3345 = vmatprep.subr.mxu0 0.0
    %3346 = vmatpush1.msra.mxu0 0.0
    %3347 = vmatprep.subr.mxu0 0.0
    %3348 = vmatpush1.msra.mxu0 0.0
    %3349 = vmatprep.subr.mxu0 0.0
    %3350 = vmatpush1.msra.mxu0 0.0
    %3351 = vmatprep.subr.mxu0 0.0
    %3352 = vmatpush1.msra.mxu0 0.0
    %3353 = vmatprep.subr.mxu0 0.0
    %3354 = vmatpush1.msra.mxu0 0.0
    %3355 = vmatprep.subr.mxu0 0.0
    %3356 = vmatpush1.msra.mxu0 0.0
    %3357 = vmatprep.subr.mxu0 0.0
    %3358 = vmatpush1.msra.mxu0 0.0
    %3359 = vmatprep.subr.mxu0 0.0
    %3360 = vmatpush1.msra.mxu0 0.0
    %3361 = vmatprep.mubr.f32.mxu0 0.0
    %3362 = vmatmul.mubr.f32.gmra.mrb[0].mxu0 %v3082
    %v3363 = vpop.f32.mrb[0].mxu0
    %v3364 = vadd.f32 %v3068, %v3363
    %v3365 = vpop.f32.mrb[0].mxu0
    %v3366 = vadd.f32 %v3072, %v3365
    %3367 = vdwg.mxu0
    %v3370 = vunpack.c.l.s4 1983009808
    %v3371 = vunpack.c.0.s8 %v3370
    %v3372 = vlaneseq
    %v3373 = vshrl.u32 %v3372, 7
    %v3374 = vsub.s32 %v3371, %v3373
    %v3375 = vrot.slane %v3030, %v3374
    %v3376 = vcombine.high %v3375, %v3375
    %v3379 = vpack.c.bf16 %v3375, %v3375
    %v3380 = vpack.c.bf16 %v3376, %v3376
    %v3381 = vld [vmem:[#allocation4] sm:$0xff]
    %v3382 = vld [vmem:[#allocation4 + $0x8] sm:$0xff]
    %v3383 = vld [vmem:[#allocation4 + $0x10] sm:$0xff]
    %v3384 = vld [vmem:[#allocation4 + $0x18] sm:$0xff]
    %v3385 = vld [vmem:[#allocation4 + $0x20] sm:$0xff]
    %v3386 = vld [vmem:[#allocation4 + $0x28] sm:$0xff]
    %v3387 = vld [vmem:[#allocation4 + $0x30] sm:$0xff]
    %v3388 = vld [vmem:[#allocation4 + $0x38] sm:$0xff]
    %v3389 = vld [vmem:[#allocation4 + $0x40] sm:$0xff]
    %v3390 = vld [vmem:[#allocation4 + $0x48] sm:$0xff]
    %v3391 = vld [vmem:[#allocation4 + $0x50] sm:$0xff]
    %v3392 = vld [vmem:[#allocation4 + $0x58] sm:$0xff]
    %v3393 = vld [vmem:[#allocation4 + $0x60] sm:$0xff]
    %v3394 = vld [vmem:[#allocation4 + $0x68] sm:$0xff]
    %v3395 = vld [vmem:[#allocation4 + $0x70] sm:$0xff]
    %v3396 = vld [vmem:[#allocation4 + $0x78] sm:$0xff]
    %v3397 = vld [vmem:[#allocation4 + $0x80] sm:$0xff]
    %v3398 = vld [vmem:[#allocation4 + $0x88] sm:$0xff]
    %v3399 = vld [vmem:[#allocation4 + $0x90] sm:$0xff]
    %v3400 = vld [vmem:[#allocation4 + $0x98] sm:$0xff]
    %v3401 = vld [vmem:[#allocation4 + $0xa0] sm:$0xff]
    %v3402 = vld [vmem:[#allocation4 + $0xa8] sm:$0xff]
    %v3403 = vld [vmem:[#allocation4 + $0xb0] sm:$0xff]
    %v3404 = vld [vmem:[#allocation4 + $0xb8] sm:$0xff]
    %v3405 = vld [vmem:[#allocation4 + $0xc0] sm:$0xff]
    %v3406 = vld [vmem:[#allocation4 + $0xc8] sm:$0xff]
    %v3407 = vld [vmem:[#allocation4 + $0xd0] sm:$0xff]
    %v3408 = vld [vmem:[#allocation4 + $0xd8] sm:$0xff]
    %v3409 = vld [vmem:[#allocation4 + $0xe0] sm:$0xff]
    %v3410 = vld [vmem:[#allocation4 + $0xe8] sm:$0xff]
    %v3411 = vld [vmem:[#allocation4 + $0xf0] sm:$0xff]
    %v3412 = vld [vmem:[#allocation4 + $0xf8] sm:$0xff]
    %v3413 = vld [vmem:[#allocation4 + $0x100] sm:$0xff]
    %v3414 = vld [vmem:[#allocation4 + $0x108] sm:$0xff]
    %v3415 = vld [vmem:[#allocation4 + $0x110] sm:$0xff]
    %v3416 = vld [vmem:[#allocation4 + $0x118] sm:$0xff]
    %v3417 = vld [vmem:[#allocation4 + $0x120] sm:$0xff]
    %v3418 = vld [vmem:[#allocation4 + $0x128] sm:$0xff]
    %v3419 = vld [vmem:[#allocation4 + $0x130] sm:$0xff]
    %v3420 = vld [vmem:[#allocation4 + $0x138] sm:$0xff]
    %v3421 = vld [vmem:[#allocation4 + $0x140] sm:$0xff]
    %v3422 = vld [vmem:[#allocation4 + $0x148] sm:$0xff]
    %v3423 = vld [vmem:[#allocation4 + $0x150] sm:$0xff]
    %v3424 = vld [vmem:[#allocation4 + $0x158] sm:$0xff]
    %v3425 = vld [vmem:[#allocation4 + $0x160] sm:$0xff]
    %v3426 = vld [vmem:[#allocation4 + $0x168] sm:$0xff]
    %v3427 = vld [vmem:[#allocation4 + $0x170] sm:$0xff]
    %v3428 = vld [vmem:[#allocation4 + $0x178] sm:$0xff]
    %v3429 = vld [vmem:[#allocation4 + $0x180] sm:$0xff]
    %v3430 = vld [vmem:[#allocation4 + $0x188] sm:$0xff]
    %v3431 = vld [vmem:[#allocation4 + $0x190] sm:$0xff]
    %v3432 = vld [vmem:[#allocation4 + $0x198] sm:$0xff]
    %v3433 = vld [vmem:[#allocation4 + $0x1a0] sm:$0xff]
    %v3434 = vld [vmem:[#allocation4 + $0x1a8] sm:$0xff]
    %v3435 = vld [vmem:[#allocation4 + $0x1b0] sm:$0xff]
    %v3436 = vld [vmem:[#allocation4 + $0x1b8] sm:$0xff]
    %v3437 = vld [vmem:[#allocation4 + $0x1c0] sm:$0xff]
    %v3438 = vld [vmem:[#allocation4 + $0x1c8] sm:$0xff]
    %v3439 = vld [vmem:[#allocation4 + $0x1d0] sm:$0xff]
    %v3440 = vld [vmem:[#allocation4 + $0x1d8] sm:$0xff]
    %v3441 = vld [vmem:[#allocation4 + $0x1e0] sm:$0xff]
    %v3442 = vld [vmem:[#allocation4 + $0x1e8] sm:$0xff]
    %v3443 = vld [vmem:[#allocation4 + $0x1f0] sm:$0xff]
    %v3444 = vld [vmem:[#allocation4 + $0x1f8] sm:$0xff]
    %v3445 = vld [vmem:[#allocation4 + $0x200] sm:$0xff]
    %v3446 = vld [vmem:[#allocation4 + $0x208] sm:$0xff]
    %v3447 = vld [vmem:[#allocation4 + $0x210] sm:$0xff]
    %v3448 = vld [vmem:[#allocation4 + $0x218] sm:$0xff]
    %v3449 = vld [vmem:[#allocation4 + $0x220] sm:$0xff]
    %v3450 = vld [vmem:[#allocation4 + $0x228] sm:$0xff]
    %v3451 = vld [vmem:[#allocation4 + $0x230] sm:$0xff]
    %v3452 = vld [vmem:[#allocation4 + $0x238] sm:$0xff]
    %v3453 = vld [vmem:[#allocation4 + $0x240] sm:$0xff]
    %v3454 = vld [vmem:[#allocation4 + $0x248] sm:$0xff]
    %v3455 = vld [vmem:[#allocation4 + $0x250] sm:$0xff]
    %v3456 = vld [vmem:[#allocation4 + $0x258] sm:$0xff]
    %v3457 = vld [vmem:[#allocation4 + $0x260] sm:$0xff]
    %v3458 = vld [vmem:[#allocation4 + $0x268] sm:$0xff]
    %v3459 = vld [vmem:[#allocation4 + $0x270] sm:$0xff]
    %v3460 = vld [vmem:[#allocation4 + $0x278] sm:$0xff]
    %v3461 = vld [vmem:[#allocation4 + $0x280] sm:$0xff]
    %v3462 = vld [vmem:[#allocation4 + $0x288] sm:$0xff]
    %v3463 = vld [vmem:[#allocation4 + $0x290] sm:$0xff]
    %v3464 = vld [vmem:[#allocation4 + $0x298] sm:$0xff]
    %v3465 = vld [vmem:[#allocation4 + $0x2a0] sm:$0xff]
    %v3466 = vld [vmem:[#allocation4 + $0x2a8] sm:$0xff]
    %v3467 = vld [vmem:[#allocation4 + $0x2b0] sm:$0xff]
    %v3468 = vld [vmem:[#allocation4 + $0x2b8] sm:$0xff]
    %v3469 = vld [vmem:[#allocation4 + $0x2c0] sm:$0xff]
    %v3470 = vld [vmem:[#allocation4 + $0x2c8] sm:$0xff]
    %v3471 = vld [vmem:[#allocation4 + $0x2d0] sm:$0xff]
    %v3472 = vld [vmem:[#allocation4 + $0x2d8] sm:$0xff]
    %v3473 = vld [vmem:[#allocation4 + $0x2e0] sm:$0xff]
    %v3474 = vld [vmem:[#allocation4 + $0x2e8] sm:$0xff]
    %v3475 = vld [vmem:[#allocation4 + $0x2f0] sm:$0xff]
    %v3476 = vld [vmem:[#allocation4 + $0x2f8] sm:$0xff]
    %v3477 = vld [vmem:[#allocation4 + $0x300] sm:$0xff]
    %v3478 = vld [vmem:[#allocation4 + $0x308] sm:$0xff]
    %v3479 = vld [vmem:[#allocation4 + $0x310] sm:$0xff]
    %v3480 = vld [vmem:[#allocation4 + $0x318] sm:$0xff]
    %v3481 = vld [vmem:[#allocation4 + $0x320] sm:$0xff]
    %v3482 = vld [vmem:[#allocation4 + $0x328] sm:$0xff]
    %v3483 = vld [vmem:[#allocation4 + $0x330] sm:$0xff]
    %v3484 = vld [vmem:[#allocation4 + $0x338] sm:$0xff]
    %v3485 = vld [vmem:[#allocation4 + $0x340] sm:$0xff]
    %v3486 = vld [vmem:[#allocation4 + $0x348] sm:$0xff]
    %v3487 = vld [vmem:[#allocation4 + $0x350] sm:$0xff]
    %v3488 = vld [vmem:[#allocation4 + $0x358] sm:$0xff]
    %v3489 = vld [vmem:[#allocation4 + $0x360] sm:$0xff]
    %v3490 = vld [vmem:[#allocation4 + $0x368] sm:$0xff]
    %v3491 = vld [vmem:[#allocation4 + $0x370] sm:$0xff]
    %v3492 = vld [vmem:[#allocation4 + $0x378] sm:$0xff]
    %v3493 = vld [vmem:[#allocation4 + $0x380] sm:$0xff]
    %v3494 = vld [vmem:[#allocation4 + $0x388] sm:$0xff]
    %v3495 = vld [vmem:[#allocation4 + $0x390] sm:$0xff]
    %v3496 = vld [vmem:[#allocation4 + $0x398] sm:$0xff]
    %v3497 = vld [vmem:[#allocation4 + $0x3a0] sm:$0xff]
    %v3498 = vld [vmem:[#allocation4 + $0x3a8] sm:$0xff]
    %v3499 = vld [vmem:[#allocation4 + $0x3b0] sm:$0xff]
    %v3500 = vld [vmem:[#allocation4 + $0x3b8] sm:$0xff]
    %v3501 = vld [vmem:[#allocation4 + $0x3c0] sm:$0xff]
    %v3502 = vld [vmem:[#allocation4 + $0x3c8] sm:$0xff]
    %v3503 = vld [vmem:[#allocation4 + $0x3d0] sm:$0xff]
    %v3504 = vld [vmem:[#allocation4 + $0x3d8] sm:$0xff]
    %v3505 = vld [vmem:[#allocation4 + $0x3e0] sm:$0xff]
    %v3506 = vld [vmem:[#allocation4 + $0x3e8] sm:$0xff]
    %v3507 = vld [vmem:[#allocation4 + $0x3f0] sm:$0xff]
    %v3508 = vld [vmem:[#allocation4 + $0x3f8] sm:$0xff]
    %v3637 = vunpack.c.l.b16 %v3381
    %v3638 = vunpack.c.h.b16 %v3381
    %v3639 = vunpack.c.l.b16 %v3382
    %v3640 = vunpack.c.h.b16 %v3382
    %v3641 = vunpack.c.l.b16 %v3383
    %v3642 = vunpack.c.h.b16 %v3383
    %v3643 = vunpack.c.l.b16 %v3384
    %v3644 = vunpack.c.h.b16 %v3384
    %v3645 = vunpack.c.l.b16 %v3385
    %v3646 = vunpack.c.h.b16 %v3385
    %v3647 = vunpack.c.l.b16 %v3386
    %v3648 = vunpack.c.h.b16 %v3386
    %v3649 = vunpack.c.l.b16 %v3387
    %v3650 = vunpack.c.h.b16 %v3387
    %v3651 = vunpack.c.l.b16 %v3388
    %v3652 = vunpack.c.h.b16 %v3388
    %v3653 = vunpack.c.l.b16 %v3389
    %v3654 = vunpack.c.h.b16 %v3389
    %v3655 = vunpack.c.l.b16 %v3390
    %v3656 = vunpack.c.h.b16 %v3390
    %v3657 = vunpack.c.l.b16 %v3391
    %v3658 = vunpack.c.h.b16 %v3391
    %v3659 = vunpack.c.l.b16 %v3392
    %v3660 = vunpack.c.h.b16 %v3392
    %v3661 = vunpack.c.l.b16 %v3393
    %v3662 = vunpack.c.h.b16 %v3393
    %v3663 = vunpack.c.l.b16 %v3394
    %v3664 = vunpack.c.h.b16 %v3394
    %v3665 = vunpack.c.l.b16 %v3395
    %v3666 = vunpack.c.h.b16 %v3395
    %v3667 = vunpack.c.l.b16 %v3396
    %v3668 = vunpack.c.h.b16 %v3396
    %v3669 = vunpack.c.l.b16 %v3397
    %v3670 = vunpack.c.h.b16 %v3397
    %v3671 = vunpack.c.l.b16 %v3398
    %v3672 = vunpack.c.h.b16 %v3398
    %v3673 = vunpack.c.l.b16 %v3399
    %v3674 = vunpack.c.h.b16 %v3399
    %v3675 = vunpack.c.l.b16 %v3400
    %v3676 = vunpack.c.h.b16 %v3400
    %v3677 = vunpack.c.l.b16 %v3401
    %v3678 = vunpack.c.h.b16 %v3401
    %v3679 = vunpack.c.l.b16 %v3402
    %v3680 = vunpack.c.h.b16 %v3402
    %v3681 = vunpack.c.l.b16 %v3403
    %v3682 = vunpack.c.h.b16 %v3403
    %v3683 = vunpack.c.l.b16 %v3404
    %v3684 = vunpack.c.h.b16 %v3404
    %v3685 = vunpack.c.l.b16 %v3405
    %v3686 = vunpack.c.h.b16 %v3405
    %v3687 = vunpack.c.l.b16 %v3406
    %v3688 = vunpack.c.h.b16 %v3406
    %v3689 = vunpack.c.l.b16 %v3407
    %v3690 = vunpack.c.h.b16 %v3407
    %v3691 = vunpack.c.l.b16 %v3408
    %v3692 = vunpack.c.h.b16 %v3408
    %v3693 = vunpack.c.l.b16 %v3409
    %v3694 = vunpack.c.h.b16 %v3409
    %v3695 = vunpack.c.l.b16 %v3410
    %v3696 = vunpack.c.h.b16 %v3410
    %v3697 = vunpack.c.l.b16 %v3411
    %v3698 = vunpack.c.h.b16 %v3411
    %v3699 = vunpack.c.l.b16 %v3412
    %v3700 = vunpack.c.h.b16 %v3412
    %v3701 = vunpack.c.l.b16 %v3413
    %v3702 = vunpack.c.h.b16 %v3413
    %v3703 = vunpack.c.l.b16 %v3414
    %v3704 = vunpack.c.h.b16 %v3414
    %v3705 = vunpack.c.l.b16 %v3415
    %v3706 = vunpack.c.h.b16 %v3415
    %v3707 = vunpack.c.l.b16 %v3416
    %v3708 = vunpack.c.h.b16 %v3416
    %v3709 = vunpack.c.l.b16 %v3417
    %v3710 = vunpack.c.h.b16 %v3417
    %v3711 = vunpack.c.l.b16 %v3418
    %v3712 = vunpack.c.h.b16 %v3418
    %v3713 = vunpack.c.l.b16 %v3419
    %v3714 = vunpack.c.h.b16 %v3419
    %v3715 = vunpack.c.l.b16 %v3420
    %v3716 = vunpack.c.h.b16 %v3420
    %v3717 = vunpack.c.l.b16 %v3421
    %v3718 = vunpack.c.h.b16 %v3421
    %v3719 = vunpack.c.l.b16 %v3422
    %v3720 = vunpack.c.h.b16 %v3422
    %v3721 = vunpack.c.l.b16 %v3423
    %v3722 = vunpack.c.h.b16 %v3423
    %v3723 = vunpack.c.l.b16 %v3424
    %v3724 = vunpack.c.h.b16 %v3424
    %v3725 = vunpack.c.l.b16 %v3425
    %v3726 = vunpack.c.h.b16 %v3425
    %v3727 = vunpack.c.l.b16 %v3426
    %v3728 = vunpack.c.h.b16 %v3426
    %v3729 = vunpack.c.l.b16 %v3427
    %v3730 = vunpack.c.h.b16 %v3427
    %v3731 = vunpack.c.l.b16 %v3428
    %v3732 = vunpack.c.h.b16 %v3428
    %v3733 = vunpack.c.l.b16 %v3429
    %v3734 = vunpack.c.h.b16 %v3429
    %v3735 = vunpack.c.l.b16 %v3430
    %v3736 = vunpack.c.h.b16 %v3430
    %v3737 = vunpack.c.l.b16 %v3431
    %v3738 = vunpack.c.h.b16 %v3431
    %v3739 = vunpack.c.l.b16 %v3432
    %v3740 = vunpack.c.h.b16 %v3432
    %v3741 = vunpack.c.l.b16 %v3433
    %v3742 = vunpack.c.h.b16 %v3433
    %v3743 = vunpack.c.l.b16 %v3434
    %v3744 = vunpack.c.h.b16 %v3434
    %v3745 = vunpack.c.l.b16 %v3435
    %v3746 = vunpack.c.h.b16 %v3435
    %v3747 = vunpack.c.l.b16 %v3436
    %v3748 = vunpack.c.h.b16 %v3436
    %v3749 = vunpack.c.l.b16 %v3437
    %v3750 = vunpack.c.h.b16 %v3437
    %v3751 = vunpack.c.l.b16 %v3438
    %v3752 = vunpack.c.h.b16 %v3438
    %v3753 = vunpack.c.l.b16 %v3439
    %v3754 = vunpack.c.h.b16 %v3439
    %v3755 = vunpack.c.l.b16 %v3440
    %v3756 = vunpack.c.h.b16 %v3440
    %v3757 = vunpack.c.l.b16 %v3441
    %v3758 = vunpack.c.h.b16 %v3441
    %v3759 = vunpack.c.l.b16 %v3442
    %v3760 = vunpack.c.h.b16 %v3442
    %v3761 = vunpack.c.l.b16 %v3443
    %v3762 = vunpack.c.h.b16 %v3443
    %v3763 = vunpack.c.l.b16 %v3444
    %v3764 = vunpack.c.h.b16 %v3444
    %v3765 = vunpack.c.l.b16 %v3445
    %v3766 = vunpack.c.h.b16 %v3445
    %v3767 = vunpack.c.l.b16 %v3446
    %v3768 = vunpack.c.h.b16 %v3446
    %v3769 = vunpack.c.l.b16 %v3447
    %v3770 = vunpack.c.h.b16 %v3447
    %v3771 = vunpack.c.l.b16 %v3448
    %v3772 = vunpack.c.h.b16 %v3448
    %v3773 = vunpack.c.l.b16 %v3449
    %v3774 = vunpack.c.h.b16 %v3449
    %v3775 = vunpack.c.l.b16 %v3450
    %v3776 = vunpack.c.h.b16 %v3450
    %v3777 = vunpack.c.l.b16 %v3451
    %v3778 = vunpack.c.h.b16 %v3451
    %v3779 = vunpack.c.l.b16 %v3452
    %v3780 = vunpack.c.h.b16 %v3452
    %v3781 = vunpack.c.l.b16 %v3453
    %v3782 = vunpack.c.h.b16 %v3453
    %v3783 = vunpack.c.l.b16 %v3454
    %v3784 = vunpack.c.h.b16 %v3454
    %v3785 = vunpack.c.l.b16 %v3455
    %v3786 = vunpack.c.h.b16 %v3455
    %v3787 = vunpack.c.l.b16 %v3456
    %v3788 = vunpack.c.h.b16 %v3456
    %v3789 = vunpack.c.l.b16 %v3457
    %v3790 = vunpack.c.h.b16 %v3457
    %v3791 = vunpack.c.l.b16 %v3458
    %v3792 = vunpack.c.h.b16 %v3458
    %v3793 = vunpack.c.l.b16 %v3459
    %v3794 = vunpack.c.h.b16 %v3459
    %v3795 = vunpack.c.l.b16 %v3460
    %v3796 = vunpack.c.h.b16 %v3460
    %v3797 = vunpack.c.l.b16 %v3461
    %v3798 = vunpack.c.h.b16 %v3461
    %v3799 = vunpack.c.l.b16 %v3462
    %v3800 = vunpack.c.h.b16 %v3462
    %v3801 = vunpack.c.l.b16 %v3463
    %v3802 = vunpack.c.h.b16 %v3463
    %v3803 = vunpack.c.l.b16 %v3464
    %v3804 = vunpack.c.h.b16 %v3464
    %v3805 = vunpack.c.l.b16 %v3465
    %v3806 = vunpack.c.h.b16 %v3465
    %v3807 = vunpack.c.l.b16 %v3466
    %v3808 = vunpack.c.h.b16 %v3466
    %v3809 = vunpack.c.l.b16 %v3467
    %v3810 = vunpack.c.h.b16 %v3467
    %v3811 = vunpack.c.l.b16 %v3468
    %v3812 = vunpack.c.h.b16 %v3468
    %v3813 = vunpack.c.l.b16 %v3469
    %v3814 = vunpack.c.h.b16 %v3469
    %v3815 = vunpack.c.l.b16 %v3470
    %v3816 = vunpack.c.h.b16 %v3470
    %v3817 = vunpack.c.l.b16 %v3471
    %v3818 = vunpack.c.h.b16 %v3471
    %v3819 = vunpack.c.l.b16 %v3472
    %v3820 = vunpack.c.h.b16 %v3472
    %v3821 = vunpack.c.l.b16 %v3473
    %v3822 = vunpack.c.h.b16 %v3473
    %v3823 = vunpack.c.l.b16 %v3474
    %v3824 = vunpack.c.h.b16 %v3474
    %v3825 = vunpack.c.l.b16 %v3475
    %v3826 = vunpack.c.h.b16 %v3475
    %v3827 = vunpack.c.l.b16 %v3476
    %v3828 = vunpack.c.h.b16 %v3476
    %v3829 = vunpack.c.l.b16 %v3477
    %v3830 = vunpack.c.h.b16 %v3477
    %v3831 = vunpack.c.l.b16 %v3478
    %v3832 = vunpack.c.h.b16 %v3478
    %v3833 = vunpack.c.l.b16 %v3479
    %v3834 = vunpack.c.h.b16 %v3479
    %v3835 = vunpack.c.l.b16 %v3480
    %v3836 = vunpack.c.h.b16 %v3480
    %v3837 = vunpack.c.l.b16 %v3481
    %v3838 = vunpack.c.h.b16 %v3481
    %v3839 = vunpack.c.l.b16 %v3482
    %v3840 = vunpack.c.h.b16 %v3482
    %v3841 = vunpack.c.l.b16 %v3483
    %v3842 = vunpack.c.h.b16 %v3483
    %v3843 = vunpack.c.l.b16 %v3484
    %v3844 = vunpack.c.h.b16 %v3484
    %v3845 = vunpack.c.l.b16 %v3485
    %v3846 = vunpack.c.h.b16 %v3485
    %v3847 = vunpack.c.l.b16 %v3486
    %v3848 = vunpack.c.h.b16 %v3486
    %v3849 = vunpack.c.l.b16 %v3487
    %v3850 = vunpack.c.h.b16 %v3487
    %v3851 = vunpack.c.l.b16 %v3488
    %v3852 = vunpack.c.h.b16 %v3488
    %v3853 = vunpack.c.l.b16 %v3489
    %v3854 = vunpack.c.h.b16 %v3489
    %v3855 = vunpack.c.l.b16 %v3490
    %v3856 = vunpack.c.h.b16 %v3490
    %v3857 = vunpack.c.l.b16 %v3491
    %v3858 = vunpack.c.h.b16 %v3491
    %v3859 = vunpack.c.l.b16 %v3492
    %v3860 = vunpack.c.h.b16 %v3492
    %v3861 = vunpack.c.l.b16 %v3493
    %v3862 = vunpack.c.h.b16 %v3493
    %v3863 = vunpack.c.l.b16 %v3494
    %v3864 = vunpack.c.h.b16 %v3494
    %v3865 = vunpack.c.l.b16 %v3495
    %v3866 = vunpack.c.h.b16 %v3495
    %v3867 = vunpack.c.l.b16 %v3496
    %v3868 = vunpack.c.h.b16 %v3496
    %v3869 = vunpack.c.l.b16 %v3497
    %v3870 = vunpack.c.h.b16 %v3497
    %v3871 = vunpack.c.l.b16 %v3498
    %v3872 = vunpack.c.h.b16 %v3498
    %v3873 = vunpack.c.l.b16 %v3499
    %v3874 = vunpack.c.h.b16 %v3499
    %v3875 = vunpack.c.l.b16 %v3500
    %v3876 = vunpack.c.h.b16 %v3500
    %v3877 = vunpack.c.l.b16 %v3501
    %v3878 = vunpack.c.h.b16 %v3501
    %v3879 = vunpack.c.l.b16 %v3502
    %v3880 = vunpack.c.h.b16 %v3502
    %v3881 = vunpack.c.l.b16 %v3503
    %v3882 = vunpack.c.h.b16 %v3503
    %v3883 = vunpack.c.l.b16 %v3504
    %v3884 = vunpack.c.h.b16 %v3504
    %v3885 = vunpack.c.l.b16 %v3505
    %v3886 = vunpack.c.h.b16 %v3505
    %v3887 = vunpack.c.l.b16 %v3506
    %v3888 = vunpack.c.h.b16 %v3506
    %v3889 = vunpack.c.l.b16 %v3507
    %v3890 = vunpack.c.h.b16 %v3507
    %v3891 = vunpack.c.l.b16 %v3508
    %v3892 = vunpack.c.h.b16 %v3508
    %v3893 = vpack.c.b16 %v3645, %v3637
    %v3894 = vpack.c.b16 %v3646, %v3638
    %v3895 = vpack.c.b16 %v3647, %v3639
    %v3896 = vpack.c.b16 %v3648, %v3640
    %v3897 = vpack.c.b16 %v3649, %v3641
    %v3898 = vpack.c.b16 %v3650, %v3642
    %v3899 = vpack.c.b16 %v3651, %v3643
    %v3900 = vpack.c.b16 %v3652, %v3644
    %v3901 = vpack.c.b16 %v3661, %v3653
    %v3902 = vpack.c.b16 %v3662, %v3654
    %v3903 = vpack.c.b16 %v3663, %v3655
    %v3904 = vpack.c.b16 %v3664, %v3656
    %v3905 = vpack.c.b16 %v3665, %v3657
    %v3906 = vpack.c.b16 %v3666, %v3658
    %v3907 = vpack.c.b16 %v3667, %v3659
    %v3908 = vpack.c.b16 %v3668, %v3660
    %v3909 = vpack.c.b16 %v3677, %v3669
    %v3910 = vpack.c.b16 %v3678, %v3670
    %v3911 = vpack.c.b16 %v3679, %v3671
    %v3912 = vpack.c.b16 %v3680, %v3672
    %v3913 = vpack.c.b16 %v3681, %v3673
    %v3914 = vpack.c.b16 %v3682, %v3674
    %v3915 = vpack.c.b16 %v3683, %v3675
    %v3916 = vpack.c.b16 %v3684, %v3676
    %v3917 = vpack.c.b16 %v3693, %v3685
    %v3918 = vpack.c.b16 %v3694, %v3686
    %v3919 = vpack.c.b16 %v3695, %v3687
    %v3920 = vpack.c.b16 %v3696, %v3688
    %v3921 = vpack.c.b16 %v3697, %v3689
    %v3922 = vpack.c.b16 %v3698, %v3690
    %v3923 = vpack.c.b16 %v3699, %v3691
    %v3924 = vpack.c.b16 %v3700, %v3692
    %v3925 = vpack.c.b16 %v3709, %v3701
    %v3926 = vpack.c.b16 %v3710, %v3702
    %v3927 = vpack.c.b16 %v3711, %v3703
    %v3928 = vpack.c.b16 %v3712, %v3704
    %v3929 = vpack.c.b16 %v3713, %v3705
    %v3930 = vpack.c.b16 %v3714, %v3706
    %v3931 = vpack.c.b16 %v3715, %v3707
    %v3932 = vpack.c.b16 %v3716, %v3708
    %v3933 = vpack.c.b16 %v3725, %v3717
    %v3934 = vpack.c.b16 %v3726, %v3718
    %v3935 = vpack.c.b16 %v3727, %v3719
    %v3936 = vpack.c.b16 %v3728, %v3720
    %v3937 = vpack.c.b16 %v3729, %v3721
    %v3938 = vpack.c.b16 %v3730, %v3722
    %v3939 = vpack.c.b16 %v3731, %v3723
    %v3940 = vpack.c.b16 %v3732, %v3724
    %v3941 = vpack.c.b16 %v3741, %v3733
    %v3942 = vpack.c.b16 %v3742, %v3734
    %v3943 = vpack.c.b16 %v3743, %v3735
    %v3944 = vpack.c.b16 %v3744, %v3736
    %v3945 = vpack.c.b16 %v3745, %v3737
    %v3946 = vpack.c.b16 %v3746, %v3738
    %v3947 = vpack.c.b16 %v3747, %v3739
    %v3948 = vpack.c.b16 %v3748, %v3740
    %v3949 = vpack.c.b16 %v3757, %v3749
    %v3950 = vpack.c.b16 %v3758, %v3750
    %v3951 = vpack.c.b16 %v3759, %v3751
    %v3952 = vpack.c.b16 %v3760, %v3752
    %v3953 = vpack.c.b16 %v3761, %v3753
    %v3954 = vpack.c.b16 %v3762, %v3754
    %v3955 = vpack.c.b16 %v3763, %v3755
    %v3956 = vpack.c.b16 %v3764, %v3756
    %v3957 = vpack.c.b16 %v3773, %v3765
    %v3958 = vpack.c.b16 %v3774, %v3766
    %v3959 = vpack.c.b16 %v3775, %v3767
    %v3960 = vpack.c.b16 %v3776, %v3768
    %v3961 = vpack.c.b16 %v3777, %v3769
    %v3962 = vpack.c.b16 %v3778, %v3770
    %v3963 = vpack.c.b16 %v3779, %v3771
    %v3964 = vpack.c.b16 %v3780, %v3772
    %v3965 = vpack.c.b16 %v3789, %v3781
    %v3966 = vpack.c.b16 %v3790, %v3782
    %v3967 = vpack.c.b16 %v3791, %v3783
    %v3968 = vpack.c.b16 %v3792, %v3784
    %v3969 = vpack.c.b16 %v3793, %v3785
    %v3970 = vpack.c.b16 %v3794, %v3786
    %v3971 = vpack.c.b16 %v3795, %v3787
    %v3972 = vpack.c.b16 %v3796, %v3788
    %v3973 = vpack.c.b16 %v3805, %v3797
    %v3974 = vpack.c.b16 %v3806, %v3798
    %v3975 = vpack.c.b16 %v3807, %v3799
    %v3976 = vpack.c.b16 %v3808, %v3800
    %v3977 = vpack.c.b16 %v3809, %v3801
    %v3978 = vpack.c.b16 %v3810, %v3802
    %v3979 = vpack.c.b16 %v3811, %v3803
    %v3980 = vpack.c.b16 %v3812, %v3804
    %v3981 = vpack.c.b16 %v3821, %v3813
    %v3982 = vpack.c.b16 %v3822, %v3814
    %v3983 = vpack.c.b16 %v3823, %v3815
    %v3984 = vpack.c.b16 %v3824, %v3816
    %v3985 = vpack.c.b16 %v3825, %v3817
    %v3986 = vpack.c.b16 %v3826, %v3818
    %v3987 = vpack.c.b16 %v3827, %v3819
    %v3988 = vpack.c.b16 %v3828, %v3820
    %v3989 = vpack.c.b16 %v3837, %v3829
    %v3990 = vpack.c.b16 %v3838, %v3830
    %v3991 = vpack.c.b16 %v3839, %v3831
    %v3992 = vpack.c.b16 %v3840, %v3832
    %v3993 = vpack.c.b16 %v3841, %v3833
    %v3994 = vpack.c.b16 %v3842, %v3834
    %v3995 = vpack.c.b16 %v3843, %v3835
    %v3996 = vpack.c.b16 %v3844, %v3836
    %v3997 = vpack.c.b16 %v3853, %v3845
    %v3998 = vpack.c.b16 %v3854, %v3846
    %v3999 = vpack.c.b16 %v3855, %v3847
    %v4000 = vpack.c.b16 %v3856, %v3848
    %v4001 = vpack.c.b16 %v3857, %v3849
    %v4002 = vpack.c.b16 %v3858, %v3850
    %v4003 = vpack.c.b16 %v3859, %v3851
    %v4004 = vpack.c.b16 %v3860, %v3852
    %v4005 = vpack.c.b16 %v3869, %v3861
    %v4006 = vpack.c.b16 %v3870, %v3862
    %v4007 = vpack.c.b16 %v3871, %v3863
    %v4008 = vpack.c.b16 %v3872, %v3864
    %v4009 = vpack.c.b16 %v3873, %v3865
    %v4010 = vpack.c.b16 %v3874, %v3866
    %v4011 = vpack.c.b16 %v3875, %v3867
    %v4012 = vpack.c.b16 %v3876, %v3868
    %v4013 = vpack.c.b16 %v3885, %v3877
    %v4014 = vpack.c.b16 %v3886, %v3878
    %v4015 = vpack.c.b16 %v3887, %v3879
    %v4016 = vpack.c.b16 %v3888, %v3880
    %v4017 = vpack.c.b16 %v3889, %v3881
    %v4018 = vpack.c.b16 %v3890, %v3882
    %v4019 = vpack.c.b16 %v3891, %v3883
    %v4020 = vpack.c.b16 %v3892, %v3884
    %4149 = vmatprep.subr.bf16.mxu0 %v3894
    %4150 = vmatpush1.bf16.msra.mxu0 %v3893
    %4151 = vmatprep.subr.bf16.mxu0 %v3902
    %4152 = vmatpush1.bf16.msra.mxu0 %v3901
    %4153 = vmatprep.subr.bf16.mxu0 %v3910
    %4154 = vmatpush1.bf16.msra.mxu0 %v3909
    %4155 = vmatprep.subr.bf16.mxu0 %v3918
    %4156 = vmatpush1.bf16.msra.mxu0 %v3917
    %4157 = vmatprep.subr.bf16.mxu0 %v3926
    %4158 = vmatpush1.bf16.msra.mxu0 %v3925
    %4159 = vmatprep.subr.bf16.mxu0 %v3934
    %4160 = vmatpush1.bf16.msra.mxu0 %v3933
    %4161 = vmatprep.subr.bf16.mxu0 %v3942
    %4162 = vmatpush1.bf16.msra.mxu0 %v3941
    %4163 = vmatprep.subr.bf16.mxu0 %v3950
    %4164 = vmatpush1.bf16.msra.mxu0 %v3949
    %4165 = vmatprep.subr.bf16.mxu0 %v3958
    %4166 = vmatpush1.bf16.msra.mxu0 %v3957
    %4167 = vmatprep.subr.bf16.mxu0 %v3966
    %4168 = vmatpush1.bf16.msra.mxu0 %v3965
    %4169 = vmatprep.subr.bf16.mxu0 %v3974
    %4170 = vmatpush1.bf16.msra.mxu0 %v3973
    %4171 = vmatprep.subr.bf16.mxu0 %v3982
    %4172 = vmatpush1.bf16.msra.mxu0 %v3981
    %4173 = vmatprep.subr.bf16.mxu0 %v3990
    %4174 = vmatpush1.bf16.msra.mxu0 %v3989
    %4175 = vmatprep.subr.bf16.mxu0 %v3998
    %4176 = vmatpush1.bf16.msra.mxu0 %v3997
    %4177 = vmatprep.subr.bf16.mxu0 %v4006
    %4178 = vmatpush1.bf16.msra.mxu0 %v4005
    %4179 = vmatprep.subr.bf16.mxu0 %v4014
    %4180 = vmatpush1.bf16.msra.mxu0 %v4013
    %4181 = vmatprep.mubr.bf16.mxu0 %v3380
    %4182 = vmatmul.mubr.bf16.gmra.mrb[0].mxu0 %v3379
    %v4183 = vpop.f32.mrb[0].mxu0
    %v4184 = vadd.f32 0.0, %v4183
    %v4185 = vpop.f32.mrb[0].mxu0
    %v4186 = vadd.f32 0.0, %v4185
    %v4187 = vpop.f32.mrb[0].mxu0
    %v4188 = vpop.f32.mrb[0].mxu0
    %4189 = vdwg.mxu0
    %4190 = vmatprep.subr.bf16.mxu0 %v3896
    %4191 = vmatpush1.bf16.msra.mxu0 %v3895
    %4192 = vmatprep.subr.bf16.mxu0 %v3904
    %4193 = vmatpush1.bf16.msra.mxu0 %v3903
    %4194 = vmatprep.subr.bf16.mxu0 %v3912
    %4195 = vmatpush1.bf16.msra.mxu0 %v3911
    %4196 = vmatprep.subr.bf16.mxu0 %v3920
    %4197 = vmatpush1.bf16.msra.mxu0 %v3919
    %4198 = vmatprep.subr.bf16.mxu0 %v3928
    %4199 = vmatpush1.bf16.msra.mxu0 %v3927
    %4200 = vmatprep.subr.bf16.mxu0 %v3936
    %4201 = vmatpush1.bf16.msra.mxu0 %v3935
    %4202 = vmatprep.subr.bf16.mxu0 %v3944
    %4203 = vmatpush1.bf16.msra.mxu0 %v3943
    %4204 = vmatprep.subr.bf16.mxu0 %v3952
    %4205 = vmatpush1.bf16.msra.mxu0 %v3951
    %4206 = vmatprep.subr.bf16.mxu0 %v3960
    %4207 = vmatpush1.bf16.msra.mxu0 %v3959
    %4208 = vmatprep.subr.bf16.mxu0 %v3968
    %4209 = vmatpush1.bf16.msra.mxu0 %v3967
    %4210 = vmatprep.subr.bf16.mxu0 %v3976
    %4211 = vmatpush1.bf16.msra.mxu0 %v3975
    %4212 = vmatprep.subr.bf16.mxu0 %v3984
    %4213 = vmatpush1.bf16.msra.mxu0 %v3983
    %4214 = vmatprep.subr.bf16.mxu0 %v3992
    %4215 = vmatpush1.bf16.msra.mxu0 %v3991
    %4216 = vmatprep.subr.bf16.mxu0 %v4000
    %4217 = vmatpush1.bf16.msra.mxu0 %v3999
    %4218 = vmatprep.subr.bf16.mxu0 %v4008
    %4219 = vmatpush1.bf16.msra.mxu0 %v4007
    %4220 = vmatprep.subr.bf16.mxu0 %v4016
    %4221 = vmatpush1.bf16.msra.mxu0 %v4015
    %4222 = vmatprep.mubr.bf16.mxu0 %v3380
    %4223 = vmatmul.mubr.bf16.gmra.mrb[0].mxu0 %v3379
    %v4224 = vpop.f32.mrb[0].mxu0
    %v4225 = vadd.f32 0.0, %v4224
    %v4226 = vpop.f32.mrb[0].mxu0
    %v4227 = vadd.f32 0.0, %v4226
    %v4228 = vpop.f32.mrb[0].mxu0
    %v4229 = vpop.f32.mrb[0].mxu0
    %4230 = vdwg.mxu0
    %4231 = vmatprep.subr.bf16.mxu0 %v3898
    %4232 = vmatpush1.bf16.msra.mxu0 %v3897
    %4233 = vmatprep.subr.bf16.mxu0 %v3906
    %4234 = vmatpush1.bf16.msra.mxu0 %v3905
    %4235 = vmatprep.subr.bf16.mxu0 %v3914
    %4236 = vmatpush1.bf16.msra.mxu0 %v3913
    %4237 = vmatprep.subr.bf16.mxu0 %v3922
    %4238 = vmatpush1.bf16.msra.mxu0 %v3921
    %4239 = vmatprep.subr.bf16.mxu0 %v3930
    %4240 = vmatpush1.bf16.msra.mxu0 %v3929
    %4241 = vmatprep.subr.bf16.mxu0 %v3938
    %4242 = vmatpush1.bf16.msra.mxu0 %v3937
    %4243 = vmatprep.subr.bf16.mxu0 %v3946
    %4244 = vmatpush1.bf16.msra.mxu0 %v3945
    %4245 = vmatprep.subr.bf16.mxu0 %v3954
    %4246 = vmatpush1.bf16.msra.mxu0 %v3953
    %4247 = vmatprep.subr.bf16.mxu0 %v3962
    %4248 = vmatpush1.bf16.msra.mxu0 %v3961
    %4249 = vmatprep.subr.bf16.mxu0 %v3970
    %4250 = vmatpush1.bf16.msra.mxu0 %v3969
    %4251 = vmatprep.subr.bf16.mxu0 %v3978
    %4252 = vmatpush1.bf16.msra.mxu0 %v3977
    %4253 = vmatprep.subr.bf16.mxu0 %v3986
    %4254 = vmatpush1.bf16.msra.mxu0 %v3985
    %4255 = vmatprep.subr.bf16.mxu0 %v3994
    %4256 = vmatpush1.bf16.msra.mxu0 %v3993
    %4257 = vmatprep.subr.bf16.mxu0 %v4002
    %4258 = vmatpush1.bf16.msra.mxu0 %v4001
    %4259 = vmatprep.subr.bf16.mxu0 %v4010
    %4260 = vmatpush1.bf16.msra.mxu0 %v4009
    %4261 = vmatprep.subr.bf16.mxu0 %v4018
    %4262 = vmatpush1.bf16.msra.mxu0 %v4017
    %4263 = vmatprep.mubr.bf16.mxu0 %v3380
    %4264 = vmatmul.mubr.bf16.gmra.mrb[0].mxu0 %v3379
    %v4265 = vpop.f32.mrb[0].mxu0
    %v4266 = vadd.f32 0.0, %v4265
    %v4267 = vpop.f32.mrb[0].mxu0
    %v4268 = vadd.f32 0.0, %v4267
    %v4269 = vpop.f32.mrb[0].mxu0
    %v4270 = vpop.f32.mrb[0].mxu0
    %4271 = vdwg.mxu0
    %4272 = vmatprep.subr.bf16.mxu0 %v3900
    %4273 = vmatpush1.bf16.msra.mxu0 %v3899
    %4274 = vmatprep.subr.bf16.mxu0 %v3908
    %4275 = vmatpush1.bf16.msra.mxu0 %v3907
    %4276 = vmatprep.subr.bf16.mxu0 %v3916
    %4277 = vmatpush1.bf16.msra.mxu0 %v3915
    %4278 = vmatprep.subr.bf16.mxu0 %v3924
    %4279 = vmatpush1.bf16.msra.mxu0 %v3923
    %4280 = vmatprep.subr.bf16.mxu0 %v3932
    %4281 = vmatpush1.bf16.msra.mxu0 %v3931
    %4282 = vmatprep.subr.bf16.mxu0 %v3940
    %4283 = vmatpush1.bf16.msra.mxu0 %v3939
    %4284 = vmatprep.subr.bf16.mxu0 %v3948
    %4285 = vmatpush1.bf16.msra.mxu0 %v3947
    %4286 = vmatprep.subr.bf16.mxu0 %v3956
    %4287 = vmatpush1.bf16.msra.mxu0 %v3955
    %4288 = vmatprep.subr.bf16.mxu0 %v3964
    %4289 = vmatpush1.bf16.msra.mxu0 %v3963
    %4290 = vmatprep.subr.bf16.mxu0 %v3972
    %4291 = vmatpush1.bf16.msra.mxu0 %v3971
    %4292 = vmatprep.subr.bf16.mxu0 %v3980
    %4293 = vmatpush1.bf16.msra.mxu0 %v3979
    %4294 = vmatprep.subr.bf16.mxu0 %v3988
    %4295 = vmatpush1.bf16.msra.mxu0 %v3987
    %4296 = vmatprep.subr.bf16.mxu0 %v3996
    %4297 = vmatpush1.bf16.msra.mxu0 %v3995
    %4298 = vmatprep.subr.bf16.mxu0 %v4004
    %4299 = vmatpush1.bf16.msra.mxu0 %v4003
    %4300 = vmatprep.subr.bf16.mxu0 %v4012
    %4301 = vmatpush1.bf16.msra.mxu0 %v4011
    %4302 = vmatprep.subr.bf16.mxu0 %v4020
    %4303 = vmatpush1.bf16.msra.mxu0 %v4019
    %4304 = vmatprep.mubr.bf16.mxu0 %v3380
    %4305 = vmatmul.mubr.bf16.gmra.mrb[0].mxu0 %v3379
    %v4306 = vpop.f32.mrb[0].mxu0
    %v4307 = vadd.f32 0.0, %v4306
    %v4308 = vpop.f32.mrb[0].mxu0
    %v4309 = vadd.f32 0.0, %v4308
    %v4310 = vpop.f32.mrb[0].mxu0
    %v4311 = vpop.f32.mrb[0].mxu0
    %4312 = vdwg.mxu0
    %v4313 = vadd.f32 %v3151, %v4184
    %v4314 = vadd.f32 %v3153, %v4186
    %v4315 = vadd.f32 %v3222, %v4225
    %v4316 = vadd.f32 %v3224, %v4227
    %v4317 = vadd.f32 %v3293, %v4266
    %v4318 = vadd.f32 %v3295, %v4268
    %v4319 = vadd.f32 %v3364, %v4307
    %v4320 = vadd.f32 %v3366, %v4309
    %v4321 = vxor.u32 %v4313, 2147483648
    %v4322 = vxor.u32 %v4314, 2147483648
    %v4323 = vmul.f32 %v4321, 1.442695
    %v4324 = vpow.pop %v4323
    %v4325 = vmul.f32 %v4322, 1.442695
    %v4326 = vpow.pop %v4325
    %v4327 = vadd.f32 %v4324, 1.0
    %v4328 = vadd.f32 %v4326, 1.0
    %v4329 = vrcp.pop %v4327
    %v4330 = vmul.f32 1.0, %v4329
    %v4331 = vrcp.pop %v4328
    %v4332 = vmul.f32 1.0, %v4331
    %v4333 = vxor.u32 %v4315, 2147483648
    %v4334 = vxor.u32 %v4316, 2147483648
    %v4335 = vmul.f32 %v4333, 1.442695
    %v4336 = vpow.pop %v4335
    %v4337 = vmul.f32 %v4334, 1.442695
    %v4338 = vpow.pop %v4337
    %v4339 = vadd.f32 %v4336, 1.0
    %v4340 = vadd.f32 %v4338, 1.0
    %v4341 = vrcp.pop %v4339
    %v4342 = vmul.f32 1.0, %v4341
    %v4343 = vrcp.pop %v4340
    %v4344 = vmul.f32 1.0, %v4343
    %v4345 = vtanh.pop %v4317
    %v4346 = vtanh.pop %v4318
    %v4347 = vxor.u32 %v4319, 2147483648
    %v4348 = vxor.u32 %v4320, 2147483648
    %v4349 = vmul.f32 %v4347, 1.442695
    %v4350 = vpow.pop %v4349
    %v4351 = vmul.f32 %v4348, 1.442695
    %v4352 = vpow.pop %v4351
    %v4353 = vadd.f32 %v4350, 1.0
    %v4354 = vadd.f32 %v4352, 1.0
    %v4355 = vrcp.pop %v4353
    %v4356 = vmul.f32 1.0, %v4355
    %v4357 = vrcp.pop %v4354
    %v4358 = vmul.f32 1.0, %v4357
    %v4359 = vld [vmem:[#allocation3] sm:$0xf]
    %v4362 = vunpack.c.l.s4 1983009808
    %v4363 = vunpack.c.0.s8 %v4362
    %v4364 = vlaneseq
    %v4365 = vshrl.u32 %v4364, 7
    %v4366 = vsub.s32 %v4363, %v4365
    %v4367 = vrot.slane %v4359, %v4366
    %v4368 = vcombine.high %v4367, %v4367
    %v4371 = vmul.f32 %v4342, %v4367
    %v4372 = vmul.f32 %v4344, %v4368
    %v4373 = vmul.f32 %v4330, %v4345
    %v4374 = vmul.f32 %v4332, %v4346
    %v4375 = vadd.f32 %v4371, %v4373
    %v4376 = vadd.f32 %v4372, %v4374
    %v4377 = vtanh.pop %v4375
    %v4378 = vtanh.pop %v4376
    %v4379 = vmul.f32 %v4356, %v4377
    %v4380 = vmul.f32 %v4358, %v4378
    %v4383 = vcombine.low %v4375, %v4376
    %v4385 = vunpack.c.l.s4 1983009808
    %v4386 = vunpack.c.0.s8 %v4385
    %v4387 = vlaneseq
    %v4388 = vshrl.u32 %v4387, 7
    %v4389 = vsub.s32 %v4386, %v4388
    %v4390 = vrot.slane %v4383, %v4389
    %4392 = vst [vmem:[#allocation3] sm:$0xf] %v4390
    %v4395 = vcombine.low %v4379, %v4380
    %v4397 = vunpack.c.l.s4 1983009808
    %v4398 = vunpack.c.0.s8 %v4397
    %v4399 = vlaneseq
    %v4400 = vshrl.u32 %v4399, 7
    %v4401 = vsub.s32 %v4398, %v4400
    %v4402 = vrot.slane %v4395, %v4401
    %4404 = vst [vmem:[#allocation2] sm:$0xf] %v4402
    %v4405 = vld [vmem:[#allocation6] sm:$0xff]
    %v4406 = vld [vmem:[#allocation6 + $0x8] sm:$0xff]
    %v4407 = vld [vmem:[#allocation6 + $0x10] sm:$0xff]
    %v4408 = vld [vmem:[#allocation6 + $0x18] sm:$0xff]
    %v4409 = vld [vmem:[#allocation6 + $0x20] sm:$0xff]
    %v4410 = vld [vmem:[#allocation6 + $0x28] sm:$0xff]
    %v4411 = vld [vmem:[#allocation6 + $0x30] sm:$0xff]
    %v4412 = vld [vmem:[#allocation6 + $0x38] sm:$0xff]
    %v4413 = vld [vmem:[#allocation6 + $0x40] sm:$0xff]
    %v4414 = vld [vmem:[#allocation6 + $0x48] sm:$0xff]
    %v4415 = vld [vmem:[#allocation6 + $0x50] sm:$0xff]
    %v4416 = vld [vmem:[#allocation6 + $0x58] sm:$0xff]
    %v4417 = vld [vmem:[#allocation6 + $0x60] sm:$0xff]
    %v4418 = vld [vmem:[#allocation6 + $0x68] sm:$0xff]
    %v4419 = vld [vmem:[#allocation6 + $0x70] sm:$0xff]
    %v4420 = vld [vmem:[#allocation6 + $0x78] sm:$0xff]
    %v4421 = vld [vmem:[#allocation6 + $0x80] sm:$0xff]
    %v4422 = vld [vmem:[#allocation6 + $0x88] sm:$0xff]
    %v4423 = vld [vmem:[#allocation6 + $0x90] sm:$0xff]
    %v4424 = vld [vmem:[#allocation6 + $0x98] sm:$0xff]
    %v4425 = vld [vmem:[#allocation6 + $0xa0] sm:$0xff]
    %v4426 = vld [vmem:[#allocation6 + $0xa8] sm:$0xff]
    %v4427 = vld [vmem:[#allocation6 + $0xb0] sm:$0xff]
    %v4428 = vld [vmem:[#allocation6 + $0xb8] sm:$0xff]
    %v4429 = vld [vmem:[#allocation6 + $0xc0] sm:$0xff]
    %v4430 = vld [vmem:[#allocation6 + $0xc8] sm:$0xff]
    %v4431 = vld [vmem:[#allocation6 + $0xd0] sm:$0xff]
    %v4432 = vld [vmem:[#allocation6 + $0xd8] sm:$0xff]
    %v4433 = vld [vmem:[#allocation6 + $0xe0] sm:$0xff]
    %v4434 = vld [vmem:[#allocation6 + $0xe8] sm:$0xff]
    %v4435 = vld [vmem:[#allocation6 + $0xf0] sm:$0xff]
    %v4436 = vld [vmem:[#allocation6 + $0xf8] sm:$0xff]
    %v4437 = vld [vmem:[%s5] sm:$0x1]
    %v4439 = vlaneseq
    %v4440 = vshrl.u32 %v4439, 7
    %v4441 = vsub.s32 0, %v4440
    %v4442 = vrot.slane %v4437, %v4441
    %4444 = vmatprep.subr.mxu0 0.0
    %4445 = vmatpush1.msra.mxu0 %v4405
    %4446 = vmatprep.subr.mxu0 0.0
    %4447 = vmatpush1.msra.mxu0 %v4406
    %4448 = vmatprep.subr.mxu0 0.0
    %4449 = vmatpush1.msra.mxu0 %v4407
    %4450 = vmatprep.subr.mxu0 0.0
    %4451 = vmatpush1.msra.mxu0 %v4408
    %4452 = vmatprep.subr.mxu0 0.0
    %4453 = vmatpush1.msra.mxu0 %v4409
    %4454 = vmatprep.subr.mxu0 0.0
    %4455 = vmatpush1.msra.mxu0 %v4410
    %4456 = vmatprep.subr.mxu0 0.0
    %4457 = vmatpush1.msra.mxu0 %v4411
    %4458 = vmatprep.subr.mxu0 0.0
    %4459 = vmatpush1.msra.mxu0 %v4412
    %4460 = vmatprep.subr.mxu0 0.0
    %4461 = vmatpush1.msra.mxu0 %v4413
    %4462 = vmatprep.subr.mxu0 0.0
    %4463 = vmatpush1.msra.mxu0 %v4414
    %4464 = vmatprep.subr.mxu0 0.0
    %4465 = vmatpush1.msra.mxu0 %v4415
    %4466 = vmatprep.subr.mxu0 0.0
    %4467 = vmatpush1.msra.mxu0 %v4416
    %4468 = vmatprep.subr.mxu0 0.0
    %4469 = vmatpush1.msra.mxu0 %v4417
    %4470 = vmatprep.subr.mxu0 0.0
    %4471 = vmatpush1.msra.mxu0 %v4418
    %4472 = vmatprep.subr.mxu0 0.0
    %4473 = vmatpush1.msra.mxu0 %v4419
    %4474 = vmatprep.subr.mxu0 0.0
    %4475 = vmatpush1.msra.mxu0 %v4420
    %4476 = vmatprep.subr.mxu0 0.0
    %4477 = vmatpush1.msra.mxu0 %v4421
    %4478 = vmatprep.subr.mxu0 0.0
    %4479 = vmatpush1.msra.mxu0 %v4422
    %4480 = vmatprep.subr.mxu0 0.0
    %4481 = vmatpush1.msra.mxu0 %v4423
    %4482 = vmatprep.subr.mxu0 0.0
    %4483 = vmatpush1.msra.mxu0 %v4424
    %4484 = vmatprep.subr.mxu0 0.0
    %4485 = vmatpush1.msra.mxu0 %v4425
    %4486 = vmatprep.subr.mxu0 0.0
    %4487 = vmatpush1.msra.mxu0 %v4426
    %4488 = vmatprep.subr.mxu0 0.0
    %4489 = vmatpush1.msra.mxu0 %v4427
    %4490 = vmatprep.subr.mxu0 0.0
    %4491 = vmatpush1.msra.mxu0 %v4428
    %4492 = vmatprep.subr.mxu0 0.0
    %4493 = vmatpush1.msra.mxu0 %v4429
    %4494 = vmatprep.subr.mxu0 0.0
    %4495 = vmatpush1.msra.mxu0 %v4430
    %4496 = vmatprep.subr.mxu0 0.0
    %4497 = vmatpush1.msra.mxu0 %v4431
    %4498 = vmatprep.subr.mxu0 0.0
    %4499 = vmatpush1.msra.mxu0 %v4432
    %4500 = vmatprep.subr.mxu0 0.0
    %4501 = vmatpush1.msra.mxu0 %v4433
    %4502 = vmatprep.subr.mxu0 0.0
    %4503 = vmatpush1.msra.mxu0 %v4434
    %4504 = vmatprep.subr.mxu0 0.0
    %4505 = vmatpush1.msra.mxu0 %v4435
    %4506 = vmatprep.subr.mxu0 0.0
    %4507 = vmatpush1.msra.mxu0 %v4436
    %4508 = vmatprep.mubr.f32.mxu0 %v4380
    %4509 = vmatmul.mubr.f32.gmra.mrb[0].mxu0 %v4379
    %v4510 = vpop.f32.mrb[0].mxu0
    %v4511 = vadd.f32 %v4442, %v4510
    %v4512 = vpop.f32.mrb[0].mxu0
    %4513 = vdwg.mxu0
    %s4514 = scalar_lea.vmem %s6, 4
    %4515 = vst [vmem:[%s4514] sm:$0x3] %v4511
    %s4516 = scalar_lea.vmem %s0, 6
    %v4517 = vld [vmem:[%s4516] sm:$0x3]
    %v4518 = vld [vmem:[#allocation2] sm:$0xf]
    %v4519 = vld [vmem:[%s1] sm:$0xff]
    %v4520 = vld [vmem:[%s1 + $0x8] sm:$0xff]
    %v4521 = vld [vmem:[%s1 + $0x10] sm:$0xff]
    %v4522 = vld [vmem:[%s1 + $0x18] sm:$0xff]
    %v4523 = vld [vmem:[%s1 + $0x20] sm:$0xff]
    %v4524 = vld [vmem:[%s1 + $0x28] sm:$0xff]
    %v4525 = vld [vmem:[%s1 + $0x30] sm:$0xff]
    %v4526 = vld [vmem:[%s1 + $0x38] sm:$0xff]
    %v4527 = vld [vmem:[%s3] sm:$0xff]
    %v4529 = vlaneseq
    %v4530 = vshrl.u32 %v4529, 7
    %v4531 = vsub.s32 0, %v4530
    %v4532 = vrot.slane %v4527, %v4531
    %v4533 = vlaneseq
    %v4534 = vshrl.u32 %v4533, 7
    %v4535 = vsub.s32 1, %v4534
    %v4536 = vrot.slane %v4527, %v4535
    %v4537 = vlaneseq
    %v4538 = vshrl.u32 %v4537, 7
    %v4539 = vsub.s32 2, %v4538
    %v4540 = vrot.slane %v4527, %v4539
    %v4541 = vlaneseq
    %v4542 = vshrl.u32 %v4541, 7
    %v4543 = vsub.s32 3, %v4542
    %v4544 = vrot.slane %v4527, %v4543
    %v4545 = vlaneseq
    %v4546 = vshrl.u32 %v4545, 7
    %v4547 = vsub.s32 4, %v4546
    %v4548 = vrot.slane %v4527, %v4547
    %v4549 = vlaneseq
    %v4550 = vshrl.u32 %v4549, 7
    %v4551 = vsub.s32 5, %v4550
    %v4552 = vrot.slane %v4527, %v4551
    %v4553 = vlaneseq
    %v4554 = vshrl.u32 %v4553, 7
    %v4555 = vsub.s32 6, %v4554
    %v4556 = vrot.slane %v4527, %v4555
    %v4557 = vlaneseq
    %v4558 = vshrl.u32 %v4557, 7
    %v4559 = vsub.s32 7, %v4558
    %v4560 = vrot.slane %v4527, %v4559
    %v4570 = vsel %vm105, %v4517, 0
    %4572 = vmatprep.subr.mxu0 %v4520
    %4573 = vmatpush1.msra.mxu0 %v4519
    %4574 = vmatprep.subr.mxu0 0.0
    %4575 = vmatpush1.msra.mxu0 0.0
    %4576 = vmatprep.subr.mxu0 0.0
    %4577 = vmatpush1.msra.mxu0 0.0
    %4578 = vmatprep.subr.mxu0 0.0
    %4579 = vmatpush1.msra.mxu0 0.0
    %4580 = vmatprep.subr.mxu0 0.0
    %4581 = vmatpush1.msra.mxu0 0.0
    %4582 = vmatprep.subr.mxu0 0.0
    %4583 = vmatpush1.msra.mxu0 0.0
    %4584 = vmatprep.subr.mxu0 0.0
    %4585 = vmatpush1.msra.mxu0 0.0
    %4586 = vmatprep.subr.mxu0 0.0
    %4587 = vmatpush1.msra.mxu0 0.0
    %4588 = vmatprep.subr.mxu0 0.0
    %4589 = vmatpush1.msra.mxu0 0.0
    %4590 = vmatprep.subr.mxu0 0.0
    %4591 = vmatpush1.msra.mxu0 0.0
    %4592 = vmatprep.subr.mxu0 0.0
    %4593 = vmatpush1.msra.mxu0 0.0
    %4594 = vmatprep.subr.mxu0 0.0
    %4595 = vmatpush1.msra.mxu0 0.0
    %4596 = vmatprep.subr.mxu0 0.0
    %4597 = vmatpush1.msra.mxu0 0.0
    %4598 = vmatprep.subr.mxu0 0.0
    %4599 = vmatpush1.msra.mxu0 0.0
    %4600 = vmatprep.subr.mxu0 0.0
    %4601 = vmatpush1.msra.mxu0 0.0
    %4602 = vmatprep.subr.mxu0 0.0
    %4603 = vmatpush1.msra.mxu0 0.0
    %4604 = vmatprep.subr.mxu0 0.0
    %4605 = vmatpush1.msra.mxu0 0.0
    %4606 = vmatprep.subr.mxu0 0.0
    %4607 = vmatpush1.msra.mxu0 0.0
    %4608 = vmatprep.subr.mxu0 0.0
    %4609 = vmatpush1.msra.mxu0 0.0
    %4610 = vmatprep.subr.mxu0 0.0
    %4611 = vmatpush1.msra.mxu0 0.0
    %4612 = vmatprep.subr.mxu0 0.0
    %4613 = vmatpush1.msra.mxu0 0.0
    %4614 = vmatprep.subr.mxu0 0.0
    %4615 = vmatpush1.msra.mxu0 0.0
    %4616 = vmatprep.subr.mxu0 0.0
    %4617 = vmatpush1.msra.mxu0 0.0
    %4618 = vmatprep.subr.mxu0 0.0
    %4619 = vmatpush1.msra.mxu0 0.0
    %4620 = vmatprep.subr.mxu0 0.0
    %4621 = vmatpush1.msra.mxu0 0.0
    %4622 = vmatprep.subr.mxu0 0.0
    %4623 = vmatpush1.msra.mxu0 0.0
    %4624 = vmatprep.subr.mxu0 0.0
    %4625 = vmatpush1.msra.mxu0 0.0
    %4626 = vmatprep.subr.mxu0 0.0
    %4627 = vmatpush1.msra.mxu0 0.0
    %4628 = vmatprep.subr.mxu0 0.0
    %4629 = vmatpush1.msra.mxu0 0.0
    %4630 = vmatprep.subr.mxu0 0.0
    %4631 = vmatpush1.msra.mxu0 0.0
    %4632 = vmatprep.subr.mxu0 0.0
    %4633 = vmatpush1.msra.mxu0 0.0
    %4634 = vmatprep.subr.mxu0 0.0
    %4635 = vmatpush1.msra.mxu0 0.0
    %4636 = vmatprep.mubr.f32.mxu0 0.0
    %4637 = vmatmul.mubr.f32.gmra.mrb[0].mxu0 %v4570
    %v4638 = vpop.f32.mrb[0].mxu0
    %v4639 = vadd.f32 %v4532, %v4638
    %v4640 = vpop.f32.mrb[0].mxu0
    %v4641 = vadd.f32 %v4536, %v4640
    %4642 = vdwg.mxu0
    %4643 = vmatprep.subr.mxu0 %v4522
    %4644 = vmatpush1.msra.mxu0 %v4521
    %4645 = vmatprep.subr.mxu0 0.0
    %4646 = vmatpush1.msra.mxu0 0.0
    %4647 = vmatprep.subr.mxu0 0.0
    %4648 = vmatpush1.msra.mxu0 0.0
    %4649 = vmatprep.subr.mxu0 0.0
    %4650 = vmatpush1.msra.mxu0 0.0
    %4651 = vmatprep.subr.mxu0 0.0
    %4652 = vmatpush1.msra.mxu0 0.0
    %4653 = vmatprep.subr.mxu0 0.0
    %4654 = vmatpush1.msra.mxu0 0.0
    %4655 = vmatprep.subr.mxu0 0.0
    %4656 = vmatpush1.msra.mxu0 0.0
    %4657 = vmatprep.subr.mxu0 0.0
    %4658 = vmatpush1.msra.mxu0 0.0
    %4659 = vmatprep.subr.mxu0 0.0
    %4660 = vmatpush1.msra.mxu0 0.0
    %4661 = vmatprep.subr.mxu0 0.0
    %4662 = vmatpush1.msra.mxu0 0.0
    %4663 = vmatprep.subr.mxu0 0.0
    %4664 = vmatpush1.msra.mxu0 0.0
    %4665 = vmatprep.subr.mxu0 0.0
    %4666 = vmatpush1.msra.mxu0 0.0
    %4667 = vmatprep.subr.mxu0 0.0
    %4668 = vmatpush1.msra.mxu0 0.0
    %4669 = vmatprep.subr.mxu0 0.0
    %4670 = vmatpush1.msra.mxu0 0.0
    %4671 = vmatprep.subr.mxu0 0.0
    %4672 = vmatpush1.msra.mxu0 0.0
    %4673 = vmatprep.subr.mxu0 0.0
    %4674 = vmatpush1.msra.mxu0 0.0
    %4675 = vmatprep.subr.mxu0 0.0
    %4676 = vmatpush1.msra.mxu0 0.0
    %4677 = vmatprep.subr.mxu0 0.0
    %4678 = vmatpush1.msra.mxu0 0.0
    %4679 = vmatprep.subr.mxu0 0.0
    %4680 = vmatpush1.msra.mxu0 0.0
    %4681 = vmatprep.subr.mxu0 0.0
    %4682 = vmatpush1.msra.mxu0 0.0
    %4683 = vmatprep.subr.mxu0 0.0
    %4684 = vmatpush1.msra.mxu0 0.0
    %4685 = vmatprep.subr.mxu0 0.0
    %4686 = vmatpush1.msra.mxu0 0.0
    %4687 = vmatprep.subr.mxu0 0.0
    %4688 = vmatpush1.msra.mxu0 0.0
    %4689 = vmatprep.subr.mxu0 0.0
    %4690 = vmatpush1.msra.mxu0 0.0
    %4691 = vmatprep.subr.mxu0 0.0
    %4692 = vmatpush1.msra.mxu0 0.0
    %4693 = vmatprep.subr.mxu0 0.0
    %4694 = vmatpush1.msra.mxu0 0.0
    %4695 = vmatprep.subr.mxu0 0.0
    %4696 = vmatpush1.msra.mxu0 0.0
    %4697 = vmatprep.subr.mxu0 0.0
    %4698 = vmatpush1.msra.mxu0 0.0
    %4699 = vmatprep.subr.mxu0 0.0
    %4700 = vmatpush1.msra.mxu0 0.0
    %4701 = vmatprep.subr.mxu0 0.0
    %4702 = vmatpush1.msra.mxu0 0.0
    %4703 = vmatprep.subr.mxu0 0.0
    %4704 = vmatpush1.msra.mxu0 0.0
    %4705 = vmatprep.subr.mxu0 0.0
    %4706 = vmatpush1.msra.mxu0 0.0
    %4707 = vmatprep.mubr.f32.mxu0 0.0
    %4708 = vmatmul.mubr.f32.gmra.mrb[0].mxu0 %v4570
    %v4709 = vpop.f32.mrb[0].mxu0
    %v4710 = vadd.f32 %v4540, %v4709
    %v4711 = vpop.f32.mrb[0].mxu0
    %v4712 = vadd.f32 %v4544, %v4711
    %4713 = vdwg.mxu0
    %4714 = vmatprep.subr.mxu0 %v4524
    %4715 = vmatpush1.msra.mxu0 %v4523
    %4716 = vmatprep.subr.mxu0 0.0
    %4717 = vmatpush1.msra.mxu0 0.0
    %4718 = vmatprep.subr.mxu0 0.0
    %4719 = vmatpush1.msra.mxu0 0.0
    %4720 = vmatprep.subr.mxu0 0.0
    %4721 = vmatpush1.msra.mxu0 0.0
    %4722 = vmatprep.subr.mxu0 0.0
    %4723 = vmatpush1.msra.mxu0 0.0
    %4724 = vmatprep.subr.mxu0 0.0
    %4725 = vmatpush1.msra.mxu0 0.0
    %4726 = vmatprep.subr.mxu0 0.0
    %4727 = vmatpush1.msra.mxu0 0.0
    %4728 = vmatprep.subr.mxu0 0.0
    %4729 = vmatpush1.msra.mxu0 0.0
    %4730 = vmatprep.subr.mxu0 0.0
    %4731 = vmatpush1.msra.mxu0 0.0
    %4732 = vmatprep.subr.mxu0 0.0
    %4733 = vmatpush1.msra.mxu0 0.0
    %4734 = vmatprep.subr.mxu0 0.0
    %4735 = vmatpush1.msra.mxu0 0.0
    %4736 = vmatprep.subr.mxu0 0.0
    %4737 = vmatpush1.msra.mxu0 0.0
    %4738 = vmatprep.subr.mxu0 0.0
    %4739 = vmatpush1.msra.mxu0 0.0
    %4740 = vmatprep.subr.mxu0 0.0
    %4741 = vmatpush1.msra.mxu0 0.0
    %4742 = vmatprep.subr.mxu0 0.0
    %4743 = vmatpush1.msra.mxu0 0.0
    %4744 = vmatprep.subr.mxu0 0.0
    %4745 = vmatpush1.msra.mxu0 0.0
    %4746 = vmatprep.subr.mxu0 0.0
    %4747 = vmatpush1.msra.mxu0 0.0
    %4748 = vmatprep.subr.mxu0 0.0
    %4749 = vmatpush1.msra.mxu0 0.0
    %4750 = vmatprep.subr.mxu0 0.0
    %4751 = vmatpush1.msra.mxu0 0.0
    %4752 = vmatprep.subr.mxu0 0.0
    %4753 = vmatpush1.msra.mxu0 0.0
    %4754 = vmatprep.subr.mxu0 0.0
    %4755 = vmatpush1.msra.mxu0 0.0
    %4756 = vmatprep.subr.mxu0 0.0
    %4757 = vmatpush1.msra.mxu0 0.0
    %4758 = vmatprep.subr.mxu0 0.0
    %4759 = vmatpush1.msra.mxu0 0.0
    %4760 = vmatprep.subr.mxu0 0.0
    %4761 = vmatpush1.msra.mxu0 0.0
    %4762 = vmatprep.subr.mxu0 0.0
    %4763 = vmatpush1.msra.mxu0 0.0
    %4764 = vmatprep.subr.mxu0 0.0
    %4765 = vmatpush1.msra.mxu0 0.0
    %4766 = vmatprep.subr.mxu0 0.0
    %4767 = vmatpush1.msra.mxu0 0.0
    %4768 = vmatprep.subr.mxu0 0.0
    %4769 = vmatpush1.msra.mxu0 0.0
    %4770 = vmatprep.subr.mxu0 0.0
    %4771 = vmatpush1.msra.mxu0 0.0
    %4772 = vmatprep.subr.mxu0 0.0
    %4773 = vmatpush1.msra.mxu0 0.0
    %4774 = vmatprep.subr.mxu0 0.0
    %4775 = vmatpush1.msra.mxu0 0.0
    %4776 = vmatprep.subr.mxu0 0.0
    %4777 = vmatpush1.msra.mxu0 0.0
    %4778 = vmatprep.mubr.f32.mxu0 0.0
    %4779 = vmatmul.mubr.f32.gmra.mrb[0].mxu0 %v4570
    %v4780 = vpop.f32.mrb[0].mxu0
    %v4781 = vadd.f32 %v4548, %v4780
    %v4782 = vpop.f32.mrb[0].mxu0
    %v4783 = vadd.f32 %v4552, %v4782
    %4784 = vdwg.mxu0
    %4785 = vmatprep.subr.mxu0 %v4526
    %4786 = vmatpush1.msra.mxu0 %v4525
    %4787 = vmatprep.subr.mxu0 0.0
    %4788 = vmatpush1.msra.mxu0 0.0
    %4789 = vmatprep.subr.mxu0 0.0
    %4790 = vmatpush1.msra.mxu0 0.0
    %4791 = vmatprep.subr.mxu0 0.0
    %4792 = vmatpush1.msra.mxu0 0.0
    %4793 = vmatprep.subr.mxu0 0.0
    %4794 = vmatpush1.msra.mxu0 0.0
    %4795 = vmatprep.subr.mxu0 0.0
    %4796 = vmatpush1.msra.mxu0 0.0
    %4797 = vmatprep.subr.mxu0 0.0
    %4798 = vmatpush1.msra.mxu0 0.0
    %4799 = vmatprep.subr.mxu0 0.0
    %4800 = vmatpush1.msra.mxu0 0.0
    %4801 = vmatprep.subr.mxu0 0.0
    %4802 = vmatpush1.msra.mxu0 0.0
    %4803 = vmatprep.subr.mxu0 0.0
    %4804 = vmatpush1.msra.mxu0 0.0
    %4805 = vmatprep.subr.mxu0 0.0
    %4806 = vmatpush1.msra.mxu0 0.0
    %4807 = vmatprep.subr.mxu0 0.0
    %4808 = vmatpush1.msra.mxu0 0.0
    %4809 = vmatprep.subr.mxu0 0.0
    %4810 = vmatpush1.msra.mxu0 0.0
    %4811 = vmatprep.subr.mxu0 0.0
    %4812 = vmatpush1.msra.mxu0 0.0
    %4813 = vmatprep.subr.mxu0 0.0
    %4814 = vmatpush1.msra.mxu0 0.0
    %4815 = vmatprep.subr.mxu0 0.0
    %4816 = vmatpush1.msra.mxu0 0.0
    %4817 = vmatprep.subr.mxu0 0.0
    %4818 = vmatpush1.msra.mxu0 0.0
    %4819 = vmatprep.subr.mxu0 0.0
    %4820 = vmatpush1.msra.mxu0 0.0
    %4821 = vmatprep.subr.mxu0 0.0
    %4822 = vmatpush1.msra.mxu0 0.0
    %4823 = vmatprep.subr.mxu0 0.0
    %4824 = vmatpush1.msra.mxu0 0.0
    %4825 = vmatprep.subr.mxu0 0.0
    %4826 = vmatpush1.msra.mxu0 0.0
    %4827 = vmatprep.subr.mxu0 0.0
    %4828 = vmatpush1.msra.mxu0 0.0
    %4829 = vmatprep.subr.mxu0 0.0
    %4830 = vmatpush1.msra.mxu0 0.0
    %4831 = vmatprep.subr.mxu0 0.0
    %4832 = vmatpush1.msra.mxu0 0.0
    %4833 = vmatprep.subr.mxu0 0.0
    %4834 = vmatpush1.msra.mxu0 0.0
    %4835 = vmatprep.subr.mxu0 0.0
    %4836 = vmatpush1.msra.mxu0 0.0
    %4837 = vmatprep.subr.mxu0 0.0
    %4838 = vmatpush1.msra.mxu0 0.0
    %4839 = vmatprep.subr.mxu0 0.0
    %4840 = vmatpush1.msra.mxu0 0.0
    %4841 = vmatprep.subr.mxu0 0.0
    %4842 = vmatpush1.msra.mxu0 0.0
    %4843 = vmatprep.subr.mxu0 0.0
    %4844 = vmatpush1.msra.mxu0 0.0
    %4845 = vmatprep.subr.mxu0 0.0
    %4846 = vmatpush1.msra.mxu0 0.0
    %4847 = vmatprep.subr.mxu0 0.0
    %4848 = vmatpush1.msra.mxu0 0.0
    %4849 = vmatprep.mubr.f32.mxu0 0.0
    %4850 = vmatmul.mubr.f32.gmra.mrb[0].mxu0 %v4570
    %v4851 = vpop.f32.mrb[0].mxu0
    %v4852 = vadd.f32 %v4556, %v4851
    %v4853 = vpop.f32.mrb[0].mxu0
    %v4854 = vadd.f32 %v4560, %v4853
    %4855 = vdwg.mxu0
    %v4858 = vunpack.c.l.s4 1983009808
    %v4859 = vunpack.c.0.s8 %v4858
    %v4860 = vlaneseq
    %v4861 = vshrl.u32 %v4860, 7
    %v4862 = vsub.s32 %v4859, %v4861
    %v4863 = vrot.slane %v4518, %v4862
    %v4864 = vcombine.high %v4863, %v4863
    %v4867 = vpack.c.bf16 %v4863, %v4863
    %v4868 = vpack.c.bf16 %v4864, %v4864
    %v4869 = vld [vmem:[#allocation4] sm:$0xff]
    %v4870 = vld [vmem:[#allocation4 + $0x8] sm:$0xff]
    %v4871 = vld [vmem:[#allocation4 + $0x10] sm:$0xff]
    %v4872 = vld [vmem:[#allocation4 + $0x18] sm:$0xff]
    %v4873 = vld [vmem:[#allocation4 + $0x20] sm:$0xff]
    %v4874 = vld [vmem:[#allocation4 + $0x28] sm:$0xff]
    %v4875 = vld [vmem:[#allocation4 + $0x30] sm:$0xff]
    %v4876 = vld [vmem:[#allocation4 + $0x38] sm:$0xff]
    %v4877 = vld [vmem:[#allocation4 + $0x40] sm:$0xff]
    %v4878 = vld [vmem:[#allocation4 + $0x48] sm:$0xff]
    %v4879 = vld [vmem:[#allocation4 + $0x50] sm:$0xff]
    %v4880 = vld [vmem:[#allocation4 + $0x58] sm:$0xff]
    %v4881 = vld [vmem:[#allocation4 + $0x60] sm:$0xff]
    %v4882 = vld [vmem:[#allocation4 + $0x68] sm:$0xff]
    %v4883 = vld [vmem:[#allocation4 + $0x70] sm:$0xff]
    %v4884 = vld [vmem:[#allocation4 + $0x78] sm:$0xff]
    %v4885 = vld [vmem:[#allocation4 + $0x80] sm:$0xff]
    %v4886 = vld [vmem:[#allocation4 + $0x88] sm:$0xff]
    %v4887 = vld [vmem:[#allocation4 + $0x90] sm:$0xff]
    %v4888 = vld [vmem:[#allocation4 + $0x98] sm:$0xff]
    %v4889 = vld [vmem:[#allocation4 + $0xa0] sm:$0xff]
    %v4890 = vld [vmem:[#allocation4 + $0xa8] sm:$0xff]
    %v4891 = vld [vmem:[#allocation4 + $0xb0] sm:$0xff]
    %v4892 = vld [vmem:[#allocation4 + $0xb8] sm:$0xff]
    %v4893 = vld [vmem:[#allocation4 + $0xc0] sm:$0xff]
    %v4894 = vld [vmem:[#allocation4 + $0xc8] sm:$0xff]
    %v4895 = vld [vmem:[#allocation4 + $0xd0] sm:$0xff]
    %v4896 = vld [vmem:[#allocation4 + $0xd8] sm:$0xff]
    %v4897 = vld [vmem:[#allocation4 + $0xe0] sm:$0xff]
    %v4898 = vld [vmem:[#allocation4 + $0xe8] sm:$0xff]
    %v4899 = vld [vmem:[#allocation4 + $0xf0] sm:$0xff]
    %v4900 = vld [vmem:[#allocation4 + $0xf8] sm:$0xff]
    %v4901 = vld [vmem:[#allocation4 + $0x100] sm:$0xff]
    %v4902 = vld [vmem:[#allocation4 + $0x108] sm:$0xff]
    %v4903 = vld [vmem:[#allocation4 + $0x110] sm:$0xff]
    %v4904 = vld [vmem:[#allocation4 + $0x118] sm:$0xff]
    %v4905 = vld [vmem:[#allocation4 + $0x120] sm:$0xff]
    %v4906 = vld [vmem:[#allocation4 + $0x128] sm:$0xff]
    %v4907 = vld [vmem:[#allocation4 + $0x130] sm:$0xff]
    %v4908 = vld [vmem:[#allocation4 + $0x138] sm:$0xff]
    %v4909 = vld [vmem:[#allocation4 + $0x140] sm:$0xff]
    %v4910 = vld [vmem:[#allocation4 + $0x148] sm:$0xff]
    %v4911 = vld [vmem:[#allocation4 + $0x150] sm:$0xff]
    %v4912 = vld [vmem:[#allocation4 + $0x158] sm:$0xff]
    %v4913 = vld [vmem:[#allocation4 + $0x160] sm:$0xff]
    %v4914 = vld [vmem:[#allocation4 + $0x168] sm:$0xff]
    %v4915 = vld [vmem:[#allocation4 + $0x170] sm:$0xff]
    %v4916 = vld [vmem:[#allocation4 + $0x178] sm:$0xff]
    %v4917 = vld [vmem:[#allocation4 + $0x180] sm:$0xff]
    %v4918 = vld [vmem:[#allocation4 + $0x188] sm:$0xff]
    %v4919 = vld [vmem:[#allocation4 + $0x190] sm:$0xff]
    %v4920 = vld [vmem:[#allocation4 + $0x198] sm:$0xff]
    %v4921 = vld [vmem:[#allocation4 + $0x1a0] sm:$0xff]
    %v4922 = vld [vmem:[#allocation4 + $0x1a8] sm:$0xff]
    %v4923 = vld [vmem:[#allocation4 + $0x1b0] sm:$0xff]
    %v4924 = vld [vmem:[#allocation4 + $0x1b8] sm:$0xff]
    %v4925 = vld [vmem:[#allocation4 + $0x1c0] sm:$0xff]
    %v4926 = vld [vmem:[#allocation4 + $0x1c8] sm:$0xff]
    %v4927 = vld [vmem:[#allocation4 + $0x1d0] sm:$0xff]
    %v4928 = vld [vmem:[#allocation4 + $0x1d8] sm:$0xff]
    %v4929 = vld [vmem:[#allocation4 + $0x1e0] sm:$0xff]
    %v4930 = vld [vmem:[#allocation4 + $0x1e8] sm:$0xff]
    %v4931 = vld [vmem:[#allocation4 + $0x1f0] sm:$0xff]
    %v4932 = vld [vmem:[#allocation4 + $0x1f8] sm:$0xff]
    %v4933 = vld [vmem:[#allocation4 + $0x200] sm:$0xff]
    %v4934 = vld [vmem:[#allocation4 + $0x208] sm:$0xff]
    %v4935 = vld [vmem:[#allocation4 + $0x210] sm:$0xff]
    %v4936 = vld [vmem:[#allocation4 + $0x218] sm:$0xff]
    %v4937 = vld [vmem:[#allocation4 + $0x220] sm:$0xff]
    %v4938 = vld [vmem:[#allocation4 + $0x228] sm:$0xff]
    %v4939 = vld [vmem:[#allocation4 + $0x230] sm:$0xff]
    %v4940 = vld [vmem:[#allocation4 + $0x238] sm:$0xff]
    %v4941 = vld [vmem:[#allocation4 + $0x240] sm:$0xff]
    %v4942 = vld [vmem:[#allocation4 + $0x248] sm:$0xff]
    %v4943 = vld [vmem:[#allocation4 + $0x250] sm:$0xff]
    %v4944 = vld [vmem:[#allocation4 + $0x258] sm:$0xff]
    %v4945 = vld [vmem:[#allocation4 + $0x260] sm:$0xff]
    %v4946 = vld [vmem:[#allocation4 + $0x268] sm:$0xff]
    %v4947 = vld [vmem:[#allocation4 + $0x270] sm:$0xff]
    %v4948 = vld [vmem:[#allocation4 + $0x278] sm:$0xff]
    %v4949 = vld [vmem:[#allocation4 + $0x280] sm:$0xff]
    %v4950 = vld [vmem:[#allocation4 + $0x288] sm:$0xff]
    %v4951 = vld [vmem:[#allocation4 + $0x290] sm:$0xff]
    %v4952 = vld [vmem:[#allocation4 + $0x298] sm:$0xff]
    %v4953 = vld [vmem:[#allocation4 + $0x2a0] sm:$0xff]
    %v4954 = vld [vmem:[#allocation4 + $0x2a8] sm:$0xff]
    %v4955 = vld [vmem:[#allocation4 + $0x2b0] sm:$0xff]
    %v4956 = vld [vmem:[#allocation4 + $0x2b8] sm:$0xff]
    %v4957 = vld [vmem:[#allocation4 + $0x2c0] sm:$0xff]
    %v4958 = vld [vmem:[#allocation4 + $0x2c8] sm:$0xff]
    %v4959 = vld [vmem:[#allocation4 + $0x2d0] sm:$0xff]
    %v4960 = vld [vmem:[#allocation4 + $0x2d8] sm:$0xff]
    %v4961 = vld [vmem:[#allocation4 + $0x2e0] sm:$0xff]
    %v4962 = vld [vmem:[#allocation4 + $0x2e8] sm:$0xff]
    %v4963 = vld [vmem:[#allocation4 + $0x2f0] sm:$0xff]
    %v4964 = vld [vmem:[#allocation4 + $0x2f8] sm:$0xff]
    %v4965 = vld [vmem:[#allocation4 + $0x300] sm:$0xff]
    %v4966 = vld [vmem:[#allocation4 + $0x308] sm:$0xff]
    %v4967 = vld [vmem:[#allocation4 + $0x310] sm:$0xff]
    %v4968 = vld [vmem:[#allocation4 + $0x318] sm:$0xff]
    %v4969 = vld [vmem:[#allocation4 + $0x320] sm:$0xff]
    %v4970 = vld [vmem:[#allocation4 + $0x328] sm:$0xff]
    %v4971 = vld [vmem:[#allocation4 + $0x330] sm:$0xff]
    %v4972 = vld [vmem:[#allocation4 + $0x338] sm:$0xff]
    %v4973 = vld [vmem:[#allocation4 + $0x340] sm:$0xff]
    %v4974 = vld [vmem:[#allocation4 + $0x348] sm:$0xff]
    %v4975 = vld [vmem:[#allocation4 + $0x350] sm:$0xff]
    %v4976 = vld [vmem:[#allocation4 + $0x358] sm:$0xff]
    %v4977 = vld [vmem:[#allocation4 + $0x360] sm:$0xff]
    %v4978 = vld [vmem:[#allocation4 + $0x368] sm:$0xff]
    %v4979 = vld [vmem:[#allocation4 + $0x370] sm:$0xff]
    %v4980 = vld [vmem:[#allocation4 + $0x378] sm:$0xff]
    %v4981 = vld [vmem:[#allocation4 + $0x380] sm:$0xff]
    %v4982 = vld [vmem:[#allocation4 + $0x388] sm:$0xff]
    %v4983 = vld [vmem:[#allocation4 + $0x390] sm:$0xff]
    %v4984 = vld [vmem:[#allocation4 + $0x398] sm:$0xff]
    %v4985 = vld [vmem:[#allocation4 + $0x3a0] sm:$0xff]
    %v4986 = vld [vmem:[#allocation4 + $0x3a8] sm:$0xff]
    %v4987 = vld [vmem:[#allocation4 + $0x3b0] sm:$0xff]
    %v4988 = vld [vmem:[#allocation4 + $0x3b8] sm:$0xff]
    %v4989 = vld [vmem:[#allocation4 + $0x3c0] sm:$0xff]
    %v4990 = vld [vmem:[#allocation4 + $0x3c8] sm:$0xff]
    %v4991 = vld [vmem:[#allocation4 + $0x3d0] sm:$0xff]
    %v4992 = vld [vmem:[#allocation4 + $0x3d8] sm:$0xff]
    %v4993 = vld [vmem:[#allocation4 + $0x3e0] sm:$0xff]
    %v4994 = vld [vmem:[#allocation4 + $0x3e8] sm:$0xff]
    %v4995 = vld [vmem:[#allocation4 + $0x3f0] sm:$0xff]
    %v4996 = vld [vmem:[#allocation4 + $0x3f8] sm:$0xff]
    %v5125 = vunpack.c.l.b16 %v4869
    %v5126 = vunpack.c.h.b16 %v4869
    %v5127 = vunpack.c.l.b16 %v4870
    %v5128 = vunpack.c.h.b16 %v4870
    %v5129 = vunpack.c.l.b16 %v4871
    %v5130 = vunpack.c.h.b16 %v4871
    %v5131 = vunpack.c.l.b16 %v4872
    %v5132 = vunpack.c.h.b16 %v4872
    %v5133 = vunpack.c.l.b16 %v4873
    %v5134 = vunpack.c.h.b16 %v4873
    %v5135 = vunpack.c.l.b16 %v4874
    %v5136 = vunpack.c.h.b16 %v4874
    %v5137 = vunpack.c.l.b16 %v4875
    %v5138 = vunpack.c.h.b16 %v4875
    %v5139 = vunpack.c.l.b16 %v4876
    %v5140 = vunpack.c.h.b16 %v4876
    %v5141 = vunpack.c.l.b16 %v4877
    %v5142 = vunpack.c.h.b16 %v4877
    %v5143 = vunpack.c.l.b16 %v4878
    %v5144 = vunpack.c.h.b16 %v4878
    %v5145 = vunpack.c.l.b16 %v4879
    %v5146 = vunpack.c.h.b16 %v4879
    %v5147 = vunpack.c.l.b16 %v4880
    %v5148 = vunpack.c.h.b16 %v4880
    %v5149 = vunpack.c.l.b16 %v4881
    %v5150 = vunpack.c.h.b16 %v4881
    %v5151 = vunpack.c.l.b16 %v4882
    %v5152 = vunpack.c.h.b16 %v4882
    %v5153 = vunpack.c.l.b16 %v4883
    %v5154 = vunpack.c.h.b16 %v4883
    %v5155 = vunpack.c.l.b16 %v4884
    %v5156 = vunpack.c.h.b16 %v4884
    %v5157 = vunpack.c.l.b16 %v4885
    %v5158 = vunpack.c.h.b16 %v4885
    %v5159 = vunpack.c.l.b16 %v4886
    %v5160 = vunpack.c.h.b16 %v4886
    %v5161 = vunpack.c.l.b16 %v4887
    %v5162 = vunpack.c.h.b16 %v4887
    %v5163 = vunpack.c.l.b16 %v4888
    %v5164 = vunpack.c.h.b16 %v4888
    %v5165 = vunpack.c.l.b16 %v4889
    %v5166 = vunpack.c.h.b16 %v4889
    %v5167 = vunpack.c.l.b16 %v4890
    %v5168 = vunpack.c.h.b16 %v4890
    %v5169 = vunpack.c.l.b16 %v4891
    %v5170 = vunpack.c.h.b16 %v4891
    %v5171 = vunpack.c.l.b16 %v4892
    %v5172 = vunpack.c.h.b16 %v4892
    %v5173 = vunpack.c.l.b16 %v4893
    %v5174 = vunpack.c.h.b16 %v4893
    %v5175 = vunpack.c.l.b16 %v4894
    %v5176 = vunpack.c.h.b16 %v4894
    %v5177 = vunpack.c.l.b16 %v4895
    %v5178 = vunpack.c.h.b16 %v4895
    %v5179 = vunpack.c.l.b16 %v4896
    %v5180 = vunpack.c.h.b16 %v4896
    %v5181 = vunpack.c.l.b16 %v4897
    %v5182 = vunpack.c.h.b16 %v4897
    %v5183 = vunpack.c.l.b16 %v4898
    %v5184 = vunpack.c.h.b16 %v4898
    %v5185 = vunpack.c.l.b16 %v4899
    %v5186 = vunpack.c.h.b16 %v4899
    %v5187 = vunpack.c.l.b16 %v4900
    %v5188 = vunpack.c.h.b16 %v4900
    %v5189 = vunpack.c.l.b16 %v4901
    %v5190 = vunpack.c.h.b16 %v4901
    %v5191 = vunpack.c.l.b16 %v4902
    %v5192 = vunpack.c.h.b16 %v4902
    %v5193 = vunpack.c.l.b16 %v4903
    %v5194 = vunpack.c.h.b16 %v4903
    %v5195 = vunpack.c.l.b16 %v4904
    %v5196 = vunpack.c.h.b16 %v4904
    %v5197 = vunpack.c.l.b16 %v4905
    %v5198 = vunpack.c.h.b16 %v4905
    %v5199 = vunpack.c.l.b16 %v4906
    %v5200 = vunpack.c.h.b16 %v4906
    %v5201 = vunpack.c.l.b16 %v4907
    %v5202 = vunpack.c.h.b16 %v4907
    %v5203 = vunpack.c.l.b16 %v4908
    %v5204 = vunpack.c.h.b16 %v4908
    %v5205 = vunpack.c.l.b16 %v4909
    %v5206 = vunpack.c.h.b16 %v4909
    %v5207 = vunpack.c.l.b16 %v4910
    %v5208 = vunpack.c.h.b16 %v4910
    %v5209 = vunpack.c.l.b16 %v4911
    %v5210 = vunpack.c.h.b16 %v4911
    %v5211 = vunpack.c.l.b16 %v4912
    %v5212 = vunpack.c.h.b16 %v4912
    %v5213 = vunpack.c.l.b16 %v4913
    %v5214 = vunpack.c.h.b16 %v4913
    %v5215 = vunpack.c.l.b16 %v4914
    %v5216 = vunpack.c.h.b16 %v4914
    %v5217 = vunpack.c.l.b16 %v4915
    %v5218 = vunpack.c.h.b16 %v4915
    %v5219 = vunpack.c.l.b16 %v4916
    %v5220 = vunpack.c.h.b16 %v4916
    %v5221 = vunpack.c.l.b16 %v4917
    %v5222 = vunpack.c.h.b16 %v4917
    %v5223 = vunpack.c.l.b16 %v4918
    %v5224 = vunpack.c.h.b16 %v4918
    %v5225 = vunpack.c.l.b16 %v4919
    %v5226 = vunpack.c.h.b16 %v4919
    %v5227 = vunpack.c.l.b16 %v4920
    %v5228 = vunpack.c.h.b16 %v4920
    %v5229 = vunpack.c.l.b16 %v4921
    %v5230 = vunpack.c.h.b16 %v4921
    %v5231 = vunpack.c.l.b16 %v4922
    %v5232 = vunpack.c.h.b16 %v4922
    %v5233 = vunpack.c.l.b16 %v4923
    %v5234 = vunpack.c.h.b16 %v4923
    %v5235 = vunpack.c.l.b16 %v4924
    %v5236 = vunpack.c.h.b16 %v4924
    %v5237 = vunpack.c.l.b16 %v4925
    %v5238 = vunpack.c.h.b16 %v4925
    %v5239 = vunpack.c.l.b16 %v4926
    %v5240 = vunpack.c.h.b16 %v4926
    %v5241 = vunpack.c.l.b16 %v4927
    %v5242 = vunpack.c.h.b16 %v4927
    %v5243 = vunpack.c.l.b16 %v4928
    %v5244 = vunpack.c.h.b16 %v4928
    %v5245 = vunpack.c.l.b16 %v4929
    %v5246 = vunpack.c.h.b16 %v4929
    %v5247 = vunpack.c.l.b16 %v4930
    %v5248 = vunpack.c.h.b16 %v4930
    %v5249 = vunpack.c.l.b16 %v4931
    %v5250 = vunpack.c.h.b16 %v4931
    %v5251 = vunpack.c.l.b16 %v4932
    %v5252 = vunpack.c.h.b16 %v4932
    %v5253 = vunpack.c.l.b16 %v4933
    %v5254 = vunpack.c.h.b16 %v4933
    %v5255 = vunpack.c.l.b16 %v4934
    %v5256 = vunpack.c.h.b16 %v4934
    %v5257 = vunpack.c.l.b16 %v4935
    %v5258 = vunpack.c.h.b16 %v4935
    %v5259 = vunpack.c.l.b16 %v4936
    %v5260 = vunpack.c.h.b16 %v4936
    %v5261 = vunpack.c.l.b16 %v4937
    %v5262 = vunpack.c.h.b16 %v4937
    %v5263 = vunpack.c.l.b16 %v4938
    %v5264 = vunpack.c.h.b16 %v4938
    %v5265 = vunpack.c.l.b16 %v4939
    %v5266 = vunpack.c.h.b16 %v4939
    %v5267 = vunpack.c.l.b16 %v4940
    %v5268 = vunpack.c.h.b16 %v4940
    %v5269 = vunpack.c.l.b16 %v4941
    %v5270 = vunpack.c.h.b16 %v4941
    %v5271 = vunpack.c.l.b16 %v4942
    %v5272 = vunpack.c.h.b16 %v4942
    %v5273 = vunpack.c.l.b16 %v4943
    %v5274 = vunpack.c.h.b16 %v4943
    %v5275 = vunpack.c.l.b16 %v4944
    %v5276 = vunpack.c.h.b16 %v4944
    %v5277 = vunpack.c.l.b16 %v4945
    %v5278 = vunpack.c.h.b16 %v4945
    %v5279 = vunpack.c.l.b16 %v4946
    %v5280 = vunpack.c.h.b16 %v4946
    %v5281 = vunpack.c.l.b16 %v4947
    %v5282 = vunpack.c.h.b16 %v4947
    %v5283 = vunpack.c.l.b16 %v4948
    %v5284 = vunpack.c.h.b16 %v4948
    %v5285 = vunpack.c.l.b16 %v4949
    %v5286 = vunpack.c.h.b16 %v4949
    %v5287 = vunpack.c.l.b16 %v4950
    %v5288 = vunpack.c.h.b16 %v4950
    %v5289 = vunpack.c.l.b16 %v4951
    %v5290 = vunpack.c.h.b16 %v4951
    %v5291 = vunpack.c.l.b16 %v4952
    %v5292 = vunpack.c.h.b16 %v4952
    %v5293 = vunpack.c.l.b16 %v4953
    %v5294 = vunpack.c.h.b16 %v4953
    %v5295 = vunpack.c.l.b16 %v4954
    %v5296 = vunpack.c.h.b16 %v4954
    %v5297 = vunpack.c.l.b16 %v4955
    %v5298 = vunpack.c.h.b16 %v4955
    %v5299 = vunpack.c.l.b16 %v4956
    %v5300 = vunpack.c.h.b16 %v4956
    %v5301 = vunpack.c.l.b16 %v4957
    %v5302 = vunpack.c.h.b16 %v4957
    %v5303 = vunpack.c.l.b16 %v4958
    %v5304 = vunpack.c.h.b16 %v4958
    %v5305 = vunpack.c.l.b16 %v4959
    %v5306 = vunpack.c.h.b16 %v4959
    %v5307 = vunpack.c.l.b16 %v4960
    %v5308 = vunpack.c.h.b16 %v4960
    %v5309 = vunpack.c.l.b16 %v4961
    %v5310 = vunpack.c.h.b16 %v4961
    %v5311 = vunpack.c.l.b16 %v4962
    %v5312 = vunpack.c.h.b16 %v4962
    %v5313 = vunpack.c.l.b16 %v4963
    %v5314 = vunpack.c.h.b16 %v4963
    %v5315 = vunpack.c.l.b16 %v4964
    %v5316 = vunpack.c.h.b16 %v4964
    %v5317 = vunpack.c.l.b16 %v4965
    %v5318 = vunpack.c.h.b16 %v4965
    %v5319 = vunpack.c.l.b16 %v4966
    %v5320 = vunpack.c.h.b16 %v4966
    %v5321 = vunpack.c.l.b16 %v4967
    %v5322 = vunpack.c.h.b16 %v4967
    %v5323 = vunpack.c.l.b16 %v4968
    %v5324 = vunpack.c.h.b16 %v4968
    %v5325 = vunpack.c.l.b16 %v4969
    %v5326 = vunpack.c.h.b16 %v4969
    %v5327 = vunpack.c.l.b16 %v4970
    %v5328 = vunpack.c.h.b16 %v4970
    %v5329 = vunpack.c.l.b16 %v4971
    %v5330 = vunpack.c.h.b16 %v4971
    %v5331 = vunpack.c.l.b16 %v4972
    %v5332 = vunpack.c.h.b16 %v4972
    %v5333 = vunpack.c.l.b16 %v4973
    %v5334 = vunpack.c.h.b16 %v4973
    %v5335 = vunpack.c.l.b16 %v4974
    %v5336 = vunpack.c.h.b16 %v4974
    %v5337 = vunpack.c.l.b16 %v4975
    %v5338 = vunpack.c.h.b16 %v4975
    %v5339 = vunpack.c.l.b16 %v4976
    %v5340 = vunpack.c.h.b16 %v4976
    %v5341 = vunpack.c.l.b16 %v4977
    %v5342 = vunpack.c.h.b16 %v4977
    %v5343 = vunpack.c.l.b16 %v4978
    %v5344 = vunpack.c.h.b16 %v4978
    %v5345 = vunpack.c.l.b16 %v4979
    %v5346 = vunpack.c.h.b16 %v4979
    %v5347 = vunpack.c.l.b16 %v4980
    %v5348 = vunpack.c.h.b16 %v4980
    %v5349 = vunpack.c.l.b16 %v4981
    %v5350 = vunpack.c.h.b16 %v4981
    %v5351 = vunpack.c.l.b16 %v4982
    %v5352 = vunpack.c.h.b16 %v4982
    %v5353 = vunpack.c.l.b16 %v4983
    %v5354 = vunpack.c.h.b16 %v4983
    %v5355 = vunpack.c.l.b16 %v4984
    %v5356 = vunpack.c.h.b16 %v4984
    %v5357 = vunpack.c.l.b16 %v4985
    %v5358 = vunpack.c.h.b16 %v4985
    %v5359 = vunpack.c.l.b16 %v4986
    %v5360 = vunpack.c.h.b16 %v4986
    %v5361 = vunpack.c.l.b16 %v4987
    %v5362 = vunpack.c.h.b16 %v4987
    %v5363 = vunpack.c.l.b16 %v4988
    %v5364 = vunpack.c.h.b16 %v4988
    %v5365 = vunpack.c.l.b16 %v4989
    %v5366 = vunpack.c.h.b16 %v4989
    %v5367 = vunpack.c.l.b16 %v4990
    %v5368 = vunpack.c.h.b16 %v4990
    %v5369 = vunpack.c.l.b16 %v4991
    %v5370 = vunpack.c.h.b16 %v4991
    %v5371 = vunpack.c.l.b16 %v4992
    %v5372 = vunpack.c.h.b16 %v4992
    %v5373 = vunpack.c.l.b16 %v4993
    %v5374 = vunpack.c.h.b16 %v4993
    %v5375 = vunpack.c.l.b16 %v4994
    %v5376 = vunpack.c.h.b16 %v4994
    %v5377 = vunpack.c.l.b16 %v4995
    %v5378 = vunpack.c.h.b16 %v4995
    %v5379 = vunpack.c.l.b16 %v4996
    %v5380 = vunpack.c.h.b16 %v4996
    %v5381 = vpack.c.b16 %v5133, %v5125
    %v5382 = vpack.c.b16 %v5134, %v5126
    %v5383 = vpack.c.b16 %v5135, %v5127
    %v5384 = vpack.c.b16 %v5136, %v5128
    %v5385 = vpack.c.b16 %v5137, %v5129
    %v5386 = vpack.c.b16 %v5138, %v5130
    %v5387 = vpack.c.b16 %v5139, %v5131
    %v5388 = vpack.c.b16 %v5140, %v5132
    %v5389 = vpack.c.b16 %v5149, %v5141
    %v5390 = vpack.c.b16 %v5150, %v5142
    %v5391 = vpack.c.b16 %v5151, %v5143
    %v5392 = vpack.c.b16 %v5152, %v5144
    %v5393 = vpack.c.b16 %v5153, %v5145
    %v5394 = vpack.c.b16 %v5154, %v5146
    %v5395 = vpack.c.b16 %v5155, %v5147
    %v5396 = vpack.c.b16 %v5156, %v5148
    %v5397 = vpack.c.b16 %v5165, %v5157
    %v5398 = vpack.c.b16 %v5166, %v5158
    %v5399 = vpack.c.b16 %v5167, %v5159
    %v5400 = vpack.c.b16 %v5168, %v5160
    %v5401 = vpack.c.b16 %v5169, %v5161
    %v5402 = vpack.c.b16 %v5170, %v5162
    %v5403 = vpack.c.b16 %v5171, %v5163
    %v5404 = vpack.c.b16 %v5172, %v5164
    %v5405 = vpack.c.b16 %v5181, %v5173
    %v5406 = vpack.c.b16 %v5182, %v5174
    %v5407 = vpack.c.b16 %v5183, %v5175
    %v5408 = vpack.c.b16 %v5184, %v5176
    %v5409 = vpack.c.b16 %v5185, %v5177
    %v5410 = vpack.c.b16 %v5186, %v5178
    %v5411 = vpack.c.b16 %v5187, %v5179
    %v5412 = vpack.c.b16 %v5188, %v5180
    %v5413 = vpack.c.b16 %v5197, %v5189
    %v5414 = vpack.c.b16 %v5198, %v5190
    %v5415 = vpack.c.b16 %v5199, %v5191
    %v5416 = vpack.c.b16 %v5200, %v5192
    %v5417 = vpack.c.b16 %v5201, %v5193
    %v5418 = vpack.c.b16 %v5202, %v5194
    %v5419 = vpack.c.b16 %v5203, %v5195
    %v5420 = vpack.c.b16 %v5204, %v5196
    %v5421 = vpack.c.b16 %v5213, %v5205
    %v5422 = vpack.c.b16 %v5214, %v5206
    %v5423 = vpack.c.b16 %v5215, %v5207
    %v5424 = vpack.c.b16 %v5216, %v5208
    %v5425 = vpack.c.b16 %v5217, %v5209
    %v5426 = vpack.c.b16 %v5218, %v5210
    %v5427 = vpack.c.b16 %v5219, %v5211
    %v5428 = vpack.c.b16 %v5220, %v5212
    %v5429 = vpack.c.b16 %v5229, %v5221
    %v5430 = vpack.c.b16 %v5230, %v5222
    %v5431 = vpack.c.b16 %v5231, %v5223
    %v5432 = vpack.c.b16 %v5232, %v5224
    %v5433 = vpack.c.b16 %v5233, %v5225
    %v5434 = vpack.c.b16 %v5234, %v5226
    %v5435 = vpack.c.b16 %v5235, %v5227
    %v5436 = vpack.c.b16 %v5236, %v5228
    %v5437 = vpack.c.b16 %v5245, %v5237
    %v5438 = vpack.c.b16 %v5246, %v5238
    %v5439 = vpack.c.b16 %v5247, %v5239
    %v5440 = vpack.c.b16 %v5248, %v5240
    %v5441 = vpack.c.b16 %v5249, %v5241
    %v5442 = vpack.c.b16 %v5250, %v5242
    %v5443 = vpack.c.b16 %v5251, %v5243
    %v5444 = vpack.c.b16 %v5252, %v5244
    %v5445 = vpack.c.b16 %v5261, %v5253
    %v5446 = vpack.c.b16 %v5262, %v5254
    %v5447 = vpack.c.b16 %v5263, %v5255
    %v5448 = vpack.c.b16 %v5264, %v5256
    %v5449 = vpack.c.b16 %v5265, %v5257
    %v5450 = vpack.c.b16 %v5266, %v5258
    %v5451 = vpack.c.b16 %v5267, %v5259
    %v5452 = vpack.c.b16 %v5268, %v5260
    %v5453 = vpack.c.b16 %v5277, %v5269
    %v5454 = vpack.c.b16 %v5278, %v5270
    %v5455 = vpack.c.b16 %v5279, %v5271
    %v5456 = vpack.c.b16 %v5280, %v5272
    %v5457 = vpack.c.b16 %v5281, %v5273
    %v5458 = vpack.c.b16 %v5282, %v5274
    %v5459 = vpack.c.b16 %v5283, %v5275
    %v5460 = vpack.c.b16 %v5284, %v5276
    %v5461 = vpack.c.b16 %v5293, %v5285
    %v5462 = vpack.c.b16 %v5294, %v5286
    %v5463 = vpack.c.b16 %v5295, %v5287
    %v5464 = vpack.c.b16 %v5296, %v5288
    %v5465 = vpack.c.b16 %v5297, %v5289
    %v5466 = vpack.c.b16 %v5298, %v5290
    %v5467 = vpack.c.b16 %v5299, %v5291
    %v5468 = vpack.c.b16 %v5300, %v5292
    %v5469 = vpack.c.b16 %v5309, %v5301
    %v5470 = vpack.c.b16 %v5310, %v5302
    %v5471 = vpack.c.b16 %v5311, %v5303
    %v5472 = vpack.c.b16 %v5312, %v5304
    %v5473 = vpack.c.b16 %v5313, %v5305
    %v5474 = vpack.c.b16 %v5314, %v5306
    %v5475 = vpack.c.b16 %v5315, %v5307
    %v5476 = vpack.c.b16 %v5316, %v5308
    %v5477 = vpack.c.b16 %v5325, %v5317
    %v5478 = vpack.c.b16 %v5326, %v5318
    %v5479 = vpack.c.b16 %v5327, %v5319
    %v5480 = vpack.c.b16 %v5328, %v5320
    %v5481 = vpack.c.b16 %v5329, %v5321
    %v5482 = vpack.c.b16 %v5330, %v5322
    %v5483 = vpack.c.b16 %v5331, %v5323
    %v5484 = vpack.c.b16 %v5332, %v5324
    %v5485 = vpack.c.b16 %v5341, %v5333
    %v5486 = vpack.c.b16 %v5342, %v5334
    %v5487 = vpack.c.b16 %v5343, %v5335
    %v5488 = vpack.c.b16 %v5344, %v5336
    %v5489 = vpack.c.b16 %v5345, %v5337
    %v5490 = vpack.c.b16 %v5346, %v5338
    %v5491 = vpack.c.b16 %v5347, %v5339
    %v5492 = vpack.c.b16 %v5348, %v5340
    %v5493 = vpack.c.b16 %v5357, %v5349
    %v5494 = vpack.c.b16 %v5358, %v5350
    %v5495 = vpack.c.b16 %v5359, %v5351
    %v5496 = vpack.c.b16 %v5360, %v5352
    %v5497 = vpack.c.b16 %v5361, %v5353
    %v5498 = vpack.c.b16 %v5362, %v5354
    %v5499 = vpack.c.b16 %v5363, %v5355
    %v5500 = vpack.c.b16 %v5364, %v5356
    %v5501 = vpack.c.b16 %v5373, %v5365
    %v5502 = vpack.c.b16 %v5374, %v5366
    %v5503 = vpack.c.b16 %v5375, %v5367
    %v5504 = vpack.c.b16 %v5376, %v5368
    %v5505 = vpack.c.b16 %v5377, %v5369
    %v5506 = vpack.c.b16 %v5378, %v5370
    %v5507 = vpack.c.b16 %v5379, %v5371
    %v5508 = vpack.c.b16 %v5380, %v5372
    %5637 = vmatprep.subr.bf16.mxu0 %v5382
    %5638 = vmatpush1.bf16.msra.mxu0 %v5381
    %5639 = vmatprep.subr.bf16.mxu0 %v5390
    %5640 = vmatpush1.bf16.msra.mxu0 %v5389
    %5641 = vmatprep.subr.bf16.mxu0 %v5398
    %5642 = vmatpush1.bf16.msra.mxu0 %v5397
    %5643 = vmatprep.subr.bf16.mxu0 %v5406
    %5644 = vmatpush1.bf16.msra.mxu0 %v5405
    %5645 = vmatprep.subr.bf16.mxu0 %v5414
    %5646 = vmatpush1.bf16.msra.mxu0 %v5413
    %5647 = vmatprep.subr.bf16.mxu0 %v5422
    %5648 = vmatpush1.bf16.msra.mxu0 %v5421
    %5649 = vmatprep.subr.bf16.mxu0 %v5430
    %5650 = vmatpush1.bf16.msra.mxu0 %v5429
    %5651 = vmatprep.subr.bf16.mxu0 %v5438
    %5652 = vmatpush1.bf16.msra.mxu0 %v5437
    %5653 = vmatprep.subr.bf16.mxu0 %v5446
    %5654 = vmatpush1.bf16.msra.mxu0 %v5445
    %5655 = vmatprep.subr.bf16.mxu0 %v5454
    %5656 = vmatpush1.bf16.msra.mxu0 %v5453
    %5657 = vmatprep.subr.bf16.mxu0 %v5462
    %5658 = vmatpush1.bf16.msra.mxu0 %v5461
    %5659 = vmatprep.subr.bf16.mxu0 %v5470
    %5660 = vmatpush1.bf16.msra.mxu0 %v5469
    %5661 = vmatprep.subr.bf16.mxu0 %v5478
    %5662 = vmatpush1.bf16.msra.mxu0 %v5477
    %5663 = vmatprep.subr.bf16.mxu0 %v5486
    %5664 = vmatpush1.bf16.msra.mxu0 %v5485
    %5665 = vmatprep.subr.bf16.mxu0 %v5494
    %5666 = vmatpush1.bf16.msra.mxu0 %v5493
    %5667 = vmatprep.subr.bf16.mxu0 %v5502
    %5668 = vmatpush1.bf16.msra.mxu0 %v5501
    %5669 = vmatprep.mubr.bf16.mxu0 %v4868
    %5670 = vmatmul.mubr.bf16.gmra.mrb[0].mxu0 %v4867
    %v5671 = vpop.f32.mrb[0].mxu0
    %v5672 = vadd.f32 0.0, %v5671
    %v5673 = vpop.f32.mrb[0].mxu0
    %v5674 = vadd.f32 0.0, %v5673
    %v5675 = vpop.f32.mrb[0].mxu0
    %v5676 = vpop.f32.mrb[0].mxu0
    %5677 = vdwg.mxu0
    %5678 = vmatprep.subr.bf16.mxu0 %v5384
    %5679 = vmatpush1.bf16.msra.mxu0 %v5383
    %5680 = vmatprep.subr.bf16.mxu0 %v5392
    %5681 = vmatpush1.bf16.msra.mxu0 %v5391
    %5682 = vmatprep.subr.bf16.mxu0 %v5400
    %5683 = vmatpush1.bf16.msra.mxu0 %v5399
    %5684 = vmatprep.subr.bf16.mxu0 %v5408
    %5685 = vmatpush1.bf16.msra.mxu0 %v5407
    %5686 = vmatprep.subr.bf16.mxu0 %v5416
    %5687 = vmatpush1.bf16.msra.mxu0 %v5415
    %5688 = vmatprep.subr.bf16.mxu0 %v5424
    %5689 = vmatpush1.bf16.msra.mxu0 %v5423
    %5690 = vmatprep.subr.bf16.mxu0 %v5432
    %5691 = vmatpush1.bf16.msra.mxu0 %v5431
    %5692 = vmatprep.subr.bf16.mxu0 %v5440
    %5693 = vmatpush1.bf16.msra.mxu0 %v5439
    %5694 = vmatprep.subr.bf16.mxu0 %v5448
    %5695 = vmatpush1.bf16.msra.mxu0 %v5447
    %5696 = vmatprep.subr.bf16.mxu0 %v5456
    %5697 = vmatpush1.bf16.msra.mxu0 %v5455
    %5698 = vmatprep.subr.bf16.mxu0 %v5464
    %5699 = vmatpush1.bf16.msra.mxu0 %v5463
    %5700 = vmatprep.subr.bf16.mxu0 %v5472
    %5701 = vmatpush1.bf16.msra.mxu0 %v5471
    %5702 = vmatprep.subr.bf16.mxu0 %v5480
    %5703 = vmatpush1.bf16.msra.mxu0 %v5479
    %5704 = vmatprep.subr.bf16.mxu0 %v5488
    %5705 = vmatpush1.bf16.msra.mxu0 %v5487
    %5706 = vmatprep.subr.bf16.mxu0 %v5496
    %5707 = vmatpush1.bf16.msra.mxu0 %v5495
    %5708 = vmatprep.subr.bf16.mxu0 %v5504
    %5709 = vmatpush1.bf16.msra.mxu0 %v5503
    %5710 = vmatprep.mubr.bf16.mxu0 %v4868
    %5711 = vmatmul.mubr.bf16.gmra.mrb[0].mxu0 %v4867
    %v5712 = vpop.f32.mrb[0].mxu0
    %v5713 = vadd.f32 0.0, %v5712
    %v5714 = vpop.f32.mrb[0].mxu0
    %v5715 = vadd.f32 0.0, %v5714
    %v5716 = vpop.f32.mrb[0].mxu0
    %v5717 = vpop.f32.mrb[0].mxu0
    %5718 = vdwg.mxu0
    %5719 = vmatprep.subr.bf16.mxu0 %v5386
    %5720 = vmatpush1.bf16.msra.mxu0 %v5385
    %5721 = vmatprep.subr.bf16.mxu0 %v5394
    %5722 = vmatpush1.bf16.msra.mxu0 %v5393
    %5723 = vmatprep.subr.bf16.mxu0 %v5402
    %5724 = vmatpush1.bf16.msra.mxu0 %v5401
    %5725 = vmatprep.subr.bf16.mxu0 %v5410
    %5726 = vmatpush1.bf16.msra.mxu0 %v5409
    %5727 = vmatprep.subr.bf16.mxu0 %v5418
    %5728 = vmatpush1.bf16.msra.mxu0 %v5417
    %5729 = vmatprep.subr.bf16.mxu0 %v5426
    %5730 = vmatpush1.bf16.msra.mxu0 %v5425
    %5731 = vmatprep.subr.bf16.mxu0 %v5434
    %5732 = vmatpush1.bf16.msra.mxu0 %v5433
    %5733 = vmatprep.subr.bf16.mxu0 %v5442
    %5734 = vmatpush1.bf16.msra.mxu0 %v5441
    %5735 = vmatprep.subr.bf16.mxu0 %v5450
    %5736 = vmatpush1.bf16.msra.mxu0 %v5449
    %5737 = vmatprep.subr.bf16.mxu0 %v5458
    %5738 = vmatpush1.bf16.msra.mxu0 %v5457
    %5739 = vmatprep.subr.bf16.mxu0 %v5466
    %5740 = vmatpush1.bf16.msra.mxu0 %v5465
    %5741 = vmatprep.subr.bf16.mxu0 %v5474
    %5742 = vmatpush1.bf16.msra.mxu0 %v5473
    %5743 = vmatprep.subr.bf16.mxu0 %v5482
    %5744 = vmatpush1.bf16.msra.mxu0 %v5481
    %5745 = vmatprep.subr.bf16.mxu0 %v5490
    %5746 = vmatpush1.bf16.msra.mxu0 %v5489
    %5747 = vmatprep.subr.bf16.mxu0 %v5498
    %5748 = vmatpush1.bf16.msra.mxu0 %v5497
    %5749 = vmatprep.subr.bf16.mxu0 %v5506
    %5750 = vmatpush1.bf16.msra.mxu0 %v5505
    %5751 = vmatprep.mubr.bf16.mxu0 %v4868
    %5752 = vmatmul.mubr.bf16.gmra.mrb[0].mxu0 %v4867
    %v5753 = vpop.f32.mrb[0].mxu0
    %v5754 = vadd.f32 0.0, %v5753
    %v5755 = vpop.f32.mrb[0].mxu0
    %v5756 = vadd.f32 0.0, %v5755
    %v5757 = vpop.f32.mrb[0].mxu0
    %v5758 = vpop.f32.mrb[0].mxu0
    %5759 = vdwg.mxu0
    %5760 = vmatprep.subr.bf16.mxu0 %v5388
    %5761 = vmatpush1.bf16.msra.mxu0 %v5387
    %5762 = vmatprep.subr.bf16.mxu0 %v5396
    %5763 = vmatpush1.bf16.msra.mxu0 %v5395
    %5764 = vmatprep.subr.bf16.mxu0 %v5404
    %5765 = vmatpush1.bf16.msra.mxu0 %v5403
    %5766 = vmatprep.subr.bf16.mxu0 %v5412
    %5767 = vmatpush1.bf16.msra.mxu0 %v5411
    %5768 = vmatprep.subr.bf16.mxu0 %v5420
    %5769 = vmatpush1.bf16.msra.mxu0 %v5419
    %5770 = vmatprep.subr.bf16.mxu0 %v5428
    %5771 = vmatpush1.bf16.msra.mxu0 %v5427
    %5772 = vmatprep.subr.bf16.mxu0 %v5436
    %5773 = vmatpush1.bf16.msra.mxu0 %v5435
    %5774 = vmatprep.subr.bf16.mxu0 %v5444
    %5775 = vmatpush1.bf16.msra.mxu0 %v5443
    %5776 = vmatprep.subr.bf16.mxu0 %v5452
    %5777 = vmatpush1.bf16.msra.mxu0 %v5451
    %5778 = vmatprep.subr.bf16.mxu0 %v5460
    %5779 = vmatpush1.bf16.msra.mxu0 %v5459
    %5780 = vmatprep.subr.bf16.mxu0 %v5468
    %5781 = vmatpush1.bf16.msra.mxu0 %v5467
    %5782 = vmatprep.subr.bf16.mxu0 %v5476
    %5783 = vmatpush1.bf16.msra.mxu0 %v5475
    %5784 = vmatprep.subr.bf16.mxu0 %v5484
    %5785 = vmatpush1.bf16.msra.mxu0 %v5483
    %5786 = vmatprep.subr.bf16.mxu0 %v5492
    %5787 = vmatpush1.bf16.msra.mxu0 %v5491
    %5788 = vmatprep.subr.bf16.mxu0 %v5500
    %5789 = vmatpush1.bf16.msra.mxu0 %v5499
    %5790 = vmatprep.subr.bf16.mxu0 %v5508
    %5791 = vmatpush1.bf16.msra.mxu0 %v5507
    %5792 = vmatprep.mubr.bf16.mxu0 %v4868
    %5793 = vmatmul.mubr.bf16.gmra.mrb[0].mxu0 %v4867
    %v5794 = vpop.f32.mrb[0].mxu0
    %v5795 = vadd.f32 0.0, %v5794
    %v5796 = vpop.f32.mrb[0].mxu0
    %v5797 = vadd.f32 0.0, %v5796
    %v5798 = vpop.f32.mrb[0].mxu0
    %v5799 = vpop.f32.mrb[0].mxu0
    %5800 = vdwg.mxu0
    %v5801 = vadd.f32 %v4639, %v5672
    %v5802 = vadd.f32 %v4641, %v5674
    %v5803 = vadd.f32 %v4710, %v5713
    %v5804 = vadd.f32 %v4712, %v5715
    %v5805 = vadd.f32 %v4781, %v5754
    %v5806 = vadd.f32 %v4783, %v5756
    %v5807 = vadd.f32 %v4852, %v5795
    %v5808 = vadd.f32 %v4854, %v5797
    %v5809 = vxor.u32 %v5801, 2147483648
    %v5810 = vxor.u32 %v5802, 2147483648
    %v5811 = vmul.f32 %v5809, 1.442695
    %v5812 = vpow.pop %v5811
    %v5813 = vmul.f32 %v5810, 1.442695
    %v5814 = vpow.pop %v5813
    %v5815 = vadd.f32 %v5812, 1.0
    %v5816 = vadd.f32 %v5814, 1.0
    %v5817 = vrcp.pop %v5815
    %v5818 = vmul.f32 1.0, %v5817
    %v5819 = vrcp.pop %v5816
    %v5820 = vmul.f32 1.0, %v5819
    %v5821 = vxor.u32 %v5803, 2147483648
    %v5822 = vxor.u32 %v5804, 2147483648
    %v5823 = vmul.f32 %v5821, 1.442695
    %v5824 = vpow.pop %v5823
    %v5825 = vmul.f32 %v5822, 1.442695
    %v5826 = vpow.pop %v5825
    %v5827 = vadd.f32 %v5824, 1.0
    %v5828 = vadd.f32 %v5826, 1.0
    %v5829 = vrcp.pop %v5827
    %v5830 = vmul.f32 1.0, %v5829
    %v5831 = vrcp.pop %v5828
    %v5832 = vmul.f32 1.0, %v5831
    %v5833 = vtanh.pop %v5805
    %v5834 = vtanh.pop %v5806
    %v5835 = vxor.u32 %v5807, 2147483648
    %v5836 = vxor.u32 %v5808, 2147483648
    %v5837 = vmul.f32 %v5835, 1.442695
    %v5838 = vpow.pop %v5837
    %v5839 = vmul.f32 %v5836, 1.442695
    %v5840 = vpow.pop %v5839
    %v5841 = vadd.f32 %v5838, 1.0
    %v5842 = vadd.f32 %v5840, 1.0
    %v5843 = vrcp.pop %v5841
    %v5844 = vmul.f32 1.0, %v5843
    %v5845 = vrcp.pop %v5842
    %v5846 = vmul.f32 1.0, %v5845
    %v5847 = vld [vmem:[#allocation3] sm:$0xf]
    %v5850 = vunpack.c.l.s4 1983009808
    %v5851 = vunpack.c.0.s8 %v5850
    %v5852 = vlaneseq
    %v5853 = vshrl.u32 %v5852, 7
    %v5854 = vsub.s32 %v5851, %v5853
    %v5855 = vrot.slane %v5847, %v5854
    %v5856 = vcombine.high %v5855, %v5855
    %v5859 = vmul.f32 %v5830, %v5855
    %v5860 = vmul.f32 %v5832, %v5856
    %v5861 = vmul.f32 %v5818, %v5833
    %v5862 = vmul.f32 %v5820, %v5834
    %v5863 = vadd.f32 %v5859, %v5861
    %v5864 = vadd.f32 %v5860, %v5862
    %v5865 = vtanh.pop %v5863
    %v5866 = vtanh.pop %v5864
    %v5867 = vmul.f32 %v5844, %v5865
    %v5868 = vmul.f32 %v5846, %v5866
    %v5871 = vcombine.low %v5863, %v5864
    %v5873 = vunpack.c.l.s4 1983009808
    %v5874 = vunpack.c.0.s8 %v5873
    %v5875 = vlaneseq
    %v5876 = vshrl.u32 %v5875, 7
    %v5877 = vsub.s32 %v5874, %v5876
    %v5878 = vrot.slane %v5871, %v5877
    %5880 = vst [vmem:[#allocation3] sm:$0xf] %v5878
    %v5883 = vcombine.low %v5867, %v5868
    %v5885 = vunpack.c.l.s4 1983009808
    %v5886 = vunpack.c.0.s8 %v5885
    %v5887 = vlaneseq
    %v5888 = vshrl.u32 %v5887, 7
    %v5889 = vsub.s32 %v5886, %v5888
    %v5890 = vrot.slane %v5883, %v5889
    %5892 = vst [vmem:[#allocation2] sm:$0xf] %v5890
    %v5893 = vld [vmem:[#allocation6] sm:$0xff]
    %v5894 = vld [vmem:[#allocation6 + $0x8] sm:$0xff]
    %v5895 = vld [vmem:[#allocation6 + $0x10] sm:$0xff]
    %v5896 = vld [vmem:[#allocation6 + $0x18] sm:$0xff]
    %v5897 = vld [vmem:[#allocation6 + $0x20] sm:$0xff]
    %v5898 = vld [vmem:[#allocation6 + $0x28] sm:$0xff]
    %v5899 = vld [vmem:[#allocation6 + $0x30] sm:$0xff]
    %v5900 = vld [vmem:[#allocation6 + $0x38] sm:$0xff]
    %v5901 = vld [vmem:[#allocation6 + $0x40] sm:$0xff]
    %v5902 = vld [vmem:[#allocation6 + $0x48] sm:$0xff]
    %v5903 = vld [vmem:[#allocation6 + $0x50] sm:$0xff]
    %v5904 = vld [vmem:[#allocation6 + $0x58] sm:$0xff]
    %v5905 = vld [vmem:[#allocation6 + $0x60] sm:$0xff]
    %v5906 = vld [vmem:[#allocation6 + $0x68] sm:$0xff]
    %v5907 = vld [vmem:[#allocation6 + $0x70] sm:$0xff]
    %v5908 = vld [vmem:[#allocation6 + $0x78] sm:$0xff]
    %v5909 = vld [vmem:[#allocation6 + $0x80] sm:$0xff]
    %v5910 = vld [vmem:[#allocation6 + $0x88] sm:$0xff]
    %v5911 = vld [vmem:[#allocation6 + $0x90] sm:$0xff]
    %v5912 = vld [vmem:[#allocation6 + $0x98] sm:$0xff]
    %v5913 = vld [vmem:[#allocation6 + $0xa0] sm:$0xff]
    %v5914 = vld [vmem:[#allocation6 + $0xa8] sm:$0xff]
    %v5915 = vld [vmem:[#allocation6 + $0xb0] sm:$0xff]
    %v5916 = vld [vmem:[#allocation6 + $0xb8] sm:$0xff]
    %v5917 = vld [vmem:[#allocation6 + $0xc0] sm:$0xff]
    %v5918 = vld [vmem:[#allocation6 + $0xc8] sm:$0xff]
    %v5919 = vld [vmem:[#allocation6 + $0xd0] sm:$0xff]
    %v5920 = vld [vmem:[#allocation6 + $0xd8] sm:$0xff]
    %v5921 = vld [vmem:[#allocation6 + $0xe0] sm:$0xff]
    %v5922 = vld [vmem:[#allocation6 + $0xe8] sm:$0xff]
    %v5923 = vld [vmem:[#allocation6 + $0xf0] sm:$0xff]
    %v5924 = vld [vmem:[#allocation6 + $0xf8] sm:$0xff]
    %v5925 = vld [vmem:[%s5] sm:$0x1]
    %v5927 = vlaneseq
    %v5928 = vshrl.u32 %v5927, 7
    %v5929 = vsub.s32 0, %v5928
    %v5930 = vrot.slane %v5925, %v5929
    %5932 = vmatprep.subr.mxu0 0.0
    %5933 = vmatpush1.msra.mxu0 %v5893
    %5934 = vmatprep.subr.mxu0 0.0
    %5935 = vmatpush1.msra.mxu0 %v5894
    %5936 = vmatprep.subr.mxu0 0.0
    %5937 = vmatpush1.msra.mxu0 %v5895
    %5938 = vmatprep.subr.mxu0 0.0
    %5939 = vmatpush1.msra.mxu0 %v5896
    %5940 = vmatprep.subr.mxu0 0.0
    %5941 = vmatpush1.msra.mxu0 %v5897
    %5942 = vmatprep.subr.mxu0 0.0
    %5943 = vmatpush1.msra.mxu0 %v5898
    %5944 = vmatprep.subr.mxu0 0.0
    %5945 = vmatpush1.msra.mxu0 %v5899
    %5946 = vmatprep.subr.mxu0 0.0
    %5947 = vmatpush1.msra.mxu0 %v5900
    %5948 = vmatprep.subr.mxu0 0.0
    %5949 = vmatpush1.msra.mxu0 %v5901
    %5950 = vmatprep.subr.mxu0 0.0
    %5951 = vmatpush1.msra.mxu0 %v5902
    %5952 = vmatprep.subr.mxu0 0.0
    %5953 = vmatpush1.msra.mxu0 %v5903
    %5954 = vmatprep.subr.mxu0 0.0
    %5955 = vmatpush1.msra.mxu0 %v5904
    %5956 = vmatprep.subr.mxu0 0.0
    %5957 = vmatpush1.msra.mxu0 %v5905
    %5958 = vmatprep.subr.mxu0 0.0
    %5959 = vmatpush1.msra.mxu0 %v5906
    %5960 = vmatprep.subr.mxu0 0.0
    %5961 = vmatpush1.msra.mxu0 %v5907
    %5962 = vmatprep.subr.mxu0 0.0
    %5963 = vmatpush1.msra.mxu0 %v5908
    %5964 = vmatprep.subr.mxu0 0.0
    %5965 = vmatpush1.msra.mxu0 %v5909
    %5966 = vmatprep.subr.mxu0 0.0
    %5967 = vmatpush1.msra.mxu0 %v5910
    %5968 = vmatprep.subr.mxu0 0.0
    %5969 = vmatpush1.msra.mxu0 %v5911
    %5970 = vmatprep.subr.mxu0 0.0
    %5971 = vmatpush1.msra.mxu0 %v5912
    %5972 = vmatprep.subr.mxu0 0.0
    %5973 = vmatpush1.msra.mxu0 %v5913
    %5974 = vmatprep.subr.mxu0 0.0
    %5975 = vmatpush1.msra.mxu0 %v5914
    %5976 = vmatprep.subr.mxu0 0.0
    %5977 = vmatpush1.msra.mxu0 %v5915
    %5978 = vmatprep.subr.mxu0 0.0
    %5979 = vmatpush1.msra.mxu0 %v5916
    %5980 = vmatprep.subr.mxu0 0.0
    %5981 = vmatpush1.msra.mxu0 %v5917
    %5982 = vmatprep.subr.mxu0 0.0
    %5983 = vmatpush1.msra.mxu0 %v5918
    %5984 = vmatprep.subr.mxu0 0.0
    %5985 = vmatpush1.msra.mxu0 %v5919
    %5986 = vmatprep.subr.mxu0 0.0
    %5987 = vmatpush1.msra.mxu0 %v5920
    %5988 = vmatprep.subr.mxu0 0.0
    %5989 = vmatpush1.msra.mxu0 %v5921
    %5990 = vmatprep.subr.mxu0 0.0
    %5991 = vmatpush1.msra.mxu0 %v5922
    %5992 = vmatprep.subr.mxu0 0.0
    %5993 = vmatpush1.msra.mxu0 %v5923
    %5994 = vmatprep.subr.mxu0 0.0
    %5995 = vmatpush1.msra.mxu0 %v5924
    %5996 = vmatprep.mubr.f32.mxu0 %v5868
    %5997 = vmatmul.mubr.f32.gmra.mrb[0].mxu0 %v5867
    %v5998 = vpop.f32.mrb[0].mxu0
    %v5999 = vadd.f32 %v5930, %v5998
    %v6000 = vpop.f32.mrb[0].mxu0
    %6001 = vdwg.mxu0
    %s6002 = scalar_lea.vmem %s6, 6
    %6003 = vst [vmem:[%s6002] sm:$0x3] %v5999
    %s6004 = scalar_lea.vmem %s0, 8
    %v6005 = vld [vmem:[%s6004] sm:$0x3]
    %v6006 = vld [vmem:[#allocation2] sm:$0xf]
    %v6007 = vld [vmem:[%s1] sm:$0xff]
    %v6008 = vld [vmem:[%s1 + $0x8] sm:$0xff]
    %v6009 = vld [vmem:[%s1 + $0x10] sm:$0xff]
    %v6010 = vld [vmem:[%s1 + $0x18] sm:$0xff]
    %v6011 = vld [vmem:[%s1 + $0x20] sm:$0xff]
    %v6012 = vld [vmem:[%s1 + $0x28] sm:$0xff]
    %v6013 = vld [vmem:[%s1 + $0x30] sm:$0xff]
    %v6014 = vld [vmem:[%s1 + $0x38] sm:$0xff]
    %v6015 = vld [vmem:[%s3] sm:$0xff]
    %v6017 = vlaneseq
    %v6018 = vshrl.u32 %v6017, 7
    %v6019 = vsub.s32 0, %v6018
    %v6020 = vrot.slane %v6015, %v6019
    %v6021 = vlaneseq
    %v6022 = vshrl.u32 %v6021, 7
    %v6023 = vsub.s32 1, %v6022
    %v6024 = vrot.slane %v6015, %v6023
    %v6025 = vlaneseq
    %v6026 = vshrl.u32 %v6025, 7
    %v6027 = vsub.s32 2, %v6026
    %v6028 = vrot.slane %v6015, %v6027
    %v6029 = vlaneseq
    %v6030 = vshrl.u32 %v6029, 7
    %v6031 = vsub.s32 3, %v6030
    %v6032 = vrot.slane %v6015, %v6031
    %v6033 = vlaneseq
    %v6034 = vshrl.u32 %v6033, 7
    %v6035 = vsub.s32 4, %v6034
    %v6036 = vrot.slane %v6015, %v6035
    %v6037 = vlaneseq
    %v6038 = vshrl.u32 %v6037, 7
    %v6039 = vsub.s32 5, %v6038
    %v6040 = vrot.slane %v6015, %v6039
    %v6041 = vlaneseq
    %v6042 = vshrl.u32 %v6041, 7
    %v6043 = vsub.s32 6, %v6042
    %v6044 = vrot.slane %v6015, %v6043
    %v6045 = vlaneseq
    %v6046 = vshrl.u32 %v6045, 7
    %v6047 = vsub.s32 7, %v6046
    %v6048 = vrot.slane %v6015, %v6047
    %v6058 = vsel %vm105, %v6005, 0
    %6060 = vmatprep.subr.mxu0 %v6008
    %6061 = vmatpush1.msra.mxu0 %v6007
    %6062 = vmatprep.subr.mxu0 0.0
    %6063 = vmatpush1.msra.mxu0 0.0
    %6064 = vmatprep.subr.mxu0 0.0
    %6065 = vmatpush1.msra.mxu0 0.0
    %6066 = vmatprep.subr.mxu0 0.0
    %6067 = vmatpush1.msra.mxu0 0.0
    %6068 = vmatprep.subr.mxu0 0.0
    %6069 = vmatpush1.msra.mxu0 0.0
    %6070 = vmatprep.subr.mxu0 0.0
    %6071 = vmatpush1.msra.mxu0 0.0
    %6072 = vmatprep.subr.mxu0 0.0
    %6073 = vmatpush1.msra.mxu0 0.0
    %6074 = vmatprep.subr.mxu0 0.0
    %6075 = vmatpush1.msra.mxu0 0.0
    %6076 = vmatprep.subr.mxu0 0.0
    %6077 = vmatpush1.msra.mxu0 0.0
    %6078 = vmatprep.subr.mxu0 0.0
    %6079 = vmatpush1.msra.mxu0 0.0
    %6080 = vmatprep.subr.mxu0 0.0
    %6081 = vmatpush1.msra.mxu0 0.0
    %6082 = vmatprep.subr.mxu0 0.0
    %6083 = vmatpush1.msra.mxu0 0.0
    %6084 = vmatprep.subr.mxu0 0.0
    %6085 = vmatpush1.msra.mxu0 0.0
    %6086 = vmatprep.subr.mxu0 0.0
    %6087 = vmatpush1.msra.mxu0 0.0
    %6088 = vmatprep.subr.mxu0 0.0
    %6089 = vmatpush1.msra.mxu0 0.0
    %6090 = vmatprep.subr.mxu0 0.0
    %6091 = vmatpush1.msra.mxu0 0.0
    %6092 = vmatprep.subr.mxu0 0.0
    %6093 = vmatpush1.msra.mxu0 0.0
    %6094 = vmatprep.subr.mxu0 0.0
    %6095 = vmatpush1.msra.mxu0 0.0
    %6096 = vmatprep.subr.mxu0 0.0
    %6097 = vmatpush1.msra.mxu0 0.0
    %6098 = vmatprep.subr.mxu0 0.0
    %6099 = vmatpush1.msra.mxu0 0.0
    %6100 = vmatprep.subr.mxu0 0.0
    %6101 = vmatpush1.msra.mxu0 0.0
    %6102 = vmatprep.subr.mxu0 0.0
    %6103 = vmatpush1.msra.mxu0 0.0
    %6104 = vmatprep.subr.mxu0 0.0
    %6105 = vmatpush1.msra.mxu0 0.0
    %6106 = vmatprep.subr.mxu0 0.0
    %6107 = vmatpush1.msra.mxu0 0.0
    %6108 = vmatprep.subr.mxu0 0.0
    %6109 = vmatpush1.msra.mxu0 0.0
    %6110 = vmatprep.subr.mxu0 0.0
    %6111 = vmatpush1.msra.mxu0 0.0
    %6112 = vmatprep.subr.mxu0 0.0
    %6113 = vmatpush1.msra.mxu0 0.0
    %6114 = vmatprep.subr.mxu0 0.0
    %6115 = vmatpush1.msra.mxu0 0.0
    %6116 = vmatprep.subr.mxu0 0.0
    %6117 = vmatpush1.msra.mxu0 0.0
    %6118 = vmatprep.subr.mxu0 0.0
    %6119 = vmatpush1.msra.mxu0 0.0
    %6120 = vmatprep.subr.mxu0 0.0
    %6121 = vmatpush1.msra.mxu0 0.0
    %6122 = vmatprep.subr.mxu0 0.0
    %6123 = vmatpush1.msra.mxu0 0.0
    %6124 = vmatprep.mubr.f32.mxu0 0.0
    %6125 = vmatmul.mubr.f32.gmra.mrb[0].mxu0 %v6058
    %v6126 = vpop.f32.mrb[0].mxu0
    %v6127 = vadd.f32 %v6020, %v6126
    %v6128 = vpop.f32.mrb[0].mxu0
    %v6129 = vadd.f32 %v6024, %v6128
    %6130 = vdwg.mxu0
    %6131 = vmatprep.subr.mxu0 %v6010
    %6132 = vmatpush1.msra.mxu0 %v6009
    %6133 = vmatprep.subr.mxu0 0.0
    %6134 = vmatpush1.msra.mxu0 0.0
    %6135 = vmatprep.subr.mxu0 0.0
    %6136 = vmatpush1.msra.mxu0 0.0
    %6137 = vmatprep.subr.mxu0 0.0
    %6138 = vmatpush1.msra.mxu0 0.0
    %6139 = vmatprep.subr.mxu0 0.0
    %6140 = vmatpush1.msra.mxu0 0.0
    %6141 = vmatprep.subr.mxu0 0.0
    %6142 = vmatpush1.msra.mxu0 0.0
    %6143 = vmatprep.subr.mxu0 0.0
    %6144 = vmatpush1.msra.mxu0 0.0
    %6145 = vmatprep.subr.mxu0 0.0
    %6146 = vmatpush1.msra.mxu0 0.0
    %6147 = vmatprep.subr.mxu0 0.0
    %6148 = vmatpush1.msra.mxu0 0.0
    %6149 = vmatprep.subr.mxu0 0.0
    %6150 = vmatpush1.msra.mxu0 0.0
    %6151 = vmatprep.subr.mxu0 0.0
    %6152 = vmatpush1.msra.mxu0 0.0
    %6153 = vmatprep.subr.mxu0 0.0
    %6154 = vmatpush1.msra.mxu0 0.0
    %6155 = vmatprep.subr.mxu0 0.0
    %6156 = vmatpush1.msra.mxu0 0.0
    %6157 = vmatprep.subr.mxu0 0.0
    %6158 = vmatpush1.msra.mxu0 0.0
    %6159 = vmatprep.subr.mxu0 0.0
    %6160 = vmatpush1.msra.mxu0 0.0
    %6161 = vmatprep.subr.mxu0 0.0
    %6162 = vmatpush1.msra.mxu0 0.0
    %6163 = vmatprep.subr.mxu0 0.0
    %6164 = vmatpush1.msra.mxu0 0.0
    %6165 = vmatprep.subr.mxu0 0.0
    %6166 = vmatpush1.msra.mxu0 0.0
    %6167 = vmatprep.subr.mxu0 0.0
    %6168 = vmatpush1.msra.mxu0 0.0
    %6169 = vmatprep.subr.mxu0 0.0
    %6170 = vmatpush1.msra.mxu0 0.0
    %6171 = vmatprep.subr.mxu0 0.0
    %6172 = vmatpush1.msra.mxu0 0.0
    %6173 = vmatprep.subr.mxu0 0.0
    %6174 = vmatpush1.msra.mxu0 0.0
    %6175 = vmatprep.subr.mxu0 0.0
    %6176 = vmatpush1.msra.mxu0 0.0
    %6177 = vmatprep.subr.mxu0 0.0
    %6178 = vmatpush1.msra.mxu0 0.0
    %6179 = vmatprep.subr.mxu0 0.0
    %6180 = vmatpush1.msra.mxu0 0.0
    %6181 = vmatprep.subr.mxu0 0.0
    %6182 = vmatpush1.msra.mxu0 0.0
    %6183 = vmatprep.subr.mxu0 0.0
    %6184 = vmatpush1.msra.mxu0 0.0
    %6185 = vmatprep.subr.mxu0 0.0
    %6186 = vmatpush1.msra.mxu0 0.0
    %6187 = vmatprep.subr.mxu0 0.0
    %6188 = vmatpush1.msra.mxu0 0.0
    %6189 = vmatprep.subr.mxu0 0.0
    %6190 = vmatpush1.msra.mxu0 0.0
    %6191 = vmatprep.subr.mxu0 0.0
    %6192 = vmatpush1.msra.mxu0 0.0
    %6193 = vmatprep.subr.mxu0 0.0
    %6194 = vmatpush1.msra.mxu0 0.0
    %6195 = vmatprep.mubr.f32.mxu0 0.0
    %6196 = vmatmul.mubr.f32.gmra.mrb[0].mxu0 %v6058
    %v6197 = vpop.f32.mrb[0].mxu0
    %v6198 = vadd.f32 %v6028, %v6197
    %v6199 = vpop.f32.mrb[0].mxu0
    %v6200 = vadd.f32 %v6032, %v6199
    %6201 = vdwg.mxu0
    %6202 = vmatprep.subr.mxu0 %v6012
    %6203 = vmatpush1.msra.mxu0 %v6011
    %6204 = vmatprep.subr.mxu0 0.0
    %6205 = vmatpush1.msra.mxu0 0.0
    %6206 = vmatprep.subr.mxu0 0.0
    %6207 = vmatpush1.msra.mxu0 0.0
    %6208 = vmatprep.subr.mxu0 0.0
    %6209 = vmatpush1.msra.mxu0 0.0
    %6210 = vmatprep.subr.mxu0 0.0
    %6211 = vmatpush1.msra.mxu0 0.0
    %6212 = vmatprep.subr.mxu0 0.0
    %6213 = vmatpush1.msra.mxu0 0.0
    %6214 = vmatprep.subr.mxu0 0.0
    %6215 = vmatpush1.msra.mxu0 0.0
    %6216 = vmatprep.subr.mxu0 0.0
    %6217 = vmatpush1.msra.mxu0 0.0
    %6218 = vmatprep.subr.mxu0 0.0
    %6219 = vmatpush1.msra.mxu0 0.0
    %6220 = vmatprep.subr.mxu0 0.0
    %6221 = vmatpush1.msra.mxu0 0.0
    %6222 = vmatprep.subr.mxu0 0.0
    %6223 = vmatpush1.msra.mxu0 0.0
    %6224 = vmatprep.subr.mxu0 0.0
    %6225 = vmatpush1.msra.mxu0 0.0
    %6226 = vmatprep.subr.mxu0 0.0
    %6227 = vmatpush1.msra.mxu0 0.0
    %6228 = vmatprep.subr.mxu0 0.0
    %6229 = vmatpush1.msra.mxu0 0.0
    %6230 = vmatprep.subr.mxu0 0.0
    %6231 = vmatpush1.msra.mxu0 0.0
    %6232 = vmatprep.subr.mxu0 0.0
    %6233 = vmatpush1.msra.mxu0 0.0
    %6234 = vmatprep.subr.mxu0 0.0
    %6235 = vmatpush1.msra.mxu0 0.0
    %6236 = vmatprep.subr.mxu0 0.0
    %6237 = vmatpush1.msra.mxu0 0.0
    %6238 = vmatprep.subr.mxu0 0.0
    %6239 = vmatpush1.msra.mxu0 0.0
    %6240 = vmatprep.subr.mxu0 0.0
    %6241 = vmatpush1.msra.mxu0 0.0
    %6242 = vmatprep.subr.mxu0 0.0
    %6243 = vmatpush1.msra.mxu0 0.0
    %6244 = vmatprep.subr.mxu0 0.0
    %6245 = vmatpush1.msra.mxu0 0.0
    %6246 = vmatprep.subr.mxu0 0.0
    %6247 = vmatpush1.msra.mxu0 0.0
    %6248 = vmatprep.subr.mxu0 0.0
    %6249 = vmatpush1.msra.mxu0 0.0
    %6250 = vmatprep.subr.mxu0 0.0
    %6251 = vmatpush1.msra.mxu0 0.0
    %6252 = vmatprep.subr.mxu0 0.0
    %6253 = vmatpush1.msra.mxu0 0.0
    %6254 = vmatprep.subr.mxu0 0.0
    %6255 = vmatpush1.msra.mxu0 0.0
    %6256 = vmatprep.subr.mxu0 0.0
    %6257 = vmatpush1.msra.mxu0 0.0
    %6258 = vmatprep.subr.mxu0 0.0
    %6259 = vmatpush1.msra.mxu0 0.0
    %6260 = vmatprep.subr.mxu0 0.0
    %6261 = vmatpush1.msra.mxu0 0.0
    %6262 = vmatprep.subr.mxu0 0.0
    %6263 = vmatpush1.msra.mxu0 0.0
    %6264 = vmatprep.subr.mxu0 0.0
    %6265 = vmatpush1.msra.mxu0 0.0
    %6266 = vmatprep.mubr.f32.mxu0 0.0
    %6267 = vmatmul.mubr.f32.gmra.mrb[0].mxu0 %v6058
    %v6268 = vpop.f32.mrb[0].mxu0
    %v6269 = vadd.f32 %v6036, %v6268
    %v6270 = vpop.f32.mrb[0].mxu0
    %v6271 = vadd.f32 %v6040, %v6270
    %6272 = vdwg.mxu0
    %6273 = vmatprep.subr.mxu0 %v6014
    %6274 = vmatpush1.msra.mxu0 %v6013
    %6275 = vmatprep.subr.mxu0 0.0
    %6276 = vmatpush1.msra.mxu0 0.0
    %6277 = vmatprep.subr.mxu0 0.0
    %6278 = vmatpush1.msra.mxu0 0.0
    %6279 = vmatprep.subr.mxu0 0.0
    %6280 = vmatpush1.msra.mxu0 0.0
    %6281 = vmatprep.subr.mxu0 0.0
    %6282 = vmatpush1.msra.mxu0 0.0
    %6283 = vmatprep.subr.mxu0 0.0
    %6284 = vmatpush1.msra.mxu0 0.0
    %6285 = vmatprep.subr.mxu0 0.0
    %6286 = vmatpush1.msra.mxu0 0.0
    %6287 = vmatprep.subr.mxu0 0.0
    %6288 = vmatpush1.msra.mxu0 0.0
    %6289 = vmatprep.subr.mxu0 0.0
    %6290 = vmatpush1.msra.mxu0 0.0
    %6291 = vmatprep.subr.mxu0 0.0
    %6292 = vmatpush1.msra.mxu0 0.0
    %6293 = vmatprep.subr.mxu0 0.0
    %6294 = vmatpush1.msra.mxu0 0.0
    %6295 = vmatprep.subr.mxu0 0.0
    %6296 = vmatpush1.msra.mxu0 0.0
    %6297 = vmatprep.subr.mxu0 0.0
    %6298 = vmatpush1.msra.mxu0 0.0
    %6299 = vmatprep.subr.mxu0 0.0
    %6300 = vmatpush1.msra.mxu0 0.0
    %6301 = vmatprep.subr.mxu0 0.0
    %6302 = vmatpush1.msra.mxu0 0.0
    %6303 = vmatprep.subr.mxu0 0.0
    %6304 = vmatpush1.msra.mxu0 0.0
    %6305 = vmatprep.subr.mxu0 0.0
    %6306 = vmatpush1.msra.mxu0 0.0
    %6307 = vmatprep.subr.mxu0 0.0
    %6308 = vmatpush1.msra.mxu0 0.0
    %6309 = vmatprep.subr.mxu0 0.0
    %6310 = vmatpush1.msra.mxu0 0.0
    %6311 = vmatprep.subr.mxu0 0.0
    %6312 = vmatpush1.msra.mxu0 0.0
    %6313 = vmatprep.subr.mxu0 0.0
    %6314 = vmatpush1.msra.mxu0 0.0
    %6315 = vmatprep.subr.mxu0 0.0
    %6316 = vmatpush1.msra.mxu0 0.0
    %6317 = vmatprep.subr.mxu0 0.0
    %6318 = vmatpush1.msra.mxu0 0.0
    %6319 = vmatprep.subr.mxu0 0.0
    %6320 = vmatpush1.msra.mxu0 0.0
    %6321 = vmatprep.subr.mxu0 0.0
    %6322 = vmatpush1.msra.mxu0 0.0
    %6323 = vmatprep.subr.mxu0 0.0
    %6324 = vmatpush1.msra.mxu0 0.0
    %6325 = vmatprep.subr.mxu0 0.0
    %6326 = vmatpush1.msra.mxu0 0.0
    %6327 = vmatprep.subr.mxu0 0.0
    %6328 = vmatpush1.msra.mxu0 0.0
    %6329 = vmatprep.subr.mxu0 0.0
    %6330 = vmatpush1.msra.mxu0 0.0
    %6331 = vmatprep.subr.mxu0 0.0
    %6332 = vmatpush1.msra.mxu0 0.0
    %6333 = vmatprep.subr.mxu0 0.0
    %6334 = vmatpush1.msra.mxu0 0.0
    %6335 = vmatprep.subr.mxu0 0.0
    %6336 = vmatpush1.msra.mxu0 0.0
    %6337 = vmatprep.mubr.f32.mxu0 0.0
    %6338 = vmatmul.mubr.f32.gmra.mrb[0].mxu0 %v6058
    %v6339 = vpop.f32.mrb[0].mxu0
    %v6340 = vadd.f32 %v6044, %v6339
    %v6341 = vpop.f32.mrb[0].mxu0
    %v6342 = vadd.f32 %v6048, %v6341
    %6343 = vdwg.mxu0
    %v6346 = vunpack.c.l.s4 1983009808
    %v6347 = vunpack.c.0.s8 %v6346
    %v6348 = vlaneseq
    %v6349 = vshrl.u32 %v6348, 7
    %v6350 = vsub.s32 %v6347, %v6349
    %v6351 = vrot.slane %v6006, %v6350
    %v6352 = vcombine.high %v6351, %v6351
    %v6355 = vpack.c.bf16 %v6351, %v6351
    %v6356 = vpack.c.bf16 %v6352, %v6352
    %v6357 = vld [vmem:[#allocation4] sm:$0xff]
    %v6358 = vld [vmem:[#allocation4 + $0x8] sm:$0xff]
    %v6359 = vld [vmem:[#allocation4 + $0x10] sm:$0xff]
    %v6360 = vld [vmem:[#allocation4 + $0x18] sm:$0xff]
    %v6361 = vld [vmem:[#allocation4 + $0x20] sm:$0xff]
    %v6362 = vld [vmem:[#allocation4 + $0x28] sm:$0xff]
    %v6363 = vld [vmem:[#allocation4 + $0x30] sm:$0xff]
    %v6364 = vld [vmem:[#allocation4 + $0x38] sm:$0xff]
    %v6365 = vld [vmem:[#allocation4 + $0x40] sm:$0xff]
    %v6366 = vld [vmem:[#allocation4 + $0x48] sm:$0xff]
    %v6367 = vld [vmem:[#allocation4 + $0x50] sm:$0xff]
    %v6368 = vld [vmem:[#allocation4 + $0x58] sm:$0xff]
    %v6369 = vld [vmem:[#allocation4 + $0x60] sm:$0xff]
    %v6370 = vld [vmem:[#allocation4 + $0x68] sm:$0xff]
    %v6371 = vld [vmem:[#allocation4 + $0x70] sm:$0xff]
    %v6372 = vld [vmem:[#allocation4 + $0x78] sm:$0xff]
    %v6373 = vld [vmem:[#allocation4 + $0x80] sm:$0xff]
    %v6374 = vld [vmem:[#allocation4 + $0x88] sm:$0xff]
    %v6375 = vld [vmem:[#allocation4 + $0x90] sm:$0xff]
    %v6376 = vld [vmem:[#allocation4 + $0x98] sm:$0xff]
    %v6377 = vld [vmem:[#allocation4 + $0xa0] sm:$0xff]
    %v6378 = vld [vmem:[#allocation4 + $0xa8] sm:$0xff]
    %v6379 = vld [vmem:[#allocation4 + $0xb0] sm:$0xff]
    %v6380 = vld [vmem:[#allocation4 + $0xb8] sm:$0xff]
    %v6381 = vld [vmem:[#allocation4 + $0xc0] sm:$0xff]
    %v6382 = vld [vmem:[#allocation4 + $0xc8] sm:$0xff]
    %v6383 = vld [vmem:[#allocation4 + $0xd0] sm:$0xff]
    %v6384 = vld [vmem:[#allocation4 + $0xd8] sm:$0xff]
    %v6385 = vld [vmem:[#allocation4 + $0xe0] sm:$0xff]
    %v6386 = vld [vmem:[#allocation4 + $0xe8] sm:$0xff]
    %v6387 = vld [vmem:[#allocation4 + $0xf0] sm:$0xff]
    %v6388 = vld [vmem:[#allocation4 + $0xf8] sm:$0xff]
    %v6389 = vld [vmem:[#allocation4 + $0x100] sm:$0xff]
    %v6390 = vld [vmem:[#allocation4 + $0x108] sm:$0xff]
    %v6391 = vld [vmem:[#allocation4 + $0x110] sm:$0xff]
    %v6392 = vld [vmem:[#allocation4 + $0x118] sm:$0xff]
    %v6393 = vld [vmem:[#allocation4 + $0x120] sm:$0xff]
    %v6394 = vld [vmem:[#allocation4 + $0x128] sm:$0xff]
    %v6395 = vld [vmem:[#allocation4 + $0x130] sm:$0xff]
    %v6396 = vld [vmem:[#allocation4 + $0x138] sm:$0xff]
    %v6397 = vld [vmem:[#allocation4 + $0x140] sm:$0xff]
    %v6398 = vld [vmem:[#allocation4 + $0x148] sm:$0xff]
    %v6399 = vld [vmem:[#allocation4 + $0x150] sm:$0xff]
    %v6400 = vld [vmem:[#allocation4 + $0x158] sm:$0xff]
    %v6401 = vld [vmem:[#allocation4 + $0x160] sm:$0xff]
    %v6402 = vld [vmem:[#allocation4 + $0x168] sm:$0xff]
    %v6403 = vld [vmem:[#allocation4 + $0x170] sm:$0xff]
    %v6404 = vld [vmem:[#allocation4 + $0x178] sm:$0xff]
    %v6405 = vld [vmem:[#allocation4 + $0x180] sm:$0xff]
    %v6406 = vld [vmem:[#allocation4 + $0x188] sm:$0xff]
    %v6407 = vld [vmem:[#allocation4 + $0x190] sm:$0xff]
    %v6408 = vld [vmem:[#allocation4 + $0x198] sm:$0xff]
    %v6409 = vld [vmem:[#allocation4 + $0x1a0] sm:$0xff]
    %v6410 = vld [vmem:[#allocation4 + $0x1a8] sm:$0xff]
    %v6411 = vld [vmem:[#allocation4 + $0x1b0] sm:$0xff]
    %v6412 = vld [vmem:[#allocation4 + $0x1b8] sm:$0xff]
    %v6413 = vld [vmem:[#allocation4 + $0x1c0] sm:$0xff]
    %v6414 = vld [vmem:[#allocation4 + $0x1c8] sm:$0xff]
    %v6415 = vld [vmem:[#allocation4 + $0x1d0] sm:$0xff]
    %v6416 = vld [vmem:[#allocation4 + $0x1d8] sm:$0xff]
    %v6417 = vld [vmem:[#allocation4 + $0x1e0] sm:$0xff]
    %v6418 = vld [vmem:[#allocation4 + $0x1e8] sm:$0xff]
    %v6419 = vld [vmem:[#allocation4 + $0x1f0] sm:$0xff]
    %v6420 = vld [vmem:[#allocation4 + $0x1f8] sm:$0xff]
    %v6421 = vld [vmem:[#allocation4 + $0x200] sm:$0xff]
    %v6422 = vld [vmem:[#allocation4 + $0x208] sm:$0xff]
    %v6423 = vld [vmem:[#allocation4 + $0x210] sm:$0xff]
    %v6424 = vld [vmem:[#allocation4 + $0x218] sm:$0xff]
    %v6425 = vld [vmem:[#allocation4 + $0x220] sm:$0xff]
    %v6426 = vld [vmem:[#allocation4 + $0x228] sm:$0xff]
    %v6427 = vld [vmem:[#allocation4 + $0x230] sm:$0xff]
    %v6428 = vld [vmem:[#allocation4 + $0x238] sm:$0xff]
    %v6429 = vld [vmem:[#allocation4 + $0x240] sm:$0xff]
    %v6430 = vld [vmem:[#allocation4 + $0x248] sm:$0xff]
    %v6431 = vld [vmem:[#allocation4 + $0x250] sm:$0xff]
    %v6432 = vld [vmem:[#allocation4 + $0x258] sm:$0xff]
    %v6433 = vld [vmem:[#allocation4 + $0x260] sm:$0xff]
    %v6434 = vld [vmem:[#allocation4 + $0x268] sm:$0xff]
    %v6435 = vld [vmem:[#allocation4 + $0x270] sm:$0xff]
    %v6436 = vld [vmem:[#allocation4 + $0x278] sm:$0xff]
    %v6437 = vld [vmem:[#allocation4 + $0x280] sm:$0xff]
    %v6438 = vld [vmem:[#allocation4 + $0x288] sm:$0xff]
    %v6439 = vld [vmem:[#allocation4 + $0x290] sm:$0xff]
    %v6440 = vld [vmem:[#allocation4 + $0x298] sm:$0xff]
    %v6441 = vld [vmem:[#allocation4 + $0x2a0] sm:$0xff]
    %v6442 = vld [vmem:[#allocation4 + $0x2a8] sm:$0xff]
    %v6443 = vld [vmem:[#allocation4 + $0x2b0] sm:$0xff]
    %v6444 = vld [vmem:[#allocation4 + $0x2b8] sm:$0xff]
    %v6445 = vld [vmem:[#allocation4 + $0x2c0] sm:$0xff]
    %v6446 = vld [vmem:[#allocation4 + $0x2c8] sm:$0xff]
    %v6447 = vld [vmem:[#allocation4 + $0x2d0] sm:$0xff]
    %v6448 = vld [vmem:[#allocation4 + $0x2d8] sm:$0xff]
    %v6449 = vld [vmem:[#allocation4 + $0x2e0] sm:$0xff]
    %v6450 = vld [vmem:[#allocation4 + $0x2e8] sm:$0xff]
    %v6451 = vld [vmem:[#allocation4 + $0x2f0] sm:$0xff]
    %v6452 = vld [vmem:[#allocation4 + $0x2f8] sm:$0xff]
    %v6453 = vld [vmem:[#allocation4 + $0x300] sm:$0xff]
    %v6454 = vld [vmem:[#allocation4 + $0x308] sm:$0xff]
    %v6455 = vld [vmem:[#allocation4 + $0x310] sm:$0xff]
    %v6456 = vld [vmem:[#allocation4 + $0x318] sm:$0xff]
    %v6457 = vld [vmem:[#allocation4 + $0x320] sm:$0xff]
    %v6458 = vld [vmem:[#allocation4 + $0x328] sm:$0xff]
    %v6459 = vld [vmem:[#allocation4 + $0x330] sm:$0xff]
    %v6460 = vld [vmem:[#allocation4 + $0x338] sm:$0xff]
    %v6461 = vld [vmem:[#allocation4 + $0x340] sm:$0xff]
    %v6462 = vld [vmem:[#allocation4 + $0x348] sm:$0xff]
    %v6463 = vld [vmem:[#allocation4 + $0x350] sm:$0xff]
    %v6464 = vld [vmem:[#allocation4 + $0x358] sm:$0xff]
    %v6465 = vld [vmem:[#allocation4 + $0x360] sm:$0xff]
    %v6466 = vld [vmem:[#allocation4 + $0x368] sm:$0xff]
    %v6467 = vld [vmem:[#allocation4 + $0x370] sm:$0xff]
    %v6468 = vld [vmem:[#allocation4 + $0x378] sm:$0xff]
    %v6469 = vld [vmem:[#allocation4 + $0x380] sm:$0xff]
    %v6470 = vld [vmem:[#allocation4 + $0x388] sm:$0xff]
    %v6471 = vld [vmem:[#allocation4 + $0x390] sm:$0xff]
    %v6472 = vld [vmem:[#allocation4 + $0x398] sm:$0xff]
    %v6473 = vld [vmem:[#allocation4 + $0x3a0] sm:$0xff]
    %v6474 = vld [vmem:[#allocation4 + $0x3a8] sm:$0xff]
    %v6475 = vld [vmem:[#allocation4 + $0x3b0] sm:$0xff]
    %v6476 = vld [vmem:[#allocation4 + $0x3b8] sm:$0xff]
    %v6477 = vld [vmem:[#allocation4 + $0x3c0] sm:$0xff]
    %v6478 = vld [vmem:[#allocation4 + $0x3c8] sm:$0xff]
    %v6479 = vld [vmem:[#allocation4 + $0x3d0] sm:$0xff]
    %v6480 = vld [vmem:[#allocation4 + $0x3d8] sm:$0xff]
    %v6481 = vld [vmem:[#allocation4 + $0x3e0] sm:$0xff]
    %v6482 = vld [vmem:[#allocation4 + $0x3e8] sm:$0xff]
    %v6483 = vld [vmem:[#allocation4 + $0x3f0] sm:$0xff]
    %v6484 = vld [vmem:[#allocation4 + $0x3f8] sm:$0xff]
    %v6613 = vunpack.c.l.b16 %v6357
    %v6614 = vunpack.c.h.b16 %v6357
    %v6615 = vunpack.c.l.b16 %v6358
    %v6616 = vunpack.c.h.b16 %v6358
    %v6617 = vunpack.c.l.b16 %v6359
    %v6618 = vunpack.c.h.b16 %v6359
    %v6619 = vunpack.c.l.b16 %v6360
    %v6620 = vunpack.c.h.b16 %v6360
    %v6621 = vunpack.c.l.b16 %v6361
    %v6622 = vunpack.c.h.b16 %v6361
    %v6623 = vunpack.c.l.b16 %v6362
    %v6624 = vunpack.c.h.b16 %v6362
    %v6625 = vunpack.c.l.b16 %v6363
    %v6626 = vunpack.c.h.b16 %v6363
    %v6627 = vunpack.c.l.b16 %v6364
    %v6628 = vunpack.c.h.b16 %v6364
    %v6629 = vunpack.c.l.b16 %v6365
    %v6630 = vunpack.c.h.b16 %v6365
    %v6631 = vunpack.c.l.b16 %v6366
    %v6632 = vunpack.c.h.b16 %v6366
    %v6633 = vunpack.c.l.b16 %v6367
    %v6634 = vunpack.c.h.b16 %v6367
    %v6635 = vunpack.c.l.b16 %v6368
    %v6636 = vunpack.c.h.b16 %v6368
    %v6637 = vunpack.c.l.b16 %v6369
    %v6638 = vunpack.c.h.b16 %v6369
    %v6639 = vunpack.c.l.b16 %v6370
    %v6640 = vunpack.c.h.b16 %v6370
    %v6641 = vunpack.c.l.b16 %v6371
    %v6642 = vunpack.c.h.b16 %v6371
    %v6643 = vunpack.c.l.b16 %v6372
    %v6644 = vunpack.c.h.b16 %v6372
    %v6645 = vunpack.c.l.b16 %v6373
    %v6646 = vunpack.c.h.b16 %v6373
    %v6647 = vunpack.c.l.b16 %v6374
    %v6648 = vunpack.c.h.b16 %v6374
    %v6649 = vunpack.c.l.b16 %v6375
    %v6650 = vunpack.c.h.b16 %v6375
    %v6651 = vunpack.c.l.b16 %v6376
    %v6652 = vunpack.c.h.b16 %v6376
    %v6653 = vunpack.c.l.b16 %v6377
    %v6654 = vunpack.c.h.b16 %v6377
    %v6655 = vunpack.c.l.b16 %v6378
    %v6656 = vunpack.c.h.b16 %v6378
    %v6657 = vunpack.c.l.b16 %v6379
    %v6658 = vunpack.c.h.b16 %v6379
    %v6659 = vunpack.c.l.b16 %v6380
    %v6660 = vunpack.c.h.b16 %v6380
    %v6661 = vunpack.c.l.b16 %v6381
    %v6662 = vunpack.c.h.b16 %v6381
    %v6663 = vunpack.c.l.b16 %v6382
    %v6664 = vunpack.c.h.b16 %v6382
    %v6665 = vunpack.c.l.b16 %v6383
    %v6666 = vunpack.c.h.b16 %v6383
    %v6667 = vunpack.c.l.b16 %v6384
    %v6668 = vunpack.c.h.b16 %v6384
    %v6669 = vunpack.c.l.b16 %v6385
    %v6670 = vunpack.c.h.b16 %v6385
    %v6671 = vunpack.c.l.b16 %v6386
    %v6672 = vunpack.c.h.b16 %v6386
    %v6673 = vunpack.c.l.b16 %v6387
    %v6674 = vunpack.c.h.b16 %v6387
    %v6675 = vunpack.c.l.b16 %v6388
    %v6676 = vunpack.c.h.b16 %v6388
    %v6677 = vunpack.c.l.b16 %v6389
    %v6678 = vunpack.c.h.b16 %v6389
    %v6679 = vunpack.c.l.b16 %v6390
    %v6680 = vunpack.c.h.b16 %v6390
    %v6681 = vunpack.c.l.b16 %v6391
    %v6682 = vunpack.c.h.b16 %v6391
    %v6683 = vunpack.c.l.b16 %v6392
    %v6684 = vunpack.c.h.b16 %v6392
    %v6685 = vunpack.c.l.b16 %v6393
    %v6686 = vunpack.c.h.b16 %v6393
    %v6687 = vunpack.c.l.b16 %v6394
    %v6688 = vunpack.c.h.b16 %v6394
    %v6689 = vunpack.c.l.b16 %v6395
    %v6690 = vunpack.c.h.b16 %v6395
    %v6691 = vunpack.c.l.b16 %v6396
    %v6692 = vunpack.c.h.b16 %v6396
    %v6693 = vunpack.c.l.b16 %v6397
    %v6694 = vunpack.c.h.b16 %v6397
    %v6695 = vunpack.c.l.b16 %v6398
    %v6696 = vunpack.c.h.b16 %v6398
    %v6697 = vunpack.c.l.b16 %v6399
    %v6698 = vunpack.c.h.b16 %v6399
    %v6699 = vunpack.c.l.b16 %v6400
    %v6700 = vunpack.c.h.b16 %v6400
    %v6701 = vunpack.c.l.b16 %v6401
    %v6702 = vunpack.c.h.b16 %v6401
    %v6703 = vunpack.c.l.b16 %v6402
    %v6704 = vunpack.c.h.b16 %v6402
    %v6705 = vunpack.c.l.b16 %v6403
    %v6706 = vunpack.c.h.b16 %v6403
    %v6707 = vunpack.c.l.b16 %v6404
    %v6708 = vunpack.c.h.b16 %v6404
    %v6709 = vunpack.c.l.b16 %v6405
    %v6710 = vunpack.c.h.b16 %v6405
    %v6711 = vunpack.c.l.b16 %v6406
    %v6712 = vunpack.c.h.b16 %v6406
    %v6713 = vunpack.c.l.b16 %v6407
    %v6714 = vunpack.c.h.b16 %v6407
    %v6715 = vunpack.c.l.b16 %v6408
    %v6716 = vunpack.c.h.b16 %v6408
    %v6717 = vunpack.c.l.b16 %v6409
    %v6718 = vunpack.c.h.b16 %v6409
    %v6719 = vunpack.c.l.b16 %v6410
    %v6720 = vunpack.c.h.b16 %v6410
    %v6721 = vunpack.c.l.b16 %v6411
    %v6722 = vunpack.c.h.b16 %v6411
    %v6723 = vunpack.c.l.b16 %v6412
    %v6724 = vunpack.c.h.b16 %v6412
    %v6725 = vunpack.c.l.b16 %v6413
    %v6726 = vunpack.c.h.b16 %v6413
    %v6727 = vunpack.c.l.b16 %v6414
    %v6728 = vunpack.c.h.b16 %v6414
    %v6729 = vunpack.c.l.b16 %v6415
    %v6730 = vunpack.c.h.b16 %v6415
    %v6731 = vunpack.c.l.b16 %v6416
    %v6732 = vunpack.c.h.b16 %v6416
    %v6733 = vunpack.c.l.b16 %v6417
    %v6734 = vunpack.c.h.b16 %v6417
    %v6735 = vunpack.c.l.b16 %v6418
    %v6736 = vunpack.c.h.b16 %v6418
    %v6737 = vunpack.c.l.b16 %v6419
    %v6738 = vunpack.c.h.b16 %v6419
    %v6739 = vunpack.c.l.b16 %v6420
    %v6740 = vunpack.c.h.b16 %v6420
    %v6741 = vunpack.c.l.b16 %v6421
    %v6742 = vunpack.c.h.b16 %v6421
    %v6743 = vunpack.c.l.b16 %v6422
    %v6744 = vunpack.c.h.b16 %v6422
    %v6745 = vunpack.c.l.b16 %v6423
    %v6746 = vunpack.c.h.b16 %v6423
    %v6747 = vunpack.c.l.b16 %v6424
    %v6748 = vunpack.c.h.b16 %v6424
    %v6749 = vunpack.c.l.b16 %v6425
    %v6750 = vunpack.c.h.b16 %v6425
    %v6751 = vunpack.c.l.b16 %v6426
    %v6752 = vunpack.c.h.b16 %v6426
    %v6753 = vunpack.c.l.b16 %v6427
    %v6754 = vunpack.c.h.b16 %v6427
    %v6755 = vunpack.c.l.b16 %v6428
    %v6756 = vunpack.c.h.b16 %v6428
    %v6757 = vunpack.c.l.b16 %v6429
    %v6758 = vunpack.c.h.b16 %v6429
    %v6759 = vunpack.c.l.b16 %v6430
    %v6760 = vunpack.c.h.b16 %v6430
    %v6761 = vunpack.c.l.b16 %v6431
    %v6762 = vunpack.c.h.b16 %v6431
    %v6763 = vunpack.c.l.b16 %v6432
    %v6764 = vunpack.c.h.b16 %v6432
    %v6765 = vunpack.c.l.b16 %v6433
    %v6766 = vunpack.c.h.b16 %v6433
    %v6767 = vunpack.c.l.b16 %v6434
    %v6768 = vunpack.c.h.b16 %v6434
    %v6769 = vunpack.c.l.b16 %v6435
    %v6770 = vunpack.c.h.b16 %v6435
    %v6771 = vunpack.c.l.b16 %v6436
    %v6772 = vunpack.c.h.b16 %v6436
    %v6773 = vunpack.c.l.b16 %v6437
    %v6774 = vunpack.c.h.b16 %v6437
    %v6775 = vunpack.c.l.b16 %v6438
    %v6776 = vunpack.c.h.b16 %v6438
    %v6777 = vunpack.c.l.b16 %v6439
    %v6778 = vunpack.c.h.b16 %v6439
    %v6779 = vunpack.c.l.b16 %v6440
    %v6780 = vunpack.c.h.b16 %v6440
    %v6781 = vunpack.c.l.b16 %v6441
    %v6782 = vunpack.c.h.b16 %v6441
    %v6783 = vunpack.c.l.b16 %v6442
    %v6784 = vunpack.c.h.b16 %v6442
    %v6785 = vunpack.c.l.b16 %v6443
    %v6786 = vunpack.c.h.b16 %v6443
    %v6787 = vunpack.c.l.b16 %v6444
    %v6788 = vunpack.c.h.b16 %v6444
    %v6789 = vunpack.c.l.b16 %v6445
    %v6790 = vunpack.c.h.b16 %v6445
    %v6791 = vunpack.c.l.b16 %v6446
    %v6792 = vunpack.c.h.b16 %v6446
    %v6793 = vunpack.c.l.b16 %v6447
    %v6794 = vunpack.c.h.b16 %v6447
    %v6795 = vunpack.c.l.b16 %v6448
    %v6796 = vunpack.c.h.b16 %v6448
    %v6797 = vunpack.c.l.b16 %v6449
    %v6798 = vunpack.c.h.b16 %v6449
    %v6799 = vunpack.c.l.b16 %v6450
    %v6800 = vunpack.c.h.b16 %v6450
    %v6801 = vunpack.c.l.b16 %v6451
    %v6802 = vunpack.c.h.b16 %v6451
    %v6803 = vunpack.c.l.b16 %v6452
    %v6804 = vunpack.c.h.b16 %v6452
    %v6805 = vunpack.c.l.b16 %v6453
    %v6806 = vunpack.c.h.b16 %v6453
    %v6807 = vunpack.c.l.b16 %v6454
    %v6808 = vunpack.c.h.b16 %v6454
    %v6809 = vunpack.c.l.b16 %v6455
    %v6810 = vunpack.c.h.b16 %v6455
    %v6811 = vunpack.c.l.b16 %v6456
    %v6812 = vunpack.c.h.b16 %v6456
    %v6813 = vunpack.c.l.b16 %v6457
    %v6814 = vunpack.c.h.b16 %v6457
    %v6815 = vunpack.c.l.b16 %v6458
    %v6816 = vunpack.c.h.b16 %v6458
    %v6817 = vunpack.c.l.b16 %v6459
    %v6818 = vunpack.c.h.b16 %v6459
    %v6819 = vunpack.c.l.b16 %v6460
    %v6820 = vunpack.c.h.b16 %v6460
    %v6821 = vunpack.c.l.b16 %v6461
    %v6822 = vunpack.c.h.b16 %v6461
    %v6823 = vunpack.c.l.b16 %v6462
    %v6824 = vunpack.c.h.b16 %v6462
    %v6825 = vunpack.c.l.b16 %v6463
    %v6826 = vunpack.c.h.b16 %v6463
    %v6827 = vunpack.c.l.b16 %v6464
    %v6828 = vunpack.c.h.b16 %v6464
    %v6829 = vunpack.c.l.b16 %v6465
    %v6830 = vunpack.c.h.b16 %v6465
    %v6831 = vunpack.c.l.b16 %v6466
    %v6832 = vunpack.c.h.b16 %v6466
    %v6833 = vunpack.c.l.b16 %v6467
    %v6834 = vunpack.c.h.b16 %v6467
    %v6835 = vunpack.c.l.b16 %v6468
    %v6836 = vunpack.c.h.b16 %v6468
    %v6837 = vunpack.c.l.b16 %v6469
    %v6838 = vunpack.c.h.b16 %v6469
    %v6839 = vunpack.c.l.b16 %v6470
    %v6840 = vunpack.c.h.b16 %v6470
    %v6841 = vunpack.c.l.b16 %v6471
    %v6842 = vunpack.c.h.b16 %v6471
    %v6843 = vunpack.c.l.b16 %v6472
    %v6844 = vunpack.c.h.b16 %v6472
    %v6845 = vunpack.c.l.b16 %v6473
    %v6846 = vunpack.c.h.b16 %v6473
    %v6847 = vunpack.c.l.b16 %v6474
    %v6848 = vunpack.c.h.b16 %v6474
    %v6849 = vunpack.c.l.b16 %v6475
    %v6850 = vunpack.c.h.b16 %v6475
    %v6851 = vunpack.c.l.b16 %v6476
    %v6852 = vunpack.c.h.b16 %v6476
    %v6853 = vunpack.c.l.b16 %v6477
    %v6854 = vunpack.c.h.b16 %v6477
    %v6855 = vunpack.c.l.b16 %v6478
    %v6856 = vunpack.c.h.b16 %v6478
    %v6857 = vunpack.c.l.b16 %v6479
    %v6858 = vunpack.c.h.b16 %v6479
    %v6859 = vunpack.c.l.b16 %v6480
    %v6860 = vunpack.c.h.b16 %v6480
    %v6861 = vunpack.c.l.b16 %v6481
    %v6862 = vunpack.c.h.b16 %v6481
    %v6863 = vunpack.c.l.b16 %v6482
    %v6864 = vunpack.c.h.b16 %v6482
    %v6865 = vunpack.c.l.b16 %v6483
    %v6866 = vunpack.c.h.b16 %v6483
    %v6867 = vunpack.c.l.b16 %v6484
    %v6868 = vunpack.c.h.b16 %v6484
    %v6869 = vpack.c.b16 %v6621, %v6613
    %v6870 = vpack.c.b16 %v6622, %v6614
    %v6871 = vpack.c.b16 %v6623, %v6615
    %v6872 = vpack.c.b16 %v6624, %v6616
    %v6873 = vpack.c.b16 %v6625, %v6617
    %v6874 = vpack.c.b16 %v6626, %v6618
    %v6875 = vpack.c.b16 %v6627, %v6619
    %v6876 = vpack.c.b16 %v6628, %v6620
    %v6877 = vpack.c.b16 %v6637, %v6629
    %v6878 = vpack.c.b16 %v6638, %v6630
    %v6879 = vpack.c.b16 %v6639, %v6631
    %v6880 = vpack.c.b16 %v6640, %v6632
    %v6881 = vpack.c.b16 %v6641, %v6633
    %v6882 = vpack.c.b16 %v6642, %v6634
    %v6883 = vpack.c.b16 %v6643, %v6635
    %v6884 = vpack.c.b16 %v6644, %v6636
    %v6885 = vpack.c.b16 %v6653, %v6645
    %v6886 = vpack.c.b16 %v6654, %v6646
    %v6887 = vpack.c.b16 %v6655, %v6647
    %v6888 = vpack.c.b16 %v6656, %v6648
    %v6889 = vpack.c.b16 %v6657, %v6649
    %v6890 = vpack.c.b16 %v6658, %v6650
    %v6891 = vpack.c.b16 %v6659, %v6651
    %v6892 = vpack.c.b16 %v6660, %v6652
    %v6893 = vpack.c.b16 %v6669, %v6661
    %v6894 = vpack.c.b16 %v6670, %v6662
    %v6895 = vpack.c.b16 %v6671, %v6663
    %v6896 = vpack.c.b16 %v6672, %v6664
    %v6897 = vpack.c.b16 %v6673, %v6665
    %v6898 = vpack.c.b16 %v6674, %v6666
    %v6899 = vpack.c.b16 %v6675, %v6667
    %v6900 = vpack.c.b16 %v6676, %v6668
    %v6901 = vpack.c.b16 %v6685, %v6677
    %v6902 = vpack.c.b16 %v6686, %v6678
    %v6903 = vpack.c.b16 %v6687, %v6679
    %v6904 = vpack.c.b16 %v6688, %v6680
    %v6905 = vpack.c.b16 %v6689, %v6681
    %v6906 = vpack.c.b16 %v6690, %v6682
    %v6907 = vpack.c.b16 %v6691, %v6683
    %v6908 = vpack.c.b16 %v6692, %v6684
    %v6909 = vpack.c.b16 %v6701, %v6693
    %v6910 = vpack.c.b16 %v6702, %v6694
    %v6911 = vpack.c.b16 %v6703, %v6695
    %v6912 = vpack.c.b16 %v6704, %v6696
    %v6913 = vpack.c.b16 %v6705, %v6697
    %v6914 = vpack.c.b16 %v6706, %v6698
    %v6915 = vpack.c.b16 %v6707, %v6699
    %v6916 = vpack.c.b16 %v6708, %v6700
    %v6917 = vpack.c.b16 %v6717, %v6709
    %v6918 = vpack.c.b16 %v6718, %v6710
    %v6919 = vpack.c.b16 %v6719, %v6711
    %v6920 = vpack.c.b16 %v6720, %v6712
    %v6921 = vpack.c.b16 %v6721, %v6713
    %v6922 = vpack.c.b16 %v6722, %v6714
    %v6923 = vpack.c.b16 %v6723, %v6715
    %v6924 = vpack.c.b16 %v6724, %v6716
    %v6925 = vpack.c.b16 %v6733, %v6725
    %v6926 = vpack.c.b16 %v6734, %v6726
    %v6927 = vpack.c.b16 %v6735, %v6727
    %v6928 = vpack.c.b16 %v6736, %v6728
    %v6929 = vpack.c.b16 %v6737, %v6729
    %v6930 = vpack.c.b16 %v6738, %v6730
    %v6931 = vpack.c.b16 %v6739, %v6731
    %v6932 = vpack.c.b16 %v6740, %v6732
    %v6933 = vpack.c.b16 %v6749, %v6741
    %v6934 = vpack.c.b16 %v6750, %v6742
    %v6935 = vpack.c.b16 %v6751, %v6743
    %v6936 = vpack.c.b16 %v6752, %v6744
    %v6937 = vpack.c.b16 %v6753, %v6745
    %v6938 = vpack.c.b16 %v6754, %v6746
    %v6939 = vpack.c.b16 %v6755, %v6747
    %v6940 = vpack.c.b16 %v6756, %v6748
    %v6941 = vpack.c.b16 %v6765, %v6757
    %v6942 = vpack.c.b16 %v6766, %v6758
    %v6943 = vpack.c.b16 %v6767, %v6759
    %v6944 = vpack.c.b16 %v6768, %v6760
    %v6945 = vpack.c.b16 %v6769, %v6761
    %v6946 = vpack.c.b16 %v6770, %v6762
    %v6947 = vpack.c.b16 %v6771, %v6763
    %v6948 = vpack.c.b16 %v6772, %v6764
    %v6949 = vpack.c.b16 %v6781, %v6773
    %v6950 = vpack.c.b16 %v6782, %v6774
    %v6951 = vpack.c.b16 %v6783, %v6775
    %v6952 = vpack.c.b16 %v6784, %v6776
    %v6953 = vpack.c.b16 %v6785, %v6777
    %v6954 = vpack.c.b16 %v6786, %v6778
    %v6955 = vpack.c.b16 %v6787, %v6779
    %v6956 = vpack.c.b16 %v6788, %v6780
    %v6957 = vpack.c.b16 %v6797, %v6789
    %v6958 = vpack.c.b16 %v6798, %v6790
    %v6959 = vpack.c.b16 %v6799, %v6791
    %v6960 = vpack.c.b16 %v6800, %v6792
    %v6961 = vpack.c.b16 %v6801, %v6793
    %v6962 = vpack.c.b16 %v6802, %v6794
    %v6963 = vpack.c.b16 %v6803, %v6795
    %v6964 = vpack.c.b16 %v6804, %v6796
    %v6965 = vpack.c.b16 %v6813, %v6805
    %v6966 = vpack.c.b16 %v6814, %v6806
    %v6967 = vpack.c.b16 %v6815, %v6807
    %v6968 = vpack.c.b16 %v6816, %v6808
    %v6969 = vpack.c.b16 %v6817, %v6809
    %v6970 = vpack.c.b16 %v6818, %v6810
    %v6971 = vpack.c.b16 %v6819, %v6811
    %v6972 = vpack.c.b16 %v6820, %v6812
    %v6973 = vpack.c.b16 %v6829, %v6821
    %v6974 = vpack.c.b16 %v6830, %v6822
    %v6975 = vpack.c.b16 %v6831, %v6823
    %v6976 = vpack.c.b16 %v6832, %v6824
    %v6977 = vpack.c.b16 %v6833, %v6825
    %v6978 = vpack.c.b16 %v6834, %v6826
    %v6979 = vpack.c.b16 %v6835, %v6827
    %v6980 = vpack.c.b16 %v6836, %v6828
    %v6981 = vpack.c.b16 %v6845, %v6837
    %v6982 = vpack.c.b16 %v6846, %v6838
    %v6983 = vpack.c.b16 %v6847, %v6839
    %v6984 = vpack.c.b16 %v6848, %v6840
    %v6985 = vpack.c.b16 %v6849, %v6841
    %v6986 = vpack.c.b16 %v6850, %v6842
    %v6987 = vpack.c.b16 %v6851, %v6843
    %v6988 = vpack.c.b16 %v6852, %v6844
    %v6989 = vpack.c.b16 %v6861, %v6853
    %v6990 = vpack.c.b16 %v6862, %v6854
    %v6991 = vpack.c.b16 %v6863, %v6855
    %v6992 = vpack.c.b16 %v6864, %v6856
    %v6993 = vpack.c.b16 %v6865, %v6857
    %v6994 = vpack.c.b16 %v6866, %v6858
    %v6995 = vpack.c.b16 %v6867, %v6859
    %v6996 = vpack.c.b16 %v6868, %v6860
    %7125 = vmatprep.subr.bf16.mxu0 %v6870
    %7126 = vmatpush1.bf16.msra.mxu0 %v6869
    %7127 = vmatprep.subr.bf16.mxu0 %v6878
    %7128 = vmatpush1.bf16.msra.mxu0 %v6877
    %7129 = vmatprep.subr.bf16.mxu0 %v6886
    %7130 = vmatpush1.bf16.msra.mxu0 %v6885
    %7131 = vmatprep.subr.bf16.mxu0 %v6894
    %7132 = vmatpush1.bf16.msra.mxu0 %v6893
    %7133 = vmatprep.subr.bf16.mxu0 %v6902
    %7134 = vmatpush1.bf16.msra.mxu0 %v6901
    %7135 = vmatprep.subr.bf16.mxu0 %v6910
    %7136 = vmatpush1.bf16.msra.mxu0 %v6909
    %7137 = vmatprep.subr.bf16.mxu0 %v6918
    %7138 = vmatpush1.bf16.msra.mxu0 %v6917
    %7139 = vmatprep.subr.bf16.mxu0 %v6926
    %7140 = vmatpush1.bf16.msra.mxu0 %v6925
    %7141 = vmatprep.subr.bf16.mxu0 %v6934
    %7142 = vmatpush1.bf16.msra.mxu0 %v6933
    %7143 = vmatprep.subr.bf16.mxu0 %v6942
    %7144 = vmatpush1.bf16.msra.mxu0 %v6941
    %7145 = vmatprep.subr.bf16.mxu0 %v6950
    %7146 = vmatpush1.bf16.msra.mxu0 %v6949
    %7147 = vmatprep.subr.bf16.mxu0 %v6958
    %7148 = vmatpush1.bf16.msra.mxu0 %v6957
    %7149 = vmatprep.subr.bf16.mxu0 %v6966
    %7150 = vmatpush1.bf16.msra.mxu0 %v6965
    %7151 = vmatprep.subr.bf16.mxu0 %v6974
    %7152 = vmatpush1.bf16.msra.mxu0 %v6973
    %7153 = vmatprep.subr.bf16.mxu0 %v6982
    %7154 = vmatpush1.bf16.msra.mxu0 %v6981
    %7155 = vmatprep.subr.bf16.mxu0 %v6990
    %7156 = vmatpush1.bf16.msra.mxu0 %v6989
    %7157 = vmatprep.mubr.bf16.mxu0 %v6356
    %7158 = vmatmul.mubr.bf16.gmra.mrb[0].mxu0 %v6355
    %v7159 = vpop.f32.mrb[0].mxu0
    %v7160 = vadd.f32 0.0, %v7159
    %v7161 = vpop.f32.mrb[0].mxu0
    %v7162 = vadd.f32 0.0, %v7161
    %v7163 = vpop.f32.mrb[0].mxu0
    %v7164 = vpop.f32.mrb[0].mxu0
    %7165 = vdwg.mxu0
    %7166 = vmatprep.subr.bf16.mxu0 %v6872
    %7167 = vmatpush1.bf16.msra.mxu0 %v6871
    %7168 = vmatprep.subr.bf16.mxu0 %v6880
    %7169 = vmatpush1.bf16.msra.mxu0 %v6879
    %7170 = vmatprep.subr.bf16.mxu0 %v6888
    %7171 = vmatpush1.bf16.msra.mxu0 %v6887
    %7172 = vmatprep.subr.bf16.mxu0 %v6896
    %7173 = vmatpush1.bf16.msra.mxu0 %v6895
    %7174 = vmatprep.subr.bf16.mxu0 %v6904
    %7175 = vmatpush1.bf16.msra.mxu0 %v6903
    %7176 = vmatprep.subr.bf16.mxu0 %v6912
    %7177 = vmatpush1.bf16.msra.mxu0 %v6911
    %7178 = vmatprep.subr.bf16.mxu0 %v6920
    %7179 = vmatpush1.bf16.msra.mxu0 %v6919
    %7180 = vmatprep.subr.bf16.mxu0 %v6928
    %7181 = vmatpush1.bf16.msra.mxu0 %v6927
    %7182 = vmatprep.subr.bf16.mxu0 %v6936
    %7183 = vmatpush1.bf16.msra.mxu0 %v6935
    %7184 = vmatprep.subr.bf16.mxu0 %v6944
    %7185 = vmatpush1.bf16.msra.mxu0 %v6943
    %7186 = vmatprep.subr.bf16.mxu0 %v6952
    %7187 = vmatpush1.bf16.msra.mxu0 %v6951
    %7188 = vmatprep.subr.bf16.mxu0 %v6960
    %7189 = vmatpush1.bf16.msra.mxu0 %v6959
    %7190 = vmatprep.subr.bf16.mxu0 %v6968
    %7191 = vmatpush1.bf16.msra.mxu0 %v6967
    %7192 = vmatprep.subr.bf16.mxu0 %v6976
    %7193 = vmatpush1.bf16.msra.mxu0 %v6975
    %7194 = vmatprep.subr.bf16.mxu0 %v6984
    %7195 = vmatpush1.bf16.msra.mxu0 %v6983
    %7196 = vmatprep.subr.bf16.mxu0 %v6992
    %7197 = vmatpush1.bf16.msra.mxu0 %v6991
    %7198 = vmatprep.mubr.bf16.mxu0 %v6356
    %7199 = vmatmul.mubr.bf16.gmra.mrb[0].mxu0 %v6355
    %v7200 = vpop.f32.mrb[0].mxu0
    %v7201 = vadd.f32 0.0, %v7200
    %v7202 = vpop.f32.mrb[0].mxu0
    %v7203 = vadd.f32 0.0, %v7202
    %v7204 = vpop.f32.mrb[0].mxu0
    %v7205 = vpop.f32.mrb[0].mxu0
    %7206 = vdwg.mxu0
    %7207 = vmatprep.subr.bf16.mxu0 %v6874
    %7208 = vmatpush1.bf16.msra.mxu0 %v6873
    %7209 = vmatprep.subr.bf16.mxu0 %v6882
    %7210 = vmatpush1.bf16.msra.mxu0 %v6881
    %7211 = vmatprep.subr.bf16.mxu0 %v6890
    %7212 = vmatpush1.bf16.msra.mxu0 %v6889
    %7213 = vmatprep.subr.bf16.mxu0 %v6898
    %7214 = vmatpush1.bf16.msra.mxu0 %v6897
    %7215 = vmatprep.subr.bf16.mxu0 %v6906
    %7216 = vmatpush1.bf16.msra.mxu0 %v6905
    %7217 = vmatprep.subr.bf16.mxu0 %v6914
    %7218 = vmatpush1.bf16.msra.mxu0 %v6913
    %7219 = vmatprep.subr.bf16.mxu0 %v6922
    %7220 = vmatpush1.bf16.msra.mxu0 %v6921
    %7221 = vmatprep.subr.bf16.mxu0 %v6930
    %7222 = vmatpush1.bf16.msra.mxu0 %v6929
    %7223 = vmatprep.subr.bf16.mxu0 %v6938
    %7224 = vmatpush1.bf16.msra.mxu0 %v6937
    %7225 = vmatprep.subr.bf16.mxu0 %v6946
    %7226 = vmatpush1.bf16.msra.mxu0 %v6945
    %7227 = vmatprep.subr.bf16.mxu0 %v6954
    %7228 = vmatpush1.bf16.msra.mxu0 %v6953
    %7229 = vmatprep.subr.bf16.mxu0 %v6962
    %7230 = vmatpush1.bf16.msra.mxu0 %v6961
    %7231 = vmatprep.subr.bf16.mxu0 %v6970
    %7232 = vmatpush1.bf16.msra.mxu0 %v6969
    %7233 = vmatprep.subr.bf16.mxu0 %v6978
    %7234 = vmatpush1.bf16.msra.mxu0 %v6977
    %7235 = vmatprep.subr.bf16.mxu0 %v6986
    %7236 = vmatpush1.bf16.msra.mxu0 %v6985
    %7237 = vmatprep.subr.bf16.mxu0 %v6994
    %7238 = vmatpush1.bf16.msra.mxu0 %v6993
    %7239 = vmatprep.mubr.bf16.mxu0 %v6356
    %7240 = vmatmul.mubr.bf16.gmra.mrb[0].mxu0 %v6355
    %v7241 = vpop.f32.mrb[0].mxu0
    %v7242 = vadd.f32 0.0, %v7241
    %v7243 = vpop.f32.mrb[0].mxu0
    %v7244 = vadd.f32 0.0, %v7243
    %v7245 = vpop.f32.mrb[0].mxu0
    %v7246 = vpop.f32.mrb[0].mxu0
    %7247 = vdwg.mxu0
    %7248 = vmatprep.subr.bf16.mxu0 %v6876
    %7249 = vmatpush1.bf16.msra.mxu0 %v6875
    %7250 = vmatprep.subr.bf16.mxu0 %v6884
    %7251 = vmatpush1.bf16.msra.mxu0 %v6883
    %7252 = vmatprep.subr.bf16.mxu0 %v6892
    %7253 = vmatpush1.bf16.msra.mxu0 %v6891
    %7254 = vmatprep.subr.bf16.mxu0 %v6900
    %7255 = vmatpush1.bf16.msra.mxu0 %v6899
    %7256 = vmatprep.subr.bf16.mxu0 %v6908
    %7257 = vmatpush1.bf16.msra.mxu0 %v6907
    %7258 = vmatprep.subr.bf16.mxu0 %v6916
    %7259 = vmatpush1.bf16.msra.mxu0 %v6915
    %7260 = vmatprep.subr.bf16.mxu0 %v6924
    %7261 = vmatpush1.bf16.msra.mxu0 %v6923
    %7262 = vmatprep.subr.bf16.mxu0 %v6932
    %7263 = vmatpush1.bf16.msra.mxu0 %v6931
    %7264 = vmatprep.subr.bf16.mxu0 %v6940
    %7265 = vmatpush1.bf16.msra.mxu0 %v6939
    %7266 = vmatprep.subr.bf16.mxu0 %v6948
    %7267 = vmatpush1.bf16.msra.mxu0 %v6947
    %7268 = vmatprep.subr.bf16.mxu0 %v6956
    %7269 = vmatpush1.bf16.msra.mxu0 %v6955
    %7270 = vmatprep.subr.bf16.mxu0 %v6964
    %7271 = vmatpush1.bf16.msra.mxu0 %v6963
    %7272 = vmatprep.subr.bf16.mxu0 %v6972
    %7273 = vmatpush1.bf16.msra.mxu0 %v6971
    %7274 = vmatprep.subr.bf16.mxu0 %v6980
    %7275 = vmatpush1.bf16.msra.mxu0 %v6979
    %7276 = vmatprep.subr.bf16.mxu0 %v6988
    %7277 = vmatpush1.bf16.msra.mxu0 %v6987
    %7278 = vmatprep.subr.bf16.mxu0 %v6996
    %7279 = vmatpush1.bf16.msra.mxu0 %v6995
    %7280 = vmatprep.mubr.bf16.mxu0 %v6356
    %7281 = vmatmul.mubr.bf16.gmra.mrb[0].mxu0 %v6355
    %v7282 = vpop.f32.mrb[0].mxu0
    %v7283 = vadd.f32 0.0, %v7282
    %v7284 = vpop.f32.mrb[0].mxu0
    %v7285 = vadd.f32 0.0, %v7284
    %v7286 = vpop.f32.mrb[0].mxu0
    %v7287 = vpop.f32.mrb[0].mxu0
    %7288 = vdwg.mxu0
    %v7289 = vadd.f32 %v6127, %v7160
    %v7290 = vadd.f32 %v6129, %v7162
    %v7291 = vadd.f32 %v6198, %v7201
    %v7292 = vadd.f32 %v6200, %v7203
    %v7293 = vadd.f32 %v6269, %v7242
    %v7294 = vadd.f32 %v6271, %v7244
    %v7295 = vadd.f32 %v6340, %v7283
    %v7296 = vadd.f32 %v6342, %v7285
    %v7297 = vxor.u32 %v7289, 2147483648
    %v7298 = vxor.u32 %v7290, 2147483648
    %v7299 = vmul.f32 %v7297, 1.442695
    %v7300 = vpow.pop %v7299
    %v7301 = vmul.f32 %v7298, 1.442695
    %v7302 = vpow.pop %v7301
    %v7303 = vadd.f32 %v7300, 1.0
    %v7304 = vadd.f32 %v7302, 1.0
    %v7305 = vrcp.pop %v7303
    %v7306 = vmul.f32 1.0, %v7305
    %v7307 = vrcp.pop %v7304
    %v7308 = vmul.f32 1.0, %v7307
    %v7309 = vxor.u32 %v7291, 2147483648
    %v7310 = vxor.u32 %v7292, 2147483648
    %v7311 = vmul.f32 %v7309, 1.442695
    %v7312 = vpow.pop %v7311
    %v7313 = vmul.f32 %v7310, 1.442695
    %v7314 = vpow.pop %v7313
    %v7315 = vadd.f32 %v7312, 1.0
    %v7316 = vadd.f32 %v7314, 1.0
    %v7317 = vrcp.pop %v7315
    %v7318 = vmul.f32 1.0, %v7317
    %v7319 = vrcp.pop %v7316
    %v7320 = vmul.f32 1.0, %v7319
    %v7321 = vtanh.pop %v7293
    %v7322 = vtanh.pop %v7294
    %v7323 = vxor.u32 %v7295, 2147483648
    %v7324 = vxor.u32 %v7296, 2147483648
    %v7325 = vmul.f32 %v7323, 1.442695
    %v7326 = vpow.pop %v7325
    %v7327 = vmul.f32 %v7324, 1.442695
    %v7328 = vpow.pop %v7327
    %v7329 = vadd.f32 %v7326, 1.0
    %v7330 = vadd.f32 %v7328, 1.0
    %v7331 = vrcp.pop %v7329
    %v7332 = vmul.f32 1.0, %v7331
    %v7333 = vrcp.pop %v7330
    %v7334 = vmul.f32 1.0, %v7333
    %v7335 = vld [vmem:[#allocation3] sm:$0xf]
    %v7338 = vunpack.c.l.s4 1983009808
    %v7339 = vunpack.c.0.s8 %v7338
    %v7340 = vlaneseq
    %v7341 = vshrl.u32 %v7340, 7
    %v7342 = vsub.s32 %v7339, %v7341
    %v7343 = vrot.slane %v7335, %v7342
    %v7344 = vcombine.high %v7343, %v7343
    %v7347 = vmul.f32 %v7318, %v7343
    %v7348 = vmul.f32 %v7320, %v7344
    %v7349 = vmul.f32 %v7306, %v7321
    %v7350 = vmul.f32 %v7308, %v7322
    %v7351 = vadd.f32 %v7347, %v7349
    %v7352 = vadd.f32 %v7348, %v7350
    %v7353 = vtanh.pop %v7351
    %v7354 = vtanh.pop %v7352
    %v7355 = vmul.f32 %v7332, %v7353
    %v7356 = vmul.f32 %v7334, %v7354
    %v7359 = vcombine.low %v7351, %v7352
    %v7361 = vunpack.c.l.s4 1983009808
    %v7362 = vunpack.c.0.s8 %v7361
    %v7363 = vlaneseq
    %v7364 = vshrl.u32 %v7363, 7
    %v7365 = vsub.s32 %v7362, %v7364
    %v7366 = vrot.slane %v7359, %v7365
    %7368 = vst [vmem:[#allocation3] sm:$0xf] %v7366
    %v7371 = vcombine.low %v7355, %v7356
    %v7373 = vunpack.c.l.s4 1983009808
    %v7374 = vunpack.c.0.s8 %v7373
    %v7375 = vlaneseq
    %v7376 = vshrl.u32 %v7375, 7
    %v7377 = vsub.s32 %v7374, %v7376
    %v7378 = vrot.slane %v7371, %v7377
    %7380 = vst [vmem:[#allocation2] sm:$0xf] %v7378
    %v7381 = vld [vmem:[#allocation6] sm:$0xff]
    %v7382 = vld [vmem:[#allocation6 + $0x8] sm:$0xff]
    %v7383 = vld [vmem:[#allocation6 + $0x10] sm:$0xff]
    %v7384 = vld [vmem:[#allocation6 + $0x18] sm:$0xff]
    %v7385 = vld [vmem:[#allocation6 + $0x20] sm:$0xff]
    %v7386 = vld [vmem:[#allocation6 + $0x28] sm:$0xff]
    %v7387 = vld [vmem:[#allocation6 + $0x30] sm:$0xff]
    %v7388 = vld [vmem:[#allocation6 + $0x38] sm:$0xff]
    %v7389 = vld [vmem:[#allocation6 + $0x40] sm:$0xff]
    %v7390 = vld [vmem:[#allocation6 + $0x48] sm:$0xff]
    %v7391 = vld [vmem:[#allocation6 + $0x50] sm:$0xff]
    %v7392 = vld [vmem:[#allocation6 + $0x58] sm:$0xff]
    %v7393 = vld [vmem:[#allocation6 + $0x60] sm:$0xff]
    %v7394 = vld [vmem:[#allocation6 + $0x68] sm:$0xff]
    %v7395 = vld [vmem:[#allocation6 + $0x70] sm:$0xff]
    %v7396 = vld [vmem:[#allocation6 + $0x78] sm:$0xff]
    %v7397 = vld [vmem:[#allocation6 + $0x80] sm:$0xff]
    %v7398 = vld [vmem:[#allocation6 + $0x88] sm:$0xff]
    %v7399 = vld [vmem:[#allocation6 + $0x90] sm:$0xff]
    %v7400 = vld [vmem:[#allocation6 + $0x98] sm:$0xff]
    %v7401 = vld [vmem:[#allocation6 + $0xa0] sm:$0xff]
    %v7402 = vld [vmem:[#allocation6 + $0xa8] sm:$0xff]
    %v7403 = vld [vmem:[#allocation6 + $0xb0] sm:$0xff]
    %v7404 = vld [vmem:[#allocation6 + $0xb8] sm:$0xff]
    %v7405 = vld [vmem:[#allocation6 + $0xc0] sm:$0xff]
    %v7406 = vld [vmem:[#allocation6 + $0xc8] sm:$0xff]
    %v7407 = vld [vmem:[#allocation6 + $0xd0] sm:$0xff]
    %v7408 = vld [vmem:[#allocation6 + $0xd8] sm:$0xff]
    %v7409 = vld [vmem:[#allocation6 + $0xe0] sm:$0xff]
    %v7410 = vld [vmem:[#allocation6 + $0xe8] sm:$0xff]
    %v7411 = vld [vmem:[#allocation6 + $0xf0] sm:$0xff]
    %v7412 = vld [vmem:[#allocation6 + $0xf8] sm:$0xff]
    %v7413 = vld [vmem:[%s5] sm:$0x1]
    %v7415 = vlaneseq
    %v7416 = vshrl.u32 %v7415, 7
    %v7417 = vsub.s32 0, %v7416
    %v7418 = vrot.slane %v7413, %v7417
    %7420 = vmatprep.subr.mxu0 0.0
    %7421 = vmatpush1.msra.mxu0 %v7381
    %7422 = vmatprep.subr.mxu0 0.0
    %7423 = vmatpush1.msra.mxu0 %v7382
    %7424 = vmatprep.subr.mxu0 0.0
    %7425 = vmatpush1.msra.mxu0 %v7383
    %7426 = vmatprep.subr.mxu0 0.0
    %7427 = vmatpush1.msra.mxu0 %v7384
    %7428 = vmatprep.subr.mxu0 0.0
    %7429 = vmatpush1.msra.mxu0 %v7385
    %7430 = vmatprep.subr.mxu0 0.0
    %7431 = vmatpush1.msra.mxu0 %v7386
    %7432 = vmatprep.subr.mxu0 0.0
    %7433 = vmatpush1.msra.mxu0 %v7387
    %7434 = vmatprep.subr.mxu0 0.0
    %7435 = vmatpush1.msra.mxu0 %v7388
    %7436 = vmatprep.subr.mxu0 0.0
    %7437 = vmatpush1.msra.mxu0 %v7389
    %7438 = vmatprep.subr.mxu0 0.0
    %7439 = vmatpush1.msra.mxu0 %v7390
    %7440 = vmatprep.subr.mxu0 0.0
    %7441 = vmatpush1.msra.mxu0 %v7391
    %7442 = vmatprep.subr.mxu0 0.0
    %7443 = vmatpush1.msra.mxu0 %v7392
    %7444 = vmatprep.subr.mxu0 0.0
    %7445 = vmatpush1.msra.mxu0 %v7393
    %7446 = vmatprep.subr.mxu0 0.0
    %7447 = vmatpush1.msra.mxu0 %v7394
    %7448 = vmatprep.subr.mxu0 0.0
    %7449 = vmatpush1.msra.mxu0 %v7395
    %7450 = vmatprep.subr.mxu0 0.0
    %7451 = vmatpush1.msra.mxu0 %v7396
    %7452 = vmatprep.subr.mxu0 0.0
    %7453 = vmatpush1.msra.mxu0 %v7397
    %7454 = vmatprep.subr.mxu0 0.0
    %7455 = vmatpush1.msra.mxu0 %v7398
    %7456 = vmatprep.subr.mxu0 0.0
    %7457 = vmatpush1.msra.mxu0 %v7399
    %7458 = vmatprep.subr.mxu0 0.0
    %7459 = vmatpush1.msra.mxu0 %v7400
    %7460 = vmatprep.subr.mxu0 0.0
    %7461 = vmatpush1.msra.mxu0 %v7401
    %7462 = vmatprep.subr.mxu0 0.0
    %7463 = vmatpush1.msra.mxu0 %v7402
    %7464 = vmatprep.subr.mxu0 0.0
    %7465 = vmatpush1.msra.mxu0 %v7403
    %7466 = vmatprep.subr.mxu0 0.0
    %7467 = vmatpush1.msra.mxu0 %v7404
    %7468 = vmatprep.subr.mxu0 0.0
    %7469 = vmatpush1.msra.mxu0 %v7405
    %7470 = vmatprep.subr.mxu0 0.0
    %7471 = vmatpush1.msra.mxu0 %v7406
    %7472 = vmatprep.subr.mxu0 0.0
    %7473 = vmatpush1.msra.mxu0 %v7407
    %7474 = vmatprep.subr.mxu0 0.0
    %7475 = vmatpush1.msra.mxu0 %v7408
    %7476 = vmatprep.subr.mxu0 0.0
    %7477 = vmatpush1.msra.mxu0 %v7409
    %7478 = vmatprep.subr.mxu0 0.0
    %7479 = vmatpush1.msra.mxu0 %v7410
    %7480 = vmatprep.subr.mxu0 0.0
    %7481 = vmatpush1.msra.mxu0 %v7411
    %7482 = vmatprep.subr.mxu0 0.0
    %7483 = vmatpush1.msra.mxu0 %v7412
    %7484 = vmatprep.mubr.f32.mxu0 %v7356
    %7485 = vmatmul.mubr.f32.gmra.mrb[0].mxu0 %v7355
    %v7486 = vpop.f32.mrb[0].mxu0
    %v7487 = vadd.f32 %v7418, %v7486
    %v7488 = vpop.f32.mrb[0].mxu0
    %7489 = vdwg.mxu0
    %s7490 = scalar_lea.vmem %s6, 8
    %7491 = vst [vmem:[%s7490] sm:$0x3] %v7487
    %s7492 = scalar_lea.vmem %s0, 10
    %v7493 = vld [vmem:[%s7492] sm:$0x3]
    %v7494 = vld [vmem:[#allocation2] sm:$0xf]
    %v7495 = vld [vmem:[%s1] sm:$0xff]
    %v7496 = vld [vmem:[%s1 + $0x8] sm:$0xff]
    %v7497 = vld [vmem:[%s1 + $0x10] sm:$0xff]
    %v7498 = vld [vmem:[%s1 + $0x18] sm:$0xff]
    %v7499 = vld [vmem:[%s1 + $0x20] sm:$0xff]
    %v7500 = vld [vmem:[%s1 + $0x28] sm:$0xff]
    %v7501 = vld [vmem:[%s1 + $0x30] sm:$0xff]
    %v7502 = vld [vmem:[%s1 + $0x38] sm:$0xff]
    %v7503 = vld [vmem:[%s3] sm:$0xff]
    %v7505 = vlaneseq
    %v7506 = vshrl.u32 %v7505, 7
    %v7507 = vsub.s32 0, %v7506
    %v7508 = vrot.slane %v7503, %v7507
    %v7509 = vlaneseq
    %v7510 = vshrl.u32 %v7509, 7
    %v7511 = vsub.s32 1, %v7510
    %v7512 = vrot.slane %v7503, %v7511
    %v7513 = vlaneseq
    %v7514 = vshrl.u32 %v7513, 7
    %v7515 = vsub.s32 2, %v7514
    %v7516 = vrot.slane %v7503, %v7515
    %v7517 = vlaneseq
    %v7518 = vshrl.u32 %v7517, 7
    %v7519 = vsub.s32 3, %v7518
    %v7520 = vrot.slane %v7503, %v7519
    %v7521 = vlaneseq
    %v7522 = vshrl.u32 %v7521, 7
    %v7523 = vsub.s32 4, %v7522
    %v7524 = vrot.slane %v7503, %v7523
    %v7525 = vlaneseq
    %v7526 = vshrl.u32 %v7525, 7
    %v7527 = vsub.s32 5, %v7526
    %v7528 = vrot.slane %v7503, %v7527
    %v7529 = vlaneseq
    %v7530 = vshrl.u32 %v7529, 7
    %v7531 = vsub.s32 6, %v7530
    %v7532 = vrot.slane %v7503, %v7531
    %v7533 = vlaneseq
    %v7534 = vshrl.u32 %v7533, 7
    %v7535 = vsub.s32 7, %v7534
    %v7536 = vrot.slane %v7503, %v7535
    %v7546 = vsel %vm105, %v7493, 0
    %7548 = vmatprep.subr.mxu0 %v7496
    %7549 = vmatpush1.msra.mxu0 %v7495
    %7550 = vmatprep.subr.mxu0 0.0
    %7551 = vmatpush1.msra.mxu0 0.0
    %7552 = vmatprep.subr.mxu0 0.0
    %7553 = vmatpush1.msra.mxu0 0.0
    %7554 = vmatprep.subr.mxu0 0.0
    %7555 = vmatpush1.msra.mxu0 0.0
    %7556 = vmatprep.subr.mxu0 0.0
    %7557 = vmatpush1.msra.mxu0 0.0
    %7558 = vmatprep.subr.mxu0 0.0
    %7559 = vmatpush1.msra.mxu0 0.0
    %7560 = vmatprep.subr.mxu0 0.0
    %7561 = vmatpush1.msra.mxu0 0.0
    %7562 = vmatprep.subr.mxu0 0.0
    %7563 = vmatpush1.msra.mxu0 0.0
    %7564 = vmatprep.subr.mxu0 0.0
    %7565 = vmatpush1.msra.mxu0 0.0
    %7566 = vmatprep.subr.mxu0 0.0
    %7567 = vmatpush1.msra.mxu0 0.0
    %7568 = vmatprep.subr.mxu0 0.0
    %7569 = vmatpush1.msra.mxu0 0.0
    %7570 = vmatprep.subr.mxu0 0.0
    %7571 = vmatpush1.msra.mxu0 0.0
    %7572 = vmatprep.subr.mxu0 0.0
    %7573 = vmatpush1.msra.mxu0 0.0
    %7574 = vmatprep.subr.mxu0 0.0
    %7575 = vmatpush1.msra.mxu0 0.0
    %7576 = vmatprep.subr.mxu0 0.0
    %7577 = vmatpush1.msra.mxu0 0.0
    %7578 = vmatprep.subr.mxu0 0.0
    %7579 = vmatpush1.msra.mxu0 0.0
    %7580 = vmatprep.subr.mxu0 0.0
    %7581 = vmatpush1.msra.mxu0 0.0
    %7582 = vmatprep.subr.mxu0 0.0
    %7583 = vmatpush1.msra.mxu0 0.0
    %7584 = vmatprep.subr.mxu0 0.0
    %7585 = vmatpush1.msra.mxu0 0.0
    %7586 = vmatprep.subr.mxu0 0.0
    %7587 = vmatpush1.msra.mxu0 0.0
    %7588 = vmatprep.subr.mxu0 0.0
    %7589 = vmatpush1.msra.mxu0 0.0
    %7590 = vmatprep.subr.mxu0 0.0
    %7591 = vmatpush1.msra.mxu0 0.0
    %7592 = vmatprep.subr.mxu0 0.0
    %7593 = vmatpush1.msra.mxu0 0.0
    %7594 = vmatprep.subr.mxu0 0.0
    %7595 = vmatpush1.msra.mxu0 0.0
    %7596 = vmatprep.subr.mxu0 0.0
    %7597 = vmatpush1.msra.mxu0 0.0
    %7598 = vmatprep.subr.mxu0 0.0
    %7599 = vmatpush1.msra.mxu0 0.0
    %7600 = vmatprep.subr.mxu0 0.0
    %7601 = vmatpush1.msra.mxu0 0.0
    %7602 = vmatprep.subr.mxu0 0.0
    %7603 = vmatpush1.msra.mxu0 0.0
    %7604 = vmatprep.subr.mxu0 0.0
    %7605 = vmatpush1.msra.mxu0 0.0
    %7606 = vmatprep.subr.mxu0 0.0
    %7607 = vmatpush1.msra.mxu0 0.0
    %7608 = vmatprep.subr.mxu0 0.0
    %7609 = vmatpush1.msra.mxu0 0.0
    %7610 = vmatprep.subr.mxu0 0.0
    %7611 = vmatpush1.msra.mxu0 0.0
    %7612 = vmatprep.mubr.f32.mxu0 0.0
    %7613 = vmatmul.mubr.f32.gmra.mrb[0].mxu0 %v7546
    %v7614 = vpop.f32.mrb[0].mxu0
    %v7615 = vadd.f32 %v7508, %v7614
    %v7616 = vpop.f32.mrb[0].mxu0
    %v7617 = vadd.f32 %v7512, %v7616
    %7618 = vdwg.mxu0
    %7619 = vmatprep.subr.mxu0 %v7498
    %7620 = vmatpush1.msra.mxu0 %v7497
    %7621 = vmatprep.subr.mxu0 0.0
    %7622 = vmatpush1.msra.mxu0 0.0
    %7623 = vmatprep.subr.mxu0 0.0
    %7624 = vmatpush1.msra.mxu0 0.0
    %7625 = vmatprep.subr.mxu0 0.0
    %7626 = vmatpush1.msra.mxu0 0.0
    %7627 = vmatprep.subr.mxu0 0.0
    %7628 = vmatpush1.msra.mxu0 0.0
    %7629 = vmatprep.subr.mxu0 0.0
    %7630 = vmatpush1.msra.mxu0 0.0
    %7631 = vmatprep.subr.mxu0 0.0
    %7632 = vmatpush1.msra.mxu0 0.0
    %7633 = vmatprep.subr.mxu0 0.0
    %7634 = vmatpush1.msra.mxu0 0.0
    %7635 = vmatprep.subr.mxu0 0.0
    %7636 = vmatpush1.msra.mxu0 0.0
    %7637 = vmatprep.subr.mxu0 0.0
    %7638 = vmatpush1.msra.mxu0 0.0
    %7639 = vmatprep.subr.mxu0 0.0
    %7640 = vmatpush1.msra.mxu0 0.0
    %7641 = vmatprep.subr.mxu0 0.0
    %7642 = vmatpush1.msra.mxu0 0.0
    %7643 = vmatprep.subr.mxu0 0.0
    %7644 = vmatpush1.msra.mxu0 0.0
    %7645 = vmatprep.subr.mxu0 0.0
    %7646 = vmatpush1.msra.mxu0 0.0
    %7647 = vmatprep.subr.mxu0 0.0
    %7648 = vmatpush1.msra.mxu0 0.0
    %7649 = vmatprep.subr.mxu0 0.0
    %7650 = vmatpush1.msra.mxu0 0.0
    %7651 = vmatprep.subr.mxu0 0.0
    %7652 = vmatpush1.msra.mxu0 0.0
    %7653 = vmatprep.subr.mxu0 0.0
    %7654 = vmatpush1.msra.mxu0 0.0
    %7655 = vmatprep.subr.mxu0 0.0
    %7656 = vmatpush1.msra.mxu0 0.0
    %7657 = vmatprep.subr.mxu0 0.0
    %7658 = vmatpush1.msra.mxu0 0.0
    %7659 = vmatprep.subr.mxu0 0.0
    %7660 = vmatpush1.msra.mxu0 0.0
    %7661 = vmatprep.subr.mxu0 0.0
    %7662 = vmatpush1.msra.mxu0 0.0
    %7663 = vmatprep.subr.mxu0 0.0
    %7664 = vmatpush1.msra.mxu0 0.0
    %7665 = vmatprep.subr.mxu0 0.0
    %7666 = vmatpush1.msra.mxu0 0.0
    %7667 = vmatprep.subr.mxu0 0.0
    %7668 = vmatpush1.msra.mxu0 0.0
    %7669 = vmatprep.subr.mxu0 0.0
    %7670 = vmatpush1.msra.mxu0 0.0
    %7671 = vmatprep.subr.mxu0 0.0
    %7672 = vmatpush1.msra.mxu0 0.0
    %7673 = vmatprep.subr.mxu0 0.0
    %7674 = vmatpush1.msra.mxu0 0.0
    %7675 = vmatprep.subr.mxu0 0.0
    %7676 = vmatpush1.msra.mxu0 0.0
    %7677 = vmatprep.subr.mxu0 0.0
    %7678 = vmatpush1.msra.mxu0 0.0
    %7679 = vmatprep.subr.mxu0 0.0
    %7680 = vmatpush1.msra.mxu0 0.0
    %7681 = vmatprep.subr.mxu0 0.0
    %7682 = vmatpush1.msra.mxu0 0.0
    %7683 = vmatprep.mubr.f32.mxu0 0.0
    %7684 = vmatmul.mubr.f32.gmra.mrb[0].mxu0 %v7546
    %v7685 = vpop.f32.mrb[0].mxu0
    %v7686 = vadd.f32 %v7516, %v7685
    %v7687 = vpop.f32.mrb[0].mxu0
    %v7688 = vadd.f32 %v7520, %v7687
    %7689 = vdwg.mxu0
    %7690 = vmatprep.subr.mxu0 %v7500
    %7691 = vmatpush1.msra.mxu0 %v7499
    %7692 = vmatprep.subr.mxu0 0.0
    %7693 = vmatpush1.msra.mxu0 0.0
    %7694 = vmatprep.subr.mxu0 0.0
    %7695 = vmatpush1.msra.mxu0 0.0
    %7696 = vmatprep.subr.mxu0 0.0
    %7697 = vmatpush1.msra.mxu0 0.0
    %7698 = vmatprep.subr.mxu0 0.0
    %7699 = vmatpush1.msra.mxu0 0.0
    %7700 = vmatprep.subr.mxu0 0.0
    %7701 = vmatpush1.msra.mxu0 0.0
    %7702 = vmatprep.subr.mxu0 0.0
    %7703 = vmatpush1.msra.mxu0 0.0
    %7704 = vmatprep.subr.mxu0 0.0
    %7705 = vmatpush1.msra.mxu0 0.0
    %7706 = vmatprep.subr.mxu0 0.0
    %7707 = vmatpush1.msra.mxu0 0.0
    %7708 = vmatprep.subr.mxu0 0.0
    %7709 = vmatpush1.msra.mxu0 0.0
    %7710 = vmatprep.subr.mxu0 0.0
    %7711 = vmatpush1.msra.mxu0 0.0
    %7712 = vmatprep.subr.mxu0 0.0
    %7713 = vmatpush1.msra.mxu0 0.0
    %7714 = vmatprep.subr.mxu0 0.0
    %7715 = vmatpush1.msra.mxu0 0.0
    %7716 = vmatprep.subr.mxu0 0.0
    %7717 = vmatpush1.msra.mxu0 0.0
    %7718 = vmatprep.subr.mxu0 0.0
    %7719 = vmatpush1.msra.mxu0 0.0
    %7720 = vmatprep.subr.mxu0 0.0
    %7721 = vmatpush1.msra.mxu0 0.0
    %7722 = vmatprep.subr.mxu0 0.0
    %7723 = vmatpush1.msra.mxu0 0.0
    %7724 = vmatprep.subr.mxu0 0.0
    %7725 = vmatpush1.msra.mxu0 0.0
    %7726 = vmatprep.subr.mxu0 0.0
    %7727 = vmatpush1.msra.mxu0 0.0
    %7728 = vmatprep.subr.mxu0 0.0
    %7729 = vmatpush1.msra.mxu0 0.0
    %7730 = vmatprep.subr.mxu0 0.0
    %7731 = vmatpush1.msra.mxu0 0.0
    %7732 = vmatprep.subr.mxu0 0.0
    %7733 = vmatpush1.msra.mxu0 0.0
    %7734 = vmatprep.subr.mxu0 0.0
    %7735 = vmatpush1.msra.mxu0 0.0
    %7736 = vmatprep.subr.mxu0 0.0
    %7737 = vmatpush1.msra.mxu0 0.0
    %7738 = vmatprep.subr.mxu0 0.0
    %7739 = vmatpush1.msra.mxu0 0.0
    %7740 = vmatprep.subr.mxu0 0.0
    %7741 = vmatpush1.msra.mxu0 0.0
    %7742 = vmatprep.subr.mxu0 0.0
    %7743 = vmatpush1.msra.mxu0 0.0
    %7744 = vmatprep.subr.mxu0 0.0
    %7745 = vmatpush1.msra.mxu0 0.0
    %7746 = vmatprep.subr.mxu0 0.0
    %7747 = vmatpush1.msra.mxu0 0.0
    %7748 = vmatprep.subr.mxu0 0.0
    %7749 = vmatpush1.msra.mxu0 0.0
    %7750 = vmatprep.subr.mxu0 0.0
    %7751 = vmatpush1.msra.mxu0 0.0
    %7752 = vmatprep.subr.mxu0 0.0
    %7753 = vmatpush1.msra.mxu0 0.0
    %7754 = vmatprep.mubr.f32.mxu0 0.0
    %7755 = vmatmul.mubr.f32.gmra.mrb[0].mxu0 %v7546
    %v7756 = vpop.f32.mrb[0].mxu0
    %v7757 = vadd.f32 %v7524, %v7756
    %v7758 = vpop.f32.mrb[0].mxu0
    %v7759 = vadd.f32 %v7528, %v7758
    %7760 = vdwg.mxu0
    %7761 = vmatprep.subr.mxu0 %v7502
    %7762 = vmatpush1.msra.mxu0 %v7501
    %7763 = vmatprep.subr.mxu0 0.0
    %7764 = vmatpush1.msra.mxu0 0.0
    %7765 = vmatprep.subr.mxu0 0.0
    %7766 = vmatpush1.msra.mxu0 0.0
    %7767 = vmatprep.subr.mxu0 0.0
    %7768 = vmatpush1.msra.mxu0 0.0
    %7769 = vmatprep.subr.mxu0 0.0
    %7770 = vmatpush1.msra.mxu0 0.0
    %7771 = vmatprep.subr.mxu0 0.0
    %7772 = vmatpush1.msra.mxu0 0.0
    %7773 = vmatprep.subr.mxu0 0.0
    %7774 = vmatpush1.msra.mxu0 0.0
    %7775 = vmatprep.subr.mxu0 0.0
    %7776 = vmatpush1.msra.mxu0 0.0
    %7777 = vmatprep.subr.mxu0 0.0
    %7778 = vmatpush1.msra.mxu0 0.0
    %7779 = vmatprep.subr.mxu0 0.0
    %7780 = vmatpush1.msra.mxu0 0.0
    %7781 = vmatprep.subr.mxu0 0.0
    %7782 = vmatpush1.msra.mxu0 0.0
    %7783 = vmatprep.subr.mxu0 0.0
    %7784 = vmatpush1.msra.mxu0 0.0
    %7785 = vmatprep.subr.mxu0 0.0
    %7786 = vmatpush1.msra.mxu0 0.0
    %7787 = vmatprep.subr.mxu0 0.0
    %7788 = vmatpush1.msra.mxu0 0.0
    %7789 = vmatprep.subr.mxu0 0.0
    %7790 = vmatpush1.msra.mxu0 0.0
    %7791 = vmatprep.subr.mxu0 0.0
    %7792 = vmatpush1.msra.mxu0 0.0
    %7793 = vmatprep.subr.mxu0 0.0
    %7794 = vmatpush1.msra.mxu0 0.0
    %7795 = vmatprep.subr.mxu0 0.0
    %7796 = vmatpush1.msra.mxu0 0.0
    %7797 = vmatprep.subr.mxu0 0.0
    %7798 = vmatpush1.msra.mxu0 0.0
    %7799 = vmatprep.subr.mxu0 0.0
    %7800 = vmatpush1.msra.mxu0 0.0
    %7801 = vmatprep.subr.mxu0 0.0
    %7802 = vmatpush1.msra.mxu0 0.0
    %7803 = vmatprep.subr.mxu0 0.0
    %7804 = vmatpush1.msra.mxu0 0.0
    %7805 = vmatprep.subr.mxu0 0.0
    %7806 = vmatpush1.msra.mxu0 0.0
    %7807 = vmatprep.subr.mxu0 0.0
    %7808 = vmatpush1.msra.mxu0 0.0
    %7809 = vmatprep.subr.mxu0 0.0
    %7810 = vmatpush1.msra.mxu0 0.0
    %7811 = vmatprep.subr.mxu0 0.0
    %7812 = vmatpush1.msra.mxu0 0.0
    %7813 = vmatprep.subr.mxu0 0.0
    %7814 = vmatpush1.msra.mxu0 0.0
    %7815 = vmatprep.subr.mxu0 0.0
    %7816 = vmatpush1.msra.mxu0 0.0
    %7817 = vmatprep.subr.mxu0 0.0
    %7818 = vmatpush1.msra.mxu0 0.0
    %7819 = vmatprep.subr.mxu0 0.0
    %7820 = vmatpush1.msra.mxu0 0.0
    %7821 = vmatprep.subr.mxu0 0.0
    %7822 = vmatpush1.msra.mxu0 0.0
    %7823 = vmatprep.subr.mxu0 0.0
    %7824 = vmatpush1.msra.mxu0 0.0
    %7825 = vmatprep.mubr.f32.mxu0 0.0
    %7826 = vmatmul.mubr.f32.gmra.mrb[0].mxu0 %v7546
    %v7827 = vpop.f32.mrb[0].mxu0
    %v7828 = vadd.f32 %v7532, %v7827
    %v7829 = vpop.f32.mrb[0].mxu0
    %v7830 = vadd.f32 %v7536, %v7829
    %7831 = vdwg.mxu0
    %v7834 = vunpack.c.l.s4 1983009808
    %v7835 = vunpack.c.0.s8 %v7834
    %v7836 = vlaneseq
    %v7837 = vshrl.u32 %v7836, 7
    %v7838 = vsub.s32 %v7835, %v7837
    %v7839 = vrot.slane %v7494, %v7838
    %v7840 = vcombine.high %v7839, %v7839
    %v7843 = vpack.c.bf16 %v7839, %v7839
    %v7844 = vpack.c.bf16 %v7840, %v7840
    %v7845 = vld [vmem:[#allocation4] sm:$0xff]
    %v7846 = vld [vmem:[#allocation4 + $0x8] sm:$0xff]
    %v7847 = vld [vmem:[#allocation4 + $0x10] sm:$0xff]
    %v7848 = vld [vmem:[#allocation4 + $0x18] sm:$0xff]
    %v7849 = vld [vmem:[#allocation4 + $0x20] sm:$0xff]
    %v7850 = vld [vmem:[#allocation4 + $0x28] sm:$0xff]
    %v7851 = vld [vmem:[#allocation4 + $0x30] sm:$0xff]
    %v7852 = vld [vmem:[#allocation4 + $0x38] sm:$0xff]
    %v7853 = vld [vmem:[#allocation4 + $0x40] sm:$0xff]
    %v7854 = vld [vmem:[#allocation4 + $0x48] sm:$0xff]
    %v7855 = vld [vmem:[#allocation4 + $0x50] sm:$0xff]
    %v7856 = vld [vmem:[#allocation4 + $0x58] sm:$0xff]
    %v7857 = vld [vmem:[#allocation4 + $0x60] sm:$0xff]
    %v7858 = vld [vmem:[#allocation4 + $0x68] sm:$0xff]
    %v7859 = vld [vmem:[#allocation4 + $0x70] sm:$0xff]
    %v7860 = vld [vmem:[#allocation4 + $0x78] sm:$0xff]
    %v7861 = vld [vmem:[#allocation4 + $0x80] sm:$0xff]
    %v7862 = vld [vmem:[#allocation4 + $0x88] sm:$0xff]
    %v7863 = vld [vmem:[#allocation4 + $0x90] sm:$0xff]
    %v7864 = vld [vmem:[#allocation4 + $0x98] sm:$0xff]
    %v7865 = vld [vmem:[#allocation4 + $0xa0] sm:$0xff]
    %v7866 = vld [vmem:[#allocation4 + $0xa8] sm:$0xff]
    %v7867 = vld [vmem:[#allocation4 + $0xb0] sm:$0xff]
    %v7868 = vld [vmem:[#allocation4 + $0xb8] sm:$0xff]
    %v7869 = vld [vmem:[#allocation4 + $0xc0] sm:$0xff]
    %v7870 = vld [vmem:[#allocation4 + $0xc8] sm:$0xff]
    %v7871 = vld [vmem:[#allocation4 + $0xd0] sm:$0xff]
    %v7872 = vld [vmem:[#allocation4 + $0xd8] sm:$0xff]
    %v7873 = vld [vmem:[#allocation4 + $0xe0] sm:$0xff]
    %v7874 = vld [vmem:[#allocation4 + $0xe8] sm:$0xff]
    %v7875 = vld [vmem:[#allocation4 + $0xf0] sm:$0xff]
    %v7876 = vld [vmem:[#allocation4 + $0xf8] sm:$0xff]
    %v7877 = vld [vmem:[#allocation4 + $0x100] sm:$0xff]
    %v7878 = vld [vmem:[#allocation4 + $0x108] sm:$0xff]
    %v7879 = vld [vmem:[#allocation4 + $0x110] sm:$0xff]
    %v7880 = vld [vmem:[#allocation4 + $0x118] sm:$0xff]
    %v7881 = vld [vmem:[#allocation4 + $0x120] sm:$0xff]
    %v7882 = vld [vmem:[#allocation4 + $0x128] sm:$0xff]
    %v7883 = vld [vmem:[#allocation4 + $0x130] sm:$0xff]
    %v7884 = vld [vmem:[#allocation4 + $0x138] sm:$0xff]
    %v7885 = vld [vmem:[#allocation4 + $0x140] sm:$0xff]
    %v7886 = vld [vmem:[#allocation4 + $0x148] sm:$0xff]
    %v7887 = vld [vmem:[#allocation4 + $0x150] sm:$0xff]
    %v7888 = vld [vmem:[#allocation4 + $0x158] sm:$0xff]
    %v7889 = vld [vmem:[#allocation4 + $0x160] sm:$0xff]
    %v7890 = vld [vmem:[#allocation4 + $0x168] sm:$0xff]
    %v7891 = vld [vmem:[#allocation4 + $0x170] sm:$0xff]
    %v7892 = vld [vmem:[#allocation4 + $0x178] sm:$0xff]
    %v7893 = vld [vmem:[#allocation4 + $0x180] sm:$0xff]
    %v7894 = vld [vmem:[#allocation4 + $0x188] sm:$0xff]
    %v7895 = vld [vmem:[#allocation4 + $0x190] sm:$0xff]
    %v7896 = vld [vmem:[#allocation4 + $0x198] sm:$0xff]
    %v7897 = vld [vmem:[#allocation4 + $0x1a0] sm:$0xff]
    %v7898 = vld [vmem:[#allocation4 + $0x1a8] sm:$0xff]
    %v7899 = vld [vmem:[#allocation4 + $0x1b0] sm:$0xff]
    %v7900 = vld [vmem:[#allocation4 + $0x1b8] sm:$0xff]
    %v7901 = vld [vmem:[#allocation4 + $0x1c0] sm:$0xff]
    %v7902 = vld [vmem:[#allocation4 + $0x1c8] sm:$0xff]
    %v7903 = vld [vmem:[#allocation4 + $0x1d0] sm:$0xff]
    %v7904 = vld [vmem:[#allocation4 + $0x1d8] sm:$0xff]
    %v7905 = vld [vmem:[#allocation4 + $0x1e0] sm:$0xff]
    %v7906 = vld [vmem:[#allocation4 + $0x1e8] sm:$0xff]
    %v7907 = vld [vmem:[#allocation4 + $0x1f0] sm:$0xff]
    %v7908 = vld [vmem:[#allocation4 + $0x1f8] sm:$0xff]
    %v7909 = vld [vmem:[#allocation4 + $0x200] sm:$0xff]
    %v7910 = vld [vmem:[#allocation4 + $0x208] sm:$0xff]
    %v7911 = vld [vmem:[#allocation4 + $0x210] sm:$0xff]
    %v7912 = vld [vmem:[#allocation4 + $0x218] sm:$0xff]
    %v7913 = vld [vmem:[#allocation4 + $0x220] sm:$0xff]
    %v7914 = vld [vmem:[#allocation4 + $0x228] sm:$0xff]
    %v7915 = vld [vmem:[#allocation4 + $0x230] sm:$0xff]
    %v7916 = vld [vmem:[#allocation4 + $0x238] sm:$0xff]
    %v7917 = vld [vmem:[#allocation4 + $0x240] sm:$0xff]
    %v7918 = vld [vmem:[#allocation4 + $0x248] sm:$0xff]
    %v7919 = vld [vmem:[#allocation4 + $0x250] sm:$0xff]
    %v7920 = vld [vmem:[#allocation4 + $0x258] sm:$0xff]
    %v7921 = vld [vmem:[#allocation4 + $0x260] sm:$0xff]
    %v7922 = vld [vmem:[#allocation4 + $0x268] sm:$0xff]
    %v7923 = vld [vmem:[#allocation4 + $0x270] sm:$0xff]
    %v7924 = vld [vmem:[#allocation4 + $0x278] sm:$0xff]
    %v7925 = vld [vmem:[#allocation4 + $0x280] sm:$0xff]
    %v7926 = vld [vmem:[#allocation4 + $0x288] sm:$0xff]
    %v7927 = vld [vmem:[#allocation4 + $0x290] sm:$0xff]
    %v7928 = vld [vmem:[#allocation4 + $0x298] sm:$0xff]
    %v7929 = vld [vmem:[#allocation4 + $0x2a0] sm:$0xff]
    %v7930 = vld [vmem:[#allocation4 + $0x2a8] sm:$0xff]
    %v7931 = vld [vmem:[#allocation4 + $0x2b0] sm:$0xff]
    %v7932 = vld [vmem:[#allocation4 + $0x2b8] sm:$0xff]
    %v7933 = vld [vmem:[#allocation4 + $0x2c0] sm:$0xff]
    %v7934 = vld [vmem:[#allocation4 + $0x2c8] sm:$0xff]
    %v7935 = vld [vmem:[#allocation4 + $0x2d0] sm:$0xff]
    %v7936 = vld [vmem:[#allocation4 + $0x2d8] sm:$0xff]
    %v7937 = vld [vmem:[#allocation4 + $0x2e0] sm:$0xff]
    %v7938 = vld [vmem:[#allocation4 + $0x2e8] sm:$0xff]
    %v7939 = vld [vmem:[#allocation4 + $0x2f0] sm:$0xff]
    %v7940 = vld [vmem:[#allocation4 + $0x2f8] sm:$0xff]
    %v7941 = vld [vmem:[#allocation4 + $0x300] sm:$0xff]
    %v7942 = vld [vmem:[#allocation4 + $0x308] sm:$0xff]
    %v7943 = vld [vmem:[#allocation4 + $0x310] sm:$0xff]
    %v7944 = vld [vmem:[#allocation4 + $0x318] sm:$0xff]
    %v7945 = vld [vmem:[#allocation4 + $0x320] sm:$0xff]
    %v7946 = vld [vmem:[#allocation4 + $0x328] sm:$0xff]
    %v7947 = vld [vmem:[#allocation4 + $0x330] sm:$0xff]
    %v7948 = vld [vmem:[#allocation4 + $0x338] sm:$0xff]
    %v7949 = vld [vmem:[#allocation4 + $0x340] sm:$0xff]
    %v7950 = vld [vmem:[#allocation4 + $0x348] sm:$0xff]
    %v7951 = vld [vmem:[#allocation4 + $0x350] sm:$0xff]
    %v7952 = vld [vmem:[#allocation4 + $0x358] sm:$0xff]
    %v7953 = vld [vmem:[#allocation4 + $0x360] sm:$0xff]
    %v7954 = vld [vmem:[#allocation4 + $0x368] sm:$0xff]
    %v7955 = vld [vmem:[#allocation4 + $0x370] sm:$0xff]
    %v7956 = vld [vmem:[#allocation4 + $0x378] sm:$0xff]
    %v7957 = vld [vmem:[#allocation4 + $0x380] sm:$0xff]
    %v7958 = vld [vmem:[#allocation4 + $0x388] sm:$0xff]
    %v7959 = vld [vmem:[#allocation4 + $0x390] sm:$0xff]
    %v7960 = vld [vmem:[#allocation4 + $0x398] sm:$0xff]
    %v7961 = vld [vmem:[#allocation4 + $0x3a0] sm:$0xff]
    %v7962 = vld [vmem:[#allocation4 + $0x3a8] sm:$0xff]
    %v7963 = vld [vmem:[#allocation4 + $0x3b0] sm:$0xff]
    %v7964 = vld [vmem:[#allocation4 + $0x3b8] sm:$0xff]
    %v7965 = vld [vmem:[#allocation4 + $0x3c0] sm:$0xff]
    %v7966 = vld [vmem:[#allocation4 + $0x3c8] sm:$0xff]
    %v7967 = vld [vmem:[#allocation4 + $0x3d0] sm:$0xff]
    %v7968 = vld [vmem:[#allocation4 + $0x3d8] sm:$0xff]
    %v7969 = vld [vmem:[#allocation4 + $0x3e0] sm:$0xff]
    %v7970 = vld [vmem:[#allocation4 + $0x3e8] sm:$0xff]
    %v7971 = vld [vmem:[#allocation4 + $0x3f0] sm:$0xff]
    %v7972 = vld [vmem:[#allocation4 + $0x3f8] sm:$0xff]
    %v8101 = vunpack.c.l.b16 %v7845
    %v8102 = vunpack.c.h.b16 %v7845
    %v8103 = vunpack.c.l.b16 %v7846
    %v8104 = vunpack.c.h.b16 %v7846
    %v8105 = vunpack.c.l.b16 %v7847
    %v8106 = vunpack.c.h.b16 %v7847
    %v8107 = vunpack.c.l.b16 %v7848
    %v8108 = vunpack.c.h.b16 %v7848
    %v8109 = vunpack.c.l.b16 %v7849
    %v8110 = vunpack.c.h.b16 %v7849
    %v8111 = vunpack.c.l.b16 %v7850
    %v8112 = vunpack.c.h.b16 %v7850
    %v8113 = vunpack.c.l.b16 %v7851
    %v8114 = vunpack.c.h.b16 %v7851
    %v8115 = vunpack.c.l.b16 %v7852
    %v8116 = vunpack.c.h.b16 %v7852
    %v8117 = vunpack.c.l.b16 %v7853
    %v8118 = vunpack.c.h.b16 %v7853
    %v8119 = vunpack.c.l.b16 %v7854
    %v8120 = vunpack.c.h.b16 %v7854
    %v8121 = vunpack.c.l.b16 %v7855
    %v8122 = vunpack.c.h.b16 %v7855
    %v8123 = vunpack.c.l.b16 %v7856
    %v8124 = vunpack.c.h.b16 %v7856
    %v8125 = vunpack.c.l.b16 %v7857
    %v8126 = vunpack.c.h.b16 %v7857
    %v8127 = vunpack.c.l.b16 %v7858
    %v8128 = vunpack.c.h.b16 %v7858
    %v8129 = vunpack.c.l.b16 %v7859
    %v8130 = vunpack.c.h.b16 %v7859
    %v8131 = vunpack.c.l.b16 %v7860
    %v8132 = vunpack.c.h.b16 %v7860
    %v8133 = vunpack.c.l.b16 %v7861
    %v8134 = vunpack.c.h.b16 %v7861
    %v8135 = vunpack.c.l.b16 %v7862
    %v8136 = vunpack.c.h.b16 %v7862
    %v8137 = vunpack.c.l.b16 %v7863
    %v8138 = vunpack.c.h.b16 %v7863
    %v8139 = vunpack.c.l.b16 %v7864
    %v8140 = vunpack.c.h.b16 %v7864
    %v8141 = vunpack.c.l.b16 %v7865
    %v8142 = vunpack.c.h.b16 %v7865
    %v8143 = vunpack.c.l.b16 %v7866
    %v8144 = vunpack.c.h.b16 %v7866
    %v8145 = vunpack.c.l.b16 %v7867
    %v8146 = vunpack.c.h.b16 %v7867
    %v8147 = vunpack.c.l.b16 %v7868
    %v8148 = vunpack.c.h.b16 %v7868
    %v8149 = vunpack.c.l.b16 %v7869
    %v8150 = vunpack.c.h.b16 %v7869
    %v8151 = vunpack.c.l.b16 %v7870
    %v8152 = vunpack.c.h.b16 %v7870
    %v8153 = vunpack.c.l.b16 %v7871
    %v8154 = vunpack.c.h.b16 %v7871
    %v8155 = vunpack.c.l.b16 %v7872
    %v8156 = vunpack.c.h.b16 %v7872
    %v8157 = vunpack.c.l.b16 %v7873
    %v8158 = vunpack.c.h.b16 %v7873
    %v8159 = vunpack.c.l.b16 %v7874
    %v8160 = vunpack.c.h.b16 %v7874
    %v8161 = vunpack.c.l.b16 %v7875
    %v8162 = vunpack.c.h.b16 %v7875
    %v8163 = vunpack.c.l.b16 %v7876
    %v8164 = vunpack.c.h.b16 %v7876
    %v8165 = vunpack.c.l.b16 %v7877
    %v8166 = vunpack.c.h.b16 %v7877
    %v8167 = vunpack.c.l.b16 %v7878
    %v8168 = vunpack.c.h.b16 %v7878
    %v8169 = vunpack.c.l.b16 %v7879
    %v8170 = vunpack.c.h.b16 %v7879
    %v8171 = vunpack.c.l.b16 %v7880
    %v8172 = vunpack.c.h.b16 %v7880
    %v8173 = vunpack.c.l.b16 %v7881
    %v8174 = vunpack.c.h.b16 %v7881
    %v8175 = vunpack.c.l.b16 %v7882
    %v8176 = vunpack.c.h.b16 %v7882
    %v8177 = vunpack.c.l.b16 %v7883
    %v8178 = vunpack.c.h.b16 %v7883
    %v8179 = vunpack.c.l.b16 %v7884
    %v8180 = vunpack.c.h.b16 %v7884
    %v8181 = vunpack.c.l.b16 %v7885
    %v8182 = vunpack.c.h.b16 %v7885
    %v8183 = vunpack.c.l.b16 %v7886
    %v8184 = vunpack.c.h.b16 %v7886
    %v8185 = vunpack.c.l.b16 %v7887
    %v8186 = vunpack.c.h.b16 %v7887
    %v8187 = vunpack.c.l.b16 %v7888
    %v8188 = vunpack.c.h.b16 %v7888
    %v8189 = vunpack.c.l.b16 %v7889
    %v8190 = vunpack.c.h.b16 %v7889
    %v8191 = vunpack.c.l.b16 %v7890
    %v8192 = vunpack.c.h.b16 %v7890
    %v8193 = vunpack.c.l.b16 %v7891
    %v8194 = vunpack.c.h.b16 %v7891
    %v8195 = vunpack.c.l.b16 %v7892
    %v8196 = vunpack.c.h.b16 %v7892
    %v8197 = vunpack.c.l.b16 %v7893
    %v8198 = vunpack.c.h.b16 %v7893
    %v8199 = vunpack.c.l.b16 %v7894
    %v8200 = vunpack.c.h.b16 %v7894
    %v8201 = vunpack.c.l.b16 %v7895
    %v8202 = vunpack.c.h.b16 %v7895
    %v8203 = vunpack.c.l.b16 %v7896
    %v8204 = vunpack.c.h.b16 %v7896
    %v8205 = vunpack.c.l.b16 %v7897
    %v8206 = vunpack.c.h.b16 %v7897
    %v8207 = vunpack.c.l.b16 %v7898
    %v8208 = vunpack.c.h.b16 %v7898
    %v8209 = vunpack.c.l.b16 %v7899
    %v8210 = vunpack.c.h.b16 %v7899
    %v8211 = vunpack.c.l.b16 %v7900
    %v8212 = vunpack.c.h.b16 %v7900
    %v8213 = vunpack.c.l.b16 %v7901
    %v8214 = vunpack.c.h.b16 %v7901
    %v8215 = vunpack.c.l.b16 %v7902
    %v8216 = vunpack.c.h.b16 %v7902
    %v8217 = vunpack.c.l.b16 %v7903
    %v8218 = vunpack.c.h.b16 %v7903
    %v8219 = vunpack.c.l.b16 %v7904
    %v8220 = vunpack.c.h.b16 %v7904
    %v8221 = vunpack.c.l.b16 %v7905
    %v8222 = vunpack.c.h.b16 %v7905
    %v8223 = vunpack.c.l.b16 %v7906
    %v8224 = vunpack.c.h.b16 %v7906
    %v8225 = vunpack.c.l.b16 %v7907
    %v8226 = vunpack.c.h.b16 %v7907
    %v8227 = vunpack.c.l.b16 %v7908
    %v8228 = vunpack.c.h.b16 %v7908
    %v8229 = vunpack.c.l.b16 %v7909
    %v8230 = vunpack.c.h.b16 %v7909
    %v8231 = vunpack.c.l.b16 %v7910
    %v8232 = vunpack.c.h.b16 %v7910
    %v8233 = vunpack.c.l.b16 %v7911
    %v8234 = vunpack.c.h.b16 %v7911
    %v8235 = vunpack.c.l.b16 %v7912
    %v8236 = vunpack.c.h.b16 %v7912
    %v8237 = vunpack.c.l.b16 %v7913
    %v8238 = vunpack.c.h.b16 %v7913
    %v8239 = vunpack.c.l.b16 %v7914
    %v8240 = vunpack.c.h.b16 %v7914
    %v8241 = vunpack.c.l.b16 %v7915
    %v8242 = vunpack.c.h.b16 %v7915
    %v8243 = vunpack.c.l.b16 %v7916
    %v8244 = vunpack.c.h.b16 %v7916
    %v8245 = vunpack.c.l.b16 %v7917
    %v8246 = vunpack.c.h.b16 %v7917
    %v8247 = vunpack.c.l.b16 %v7918
    %v8248 = vunpack.c.h.b16 %v7918
    %v8249 = vunpack.c.l.b16 %v7919
    %v8250 = vunpack.c.h.b16 %v7919
    %v8251 = vunpack.c.l.b16 %v7920
    %v8252 = vunpack.c.h.b16 %v7920
    %v8253 = vunpack.c.l.b16 %v7921
    %v8254 = vunpack.c.h.b16 %v7921
    %v8255 = vunpack.c.l.b16 %v7922
    %v8256 = vunpack.c.h.b16 %v7922
    %v8257 = vunpack.c.l.b16 %v7923
    %v8258 = vunpack.c.h.b16 %v7923
    %v8259 = vunpack.c.l.b16 %v7924
    %v8260 = vunpack.c.h.b16 %v7924
    %v8261 = vunpack.c.l.b16 %v7925
    %v8262 = vunpack.c.h.b16 %v7925
    %v8263 = vunpack.c.l.b16 %v7926
    %v8264 = vunpack.c.h.b16 %v7926
    %v8265 = vunpack.c.l.b16 %v7927
    %v8266 = vunpack.c.h.b16 %v7927
    %v8267 = vunpack.c.l.b16 %v7928
    %v8268 = vunpack.c.h.b16 %v7928
    %v8269 = vunpack.c.l.b16 %v7929
    %v8270 = vunpack.c.h.b16 %v7929
    %v8271 = vunpack.c.l.b16 %v7930
    %v8272 = vunpack.c.h.b16 %v7930
    %v8273 = vunpack.c.l.b16 %v7931
    %v8274 = vunpack.c.h.b16 %v7931
    %v8275 = vunpack.c.l.b16 %v7932
    %v8276 = vunpack.c.h.b16 %v7932
    %v8277 = vunpack.c.l.b16 %v7933
    %v8278 = vunpack.c.h.b16 %v7933
    %v8279 = vunpack.c.l.b16 %v7934
    %v8280 = vunpack.c.h.b16 %v7934
    %v8281 = vunpack.c.l.b16 %v7935
    %v8282 = vunpack.c.h.b16 %v7935
    %v8283 = vunpack.c.l.b16 %v7936
    %v8284 = vunpack.c.h.b16 %v7936
    %v8285 = vunpack.c.l.b16 %v7937
    %v8286 = vunpack.c.h.b16 %v7937
    %v8287 = vunpack.c.l.b16 %v7938
    %v8288 = vunpack.c.h.b16 %v7938
    %v8289 = vunpack.c.l.b16 %v7939
    %v8290 = vunpack.c.h.b16 %v7939
    %v8291 = vunpack.c.l.b16 %v7940
    %v8292 = vunpack.c.h.b16 %v7940
    %v8293 = vunpack.c.l.b16 %v7941
    %v8294 = vunpack.c.h.b16 %v7941
    %v8295 = vunpack.c.l.b16 %v7942
    %v8296 = vunpack.c.h.b16 %v7942
    %v8297 = vunpack.c.l.b16 %v7943
    %v8298 = vunpack.c.h.b16 %v7943
    %v8299 = vunpack.c.l.b16 %v7944
    %v8300 = vunpack.c.h.b16 %v7944
    %v8301 = vunpack.c.l.b16 %v7945
    %v8302 = vunpack.c.h.b16 %v7945
    %v8303 = vunpack.c.l.b16 %v7946
    %v8304 = vunpack.c.h.b16 %v7946
    %v8305 = vunpack.c.l.b16 %v7947
    %v8306 = vunpack.c.h.b16 %v7947
    %v8307 = vunpack.c.l.b16 %v7948
    %v8308 = vunpack.c.h.b16 %v7948
    %v8309 = vunpack.c.l.b16 %v7949
    %v8310 = vunpack.c.h.b16 %v7949
    %v8311 = vunpack.c.l.b16 %v7950
    %v8312 = vunpack.c.h.b16 %v7950
    %v8313 = vunpack.c.l.b16 %v7951
    %v8314 = vunpack.c.h.b16 %v7951
    %v8315 = vunpack.c.l.b16 %v7952
    %v8316 = vunpack.c.h.b16 %v7952
    %v8317 = vunpack.c.l.b16 %v7953
    %v8318 = vunpack.c.h.b16 %v7953
    %v8319 = vunpack.c.l.b16 %v7954
    %v8320 = vunpack.c.h.b16 %v7954
    %v8321 = vunpack.c.l.b16 %v7955
    %v8322 = vunpack.c.h.b16 %v7955
    %v8323 = vunpack.c.l.b16 %v7956
    %v8324 = vunpack.c.h.b16 %v7956
    %v8325 = vunpack.c.l.b16 %v7957
    %v8326 = vunpack.c.h.b16 %v7957
    %v8327 = vunpack.c.l.b16 %v7958
    %v8328 = vunpack.c.h.b16 %v7958
    %v8329 = vunpack.c.l.b16 %v7959
    %v8330 = vunpack.c.h.b16 %v7959
    %v8331 = vunpack.c.l.b16 %v7960
    %v8332 = vunpack.c.h.b16 %v7960
    %v8333 = vunpack.c.l.b16 %v7961
    %v8334 = vunpack.c.h.b16 %v7961
    %v8335 = vunpack.c.l.b16 %v7962
    %v8336 = vunpack.c.h.b16 %v7962
    %v8337 = vunpack.c.l.b16 %v7963
    %v8338 = vunpack.c.h.b16 %v7963
    %v8339 = vunpack.c.l.b16 %v7964
    %v8340 = vunpack.c.h.b16 %v7964
    %v8341 = vunpack.c.l.b16 %v7965
    %v8342 = vunpack.c.h.b16 %v7965
    %v8343 = vunpack.c.l.b16 %v7966
    %v8344 = vunpack.c.h.b16 %v7966
    %v8345 = vunpack.c.l.b16 %v7967
    %v8346 = vunpack.c.h.b16 %v7967
    %v8347 = vunpack.c.l.b16 %v7968
    %v8348 = vunpack.c.h.b16 %v7968
    %v8349 = vunpack.c.l.b16 %v7969
    %v8350 = vunpack.c.h.b16 %v7969
    %v8351 = vunpack.c.l.b16 %v7970
    %v8352 = vunpack.c.h.b16 %v7970
    %v8353 = vunpack.c.l.b16 %v7971
    %v8354 = vunpack.c.h.b16 %v7971
    %v8355 = vunpack.c.l.b16 %v7972
    %v8356 = vunpack.c.h.b16 %v7972
    %v8357 = vpack.c.b16 %v8109, %v8101
    %v8358 = vpack.c.b16 %v8110, %v8102
    %v8359 = vpack.c.b16 %v8111, %v8103
    %v8360 = vpack.c.b16 %v8112, %v8104
    %v8361 = vpack.c.b16 %v8113, %v8105
    %v8362 = vpack.c.b16 %v8114, %v8106
    %v8363 = vpack.c.b16 %v8115, %v8107
    %v8364 = vpack.c.b16 %v8116, %v8108
    %v8365 = vpack.c.b16 %v8125, %v8117
    %v8366 = vpack.c.b16 %v8126, %v8118
    %v8367 = vpack.c.b16 %v8127, %v8119
    %v8368 = vpack.c.b16 %v8128, %v8120
    %v8369 = vpack.c.b16 %v8129, %v8121
    %v8370 = vpack.c.b16 %v8130, %v8122
    %v8371 = vpack.c.b16 %v8131, %v8123
    %v8372 = vpack.c.b16 %v8132, %v8124
    %v8373 = vpack.c.b16 %v8141, %v8133
    %v8374 = vpack.c.b16 %v8142, %v8134
    %v8375 = vpack.c.b16 %v8143, %v8135
    %v8376 = vpack.c.b16 %v8144, %v8136
    %v8377 = vpack.c.b16 %v8145, %v8137
    %v8378 = vpack.c.b16 %v8146, %v8138
    %v8379 = vpack.c.b16 %v8147, %v8139
    %v8380 = vpack.c.b16 %v8148, %v8140
    %v8381 = vpack.c.b16 %v8157, %v8149
    %v8382 = vpack.c.b16 %v8158, %v8150
    %v8383 = vpack.c.b16 %v8159, %v8151
    %v8384 = vpack.c.b16 %v8160, %v8152
    %v8385 = vpack.c.b16 %v8161, %v8153
    %v8386 = vpack.c.b16 %v8162, %v8154
    %v8387 = vpack.c.b16 %v8163, %v8155
    %v8388 = vpack.c.b16 %v8164, %v8156
    %v8389 = vpack.c.b16 %v8173, %v8165
    %v8390 = vpack.c.b16 %v8174, %v8166
    %v8391 = vpack.c.b16 %v8175, %v8167
    %v8392 = vpack.c.b16 %v8176, %v8168
    %v8393 = vpack.c.b16 %v8177, %v8169
    %v8394 = vpack.c.b16 %v8178, %v8170
    %v8395 = vpack.c.b16 %v8179, %v8171
    %v8396 = vpack.c.b16 %v8180, %v8172
    %v8397 = vpack.c.b16 %v8189, %v8181
    %v8398 = vpack.c.b16 %v8190, %v8182
    %v8399 = vpack.c.b16 %v8191, %v8183
    %v8400 = vpack.c.b16 %v8192, %v8184
    %v8401 = vpack.c.b16 %v8193, %v8185
    %v8402 = vpack.c.b16 %v8194, %v8186
    %v8403 = vpack.c.b16 %v8195, %v8187
    %v8404 = vpack.c.b16 %v8196, %v8188
    %v8405 = vpack.c.b16 %v8205, %v8197
    %v8406 = vpack.c.b16 %v8206, %v8198
    %v8407 = vpack.c.b16 %v8207, %v8199
    %v8408 = vpack.c.b16 %v8208, %v8200
    %v8409 = vpack.c.b16 %v8209, %v8201
    %v8410 = vpack.c.b16 %v8210, %v8202
    %v8411 = vpack.c.b16 %v8211, %v8203
    %v8412 = vpack.c.b16 %v8212, %v8204
    %v8413 = vpack.c.b16 %v8221, %v8213
    %v8414 = vpack.c.b16 %v8222, %v8214
    %v8415 = vpack.c.b16 %v8223, %v8215
    %v8416 = vpack.c.b16 %v8224, %v8216
    %v8417 = vpack.c.b16 %v8225, %v8217
    %v8418 = vpack.c.b16 %v8226, %v8218
    %v8419 = vpack.c.b16 %v8227, %v8219
    %v8420 = vpack.c.b16 %v8228, %v8220
    %v8421 = vpack.c.b16 %v8237, %v8229
    %v8422 = vpack.c.b16 %v8238, %v8230
    %v8423 = vpack.c.b16 %v8239, %v8231
    %v8424 = vpack.c.b16 %v8240, %v8232
    %v8425 = vpack.c.b16 %v8241, %v8233
    %v8426 = vpack.c.b16 %v8242, %v8234
    %v8427 = vpack.c.b16 %v8243, %v8235
    %v8428 = vpack.c.b16 %v8244, %v8236
    %v8429 = vpack.c.b16 %v8253, %v8245
    %v8430 = vpack.c.b16 %v8254, %v8246
    %v8431 = vpack.c.b16 %v8255, %v8247
    %v8432 = vpack.c.b16 %v8256, %v8248
    %v8433 = vpack.c.b16 %v8257, %v8249
    %v8434 = vpack.c.b16 %v8258, %v8250
    %v8435 = vpack.c.b16 %v8259, %v8251
    %v8436 = vpack.c.b16 %v8260, %v8252
    %v8437 = vpack.c.b16 %v8269, %v8261
    %v8438 = vpack.c.b16 %v8270, %v8262
    %v8439 = vpack.c.b16 %v8271, %v8263
    %v8440 = vpack.c.b16 %v8272, %v8264
    %v8441 = vpack.c.b16 %v8273, %v8265
    %v8442 = vpack.c.b16 %v8274, %v8266
    %v8443 = vpack.c.b16 %v8275, %v8267
    %v8444 = vpack.c.b16 %v8276, %v8268
    %v8445 = vpack.c.b16 %v8285, %v8277
    %v8446 = vpack.c.b16 %v8286, %v8278
    %v8447 = vpack.c.b16 %v8287, %v8279
    %v8448 = vpack.c.b16 %v8288, %v8280
    %v8449 = vpack.c.b16 %v8289, %v8281
    %v8450 = vpack.c.b16 %v8290, %v8282
    %v8451 = vpack.c.b16 %v8291, %v8283
    %v8452 = vpack.c.b16 %v8292, %v8284
    %v8453 = vpack.c.b16 %v8301, %v8293
    %v8454 = vpack.c.b16 %v8302, %v8294
    %v8455 = vpack.c.b16 %v8303, %v8295
    %v8456 = vpack.c.b16 %v8304, %v8296
    %v8457 = vpack.c.b16 %v8305, %v8297
    %v8458 = vpack.c.b16 %v8306, %v8298
    %v8459 = vpack.c.b16 %v8307, %v8299
    %v8460 = vpack.c.b16 %v8308, %v8300
    %v8461 = vpack.c.b16 %v8317, %v8309
    %v8462 = vpack.c.b16 %v8318, %v8310
    %v8463 = vpack.c.b16 %v8319, %v8311
    %v8464 = vpack.c.b16 %v8320, %v8312
    %v8465 = vpack.c.b16 %v8321, %v8313
    %v8466 = vpack.c.b16 %v8322, %v8314
    %v8467 = vpack.c.b16 %v8323, %v8315
    %v8468 = vpack.c.b16 %v8324, %v8316
    %v8469 = vpack.c.b16 %v8333, %v8325
    %v8470 = vpack.c.b16 %v8334, %v8326
    %v8471 = vpack.c.b16 %v8335, %v8327
    %v8472 = vpack.c.b16 %v8336, %v8328
    %v8473 = vpack.c.b16 %v8337, %v8329
    %v8474 = vpack.c.b16 %v8338, %v8330
    %v8475 = vpack.c.b16 %v8339, %v8331
    %v8476 = vpack.c.b16 %v8340, %v8332
    %v8477 = vpack.c.b16 %v8349, %v8341
    %v8478 = vpack.c.b16 %v8350, %v8342
    %v8479 = vpack.c.b16 %v8351, %v8343
    %v8480 = vpack.c.b16 %v8352, %v8344
    %v8481 = vpack.c.b16 %v8353, %v8345
    %v8482 = vpack.c.b16 %v8354, %v8346
    %v8483 = vpack.c.b16 %v8355, %v8347
    %v8484 = vpack.c.b16 %v8356, %v8348
    %8613 = vmatprep.subr.bf16.mxu0 %v8358
    %8614 = vmatpush1.bf16.msra.mxu0 %v8357
    %8615 = vmatprep.subr.bf16.mxu0 %v8366
    %8616 = vmatpush1.bf16.msra.mxu0 %v8365
    %8617 = vmatprep.subr.bf16.mxu0 %v8374
    %8618 = vmatpush1.bf16.msra.mxu0 %v8373
    %8619 = vmatprep.subr.bf16.mxu0 %v8382
    %8620 = vmatpush1.bf16.msra.mxu0 %v8381
    %8621 = vmatprep.subr.bf16.mxu0 %v8390
    %8622 = vmatpush1.bf16.msra.mxu0 %v8389
    %8623 = vmatprep.subr.bf16.mxu0 %v8398
    %8624 = vmatpush1.bf16.msra.mxu0 %v8397
    %8625 = vmatprep.subr.bf16.mxu0 %v8406
    %8626 = vmatpush1.bf16.msra.mxu0 %v8405
    %8627 = vmatprep.subr.bf16.mxu0 %v8414
    %8628 = vmatpush1.bf16.msra.mxu0 %v8413
    %8629 = vmatprep.subr.bf16.mxu0 %v8422
    %8630 = vmatpush1.bf16.msra.mxu0 %v8421
    %8631 = vmatprep.subr.bf16.mxu0 %v8430
    %8632 = vmatpush1.bf16.msra.mxu0 %v8429
    %8633 = vmatprep.subr.bf16.mxu0 %v8438
    %8634 = vmatpush1.bf16.msra.mxu0 %v8437
    %8635 = vmatprep.subr.bf16.mxu0 %v8446
    %8636 = vmatpush1.bf16.msra.mxu0 %v8445
    %8637 = vmatprep.subr.bf16.mxu0 %v8454
    %8638 = vmatpush1.bf16.msra.mxu0 %v8453
    %8639 = vmatprep.subr.bf16.mxu0 %v8462
    %8640 = vmatpush1.bf16.msra.mxu0 %v8461
    %8641 = vmatprep.subr.bf16.mxu0 %v8470
    %8642 = vmatpush1.bf16.msra.mxu0 %v8469
    %8643 = vmatprep.subr.bf16.mxu0 %v8478
    %8644 = vmatpush1.bf16.msra.mxu0 %v8477
    %8645 = vmatprep.mubr.bf16.mxu0 %v7844
    %8646 = vmatmul.mubr.bf16.gmra.mrb[0].mxu0 %v7843
    %v8647 = vpop.f32.mrb[0].mxu0
    %v8648 = vadd.f32 0.0, %v8647
    %v8649 = vpop.f32.mrb[0].mxu0
    %v8650 = vadd.f32 0.0, %v8649
    %v8651 = vpop.f32.mrb[0].mxu0
    %v8652 = vpop.f32.mrb[0].mxu0
    %8653 = vdwg.mxu0
    %8654 = vmatprep.subr.bf16.mxu0 %v8360
    %8655 = vmatpush1.bf16.msra.mxu0 %v8359
    %8656 = vmatprep.subr.bf16.mxu0 %v8368
    %8657 = vmatpush1.bf16.msra.mxu0 %v8367
    %8658 = vmatprep.subr.bf16.mxu0 %v8376
    %8659 = vmatpush1.bf16.msra.mxu0 %v8375
    %8660 = vmatprep.subr.bf16.mxu0 %v8384
    %8661 = vmatpush1.bf16.msra.mxu0 %v8383
    %8662 = vmatprep.subr.bf16.mxu0 %v8392
    %8663 = vmatpush1.bf16.msra.mxu0 %v8391
    %8664 = vmatprep.subr.bf16.mxu0 %v8400
    %8665 = vmatpush1.bf16.msra.mxu0 %v8399
    %8666 = vmatprep.subr.bf16.mxu0 %v8408
    %8667 = vmatpush1.bf16.msra.mxu0 %v8407
    %8668 = vmatprep.subr.bf16.mxu0 %v8416
    %8669 = vmatpush1.bf16.msra.mxu0 %v8415
    %8670 = vmatprep.subr.bf16.mxu0 %v8424
    %8671 = vmatpush1.bf16.msra.mxu0 %v8423
    %8672 = vmatprep.subr.bf16.mxu0 %v8432
    %8673 = vmatpush1.bf16.msra.mxu0 %v8431
    %8674 = vmatprep.subr.bf16.mxu0 %v8440
    %8675 = vmatpush1.bf16.msra.mxu0 %v8439
    %8676 = vmatprep.subr.bf16.mxu0 %v8448
    %8677 = vmatpush1.bf16.msra.mxu0 %v8447
    %8678 = vmatprep.subr.bf16.mxu0 %v8456
    %8679 = vmatpush1.bf16.msra.mxu0 %v8455
    %8680 = vmatprep.subr.bf16.mxu0 %v8464
    %8681 = vmatpush1.bf16.msra.mxu0 %v8463
    %8682 = vmatprep.subr.bf16.mxu0 %v8472
    %8683 = vmatpush1.bf16.msra.mxu0 %v8471
    %8684 = vmatprep.subr.bf16.mxu0 %v8480
    %8685 = vmatpush1.bf16.msra.mxu0 %v8479
    %8686 = vmatprep.mubr.bf16.mxu0 %v7844
    %8687 = vmatmul.mubr.bf16.gmra.mrb[0].mxu0 %v7843
    %v8688 = vpop.f32.mrb[0].mxu0
    %v8689 = vadd.f32 0.0, %v8688
    %v8690 = vpop.f32.mrb[0].mxu0
    %v8691 = vadd.f32 0.0, %v8690
    %v8692 = vpop.f32.mrb[0].mxu0
    %v8693 = vpop.f32.mrb[0].mxu0
    %8694 = vdwg.mxu0
    %8695 = vmatprep.subr.bf16.mxu0 %v8362
    %8696 = vmatpush1.bf16.msra.mxu0 %v8361
    %8697 = vmatprep.subr.bf16.mxu0 %v8370
    %8698 = vmatpush1.bf16.msra.mxu0 %v8369
    %8699 = vmatprep.subr.bf16.mxu0 %v8378
    %8700 = vmatpush1.bf16.msra.mxu0 %v8377
    %8701 = vmatprep.subr.bf16.mxu0 %v8386
    %8702 = vmatpush1.bf16.msra.mxu0 %v8385
    %8703 = vmatprep.subr.bf16.mxu0 %v8394
    %8704 = vmatpush1.bf16.msra.mxu0 %v8393
    %8705 = vmatprep.subr.bf16.mxu0 %v8402
    %8706 = vmatpush1.bf16.msra.mxu0 %v8401
    %8707 = vmatprep.subr.bf16.mxu0 %v8410
    %8708 = vmatpush1.bf16.msra.mxu0 %v8409
    %8709 = vmatprep.subr.bf16.mxu0 %v8418
    %8710 = vmatpush1.bf16.msra.mxu0 %v8417
    %8711 = vmatprep.subr.bf16.mxu0 %v8426
    %8712 = vmatpush1.bf16.msra.mxu0 %v8425
    %8713 = vmatprep.subr.bf16.mxu0 %v8434
    %8714 = vmatpush1.bf16.msra.mxu0 %v8433
    %8715 = vmatprep.subr.bf16.mxu0 %v8442
    %8716 = vmatpush1.bf16.msra.mxu0 %v8441
    %8717 = vmatprep.subr.bf16.mxu0 %v8450
    %8718 = vmatpush1.bf16.msra.mxu0 %v8449
    %8719 = vmatprep.subr.bf16.mxu0 %v8458
    %8720 = vmatpush1.bf16.msra.mxu0 %v8457
    %8721 = vmatprep.subr.bf16.mxu0 %v8466
    %8722 = vmatpush1.bf16.msra.mxu0 %v8465
    %8723 = vmatprep.subr.bf16.mxu0 %v8474
    %8724 = vmatpush1.bf16.msra.mxu0 %v8473
    %8725 = vmatprep.subr.bf16.mxu0 %v8482
    %8726 = vmatpush1.bf16.msra.mxu0 %v8481
    %8727 = vmatprep.mubr.bf16.mxu0 %v7844
    %8728 = vmatmul.mubr.bf16.gmra.mrb[0].mxu0 %v7843
    %v8729 = vpop.f32.mrb[0].mxu0
    %v8730 = vadd.f32 0.0, %v8729
    %v8731 = vpop.f32.mrb[0].mxu0
    %v8732 = vadd.f32 0.0, %v8731
    %v8733 = vpop.f32.mrb[0].mxu0
    %v8734 = vpop.f32.mrb[0].mxu0
    %8735 = vdwg.mxu0
    %8736 = vmatprep.subr.bf16.mxu0 %v8364
    %8737 = vmatpush1.bf16.msra.mxu0 %v8363
    %8738 = vmatprep.subr.bf16.mxu0 %v8372
    %8739 = vmatpush1.bf16.msra.mxu0 %v8371
    %8740 = vmatprep.subr.bf16.mxu0 %v8380
    %8741 = vmatpush1.bf16.msra.mxu0 %v8379
    %8742 = vmatprep.subr.bf16.mxu0 %v8388
    %8743 = vmatpush1.bf16.msra.mxu0 %v8387
    %8744 = vmatprep.subr.bf16.mxu0 %v8396
    %8745 = vmatpush1.bf16.msra.mxu0 %v8395
    %8746 = vmatprep.subr.bf16.mxu0 %v8404
    %8747 = vmatpush1.bf16.msra.mxu0 %v8403
    %8748 = vmatprep.subr.bf16.mxu0 %v8412
    %8749 = vmatpush1.bf16.msra.mxu0 %v8411
    %8750 = vmatprep.subr.bf16.mxu0 %v8420
    %8751 = vmatpush1.bf16.msra.mxu0 %v8419
    %8752 = vmatprep.subr.bf16.mxu0 %v8428
    %8753 = vmatpush1.bf16.msra.mxu0 %v8427
    %8754 = vmatprep.subr.bf16.mxu0 %v8436
    %8755 = vmatpush1.bf16.msra.mxu0 %v8435
    %8756 = vmatprep.subr.bf16.mxu0 %v8444
    %8757 = vmatpush1.bf16.msra.mxu0 %v8443
    %8758 = vmatprep.subr.bf16.mxu0 %v8452
    %8759 = vmatpush1.bf16.msra.mxu0 %v8451
    %8760 = vmatprep.subr.bf16.mxu0 %v8460
    %8761 = vmatpush1.bf16.msra.mxu0 %v8459
    %8762 = vmatprep.subr.bf16.mxu0 %v8468
    %8763 = vmatpush1.bf16.msra.mxu0 %v8467
    %8764 = vmatprep.subr.bf16.mxu0 %v8476
    %8765 = vmatpush1.bf16.msra.mxu0 %v8475
    %8766 = vmatprep.subr.bf16.mxu0 %v8484
    %8767 = vmatpush1.bf16.msra.mxu0 %v8483
    %8768 = vmatprep.mubr.bf16.mxu0 %v7844
    %8769 = vmatmul.mubr.bf16.gmra.mrb[0].mxu0 %v7843
    %v8770 = vpop.f32.mrb[0].mxu0
    %v8771 = vadd.f32 0.0, %v8770
    %v8772 = vpop.f32.mrb[0].mxu0
    %v8773 = vadd.f32 0.0, %v8772
    %v8774 = vpop.f32.mrb[0].mxu0
    %v8775 = vpop.f32.mrb[0].mxu0
    %8776 = vdwg.mxu0
    %v8777 = vadd.f32 %v7615, %v8648
    %v8778 = vadd.f32 %v7617, %v8650
    %v8779 = vadd.f32 %v7686, %v8689
    %v8780 = vadd.f32 %v7688, %v8691
    %v8781 = vadd.f32 %v7757, %v8730
    %v8782 = vadd.f32 %v7759, %v8732
    %v8783 = vadd.f32 %v7828, %v8771
    %v8784 = vadd.f32 %v7830, %v8773
    %v8785 = vxor.u32 %v8777, 2147483648
    %v8786 = vxor.u32 %v8778, 2147483648
    %v8787 = vmul.f32 %v8785, 1.442695
    %v8788 = vpow.pop %v8787
    %v8789 = vmul.f32 %v8786, 1.442695
    %v8790 = vpow.pop %v8789
    %v8791 = vadd.f32 %v8788, 1.0
    %v8792 = vadd.f32 %v8790, 1.0
    %v8793 = vrcp.pop %v8791
    %v8794 = vmul.f32 1.0, %v8793
    %v8795 = vrcp.pop %v8792
    %v8796 = vmul.f32 1.0, %v8795
    %v8797 = vxor.u32 %v8779, 2147483648
    %v8798 = vxor.u32 %v8780, 2147483648
    %v8799 = vmul.f32 %v8797, 1.442695
    %v8800 = vpow.pop %v8799
    %v8801 = vmul.f32 %v8798, 1.442695
    %v8802 = vpow.pop %v8801
    %v8803 = vadd.f32 %v8800, 1.0
    %v8804 = vadd.f32 %v8802, 1.0
    %v8805 = vrcp.pop %v8803
    %v8806 = vmul.f32 1.0, %v8805
    %v8807 = vrcp.pop %v8804
    %v8808 = vmul.f32 1.0, %v8807
    %v8809 = vtanh.pop %v8781
    %v8810 = vtanh.pop %v8782
    %v8811 = vxor.u32 %v8783, 2147483648
    %v8812 = vxor.u32 %v8784, 2147483648
    %v8813 = vmul.f32 %v8811, 1.442695
    %v8814 = vpow.pop %v8813
    %v8815 = vmul.f32 %v8812, 1.442695
    %v8816 = vpow.pop %v8815
    %v8817 = vadd.f32 %v8814, 1.0
    %v8818 = vadd.f32 %v8816, 1.0
    %v8819 = vrcp.pop %v8817
    %v8820 = vmul.f32 1.0, %v8819
    %v8821 = vrcp.pop %v8818
    %v8822 = vmul.f32 1.0, %v8821
    %v8823 = vld [vmem:[#allocation3] sm:$0xf]
    %v8826 = vunpack.c.l.s4 1983009808
    %v8827 = vunpack.c.0.s8 %v8826
    %v8828 = vlaneseq
    %v8829 = vshrl.u32 %v8828, 7
    %v8830 = vsub.s32 %v8827, %v8829
    %v8831 = vrot.slane %v8823, %v8830
    %v8832 = vcombine.high %v8831, %v8831
    %v8835 = vmul.f32 %v8806, %v8831
    %v8836 = vmul.f32 %v8808, %v8832
    %v8837 = vmul.f32 %v8794, %v8809
    %v8838 = vmul.f32 %v8796, %v8810
    %v8839 = vadd.f32 %v8835, %v8837
    %v8840 = vadd.f32 %v8836, %v8838
    %v8841 = vtanh.pop %v8839
    %v8842 = vtanh.pop %v8840
    %v8843 = vmul.f32 %v8820, %v8841
    %v8844 = vmul.f32 %v8822, %v8842
    %v8847 = vcombine.low %v8839, %v8840
    %v8849 = vunpack.c.l.s4 1983009808
    %v8850 = vunpack.c.0.s8 %v8849
    %v8851 = vlaneseq
    %v8852 = vshrl.u32 %v8851, 7
    %v8853 = vsub.s32 %v8850, %v8852
    %v8854 = vrot.slane %v8847, %v8853
    %8856 = vst [vmem:[#allocation3] sm:$0xf] %v8854
    %v8859 = vcombine.low %v8843, %v8844
    %v8861 = vunpack.c.l.s4 1983009808
    %v8862 = vunpack.c.0.s8 %v8861
    %v8863 = vlaneseq
    %v8864 = vshrl.u32 %v8863, 7
    %v8865 = vsub.s32 %v8862, %v8864
    %v8866 = vrot.slane %v8859, %v8865
    %8868 = vst [vmem:[#allocation2] sm:$0xf] %v8866
    %v8869 = vld [vmem:[#allocation6] sm:$0xff]
    %v8870 = vld [vmem:[#allocation6 + $0x8] sm:$0xff]
    %v8871 = vld [vmem:[#allocation6 + $0x10] sm:$0xff]
    %v8872 = vld [vmem:[#allocation6 + $0x18] sm:$0xff]
    %v8873 = vld [vmem:[#allocation6 + $0x20] sm:$0xff]
    %v8874 = vld [vmem:[#allocation6 + $0x28] sm:$0xff]
    %v8875 = vld [vmem:[#allocation6 + $0x30] sm:$0xff]
    %v8876 = vld [vmem:[#allocation6 + $0x38] sm:$0xff]
    %v8877 = vld [vmem:[#allocation6 + $0x40] sm:$0xff]
    %v8878 = vld [vmem:[#allocation6 + $0x48] sm:$0xff]
    %v8879 = vld [vmem:[#allocation6 + $0x50] sm:$0xff]
    %v8880 = vld [vmem:[#allocation6 + $0x58] sm:$0xff]
    %v8881 = vld [vmem:[#allocation6 + $0x60] sm:$0xff]
    %v8882 = vld [vmem:[#allocation6 + $0x68] sm:$0xff]
    %v8883 = vld [vmem:[#allocation6 + $0x70] sm:$0xff]
    %v8884 = vld [vmem:[#allocation6 + $0x78] sm:$0xff]
    %v8885 = vld [vmem:[#allocation6 + $0x80] sm:$0xff]
    %v8886 = vld [vmem:[#allocation6 + $0x88] sm:$0xff]
    %v8887 = vld [vmem:[#allocation6 + $0x90] sm:$0xff]
    %v8888 = vld [vmem:[#allocation6 + $0x98] sm:$0xff]
    %v8889 = vld [vmem:[#allocation6 + $0xa0] sm:$0xff]
    %v8890 = vld [vmem:[#allocation6 + $0xa8] sm:$0xff]
    %v8891 = vld [vmem:[#allocation6 + $0xb0] sm:$0xff]
    %v8892 = vld [vmem:[#allocation6 + $0xb8] sm:$0xff]
    %v8893 = vld [vmem:[#allocation6 + $0xc0] sm:$0xff]
    %v8894 = vld [vmem:[#allocation6 + $0xc8] sm:$0xff]
    %v8895 = vld [vmem:[#allocation6 + $0xd0] sm:$0xff]
    %v8896 = vld [vmem:[#allocation6 + $0xd8] sm:$0xff]
    %v8897 = vld [vmem:[#allocation6 + $0xe0] sm:$0xff]
    %v8898 = vld [vmem:[#allocation6 + $0xe8] sm:$0xff]
    %v8899 = vld [vmem:[#allocation6 + $0xf0] sm:$0xff]
    %v8900 = vld [vmem:[#allocation6 + $0xf8] sm:$0xff]
    %v8901 = vld [vmem:[%s5] sm:$0x1]
    %v8903 = vlaneseq
    %v8904 = vshrl.u32 %v8903, 7
    %v8905 = vsub.s32 0, %v8904
    %v8906 = vrot.slane %v8901, %v8905
    %8908 = vmatprep.subr.mxu0 0.0
    %8909 = vmatpush1.msra.mxu0 %v8869
    %8910 = vmatprep.subr.mxu0 0.0
    %8911 = vmatpush1.msra.mxu0 %v8870
    %8912 = vmatprep.subr.mxu0 0.0
    %8913 = vmatpush1.msra.mxu0 %v8871
    %8914 = vmatprep.subr.mxu0 0.0
    %8915 = vmatpush1.msra.mxu0 %v8872
    %8916 = vmatprep.subr.mxu0 0.0
    %8917 = vmatpush1.msra.mxu0 %v8873
    %8918 = vmatprep.subr.mxu0 0.0
    %8919 = vmatpush1.msra.mxu0 %v8874
    %8920 = vmatprep.subr.mxu0 0.0
    %8921 = vmatpush1.msra.mxu0 %v8875
    %8922 = vmatprep.subr.mxu0 0.0
    %8923 = vmatpush1.msra.mxu0 %v8876
    %8924 = vmatprep.subr.mxu0 0.0
    %8925 = vmatpush1.msra.mxu0 %v8877
    %8926 = vmatprep.subr.mxu0 0.0
    %8927 = vmatpush1.msra.mxu0 %v8878
    %8928 = vmatprep.subr.mxu0 0.0
    %8929 = vmatpush1.msra.mxu0 %v8879
    %8930 = vmatprep.subr.mxu0 0.0
    %8931 = vmatpush1.msra.mxu0 %v8880
    %8932 = vmatprep.subr.mxu0 0.0
    %8933 = vmatpush1.msra.mxu0 %v8881
    %8934 = vmatprep.subr.mxu0 0.0
    %8935 = vmatpush1.msra.mxu0 %v8882
    %8936 = vmatprep.subr.mxu0 0.0
    %8937 = vmatpush1.msra.mxu0 %v8883
    %8938 = vmatprep.subr.mxu0 0.0
    %8939 = vmatpush1.msra.mxu0 %v8884
    %8940 = vmatprep.subr.mxu0 0.0
    %8941 = vmatpush1.msra.mxu0 %v8885
    %8942 = vmatprep.subr.mxu0 0.0
    %8943 = vmatpush1.msra.mxu0 %v8886
    %8944 = vmatprep.subr.mxu0 0.0
    %8945 = vmatpush1.msra.mxu0 %v8887
    %8946 = vmatprep.subr.mxu0 0.0
    %8947 = vmatpush1.msra.mxu0 %v8888
    %8948 = vmatprep.subr.mxu0 0.0
    %8949 = vmatpush1.msra.mxu0 %v8889
    %8950 = vmatprep.subr.mxu0 0.0
    %8951 = vmatpush1.msra.mxu0 %v8890
    %8952 = vmatprep.subr.mxu0 0.0
    %8953 = vmatpush1.msra.mxu0 %v8891
    %8954 = vmatprep.subr.mxu0 0.0
    %8955 = vmatpush1.msra.mxu0 %v8892
    %8956 = vmatprep.subr.mxu0 0.0
    %8957 = vmatpush1.msra.mxu0 %v8893
    %8958 = vmatprep.subr.mxu0 0.0
    %8959 = vmatpush1.msra.mxu0 %v8894
    %8960 = vmatprep.subr.mxu0 0.0
    %8961 = vmatpush1.msra.mxu0 %v8895
    %8962 = vmatprep.subr.mxu0 0.0
    %8963 = vmatpush1.msra.mxu0 %v8896
    %8964 = vmatprep.subr.mxu0 0.0
    %8965 = vmatpush1.msra.mxu0 %v8897
    %8966 = vmatprep.subr.mxu0 0.0
    %8967 = vmatpush1.msra.mxu0 %v8898
    %8968 = vmatprep.subr.mxu0 0.0
    %8969 = vmatpush1.msra.mxu0 %v8899
    %8970 = vmatprep.subr.mxu0 0.0
    %8971 = vmatpush1.msra.mxu0 %v8900
    %8972 = vmatprep.mubr.f32.mxu0 %v8844
    %8973 = vmatmul.mubr.f32.gmra.mrb[0].mxu0 %v8843
    %v8974 = vpop.f32.mrb[0].mxu0
    %v8975 = vadd.f32 %v8906, %v8974
    %v8976 = vpop.f32.mrb[0].mxu0
    %8977 = vdwg.mxu0
    %s8978 = scalar_lea.vmem %s6, 10
    %8979 = vst [vmem:[%s8978] sm:$0x3] %v8975
    %s8980 = scalar_lea.vmem %s0, 12
    %v8981 = vld [vmem:[%s8980] sm:$0x3]
    %v8982 = vld [vmem:[#allocation2] sm:$0xf]
    %v8983 = vld [vmem:[%s1] sm:$0xff]
    %v8984 = vld [vmem:[%s1 + $0x8] sm:$0xff]
    %v8985 = vld [vmem:[%s1 + $0x10] sm:$0xff]
    %v8986 = vld [vmem:[%s1 + $0x18] sm:$0xff]
    %v8987 = vld [vmem:[%s1 + $0x20] sm:$0xff]
    %v8988 = vld [vmem:[%s1 + $0x28] sm:$0xff]
    %v8989 = vld [vmem:[%s1 + $0x30] sm:$0xff]
    %v8990 = vld [vmem:[%s1 + $0x38] sm:$0xff]
    %v8991 = vld [vmem:[%s3] sm:$0xff]
    %v8993 = vlaneseq
    %v8994 = vshrl.u32 %v8993, 7
    %v8995 = vsub.s32 0, %v8994
    %v8996 = vrot.slane %v8991, %v8995
    %v8997 = vlaneseq
    %v8998 = vshrl.u32 %v8997, 7
    %v8999 = vsub.s32 1, %v8998
    %v9000 = vrot.slane %v8991, %v8999
    %v9001 = vlaneseq
    %v9002 = vshrl.u32 %v9001, 7
    %v9003 = vsub.s32 2, %v9002
    %v9004 = vrot.slane %v8991, %v9003
    %v9005 = vlaneseq
    %v9006 = vshrl.u32 %v9005, 7
    %v9007 = vsub.s32 3, %v9006
    %v9008 = vrot.slane %v8991, %v9007
    %v9009 = vlaneseq
    %v9010 = vshrl.u32 %v9009, 7
    %v9011 = vsub.s32 4, %v9010
    %v9012 = vrot.slane %v8991, %v9011
    %v9013 = vlaneseq
    %v9014 = vshrl.u32 %v9013, 7
    %v9015 = vsub.s32 5, %v9014
    %v9016 = vrot.slane %v8991, %v9015
    %v9017 = vlaneseq
    %v9018 = vshrl.u32 %v9017, 7
    %v9019 = vsub.s32 6, %v9018
    %v9020 = vrot.slane %v8991, %v9019
    %v9021 = vlaneseq
    %v9022 = vshrl.u32 %v9021, 7
    %v9023 = vsub.s32 7, %v9022
    %v9024 = vrot.slane %v8991, %v9023
    %v9034 = vsel %vm105, %v8981, 0
    %9036 = vmatprep.subr.mxu0 %v8984
    %9037 = vmatpush1.msra.mxu0 %v8983
    %9038 = vmatprep.subr.mxu0 0.0
    %9039 = vmatpush1.msra.mxu0 0.0
    %9040 = vmatprep.subr.mxu0 0.0
    %9041 = vmatpush1.msra.mxu0 0.0
    %9042 = vmatprep.subr.mxu0 0.0
    %9043 = vmatpush1.msra.mxu0 0.0
    %9044 = vmatprep.subr.mxu0 0.0
    %9045 = vmatpush1.msra.mxu0 0.0
    %9046 = vmatprep.subr.mxu0 0.0
    %9047 = vmatpush1.msra.mxu0 0.0
    %9048 = vmatprep.subr.mxu0 0.0
    %9049 = vmatpush1.msra.mxu0 0.0
    %9050 = vmatprep.subr.mxu0 0.0
    %9051 = vmatpush1.msra.mxu0 0.0
    %9052 = vmatprep.subr.mxu0 0.0
    %9053 = vmatpush1.msra.mxu0 0.0
    %9054 = vmatprep.subr.mxu0 0.0
    %9055 = vmatpush1.msra.mxu0 0.0
    %9056 = vmatprep.subr.mxu0 0.0
    %9057 = vmatpush1.msra.mxu0 0.0
    %9058 = vmatprep.subr.mxu0 0.0
    %9059 = vmatpush1.msra.mxu0 0.0
    %9060 = vmatprep.subr.mxu0 0.0
    %9061 = vmatpush1.msra.mxu0 0.0
    %9062 = vmatprep.subr.mxu0 0.0
    %9063 = vmatpush1.msra.mxu0 0.0
    %9064 = vmatprep.subr.mxu0 0.0
    %9065 = vmatpush1.msra.mxu0 0.0
    %9066 = vmatprep.subr.mxu0 0.0
    %9067 = vmatpush1.msra.mxu0 0.0
    %9068 = vmatprep.subr.mxu0 0.0
    %9069 = vmatpush1.msra.mxu0 0.0
    %9070 = vmatprep.subr.mxu0 0.0
    %9071 = vmatpush1.msra.mxu0 0.0
    %9072 = vmatprep.subr.mxu0 0.0
    %9073 = vmatpush1.msra.mxu0 0.0
    %9074 = vmatprep.subr.mxu0 0.0
    %9075 = vmatpush1.msra.mxu0 0.0
    %9076 = vmatprep.subr.mxu0 0.0
    %9077 = vmatpush1.msra.mxu0 0.0
    %9078 = vmatprep.subr.mxu0 0.0
    %9079 = vmatpush1.msra.mxu0 0.0
    %9080 = vmatprep.subr.mxu0 0.0
    %9081 = vmatpush1.msra.mxu0 0.0
    %9082 = vmatprep.subr.mxu0 0.0
    %9083 = vmatpush1.msra.mxu0 0.0
    %9084 = vmatprep.subr.mxu0 0.0
    %9085 = vmatpush1.msra.mxu0 0.0
    %9086 = vmatprep.subr.mxu0 0.0
    %9087 = vmatpush1.msra.mxu0 0.0
    %9088 = vmatprep.subr.mxu0 0.0
    %9089 = vmatpush1.msra.mxu0 0.0
    %9090 = vmatprep.subr.mxu0 0.0
    %9091 = vmatpush1.msra.mxu0 0.0
    %9092 = vmatprep.subr.mxu0 0.0
    %9093 = vmatpush1.msra.mxu0 0.0
    %9094 = vmatprep.subr.mxu0 0.0
    %9095 = vmatpush1.msra.mxu0 0.0
    %9096 = vmatprep.subr.mxu0 0.0
    %9097 = vmatpush1.msra.mxu0 0.0
    %9098 = vmatprep.subr.mxu0 0.0
    %9099 = vmatpush1.msra.mxu0 0.0
    %9100 = vmatprep.mubr.f32.mxu0 0.0
    %9101 = vmatmul.mubr.f32.gmra.mrb[0].mxu0 %v9034
    %v9102 = vpop.f32.mrb[0].mxu0
    %v9103 = vadd.f32 %v8996, %v9102
    %v9104 = vpop.f32.mrb[0].mxu0
    %v9105 = vadd.f32 %v9000, %v9104
    %9106 = vdwg.mxu0
    %9107 = vmatprep.subr.mxu0 %v8986
    %9108 = vmatpush1.msra.mxu0 %v8985
    %9109 = vmatprep.subr.mxu0 0.0
    %9110 = vmatpush1.msra.mxu0 0.0
    %9111 = vmatprep.subr.mxu0 0.0
    %9112 = vmatpush1.msra.mxu0 0.0
    %9113 = vmatprep.subr.mxu0 0.0
    %9114 = vmatpush1.msra.mxu0 0.0
    %9115 = vmatprep.subr.mxu0 0.0
    %9116 = vmatpush1.msra.mxu0 0.0
    %9117 = vmatprep.subr.mxu0 0.0
    %9118 = vmatpush1.msra.mxu0 0.0
    %9119 = vmatprep.subr.mxu0 0.0
    %9120 = vmatpush1.msra.mxu0 0.0
    %9121 = vmatprep.subr.mxu0 0.0
    %9122 = vmatpush1.msra.mxu0 0.0
    %9123 = vmatprep.subr.mxu0 0.0
    %9124 = vmatpush1.msra.mxu0 0.0
    %9125 = vmatprep.subr.mxu0 0.0
    %9126 = vmatpush1.msra.mxu0 0.0
    %9127 = vmatprep.subr.mxu0 0.0
    %9128 = vmatpush1.msra.mxu0 0.0
    %9129 = vmatprep.subr.mxu0 0.0
    %9130 = vmatpush1.msra.mxu0 0.0
    %9131 = vmatprep.subr.mxu0 0.0
    %9132 = vmatpush1.msra.mxu0 0.0
    %9133 = vmatprep.subr.mxu0 0.0
    %9134 = vmatpush1.msra.mxu0 0.0
    %9135 = vmatprep.subr.mxu0 0.0
    %9136 = vmatpush1.msra.mxu0 0.0
    %9137 = vmatprep.subr.mxu0 0.0
    %9138 = vmatpush1.msra.mxu0 0.0
    %9139 = vmatprep.subr.mxu0 0.0
    %9140 = vmatpush1.msra.mxu0 0.0
    %9141 = vmatprep.subr.mxu0 0.0
    %9142 = vmatpush1.msra.mxu0 0.0
    %9143 = vmatprep.subr.mxu0 0.0
    %9144 = vmatpush1.msra.mxu0 0.0
    %9145 = vmatprep.subr.mxu0 0.0
    %9146 = vmatpush1.msra.mxu0 0.0
    %9147 = vmatprep.subr.mxu0 0.0
    %9148 = vmatpush1.msra.mxu0 0.0
    %9149 = vmatprep.subr.mxu0 0.0
    %9150 = vmatpush1.msra.mxu0 0.0
    %9151 = vmatprep.subr.mxu0 0.0
    %9152 = vmatpush1.msra.mxu0 0.0
    %9153 = vmatprep.subr.mxu0 0.0
    %9154 = vmatpush1.msra.mxu0 0.0
    %9155 = vmatprep.subr.mxu0 0.0
    %9156 = vmatpush1.msra.mxu0 0.0
    %9157 = vmatprep.subr.mxu0 0.0
    %9158 = vmatpush1.msra.mxu0 0.0
    %9159 = vmatprep.subr.mxu0 0.0
    %9160 = vmatpush1.msra.mxu0 0.0
    %9161 = vmatprep.subr.mxu0 0.0
    %9162 = vmatpush1.msra.mxu0 0.0
    %9163 = vmatprep.subr.mxu0 0.0
    %9164 = vmatpush1.msra.mxu0 0.0
    %9165 = vmatprep.subr.mxu0 0.0
    %9166 = vmatpush1.msra.mxu0 0.0
    %9167 = vmatprep.subr.mxu0 0.0
    %9168 = vmatpush1.msra.mxu0 0.0
    %9169 = vmatprep.subr.mxu0 0.0
    %9170 = vmatpush1.msra.mxu0 0.0
    %9171 = vmatprep.mubr.f32.mxu0 0.0
    %9172 = vmatmul.mubr.f32.gmra.mrb[0].mxu0 %v9034
    %v9173 = vpop.f32.mrb[0].mxu0
    %v9174 = vadd.f32 %v9004, %v9173
    %v9175 = vpop.f32.mrb[0].mxu0
    %v9176 = vadd.f32 %v9008, %v9175
    %9177 = vdwg.mxu0
    %9178 = vmatprep.subr.mxu0 %v8988
    %9179 = vmatpush1.msra.mxu0 %v8987
    %9180 = vmatprep.subr.mxu0 0.0
    %9181 = vmatpush1.msra.mxu0 0.0
    %9182 = vmatprep.subr.mxu0 0.0
    %9183 = vmatpush1.msra.mxu0 0.0
    %9184 = vmatprep.subr.mxu0 0.0
    %9185 = vmatpush1.msra.mxu0 0.0
    %9186 = vmatprep.subr.mxu0 0.0
    %9187 = vmatpush1.msra.mxu0 0.0
    %9188 = vmatprep.subr.mxu0 0.0
    %9189 = vmatpush1.msra.mxu0 0.0
    %9190 = vmatprep.subr.mxu0 0.0
    %9191 = vmatpush1.msra.mxu0 0.0
    %9192 = vmatprep.subr.mxu0 0.0
    %9193 = vmatpush1.msra.mxu0 0.0
    %9194 = vmatprep.subr.mxu0 0.0
    %9195 = vmatpush1.msra.mxu0 0.0
    %9196 = vmatprep.subr.mxu0 0.0
    %9197 = vmatpush1.msra.mxu0 0.0
    %9198 = vmatprep.subr.mxu0 0.0
    %9199 = vmatpush1.msra.mxu0 0.0
    %9200 = vmatprep.subr.mxu0 0.0
    %9201 = vmatpush1.msra.mxu0 0.0
    %9202 = vmatprep.subr.mxu0 0.0
    %9203 = vmatpush1.msra.mxu0 0.0
    %9204 = vmatprep.subr.mxu0 0.0
    %9205 = vmatpush1.msra.mxu0 0.0
    %9206 = vmatprep.subr.mxu0 0.0
    %9207 = vmatpush1.msra.mxu0 0.0
    %9208 = vmatprep.subr.mxu0 0.0
    %9209 = vmatpush1.msra.mxu0 0.0
    %9210 = vmatprep.subr.mxu0 0.0
    %9211 = vmatpush1.msra.mxu0 0.0
    %9212 = vmatprep.subr.mxu0 0.0
    %9213 = vmatpush1.msra.mxu0 0.0
    %9214 = vmatprep.subr.mxu0 0.0
    %9215 = vmatpush1.msra.mxu0 0.0
    %9216 = vmatprep.subr.mxu0 0.0
    %9217 = vmatpush1.msra.mxu0 0.0
    %9218 = vmatprep.subr.mxu0 0.0
    %9219 = vmatpush1.msra.mxu0 0.0
    %9220 = vmatprep.subr.mxu0 0.0
    %9221 = vmatpush1.msra.mxu0 0.0
    %9222 = vmatprep.subr.mxu0 0.0
    %9223 = vmatpush1.msra.mxu0 0.0
    %9224 = vmatprep.subr.mxu0 0.0
    %9225 = vmatpush1.msra.mxu0 0.0
    %9226 = vmatprep.subr.mxu0 0.0
    %9227 = vmatpush1.msra.mxu0 0.0
    %9228 = vmatprep.subr.mxu0 0.0
    %9229 = vmatpush1.msra.mxu0 0.0
    %9230 = vmatprep.subr.mxu0 0.0
    %9231 = vmatpush1.msra.mxu0 0.0
    %9232 = vmatprep.subr.mxu0 0.0
    %9233 = vmatpush1.msra.mxu0 0.0
    %9234 = vmatprep.subr.mxu0 0.0
    %9235 = vmatpush1.msra.mxu0 0.0
    %9236 = vmatprep.subr.mxu0 0.0
    %9237 = vmatpush1.msra.mxu0 0.0
    %9238 = vmatprep.subr.mxu0 0.0
    %9239 = vmatpush1.msra.mxu0 0.0
    %9240 = vmatprep.subr.mxu0 0.0
    %9241 = vmatpush1.msra.mxu0 0.0
    %9242 = vmatprep.mubr.f32.mxu0 0.0
    %9243 = vmatmul.mubr.f32.gmra.mrb[0].mxu0 %v9034
    %v9244 = vpop.f32.mrb[0].mxu0
    %v9245 = vadd.f32 %v9012, %v9244
    %v9246 = vpop.f32.mrb[0].mxu0
    %v9247 = vadd.f32 %v9016, %v9246
    %9248 = vdwg.mxu0
    %9249 = vmatprep.subr.mxu0 %v8990
    %9250 = vmatpush1.msra.mxu0 %v8989
    %9251 = vmatprep.subr.mxu0 0.0
    %9252 = vmatpush1.msra.mxu0 0.0
    %9253 = vmatprep.subr.mxu0 0.0
    %9254 = vmatpush1.msra.mxu0 0.0
    %9255 = vmatprep.subr.mxu0 0.0
    %9256 = vmatpush1.msra.mxu0 0.0
    %9257 = vmatprep.subr.mxu0 0.0
    %9258 = vmatpush1.msra.mxu0 0.0
    %9259 = vmatprep.subr.mxu0 0.0
    %9260 = vmatpush1.msra.mxu0 0.0
    %9261 = vmatprep.subr.mxu0 0.0
    %9262 = vmatpush1.msra.mxu0 0.0
    %9263 = vmatprep.subr.mxu0 0.0
    %9264 = vmatpush1.msra.mxu0 0.0
    %9265 = vmatprep.subr.mxu0 0.0
    %9266 = vmatpush1.msra.mxu0 0.0
    %9267 = vmatprep.subr.mxu0 0.0
    %9268 = vmatpush1.msra.mxu0 0.0
    %9269 = vmatprep.subr.mxu0 0.0
    %9270 = vmatpush1.msra.mxu0 0.0
    %9271 = vmatprep.subr.mxu0 0.0
    %9272 = vmatpush1.msra.mxu0 0.0
    %9273 = vmatprep.subr.mxu0 0.0
    %9274 = vmatpush1.msra.mxu0 0.0
    %9275 = vmatprep.subr.mxu0 0.0
    %9276 = vmatpush1.msra.mxu0 0.0
    %9277 = vmatprep.subr.mxu0 0.0
    %9278 = vmatpush1.msra.mxu0 0.0
    %9279 = vmatprep.subr.mxu0 0.0
    %9280 = vmatpush1.msra.mxu0 0.0
    %9281 = vmatprep.subr.mxu0 0.0
    %9282 = vmatpush1.msra.mxu0 0.0
    %9283 = vmatprep.subr.mxu0 0.0
    %9284 = vmatpush1.msra.mxu0 0.0
    %9285 = vmatprep.subr.mxu0 0.0
    %9286 = vmatpush1.msra.mxu0 0.0
    %9287 = vmatprep.subr.mxu0 0.0
    %9288 = vmatpush1.msra.mxu0 0.0
    %9289 = vmatprep.subr.mxu0 0.0
    %9290 = vmatpush1.msra.mxu0 0.0
    %9291 = vmatprep.subr.mxu0 0.0
    %9292 = vmatpush1.msra.mxu0 0.0
    %9293 = vmatprep.subr.mxu0 0.0
    %9294 = vmatpush1.msra.mxu0 0.0
    %9295 = vmatprep.subr.mxu0 0.0
    %9296 = vmatpush1.msra.mxu0 0.0
    %9297 = vmatprep.subr.mxu0 0.0
    %9298 = vmatpush1.msra.mxu0 0.0
    %9299 = vmatprep.subr.mxu0 0.0
    %9300 = vmatpush1.msra.mxu0 0.0
    %9301 = vmatprep.subr.mxu0 0.0
    %9302 = vmatpush1.msra.mxu0 0.0
    %9303 = vmatprep.subr.mxu0 0.0
    %9304 = vmatpush1.msra.mxu0 0.0
    %9305 = vmatprep.subr.mxu0 0.0
    %9306 = vmatpush1.msra.mxu0 0.0
    %9307 = vmatprep.subr.mxu0 0.0
    %9308 = vmatpush1.msra.mxu0 0.0
    %9309 = vmatprep.subr.mxu0 0.0
    %9310 = vmatpush1.msra.mxu0 0.0
    %9311 = vmatprep.subr.mxu0 0.0
    %9312 = vmatpush1.msra.mxu0 0.0
    %9313 = vmatprep.mubr.f32.mxu0 0.0
    %9314 = vmatmul.mubr.f32.gmra.mrb[0].mxu0 %v9034
    %v9315 = vpop.f32.mrb[0].mxu0
    %v9316 = vadd.f32 %v9020, %v9315
    %v9317 = vpop.f32.mrb[0].mxu0
    %v9318 = vadd.f32 %v9024, %v9317
    %9319 = vdwg.mxu0
    %v9322 = vunpack.c.l.s4 1983009808
    %v9323 = vunpack.c.0.s8 %v9322
    %v9324 = vlaneseq
    %v9325 = vshrl.u32 %v9324, 7
    %v9326 = vsub.s32 %v9323, %v9325
    %v9327 = vrot.slane %v8982, %v9326
    %v9328 = vcombine.high %v9327, %v9327
    %v9331 = vpack.c.bf16 %v9327, %v9327
    %v9332 = vpack.c.bf16 %v9328, %v9328
    %v9333 = vld [vmem:[#allocation4] sm:$0xff]
    %v9334 = vld [vmem:[#allocation4 + $0x8] sm:$0xff]
    %v9335 = vld [vmem:[#allocation4 + $0x10] sm:$0xff]
    %v9336 = vld [vmem:[#allocation4 + $0x18] sm:$0xff]
    %v9337 = vld [vmem:[#allocation4 + $0x20] sm:$0xff]
    %v9338 = vld [vmem:[#allocation4 + $0x28] sm:$0xff]
    %v9339 = vld [vmem:[#allocation4 + $0x30] sm:$0xff]
    %v9340 = vld [vmem:[#allocation4 + $0x38] sm:$0xff]
    %v9341 = vld [vmem:[#allocation4 + $0x40] sm:$0xff]
    %v9342 = vld [vmem:[#allocation4 + $0x48] sm:$0xff]
    %v9343 = vld [vmem:[#allocation4 + $0x50] sm:$0xff]
    %v9344 = vld [vmem:[#allocation4 + $0x58] sm:$0xff]
    %v9345 = vld [vmem:[#allocation4 + $0x60] sm:$0xff]
    %v9346 = vld [vmem:[#allocation4 + $0x68] sm:$0xff]
    %v9347 = vld [vmem:[#allocation4 + $0x70] sm:$0xff]
    %v9348 = vld [vmem:[#allocation4 + $0x78] sm:$0xff]
    %v9349 = vld [vmem:[#allocation4 + $0x80] sm:$0xff]
    %v9350 = vld [vmem:[#allocation4 + $0x88] sm:$0xff]
    %v9351 = vld [vmem:[#allocation4 + $0x90] sm:$0xff]
    %v9352 = vld [vmem:[#allocation4 + $0x98] sm:$0xff]
    %v9353 = vld [vmem:[#allocation4 + $0xa0] sm:$0xff]
    %v9354 = vld [vmem:[#allocation4 + $0xa8] sm:$0xff]
    %v9355 = vld [vmem:[#allocation4 + $0xb0] sm:$0xff]
    %v9356 = vld [vmem:[#allocation4 + $0xb8] sm:$0xff]
    %v9357 = vld [vmem:[#allocation4 + $0xc0] sm:$0xff]
    %v9358 = vld [vmem:[#allocation4 + $0xc8] sm:$0xff]
    %v9359 = vld [vmem:[#allocation4 + $0xd0] sm:$0xff]
    %v9360 = vld [vmem:[#allocation4 + $0xd8] sm:$0xff]
    %v9361 = vld [vmem:[#allocation4 + $0xe0] sm:$0xff]
    %v9362 = vld [vmem:[#allocation4 + $0xe8] sm:$0xff]
    %v9363 = vld [vmem:[#allocation4 + $0xf0] sm:$0xff]
    %v9364 = vld [vmem:[#allocation4 + $0xf8] sm:$0xff]
    %v9365 = vld [vmem:[#allocation4 + $0x100] sm:$0xff]
    %v9366 = vld [vmem:[#allocation4 + $0x108] sm:$0xff]
    %v9367 = vld [vmem:[#allocation4 + $0x110] sm:$0xff]
    %v9368 = vld [vmem:[#allocation4 + $0x118] sm:$0xff]
    %v9369 = vld [vmem:[#allocation4 + $0x120] sm:$0xff]
    %v9370 = vld [vmem:[#allocation4 + $0x128] sm:$0xff]
    %v9371 = vld [vmem:[#allocation4 + $0x130] sm:$0xff]
    %v9372 = vld [vmem:[#allocation4 + $0x138] sm:$0xff]
    %v9373 = vld [vmem:[#allocation4 + $0x140] sm:$0xff]
    %v9374 = vld [vmem:[#allocation4 + $0x148] sm:$0xff]
    %v9375 = vld [vmem:[#allocation4 + $0x150] sm:$0xff]
    %v9376 = vld [vmem:[#allocation4 + $0x158] sm:$0xff]
    %v9377 = vld [vmem:[#allocation4 + $0x160] sm:$0xff]
    %v9378 = vld [vmem:[#allocation4 + $0x168] sm:$0xff]
    %v9379 = vld [vmem:[#allocation4 + $0x170] sm:$0xff]
    %v9380 = vld [vmem:[#allocation4 + $0x178] sm:$0xff]
    %v9381 = vld [vmem:[#allocation4 + $0x180] sm:$0xff]
    %v9382 = vld [vmem:[#allocation4 + $0x188] sm:$0xff]
    %v9383 = vld [vmem:[#allocation4 + $0x190] sm:$0xff]
    %v9384 = vld [vmem:[#allocation4 + $0x198] sm:$0xff]
    %v9385 = vld [vmem:[#allocation4 + $0x1a0] sm:$0xff]
    %v9386 = vld [vmem:[#allocation4 + $0x1a8] sm:$0xff]
    %v9387 = vld [vmem:[#allocation4 + $0x1b0] sm:$0xff]
    %v9388 = vld [vmem:[#allocation4 + $0x1b8] sm:$0xff]
    %v9389 = vld [vmem:[#allocation4 + $0x1c0] sm:$0xff]
    %v9390 = vld [vmem:[#allocation4 + $0x1c8] sm:$0xff]
    %v9391 = vld [vmem:[#allocation4 + $0x1d0] sm:$0xff]
    %v9392 = vld [vmem:[#allocation4 + $0x1d8] sm:$0xff]
    %v9393 = vld [vmem:[#allocation4 + $0x1e0] sm:$0xff]
    %v9394 = vld [vmem:[#allocation4 + $0x1e8] sm:$0xff]
    %v9395 = vld [vmem:[#allocation4 + $0x1f0] sm:$0xff]
    %v9396 = vld [vmem:[#allocation4 + $0x1f8] sm:$0xff]
    %v9397 = vld [vmem:[#allocation4 + $0x200] sm:$0xff]
    %v9398 = vld [vmem:[#allocation4 + $0x208] sm:$0xff]
    %v9399 = vld [vmem:[#allocation4 + $0x210] sm:$0xff]
    %v9400 = vld [vmem:[#allocation4 + $0x218] sm:$0xff]
    %v9401 = vld [vmem:[#allocation4 + $0x220] sm:$0xff]
    %v9402 = vld [vmem:[#allocation4 + $0x228] sm:$0xff]
    %v9403 = vld [vmem:[#allocation4 + $0x230] sm:$0xff]
    %v9404 = vld [vmem:[#allocation4 + $0x238] sm:$0xff]
    %v9405 = vld [vmem:[#allocation4 + $0x240] sm:$0xff]
    %v9406 = vld [vmem:[#allocation4 + $0x248] sm:$0xff]
    %v9407 = vld [vmem:[#allocation4 + $0x250] sm:$0xff]
    %v9408 = vld [vmem:[#allocation4 + $0x258] sm:$0xff]
    %v9409 = vld [vmem:[#allocation4 + $0x260] sm:$0xff]
    %v9410 = vld [vmem:[#allocation4 + $0x268] sm:$0xff]
    %v9411 = vld [vmem:[#allocation4 + $0x270] sm:$0xff]
    %v9412 = vld [vmem:[#allocation4 + $0x278] sm:$0xff]
    %v9413 = vld [vmem:[#allocation4 + $0x280] sm:$0xff]
    %v9414 = vld [vmem:[#allocation4 + $0x288] sm:$0xff]
    %v9415 = vld [vmem:[#allocation4 + $0x290] sm:$0xff]
    %v9416 = vld [vmem:[#allocation4 + $0x298] sm:$0xff]
    %v9417 = vld [vmem:[#allocation4 + $0x2a0] sm:$0xff]
    %v9418 = vld [vmem:[#allocation4 + $0x2a8] sm:$0xff]
    %v9419 = vld [vmem:[#allocation4 + $0x2b0] sm:$0xff]
    %v9420 = vld [vmem:[#allocation4 + $0x2b8] sm:$0xff]
    %v9421 = vld [vmem:[#allocation4 + $0x2c0] sm:$0xff]
    %v9422 = vld [vmem:[#allocation4 + $0x2c8] sm:$0xff]
    %v9423 = vld [vmem:[#allocation4 + $0x2d0] sm:$0xff]
    %v9424 = vld [vmem:[#allocation4 + $0x2d8] sm:$0xff]
    %v9425 = vld [vmem:[#allocation4 + $0x2e0] sm:$0xff]
    %v9426 = vld [vmem:[#allocation4 + $0x2e8] sm:$0xff]
    %v9427 = vld [vmem:[#allocation4 + $0x2f0] sm:$0xff]
    %v9428 = vld [vmem:[#allocation4 + $0x2f8] sm:$0xff]
    %v9429 = vld [vmem:[#allocation4 + $0x300] sm:$0xff]
    %v9430 = vld [vmem:[#allocation4 + $0x308] sm:$0xff]
    %v9431 = vld [vmem:[#allocation4 + $0x310] sm:$0xff]
    %v9432 = vld [vmem:[#allocation4 + $0x318] sm:$0xff]
    %v9433 = vld [vmem:[#allocation4 + $0x320] sm:$0xff]
    %v9434 = vld [vmem:[#allocation4 + $0x328] sm:$0xff]
    %v9435 = vld [vmem:[#allocation4 + $0x330] sm:$0xff]
    %v9436 = vld [vmem:[#allocation4 + $0x338] sm:$0xff]
    %v9437 = vld [vmem:[#allocation4 + $0x340] sm:$0xff]
    %v9438 = vld [vmem:[#allocation4 + $0x348] sm:$0xff]
    %v9439 = vld [vmem:[#allocation4 + $0x350] sm:$0xff]
    %v9440 = vld [vmem:[#allocation4 + $0x358] sm:$0xff]
    %v9441 = vld [vmem:[#allocation4 + $0x360] sm:$0xff]
    %v9442 = vld [vmem:[#allocation4 + $0x368] sm:$0xff]
    %v9443 = vld [vmem:[#allocation4 + $0x370] sm:$0xff]
    %v9444 = vld [vmem:[#allocation4 + $0x378] sm:$0xff]
    %v9445 = vld [vmem:[#allocation4 + $0x380] sm:$0xff]
    %v9446 = vld [vmem:[#allocation4 + $0x388] sm:$0xff]
    %v9447 = vld [vmem:[#allocation4 + $0x390] sm:$0xff]
    %v9448 = vld [vmem:[#allocation4 + $0x398] sm:$0xff]
    %v9449 = vld [vmem:[#allocation4 + $0x3a0] sm:$0xff]
    %v9450 = vld [vmem:[#allocation4 + $0x3a8] sm:$0xff]
    %v9451 = vld [vmem:[#allocation4 + $0x3b0] sm:$0xff]
    %v9452 = vld [vmem:[#allocation4 + $0x3b8] sm:$0xff]
    %v9453 = vld [vmem:[#allocation4 + $0x3c0] sm:$0xff]
    %v9454 = vld [vmem:[#allocation4 + $0x3c8] sm:$0xff]
    %v9455 = vld [vmem:[#allocation4 + $0x3d0] sm:$0xff]
    %v9456 = vld [vmem:[#allocation4 + $0x3d8] sm:$0xff]
    %v9457 = vld [vmem:[#allocation4 + $0x3e0] sm:$0xff]
    %v9458 = vld [vmem:[#allocation4 + $0x3e8] sm:$0xff]
    %v9459 = vld [vmem:[#allocation4 + $0x3f0] sm:$0xff]
    %v9460 = vld [vmem:[#allocation4 + $0x3f8] sm:$0xff]
    %v9589 = vunpack.c.l.b16 %v9333
    %v9590 = vunpack.c.h.b16 %v9333
    %v9591 = vunpack.c.l.b16 %v9334
    %v9592 = vunpack.c.h.b16 %v9334
    %v9593 = vunpack.c.l.b16 %v9335
    %v9594 = vunpack.c.h.b16 %v9335
    %v9595 = vunpack.c.l.b16 %v9336
    %v9596 = vunpack.c.h.b16 %v9336
    %v9597 = vunpack.c.l.b16 %v9337
    %v9598 = vunpack.c.h.b16 %v9337
    %v9599 = vunpack.c.l.b16 %v9338
    %v9600 = vunpack.c.h.b16 %v9338
    %v9601 = vunpack.c.l.b16 %v9339
    %v9602 = vunpack.c.h.b16 %v9339
    %v9603 = vunpack.c.l.b16 %v9340
    %v9604 = vunpack.c.h.b16 %v9340
    %v9605 = vunpack.c.l.b16 %v9341
    %v9606 = vunpack.c.h.b16 %v9341
    %v9607 = vunpack.c.l.b16 %v9342
    %v9608 = vunpack.c.h.b16 %v9342
    %v9609 = vunpack.c.l.b16 %v9343
    %v9610 = vunpack.c.h.b16 %v9343
    %v9611 = vunpack.c.l.b16 %v9344
    %v9612 = vunpack.c.h.b16 %v9344
    %v9613 = vunpack.c.l.b16 %v9345
    %v9614 = vunpack.c.h.b16 %v9345
    %v9615 = vunpack.c.l.b16 %v9346
    %v9616 = vunpack.c.h.b16 %v9346
    %v9617 = vunpack.c.l.b16 %v9347
    %v9618 = vunpack.c.h.b16 %v9347
    %v9619 = vunpack.c.l.b16 %v9348
    %v9620 = vunpack.c.h.b16 %v9348
    %v9621 = vunpack.c.l.b16 %v9349
    %v9622 = vunpack.c.h.b16 %v9349
    %v9623 = vunpack.c.l.b16 %v9350
    %v9624 = vunpack.c.h.b16 %v9350
    %v9625 = vunpack.c.l.b16 %v9351
    %v9626 = vunpack.c.h.b16 %v9351
    %v9627 = vunpack.c.l.b16 %v9352
    %v9628 = vunpack.c.h.b16 %v9352
    %v9629 = vunpack.c.l.b16 %v9353
    %v9630 = vunpack.c.h.b16 %v9353
    %v9631 = vunpack.c.l.b16 %v9354
    %v9632 = vunpack.c.h.b16 %v9354
    %v9633 = vunpack.c.l.b16 %v9355
    %v9634 = vunpack.c.h.b16 %v9355
    %v9635 = vunpack.c.l.b16 %v9356
    %v9636 = vunpack.c.h.b16 %v9356
    %v9637 = vunpack.c.l.b16 %v9357
    %v9638 = vunpack.c.h.b16 %v9357
    %v9639 = vunpack.c.l.b16 %v9358
    %v9640 = vunpack.c.h.b16 %v9358
    %v9641 = vunpack.c.l.b16 %v9359
    %v9642 = vunpack.c.h.b16 %v9359
    %v9643 = vunpack.c.l.b16 %v9360
    %v9644 = vunpack.c.h.b16 %v9360
    %v9645 = vunpack.c.l.b16 %v9361
    %v9646 = vunpack.c.h.b16 %v9361
    %v9647 = vunpack.c.l.b16 %v9362
    %v9648 = vunpack.c.h.b16 %v9362
    %v9649 = vunpack.c.l.b16 %v9363
    %v9650 = vunpack.c.h.b16 %v9363
    %v9651 = vunpack.c.l.b16 %v9364
    %v9652 = vunpack.c.h.b16 %v9364
    %v9653 = vunpack.c.l.b16 %v9365
    %v9654 = vunpack.c.h.b16 %v9365
    %v9655 = vunpack.c.l.b16 %v9366
    %v9656 = vunpack.c.h.b16 %v9366
    %v9657 = vunpack.c.l.b16 %v9367
    %v9658 = vunpack.c.h.b16 %v9367
    %v9659 = vunpack.c.l.b16 %v9368
    %v9660 = vunpack.c.h.b16 %v9368
    %v9661 = vunpack.c.l.b16 %v9369
    %v9662 = vunpack.c.h.b16 %v9369
    %v9663 = vunpack.c.l.b16 %v9370
    %v9664 = vunpack.c.h.b16 %v9370
    %v9665 = vunpack.c.l.b16 %v9371
    %v9666 = vunpack.c.h.b16 %v9371
    %v9667 = vunpack.c.l.b16 %v9372
    %v9668 = vunpack.c.h.b16 %v9372
    %v9669 = vunpack.c.l.b16 %v9373
    %v9670 = vunpack.c.h.b16 %v9373
    %v9671 = vunpack.c.l.b16 %v9374
    %v9672 = vunpack.c.h.b16 %v9374
    %v9673 = vunpack.c.l.b16 %v9375
    %v9674 = vunpack.c.h.b16 %v9375
    %v9675 = vunpack.c.l.b16 %v9376
    %v9676 = vunpack.c.h.b16 %v9376
    %v9677 = vunpack.c.l.b16 %v9377
    %v9678 = vunpack.c.h.b16 %v9377
    %v9679 = vunpack.c.l.b16 %v9378
    %v9680 = vunpack.c.h.b16 %v9378
    %v9681 = vunpack.c.l.b16 %v9379
    %v9682 = vunpack.c.h.b16 %v9379
    %v9683 = vunpack.c.l.b16 %v9380
    %v9684 = vunpack.c.h.b16 %v9380
    %v9685 = vunpack.c.l.b16 %v9381
    %v9686 = vunpack.c.h.b16 %v9381
    %v9687 = vunpack.c.l.b16 %v9382
    %v9688 = vunpack.c.h.b16 %v9382
    %v9689 = vunpack.c.l.b16 %v9383
    %v9690 = vunpack.c.h.b16 %v9383
    %v9691 = vunpack.c.l.b16 %v9384
    %v9692 = vunpack.c.h.b16 %v9384
    %v9693 = vunpack.c.l.b16 %v9385
    %v9694 = vunpack.c.h.b16 %v9385
    %v9695 = vunpack.c.l.b16 %v9386
    %v9696 = vunpack.c.h.b16 %v9386
    %v9697 = vunpack.c.l.b16 %v9387
    %v9698 = vunpack.c.h.b16 %v9387
    %v9699 = vunpack.c.l.b16 %v9388
    %v9700 = vunpack.c.h.b16 %v9388
    %v9701 = vunpack.c.l.b16 %v9389
    %v9702 = vunpack.c.h.b16 %v9389
    %v9703 = vunpack.c.l.b16 %v9390
    %v9704 = vunpack.c.h.b16 %v9390
    %v9705 = vunpack.c.l.b16 %v9391
    %v9706 = vunpack.c.h.b16 %v9391
    %v9707 = vunpack.c.l.b16 %v9392
    %v9708 = vunpack.c.h.b16 %v9392
    %v9709 = vunpack.c.l.b16 %v9393
    %v9710 = vunpack.c.h.b16 %v9393
    %v9711 = vunpack.c.l.b16 %v9394
    %v9712 = vunpack.c.h.b16 %v9394
    %v9713 = vunpack.c.l.b16 %v9395
    %v9714 = vunpack.c.h.b16 %v9395
    %v9715 = vunpack.c.l.b16 %v9396
    %v9716 = vunpack.c.h.b16 %v9396
    %v9717 = vunpack.c.l.b16 %v9397
    %v9718 = vunpack.c.h.b16 %v9397
    %v9719 = vunpack.c.l.b16 %v9398
    %v9720 = vunpack.c.h.b16 %v9398
    %v9721 = vunpack.c.l.b16 %v9399
    %v9722 = vunpack.c.h.b16 %v9399
    %v9723 = vunpack.c.l.b16 %v9400
    %v9724 = vunpack.c.h.b16 %v9400
    %v9725 = vunpack.c.l.b16 %v9401
    %v9726 = vunpack.c.h.b16 %v9401
    %v9727 = vunpack.c.l.b16 %v9402
    %v9728 = vunpack.c.h.b16 %v9402
    %v9729 = vunpack.c.l.b16 %v9403
    %v9730 = vunpack.c.h.b16 %v9403
    %v9731 = vunpack.c.l.b16 %v9404
    %v9732 = vunpack.c.h.b16 %v9404
    %v9733 = vunpack.c.l.b16 %v9405
    %v9734 = vunpack.c.h.b16 %v9405
    %v9735 = vunpack.c.l.b16 %v9406
    %v9736 = vunpack.c.h.b16 %v9406
    %v9737 = vunpack.c.l.b16 %v9407
    %v9738 = vunpack.c.h.b16 %v9407
    %v9739 = vunpack.c.l.b16 %v9408
    %v9740 = vunpack.c.h.b16 %v9408
    %v9741 = vunpack.c.l.b16 %v9409
    %v9742 = vunpack.c.h.b16 %v9409
    %v9743 = vunpack.c.l.b16 %v9410
    %v9744 = vunpack.c.h.b16 %v9410
    %v9745 = vunpack.c.l.b16 %v9411
    %v9746 = vunpack.c.h.b16 %v9411
    %v9747 = vunpack.c.l.b16 %v9412
    %v9748 = vunpack.c.h.b16 %v9412
    %v9749 = vunpack.c.l.b16 %v9413
    %v9750 = vunpack.c.h.b16 %v9413
    %v9751 = vunpack.c.l.b16 %v9414
    %v9752 = vunpack.c.h.b16 %v9414
    %v9753 = vunpack.c.l.b16 %v9415
    %v9754 = vunpack.c.h.b16 %v9415
    %v9755 = vunpack.c.l.b16 %v9416
    %v9756 = vunpack.c.h.b16 %v9416
    %v9757 = vunpack.c.l.b16 %v9417
    %v9758 = vunpack.c.h.b16 %v9417
    %v9759 = vunpack.c.l.b16 %v9418
    %v9760 = vunpack.c.h.b16 %v9418
    %v9761 = vunpack.c.l.b16 %v9419
    %v9762 = vunpack.c.h.b16 %v9419
    %v9763 = vunpack.c.l.b16 %v9420
    %v9764 = vunpack.c.h.b16 %v9420
    %v9765 = vunpack.c.l.b16 %v9421
    %v9766 = vunpack.c.h.b16 %v9421
    %v9767 = vunpack.c.l.b16 %v9422
    %v9768 = vunpack.c.h.b16 %v9422
    %v9769 = vunpack.c.l.b16 %v9423
    %v9770 = vunpack.c.h.b16 %v9423
    %v9771 = vunpack.c.l.b16 %v9424
    %v9772 = vunpack.c.h.b16 %v9424
    %v9773 = vunpack.c.l.b16 %v9425
    %v9774 = vunpack.c.h.b16 %v9425
    %v9775 = vunpack.c.l.b16 %v9426
    %v9776 = vunpack.c.h.b16 %v9426
    %v9777 = vunpack.c.l.b16 %v9427
    %v9778 = vunpack.c.h.b16 %v9427
    %v9779 = vunpack.c.l.b16 %v9428
    %v9780 = vunpack.c.h.b16 %v9428
    %v9781 = vunpack.c.l.b16 %v9429
    %v9782 = vunpack.c.h.b16 %v9429
    %v9783 = vunpack.c.l.b16 %v9430
    %v9784 = vunpack.c.h.b16 %v9430
    %v9785 = vunpack.c.l.b16 %v9431
    %v9786 = vunpack.c.h.b16 %v9431
    %v9787 = vunpack.c.l.b16 %v9432
    %v9788 = vunpack.c.h.b16 %v9432
    %v9789 = vunpack.c.l.b16 %v9433
    %v9790 = vunpack.c.h.b16 %v9433
    %v9791 = vunpack.c.l.b16 %v9434
    %v9792 = vunpack.c.h.b16 %v9434
    %v9793 = vunpack.c.l.b16 %v9435
    %v9794 = vunpack.c.h.b16 %v9435
    %v9795 = vunpack.c.l.b16 %v9436
    %v9796 = vunpack.c.h.b16 %v9436
    %v9797 = vunpack.c.l.b16 %v9437
    %v9798 = vunpack.c.h.b16 %v9437
    %v9799 = vunpack.c.l.b16 %v9438
    %v9800 = vunpack.c.h.b16 %v9438
    %v9801 = vunpack.c.l.b16 %v9439
    %v9802 = vunpack.c.h.b16 %v9439
    %v9803 = vunpack.c.l.b16 %v9440
    %v9804 = vunpack.c.h.b16 %v9440
    %v9805 = vunpack.c.l.b16 %v9441
    %v9806 = vunpack.c.h.b16 %v9441
    %v9807 = vunpack.c.l.b16 %v9442
    %v9808 = vunpack.c.h.b16 %v9442
    %v9809 = vunpack.c.l.b16 %v9443
    %v9810 = vunpack.c.h.b16 %v9443
    %v9811 = vunpack.c.l.b16 %v9444
    %v9812 = vunpack.c.h.b16 %v9444
    %v9813 = vunpack.c.l.b16 %v9445
    %v9814 = vunpack.c.h.b16 %v9445
    %v9815 = vunpack.c.l.b16 %v9446
    %v9816 = vunpack.c.h.b16 %v9446
    %v9817 = vunpack.c.l.b16 %v9447
    %v9818 = vunpack.c.h.b16 %v9447
    %v9819 = vunpack.c.l.b16 %v9448
    %v9820 = vunpack.c.h.b16 %v9448
    %v9821 = vunpack.c.l.b16 %v9449
    %v9822 = vunpack.c.h.b16 %v9449
    %v9823 = vunpack.c.l.b16 %v9450
    %v9824 = vunpack.c.h.b16 %v9450
    %v9825 = vunpack.c.l.b16 %v9451
    %v9826 = vunpack.c.h.b16 %v9451
    %v9827 = vunpack.c.l.b16 %v9452
    %v9828 = vunpack.c.h.b16 %v9452
    %v9829 = vunpack.c.l.b16 %v9453
    %v9830 = vunpack.c.h.b16 %v9453
    %v9831 = vunpack.c.l.b16 %v9454
    %v9832 = vunpack.c.h.b16 %v9454
    %v9833 = vunpack.c.l.b16 %v9455
    %v9834 = vunpack.c.h.b16 %v9455
    %v9835 = vunpack.c.l.b16 %v9456
    %v9836 = vunpack.c.h.b16 %v9456
    %v9837 = vunpack.c.l.b16 %v9457
    %v9838 = vunpack.c.h.b16 %v9457
    %v9839 = vunpack.c.l.b16 %v9458
    %v9840 = vunpack.c.h.b16 %v9458
    %v9841 = vunpack.c.l.b16 %v9459
    %v9842 = vunpack.c.h.b16 %v9459
    %v9843 = vunpack.c.l.b16 %v9460
    %v9844 = vunpack.c.h.b16 %v9460
    %v9845 = vpack.c.b16 %v9597, %v9589
    %v9846 = vpack.c.b16 %v9598, %v9590
    %v9847 = vpack.c.b16 %v9599, %v9591
    %v9848 = vpack.c.b16 %v9600, %v9592
    %v9849 = vpack.c.b16 %v9601, %v9593
    %v9850 = vpack.c.b16 %v9602, %v9594
    %v9851 = vpack.c.b16 %v9603, %v9595
    %v9852 = vpack.c.b16 %v9604, %v9596
    %v9853 = vpack.c.b16 %v9613, %v9605
    %v9854 = vpack.c.b16 %v9614, %v9606
    %v9855 = vpack.c.b16 %v9615, %v9607
    %v9856 = vpack.c.b16 %v9616, %v9608
    %v9857 = vpack.c.b16 %v9617, %v9609
    %v9858 = vpack.c.b16 %v9618, %v9610
    %v9859 = vpack.c.b16 %v9619, %v9611
    %v9860 = vpack.c.b16 %v9620, %v9612
    %v9861 = vpack.c.b16 %v9629, %v9621
    %v9862 = vpack.c.b16 %v9630, %v9622
    %v9863 = vpack.c.b16 %v9631, %v9623
    %v9864 = vpack.c.b16 %v9632, %v9624
    %v9865 = vpack.c.b16 %v9633, %v9625
    %v9866 = vpack.c.b16 %v9634, %v9626
    %v9867 = vpack.c.b16 %v9635, %v9627
    %v9868 = vpack.c.b16 %v9636, %v9628
    %v9869 = vpack.c.b16 %v9645, %v9637
    %v9870 = vpack.c.b16 %v9646, %v9638
    %v9871 = vpack.c.b16 %v9647, %v9639
    %v9872 = vpack.c.b16 %v9648, %v9640
    %v9873 = vpack.c.b16 %v9649, %v9641
    %v9874 = vpack.c.b16 %v9650, %v9642
    %v9875 = vpack.c.b16 %v9651, %v9643
    %v9876 = vpack.c.b16 %v9652, %v9644
    %v9877 = vpack.c.b16 %v9661, %v9653
    %v9878 = vpack.c.b16 %v9662, %v9654
    %v9879 = vpack.c.b16 %v9663, %v9655
    %v9880 = vpack.c.b16 %v9664, %v9656
    %v9881 = vpack.c.b16 %v9665, %v9657
    %v9882 = vpack.c.b16 %v9666, %v9658
    %v9883 = vpack.c.b16 %v9667, %v9659
    %v9884 = vpack.c.b16 %v9668, %v9660
    %v9885 = vpack.c.b16 %v9677, %v9669
    %v9886 = vpack.c.b16 %v9678, %v9670
    %v9887 = vpack.c.b16 %v9679, %v9671
    %v9888 = vpack.c.b16 %v9680, %v9672
    %v9889 = vpack.c.b16 %v9681, %v9673
    %v9890 = vpack.c.b16 %v9682, %v9674
    %v9891 = vpack.c.b16 %v9683, %v9675
    %v9892 = vpack.c.b16 %v9684, %v9676
    %v9893 = vpack.c.b16 %v9693, %v9685
    %v9894 = vpack.c.b16 %v9694, %v9686
    %v9895 = vpack.c.b16 %v9695, %v9687
    %v9896 = vpack.c.b16 %v9696, %v9688
    %v9897 = vpack.c.b16 %v9697, %v9689
    %v9898 = vpack.c.b16 %v9698, %v9690
    %v9899 = vpack.c.b16 %v9699, %v9691
    %v9900 = vpack.c.b16 %v9700, %v9692
    %v9901 = vpack.c.b16 %v9709, %v9701
    %v9902 = vpack.c.b16 %v9710, %v9702
    %v9903 = vpack.c.b16 %v9711, %v9703
    %v9904 = vpack.c.b16 %v9712, %v9704
    %v9905 = vpack.c.b16 %v9713, %v9705
    %v9906 = vpack.c.b16 %v9714, %v9706
    %v9907 = vpack.c.b16 %v9715, %v9707
    %v9908 = vpack.c.b16 %v9716, %v9708
    %v9909 = vpack.c.b16 %v9725, %v9717
    %v9910 = vpack.c.b16 %v9726, %v9718
    %v9911 = vpack.c.b16 %v9727, %v9719
    %v9912 = vpack.c.b16 %v9728, %v9720
    %v9913 = vpack.c.b16 %v9729, %v9721
    %v9914 = vpack.c.b16 %v9730, %v9722
    %v9915 = vpack.c.b16 %v9731, %v9723
    %v9916 = vpack.c.b16 %v9732, %v9724
    %v9917 = vpack.c.b16 %v9741, %v9733
    %v9918 = vpack.c.b16 %v9742, %v9734
    %v9919 = vpack.c.b16 %v9743, %v9735
    %v9920 = vpack.c.b16 %v9744, %v9736
    %v9921 = vpack.c.b16 %v9745, %v9737
    %v9922 = vpack.c.b16 %v9746, %v9738
    %v9923 = vpack.c.b16 %v9747, %v9739
    %v9924 = vpack.c.b16 %v9748, %v9740
    %v9925 = vpack.c.b16 %v9757, %v9749
    %v9926 = vpack.c.b16 %v9758, %v9750
    %v9927 = vpack.c.b16 %v9759, %v9751
    %v9928 = vpack.c.b16 %v9760, %v9752
    %v9929 = vpack.c.b16 %v9761, %v9753
    %v9930 = vpack.c.b16 %v9762, %v9754
    %v9931 = vpack.c.b16 %v9763, %v9755
    %v9932 = vpack.c.b16 %v9764, %v9756
    %v9933 = vpack.c.b16 %v9773, %v9765
    %v9934 = vpack.c.b16 %v9774, %v9766
    %v9935 = vpack.c.b16 %v9775, %v9767
    %v9936 = vpack.c.b16 %v9776, %v9768
    %v9937 = vpack.c.b16 %v9777, %v9769
    %v9938 = vpack.c.b16 %v9778, %v9770
    %v9939 = vpack.c.b16 %v9779, %v9771
    %v9940 = vpack.c.b16 %v9780, %v9772
    %v9941 = vpack.c.b16 %v9789, %v9781
    %v9942 = vpack.c.b16 %v9790, %v9782
    %v9943 = vpack.c.b16 %v9791, %v9783
    %v9944 = vpack.c.b16 %v9792, %v9784
    %v9945 = vpack.c.b16 %v9793, %v9785
    %v9946 = vpack.c.b16 %v9794, %v9786
    %v9947 = vpack.c.b16 %v9795, %v9787
    %v9948 = vpack.c.b16 %v9796, %v9788
    %v9949 = vpack.c.b16 %v9805, %v9797
    %v9950 = vpack.c.b16 %v9806, %v9798
    %v9951 = vpack.c.b16 %v9807, %v9799
    %v9952 = vpack.c.b16 %v9808, %v9800
    %v9953 = vpack.c.b16 %v9809, %v9801
    %v9954 = vpack.c.b16 %v9810, %v9802
    %v9955 = vpack.c.b16 %v9811, %v9803
    %v9956 = vpack.c.b16 %v9812, %v9804
    %v9957 = vpack.c.b16 %v9821, %v9813
    %v9958 = vpack.c.b16 %v9822, %v9814
    %v9959 = vpack.c.b16 %v9823, %v9815
    %v9960 = vpack.c.b16 %v9824, %v9816
    %v9961 = vpack.c.b16 %v9825, %v9817
    %v9962 = vpack.c.b16 %v9826, %v9818
    %v9963 = vpack.c.b16 %v9827, %v9819
    %v9964 = vpack.c.b16 %v9828, %v9820
    %v9965 = vpack.c.b16 %v9837, %v9829
    %v9966 = vpack.c.b16 %v9838, %v9830
    %v9967 = vpack.c.b16 %v9839, %v9831
    %v9968 = vpack.c.b16 %v9840, %v9832
    %v9969 = vpack.c.b16 %v9841, %v9833
    %v9970 = vpack.c.b16 %v9842, %v9834
    %v9971 = vpack.c.b16 %v9843, %v9835
    %v9972 = vpack.c.b16 %v9844, %v9836
    %10101 = vmatprep.subr.bf16.mxu0 %v9846
    %10102 = vmatpush1.bf16.msra.mxu0 %v9845
    %10103 = vmatprep.subr.bf16.mxu0 %v9854
    %10104 = vmatpush1.bf16.msra.mxu0 %v9853
    %10105 = vmatprep.subr.bf16.mxu0 %v9862
    %10106 = vmatpush1.bf16.msra.mxu0 %v9861
    %10107 = vmatprep.subr.bf16.mxu0 %v9870
    %10108 = vmatpush1.bf16.msra.mxu0 %v9869
    %10109 = vmatprep.subr.bf16.mxu0 %v9878
    %10110 = vmatpush1.bf16.msra.mxu0 %v9877
    %10111 = vmatprep.subr.bf16.mxu0 %v9886
    %10112 = vmatpush1.bf16.msra.mxu0 %v9885
    %10113 = vmatprep.subr.bf16.mxu0 %v9894
    %10114 = vmatpush1.bf16.msra.mxu0 %v9893
    %10115 = vmatprep.subr.bf16.mxu0 %v9902
    %10116 = vmatpush1.bf16.msra.mxu0 %v9901
    %10117 = vmatprep.subr.bf16.mxu0 %v9910
    %10118 = vmatpush1.bf16.msra.mxu0 %v9909
    %10119 = vmatprep.subr.bf16.mxu0 %v9918
    %10120 = vmatpush1.bf16.msra.mxu0 %v9917
    %10121 = vmatprep.subr.bf16.mxu0 %v9926
    %10122 = vmatpush1.bf16.msra.mxu0 %v9925
    %10123 = vmatprep.subr.bf16.mxu0 %v9934
    %10124 = vmatpush1.bf16.msra.mxu0 %v9933
    %10125 = vmatprep.subr.bf16.mxu0 %v9942
    %10126 = vmatpush1.bf16.msra.mxu0 %v9941
    %10127 = vmatprep.subr.bf16.mxu0 %v9950
    %10128 = vmatpush1.bf16.msra.mxu0 %v9949
    %10129 = vmatprep.subr.bf16.mxu0 %v9958
    %10130 = vmatpush1.bf16.msra.mxu0 %v9957
    %10131 = vmatprep.subr.bf16.mxu0 %v9966
    %10132 = vmatpush1.bf16.msra.mxu0 %v9965
    %10133 = vmatprep.mubr.bf16.mxu0 %v9332
    %10134 = vmatmul.mubr.bf16.gmra.mrb[0].mxu0 %v9331
    %v10135 = vpop.f32.mrb[0].mxu0
    %v10136 = vadd.f32 0.0, %v10135
    %v10137 = vpop.f32.mrb[0].mxu0
    %v10138 = vadd.f32 0.0, %v10137
    %v10139 = vpop.f32.mrb[0].mxu0
    %v10140 = vpop.f32.mrb[0].mxu0
    %10141 = vdwg.mxu0
    %10142 = vmatprep.subr.bf16.mxu0 %v9848
    %10143 = vmatpush1.bf16.msra.mxu0 %v9847
    %10144 = vmatprep.subr.bf16.mxu0 %v9856
    %10145 = vmatpush1.bf16.msra.mxu0 %v9855
    %10146 = vmatprep.subr.bf16.mxu0 %v9864
    %10147 = vmatpush1.bf16.msra.mxu0 %v9863
    %10148 = vmatprep.subr.bf16.mxu0 %v9872
    %10149 = vmatpush1.bf16.msra.mxu0 %v9871
    %10150 = vmatprep.subr.bf16.mxu0 %v9880
    %10151 = vmatpush1.bf16.msra.mxu0 %v9879
    %10152 = vmatprep.subr.bf16.mxu0 %v9888
    %10153 = vmatpush1.bf16.msra.mxu0 %v9887
    %10154 = vmatprep.subr.bf16.mxu0 %v9896
    %10155 = vmatpush1.bf16.msra.mxu0 %v9895
    %10156 = vmatprep.subr.bf16.mxu0 %v9904
    %10157 = vmatpush1.bf16.msra.mxu0 %v9903
    %10158 = vmatprep.subr.bf16.mxu0 %v9912
    %10159 = vmatpush1.bf16.msra.mxu0 %v9911
    %10160 = vmatprep.subr.bf16.mxu0 %v9920
    %10161 = vmatpush1.bf16.msra.mxu0 %v9919
    %10162 = vmatprep.subr.bf16.mxu0 %v9928
    %10163 = vmatpush1.bf16.msra.mxu0 %v9927
    %10164 = vmatprep.subr.bf16.mxu0 %v9936
    %10165 = vmatpush1.bf16.msra.mxu0 %v9935
    %10166 = vmatprep.subr.bf16.mxu0 %v9944
    %10167 = vmatpush1.bf16.msra.mxu0 %v9943
    %10168 = vmatprep.subr.bf16.mxu0 %v9952
    %10169 = vmatpush1.bf16.msra.mxu0 %v9951
    %10170 = vmatprep.subr.bf16.mxu0 %v9960
    %10171 = vmatpush1.bf16.msra.mxu0 %v9959
    %10172 = vmatprep.subr.bf16.mxu0 %v9968
    %10173 = vmatpush1.bf16.msra.mxu0 %v9967
    %10174 = vmatprep.mubr.bf16.mxu0 %v9332
    %10175 = vmatmul.mubr.bf16.gmra.mrb[0].mxu0 %v9331
    %v10176 = vpop.f32.mrb[0].mxu0
    %v10177 = vadd.f32 0.0, %v10176
    %v10178 = vpop.f32.mrb[0].mxu0
    %v10179 = vadd.f32 0.0, %v10178
    %v10180 = vpop.f32.mrb[0].mxu0
    %v10181 = vpop.f32.mrb[0].mxu0
    %10182 = vdwg.mxu0
    %10183 = vmatprep.subr.bf16.mxu0 %v9850
    %10184 = vmatpush1.bf16.msra.mxu0 %v9849
    %10185 = vmatprep.subr.bf16.mxu0 %v9858
    %10186 = vmatpush1.bf16.msra.mxu0 %v9857
    %10187 = vmatprep.subr.bf16.mxu0 %v9866
    %10188 = vmatpush1.bf16.msra.mxu0 %v9865
    %10189 = vmatprep.subr.bf16.mxu0 %v9874
    %10190 = vmatpush1.bf16.msra.mxu0 %v9873
    %10191 = vmatprep.subr.bf16.mxu0 %v9882
    %10192 = vmatpush1.bf16.msra.mxu0 %v9881
    %10193 = vmatprep.subr.bf16.mxu0 %v9890
    %10194 = vmatpush1.bf16.msra.mxu0 %v9889
    %10195 = vmatprep.subr.bf16.mxu0 %v9898
    %10196 = vmatpush1.bf16.msra.mxu0 %v9897
    %10197 = vmatprep.subr.bf16.mxu0 %v9906
    %10198 = vmatpush1.bf16.msra.mxu0 %v9905
    %10199 = vmatprep.subr.bf16.mxu0 %v9914
    %10200 = vmatpush1.bf16.msra.mxu0 %v9913
    %10201 = vmatprep.subr.bf16.mxu0 %v9922
    %10202 = vmatpush1.bf16.msra.mxu0 %v9921
    %10203 = vmatprep.subr.bf16.mxu0 %v9930
    %10204 = vmatpush1.bf16.msra.mxu0 %v9929
    %10205 = vmatprep.subr.bf16.mxu0 %v9938
    %10206 = vmatpush1.bf16.msra.mxu0 %v9937
    %10207 = vmatprep.subr.bf16.mxu0 %v9946
    %10208 = vmatpush1.bf16.msra.mxu0 %v9945
    %10209 = vmatprep.subr.bf16.mxu0 %v9954
    %10210 = vmatpush1.bf16.msra.mxu0 %v9953
    %10211 = vmatprep.subr.bf16.mxu0 %v9962
    %10212 = vmatpush1.bf16.msra.mxu0 %v9961
    %10213 = vmatprep.subr.bf16.mxu0 %v9970
    %10214 = vmatpush1.bf16.msra.mxu0 %v9969
    %10215 = vmatprep.mubr.bf16.mxu0 %v9332
    %10216 = vmatmul.mubr.bf16.gmra.mrb[0].mxu0 %v9331
    %v10217 = vpop.f32.mrb[0].mxu0
    %v10218 = vadd.f32 0.0, %v10217
    %v10219 = vpop.f32.mrb[0].mxu0
    %v10220 = vadd.f32 0.0, %v10219
    %v10221 = vpop.f32.mrb[0].mxu0
    %v10222 = vpop.f32.mrb[0].mxu0
    %10223 = vdwg.mxu0
    %10224 = vmatprep.subr.bf16.mxu0 %v9852
    %10225 = vmatpush1.bf16.msra.mxu0 %v9851
    %10226 = vmatprep.subr.bf16.mxu0 %v9860
    %10227 = vmatpush1.bf16.msra.mxu0 %v9859
    %10228 = vmatprep.subr.bf16.mxu0 %v9868
    %10229 = vmatpush1.bf16.msra.mxu0 %v9867
    %10230 = vmatprep.subr.bf16.mxu0 %v9876
    %10231 = vmatpush1.bf16.msra.mxu0 %v9875
    %10232 = vmatprep.subr.bf16.mxu0 %v9884
    %10233 = vmatpush1.bf16.msra.mxu0 %v9883
    %10234 = vmatprep.subr.bf16.mxu0 %v9892
    %10235 = vmatpush1.bf16.msra.mxu0 %v9891
    %10236 = vmatprep.subr.bf16.mxu0 %v9900
    %10237 = vmatpush1.bf16.msra.mxu0 %v9899
    %10238 = vmatprep.subr.bf16.mxu0 %v9908
    %10239 = vmatpush1.bf16.msra.mxu0 %v9907
    %10240 = vmatprep.subr.bf16.mxu0 %v9916
    %10241 = vmatpush1.bf16.msra.mxu0 %v9915
    %10242 = vmatprep.subr.bf16.mxu0 %v9924
    %10243 = vmatpush1.bf16.msra.mxu0 %v9923
    %10244 = vmatprep.subr.bf16.mxu0 %v9932
    %10245 = vmatpush1.bf16.msra.mxu0 %v9931
    %10246 = vmatprep.subr.bf16.mxu0 %v9940
    %10247 = vmatpush1.bf16.msra.mxu0 %v9939
    %10248 = vmatprep.subr.bf16.mxu0 %v9948
    %10249 = vmatpush1.bf16.msra.mxu0 %v9947
    %10250 = vmatprep.subr.bf16.mxu0 %v9956
    %10251 = vmatpush1.bf16.msra.mxu0 %v9955
    %10252 = vmatprep.subr.bf16.mxu0 %v9964
    %10253 = vmatpush1.bf16.msra.mxu0 %v9963
    %10254 = vmatprep.subr.bf16.mxu0 %v9972
    %10255 = vmatpush1.bf16.msra.mxu0 %v9971
    %10256 = vmatprep.mubr.bf16.mxu0 %v9332
    %10257 = vmatmul.mubr.bf16.gmra.mrb[0].mxu0 %v9331
    %v10258 = vpop.f32.mrb[0].mxu0
    %v10259 = vadd.f32 0.0, %v10258
    %v10260 = vpop.f32.mrb[0].mxu0
    %v10261 = vadd.f32 0.0, %v10260
    %v10262 = vpop.f32.mrb[0].mxu0
    %v10263 = vpop.f32.mrb[0].mxu0
    %10264 = vdwg.mxu0
    %v10265 = vadd.f32 %v9103, %v10136
    %v10266 = vadd.f32 %v9105, %v10138
    %v10267 = vadd.f32 %v9174, %v10177
    %v10268 = vadd.f32 %v9176, %v10179
    %v10269 = vadd.f32 %v9245, %v10218
    %v10270 = vadd.f32 %v9247, %v10220
    %v10271 = vadd.f32 %v9316, %v10259
    %v10272 = vadd.f32 %v9318, %v10261
    %v10273 = vxor.u32 %v10265, 2147483648
    %v10274 = vxor.u32 %v10266, 2147483648
    %v10275 = vmul.f32 %v10273, 1.442695
    %v10276 = vpow.pop %v10275
    %v10277 = vmul.f32 %v10274, 1.442695
    %v10278 = vpow.pop %v10277
    %v10279 = vadd.f32 %v10276, 1.0
    %v10280 = vadd.f32 %v10278, 1.0
    %v10281 = vrcp.pop %v10279
    %v10282 = vmul.f32 1.0, %v10281
    %v10283 = vrcp.pop %v10280
    %v10284 = vmul.f32 1.0, %v10283
    %v10285 = vxor.u32 %v10267, 2147483648
    %v10286 = vxor.u32 %v10268, 2147483648
    %v10287 = vmul.f32 %v10285, 1.442695
    %v10288 = vpow.pop %v10287
    %v10289 = vmul.f32 %v10286, 1.442695
    %v10290 = vpow.pop %v10289
    %v10291 = vadd.f32 %v10288, 1.0
    %v10292 = vadd.f32 %v10290, 1.0
    %v10293 = vrcp.pop %v10291
    %v10294 = vmul.f32 1.0, %v10293
    %v10295 = vrcp.pop %v10292
    %v10296 = vmul.f32 1.0, %v10295
    %v10297 = vtanh.pop %v10269
    %v10298 = vtanh.pop %v10270
    %v10299 = vxor.u32 %v10271, 2147483648
    %v10300 = vxor.u32 %v10272, 2147483648
    %v10301 = vmul.f32 %v10299, 1.442695
    %v10302 = vpow.pop %v10301
    %v10303 = vmul.f32 %v10300, 1.442695
    %v10304 = vpow.pop %v10303
    %v10305 = vadd.f32 %v10302, 1.0
    %v10306 = vadd.f32 %v10304, 1.0
    %v10307 = vrcp.pop %v10305
    %v10308 = vmul.f32 1.0, %v10307
    %v10309 = vrcp.pop %v10306
    %v10310 = vmul.f32 1.0, %v10309
    %v10311 = vld [vmem:[#allocation3] sm:$0xf]
    %v10314 = vunpack.c.l.s4 1983009808
    %v10315 = vunpack.c.0.s8 %v10314
    %v10316 = vlaneseq
    %v10317 = vshrl.u32 %v10316, 7
    %v10318 = vsub.s32 %v10315, %v10317
    %v10319 = vrot.slane %v10311, %v10318
    %v10320 = vcombine.high %v10319, %v10319
    %v10323 = vmul.f32 %v10294, %v10319
    %v10324 = vmul.f32 %v10296, %v10320
    %v10325 = vmul.f32 %v10282, %v10297
    %v10326 = vmul.f32 %v10284, %v10298
    %v10327 = vadd.f32 %v10323, %v10325
    %v10328 = vadd.f32 %v10324, %v10326
    %v10329 = vtanh.pop %v10327
    %v10330 = vtanh.pop %v10328
    %v10331 = vmul.f32 %v10308, %v10329
    %v10332 = vmul.f32 %v10310, %v10330
    %v10335 = vcombine.low %v10327, %v10328
    %v10337 = vunpack.c.l.s4 1983009808
    %v10338 = vunpack.c.0.s8 %v10337
    %v10339 = vlaneseq
    %v10340 = vshrl.u32 %v10339, 7
    %v10341 = vsub.s32 %v10338, %v10340
    %v10342 = vrot.slane %v10335, %v10341
    %10344 = vst [vmem:[#allocation3] sm:$0xf] %v10342
    %v10347 = vcombine.low %v10331, %v10332
    %v10349 = vunpack.c.l.s4 1983009808
    %v10350 = vunpack.c.0.s8 %v10349
    %v10351 = vlaneseq
    %v10352 = vshrl.u32 %v10351, 7
    %v10353 = vsub.s32 %v10350, %v10352
    %v10354 = vrot.slane %v10347, %v10353
    %10356 = vst [vmem:[#allocation2] sm:$0xf] %v10354
    %v10357 = vld [vmem:[#allocation6] sm:$0xff]
    %v10358 = vld [vmem:[#allocation6 + $0x8] sm:$0xff]
    %v10359 = vld [vmem:[#allocation6 + $0x10] sm:$0xff]
    %v10360 = vld [vmem:[#allocation6 + $0x18] sm:$0xff]
    %v10361 = vld [vmem:[#allocation6 + $0x20] sm:$0xff]
    %v10362 = vld [vmem:[#allocation6 + $0x28] sm:$0xff]
    %v10363 = vld [vmem:[#allocation6 + $0x30] sm:$0xff]
    %v10364 = vld [vmem:[#allocation6 + $0x38] sm:$0xff]
    %v10365 = vld [vmem:[#allocation6 + $0x40] sm:$0xff]
    %v10366 = vld [vmem:[#allocation6 + $0x48] sm:$0xff]
    %v10367 = vld [vmem:[#allocation6 + $0x50] sm:$0xff]
    %v10368 = vld [vmem:[#allocation6 + $0x58] sm:$0xff]
    %v10369 = vld [vmem:[#allocation6 + $0x60] sm:$0xff]
    %v10370 = vld [vmem:[#allocation6 + $0x68] sm:$0xff]
    %v10371 = vld [vmem:[#allocation6 + $0x70] sm:$0xff]
    %v10372 = vld [vmem:[#allocation6 + $0x78] sm:$0xff]
    %v10373 = vld [vmem:[#allocation6 + $0x80] sm:$0xff]
    %v10374 = vld [vmem:[#allocation6 + $0x88] sm:$0xff]
    %v10375 = vld [vmem:[#allocation6 + $0x90] sm:$0xff]
    %v10376 = vld [vmem:[#allocation6 + $0x98] sm:$0xff]
    %v10377 = vld [vmem:[#allocation6 + $0xa0] sm:$0xff]
    %v10378 = vld [vmem:[#allocation6 + $0xa8] sm:$0xff]
    %v10379 = vld [vmem:[#allocation6 + $0xb0] sm:$0xff]
    %v10380 = vld [vmem:[#allocation6 + $0xb8] sm:$0xff]
    %v10381 = vld [vmem:[#allocation6 + $0xc0] sm:$0xff]
    %v10382 = vld [vmem:[#allocation6 + $0xc8] sm:$0xff]
    %v10383 = vld [vmem:[#allocation6 + $0xd0] sm:$0xff]
    %v10384 = vld [vmem:[#allocation6 + $0xd8] sm:$0xff]
    %v10385 = vld [vmem:[#allocation6 + $0xe0] sm:$0xff]
    %v10386 = vld [vmem:[#allocation6 + $0xe8] sm:$0xff]
    %v10387 = vld [vmem:[#allocation6 + $0xf0] sm:$0xff]
    %v10388 = vld [vmem:[#allocation6 + $0xf8] sm:$0xff]
    %v10389 = vld [vmem:[%s5] sm:$0x1]
    %v10391 = vlaneseq
    %v10392 = vshrl.u32 %v10391, 7
    %v10393 = vsub.s32 0, %v10392
    %v10394 = vrot.slane %v10389, %v10393
    %10396 = vmatprep.subr.mxu0 0.0
    %10397 = vmatpush1.msra.mxu0 %v10357
    %10398 = vmatprep.subr.mxu0 0.0
    %10399 = vmatpush1.msra.mxu0 %v10358
    %10400 = vmatprep.subr.mxu0 0.0
    %10401 = vmatpush1.msra.mxu0 %v10359
    %10402 = vmatprep.subr.mxu0 0.0
    %10403 = vmatpush1.msra.mxu0 %v10360
    %10404 = vmatprep.subr.mxu0 0.0
    %10405 = vmatpush1.msra.mxu0 %v10361
    %10406 = vmatprep.subr.mxu0 0.0
    %10407 = vmatpush1.msra.mxu0 %v10362
    %10408 = vmatprep.subr.mxu0 0.0
    %10409 = vmatpush1.msra.mxu0 %v10363
    %10410 = vmatprep.subr.mxu0 0.0
    %10411 = vmatpush1.msra.mxu0 %v10364
    %10412 = vmatprep.subr.mxu0 0.0
    %10413 = vmatpush1.msra.mxu0 %v10365
    %10414 = vmatprep.subr.mxu0 0.0
    %10415 = vmatpush1.msra.mxu0 %v10366
    %10416 = vmatprep.subr.mxu0 0.0
    %10417 = vmatpush1.msra.mxu0 %v10367
    %10418 = vmatprep.subr.mxu0 0.0
    %10419 = vmatpush1.msra.mxu0 %v10368
    %10420 = vmatprep.subr.mxu0 0.0
    %10421 = vmatpush1.msra.mxu0 %v10369
    %10422 = vmatprep.subr.mxu0 0.0
    %10423 = vmatpush1.msra.mxu0 %v10370
    %10424 = vmatprep.subr.mxu0 0.0
    %10425 = vmatpush1.msra.mxu0 %v10371
    %10426 = vmatprep.subr.mxu0 0.0
    %10427 = vmatpush1.msra.mxu0 %v10372
    %10428 = vmatprep.subr.mxu0 0.0
    %10429 = vmatpush1.msra.mxu0 %v10373
    %10430 = vmatprep.subr.mxu0 0.0
    %10431 = vmatpush1.msra.mxu0 %v10374
    %10432 = vmatprep.subr.mxu0 0.0
    %10433 = vmatpush1.msra.mxu0 %v10375
    %10434 = vmatprep.subr.mxu0 0.0
    %10435 = vmatpush1.msra.mxu0 %v10376
    %10436 = vmatprep.subr.mxu0 0.0
    %10437 = vmatpush1.msra.mxu0 %v10377
    %10438 = vmatprep.subr.mxu0 0.0
    %10439 = vmatpush1.msra.mxu0 %v10378
    %10440 = vmatprep.subr.mxu0 0.0
    %10441 = vmatpush1.msra.mxu0 %v10379
    %10442 = vmatprep.subr.mxu0 0.0
    %10443 = vmatpush1.msra.mxu0 %v10380
    %10444 = vmatprep.subr.mxu0 0.0
    %10445 = vmatpush1.msra.mxu0 %v10381
    %10446 = vmatprep.subr.mxu0 0.0
    %10447 = vmatpush1.msra.mxu0 %v10382
    %10448 = vmatprep.subr.mxu0 0.0
    %10449 = vmatpush1.msra.mxu0 %v10383
    %10450 = vmatprep.subr.mxu0 0.0
    %10451 = vmatpush1.msra.mxu0 %v10384
    %10452 = vmatprep.subr.mxu0 0.0
    %10453 = vmatpush1.msra.mxu0 %v10385
    %10454 = vmatprep.subr.mxu0 0.0
    %10455 = vmatpush1.msra.mxu0 %v10386
    %10456 = vmatprep.subr.mxu0 0.0
    %10457 = vmatpush1.msra.mxu0 %v10387
    %10458 = vmatprep.subr.mxu0 0.0
    %10459 = vmatpush1.msra.mxu0 %v10388
    %10460 = vmatprep.mubr.f32.mxu0 %v10332
    %10461 = vmatmul.mubr.f32.gmra.mrb[0].mxu0 %v10331
    %v10462 = vpop.f32.mrb[0].mxu0
    %v10463 = vadd.f32 %v10394, %v10462
    %v10464 = vpop.f32.mrb[0].mxu0
    %10465 = vdwg.mxu0
    %s10466 = scalar_lea.vmem %s6, 12
    %10467 = vst [vmem:[%s10466] sm:$0x3] %v10463
    %s10468 = scalar_lea.vmem %s0, 14
    %v10469 = vld [vmem:[%s10468] sm:$0x3]
    %v10470 = vld [vmem:[#allocation2] sm:$0xf]
    %v10471 = vld [vmem:[%s1] sm:$0xff]
    %v10472 = vld [vmem:[%s1 + $0x8] sm:$0xff]
    %v10473 = vld [vmem:[%s1 + $0x10] sm:$0xff]
    %v10474 = vld [vmem:[%s1 + $0x18] sm:$0xff]
    %v10475 = vld [vmem:[%s1 + $0x20] sm:$0xff]
    %v10476 = vld [vmem:[%s1 + $0x28] sm:$0xff]
    %v10477 = vld [vmem:[%s1 + $0x30] sm:$0xff]
    %v10478 = vld [vmem:[%s1 + $0x38] sm:$0xff]
    %v10479 = vld [vmem:[%s3] sm:$0xff]
    %v10481 = vlaneseq
    %v10482 = vshrl.u32 %v10481, 7
    %v10483 = vsub.s32 0, %v10482
    %v10484 = vrot.slane %v10479, %v10483
    %v10485 = vlaneseq
    %v10486 = vshrl.u32 %v10485, 7
    %v10487 = vsub.s32 1, %v10486
    %v10488 = vrot.slane %v10479, %v10487
    %v10489 = vlaneseq
    %v10490 = vshrl.u32 %v10489, 7
    %v10491 = vsub.s32 2, %v10490
    %v10492 = vrot.slane %v10479, %v10491
    %v10493 = vlaneseq
    %v10494 = vshrl.u32 %v10493, 7
    %v10495 = vsub.s32 3, %v10494
    %v10496 = vrot.slane %v10479, %v10495
    %v10497 = vlaneseq
    %v10498 = vshrl.u32 %v10497, 7
    %v10499 = vsub.s32 4, %v10498
    %v10500 = vrot.slane %v10479, %v10499
    %v10501 = vlaneseq
    %v10502 = vshrl.u32 %v10501, 7
    %v10503 = vsub.s32 5, %v10502
    %v10504 = vrot.slane %v10479, %v10503
    %v10505 = vlaneseq
    %v10506 = vshrl.u32 %v10505, 7
    %v10507 = vsub.s32 6, %v10506
    %v10508 = vrot.slane %v10479, %v10507
    %v10509 = vlaneseq
    %v10510 = vshrl.u32 %v10509, 7
    %v10511 = vsub.s32 7, %v10510
    %v10512 = vrot.slane %v10479, %v10511
    %v10522 = vsel %vm105, %v10469, 0
    %10524 = vmatprep.subr.mxu0 %v10472
    %10525 = vmatpush1.msra.mxu0 %v10471
    %10526 = vmatprep.subr.mxu0 0.0
    %10527 = vmatpush1.msra.mxu0 0.0
    %10528 = vmatprep.subr.mxu0 0.0
    %10529 = vmatpush1.msra.mxu0 0.0
    %10530 = vmatprep.subr.mxu0 0.0
    %10531 = vmatpush1.msra.mxu0 0.0
    %10532 = vmatprep.subr.mxu0 0.0
    %10533 = vmatpush1.msra.mxu0 0.0
    %10534 = vmatprep.subr.mxu0 0.0
    %10535 = vmatpush1.msra.mxu0 0.0
    %10536 = vmatprep.subr.mxu0 0.0
    %10537 = vmatpush1.msra.mxu0 0.0
    %10538 = vmatprep.subr.mxu0 0.0
    %10539 = vmatpush1.msra.mxu0 0.0
    %10540 = vmatprep.subr.mxu0 0.0
    %10541 = vmatpush1.msra.mxu0 0.0
    %10542 = vmatprep.subr.mxu0 0.0
    %10543 = vmatpush1.msra.mxu0 0.0
    %10544 = vmatprep.subr.mxu0 0.0
    %10545 = vmatpush1.msra.mxu0 0.0
    %10546 = vmatprep.subr.mxu0 0.0
    %10547 = vmatpush1.msra.mxu0 0.0
    %10548 = vmatprep.subr.mxu0 0.0
    %10549 = vmatpush1.msra.mxu0 0.0
    %10550 = vmatprep.subr.mxu0 0.0
    %10551 = vmatpush1.msra.mxu0 0.0
    %10552 = vmatprep.subr.mxu0 0.0
    %10553 = vmatpush1.msra.mxu0 0.0
    %10554 = vmatprep.subr.mxu0 0.0
    %10555 = vmatpush1.msra.mxu0 0.0
    %10556 = vmatprep.subr.mxu0 0.0
    %10557 = vmatpush1.msra.mxu0 0.0
    %10558 = vmatprep.subr.mxu0 0.0
    %10559 = vmatpush1.msra.mxu0 0.0
    %10560 = vmatprep.subr.mxu0 0.0
    %10561 = vmatpush1.msra.mxu0 0.0
    %10562 = vmatprep.subr.mxu0 0.0
    %10563 = vmatpush1.msra.mxu0 0.0
    %10564 = vmatprep.subr.mxu0 0.0
    %10565 = vmatpush1.msra.mxu0 0.0
    %10566 = vmatprep.subr.mxu0 0.0
    %10567 = vmatpush1.msra.mxu0 0.0
    %10568 = vmatprep.subr.mxu0 0.0
    %10569 = vmatpush1.msra.mxu0 0.0
    %10570 = vmatprep.subr.mxu0 0.0
    %10571 = vmatpush1.msra.mxu0 0.0
    %10572 = vmatprep.subr.mxu0 0.0
    %10573 = vmatpush1.msra.mxu0 0.0
    %10574 = vmatprep.subr.mxu0 0.0
    %10575 = vmatpush1.msra.mxu0 0.0
    %10576 = vmatprep.subr.mxu0 0.0
    %10577 = vmatpush1.msra.mxu0 0.0
    %10578 = vmatprep.subr.mxu0 0.0
    %10579 = vmatpush1.msra.mxu0 0.0
    %10580 = vmatprep.subr.mxu0 0.0
    %10581 = vmatpush1.msra.mxu0 0.0
    %10582 = vmatprep.subr.mxu0 0.0
    %10583 = vmatpush1.msra.mxu0 0.0
    %10584 = vmatprep.subr.mxu0 0.0
    %10585 = vmatpush1.msra.mxu0 0.0
    %10586 = vmatprep.subr.mxu0 0.0
    %10587 = vmatpush1.msra.mxu0 0.0
    %10588 = vmatprep.mubr.f32.mxu0 0.0
    %10589 = vmatmul.mubr.f32.gmra.mrb[0].mxu0 %v10522
    %v10590 = vpop.f32.mrb[0].mxu0
    %v10591 = vadd.f32 %v10484, %v10590
    %v10592 = vpop.f32.mrb[0].mxu0
    %v10593 = vadd.f32 %v10488, %v10592
    %10594 = vdwg.mxu0
    %10595 = vmatprep.subr.mxu0 %v10474
    %10596 = vmatpush1.msra.mxu0 %v10473
    %10597 = vmatprep.subr.mxu0 0.0
    %10598 = vmatpush1.msra.mxu0 0.0
    %10599 = vmatprep.subr.mxu0 0.0
    %10600 = vmatpush1.msra.mxu0 0.0
    %10601 = vmatprep.subr.mxu0 0.0
    %10602 = vmatpush1.msra.mxu0 0.0
    %10603 = vmatprep.subr.mxu0 0.0
    %10604 = vmatpush1.msra.mxu0 0.0
    %10605 = vmatprep.subr.mxu0 0.0
    %10606 = vmatpush1.msra.mxu0 0.0
    %10607 = vmatprep.subr.mxu0 0.0
    %10608 = vmatpush1.msra.mxu0 0.0
    %10609 = vmatprep.subr.mxu0 0.0
    %10610 = vmatpush1.msra.mxu0 0.0
    %10611 = vmatprep.subr.mxu0 0.0
    %10612 = vmatpush1.msra.mxu0 0.0
    %10613 = vmatprep.subr.mxu0 0.0
    %10614 = vmatpush1.msra.mxu0 0.0
    %10615 = vmatprep.subr.mxu0 0.0
    %10616 = vmatpush1.msra.mxu0 0.0
    %10617 = vmatprep.subr.mxu0 0.0
    %10618 = vmatpush1.msra.mxu0 0.0
    %10619 = vmatprep.subr.mxu0 0.0
    %10620 = vmatpush1.msra.mxu0 0.0
    %10621 = vmatprep.subr.mxu0 0.0
    %10622 = vmatpush1.msra.mxu0 0.0
    %10623 = vmatprep.subr.mxu0 0.0
    %10624 = vmatpush1.msra.mxu0 0.0
    %10625 = vmatprep.subr.mxu0 0.0
    %10626 = vmatpush1.msra.mxu0 0.0
    %10627 = vmatprep.subr.mxu0 0.0
    %10628 = vmatpush1.msra.mxu0 0.0
    %10629 = vmatprep.subr.mxu0 0.0
    %10630 = vmatpush1.msra.mxu0 0.0
    %10631 = vmatprep.subr.mxu0 0.0
    %10632 = vmatpush1.msra.mxu0 0.0
    %10633 = vmatprep.subr.mxu0 0.0
    %10634 = vmatpush1.msra.mxu0 0.0
    %10635 = vmatprep.subr.mxu0 0.0
    %10636 = vmatpush1.msra.mxu0 0.0
    %10637 = vmatprep.subr.mxu0 0.0
    %10638 = vmatpush1.msra.mxu0 0.0
    %10639 = vmatprep.subr.mxu0 0.0
    %10640 = vmatpush1.msra.mxu0 0.0
    %10641 = vmatprep.subr.mxu0 0.0
    %10642 = vmatpush1.msra.mxu0 0.0
    %10643 = vmatprep.subr.mxu0 0.0
    %10644 = vmatpush1.msra.mxu0 0.0
    %10645 = vmatprep.subr.mxu0 0.0
    %10646 = vmatpush1.msra.mxu0 0.0
    %10647 = vmatprep.subr.mxu0 0.0
    %10648 = vmatpush1.msra.mxu0 0.0
    %10649 = vmatprep.subr.mxu0 0.0
    %10650 = vmatpush1.msra.mxu0 0.0
    %10651 = vmatprep.subr.mxu0 0.0
    %10652 = vmatpush1.msra.mxu0 0.0
    %10653 = vmatprep.subr.mxu0 0.0
    %10654 = vmatpush1.msra.mxu0 0.0
    %10655 = vmatprep.subr.mxu0 0.0
    %10656 = vmatpush1.msra.mxu0 0.0
    %10657 = vmatprep.subr.mxu0 0.0
    %10658 = vmatpush1.msra.mxu0 0.0
    %10659 = vmatprep.mubr.f32.mxu0 0.0
    %10660 = vmatmul.mubr.f32.gmra.mrb[0].mxu0 %v10522
    %v10661 = vpop.f32.mrb[0].mxu0
    %v10662 = vadd.f32 %v10492, %v10661
    %v10663 = vpop.f32.mrb[0].mxu0
    %v10664 = vadd.f32 %v10496, %v10663
    %10665 = vdwg.mxu0
    %10666 = vmatprep.subr.mxu0 %v10476
    %10667 = vmatpush1.msra.mxu0 %v10475
    %10668 = vmatprep.subr.mxu0 0.0
    %10669 = vmatpush1.msra.mxu0 0.0
    %10670 = vmatprep.subr.mxu0 0.0
    %10671 = vmatpush1.msra.mxu0 0.0
    %10672 = vmatprep.subr.mxu0 0.0
    %10673 = vmatpush1.msra.mxu0 0.0
    %10674 = vmatprep.subr.mxu0 0.0
    %10675 = vmatpush1.msra.mxu0 0.0
    %10676 = vmatprep.subr.mxu0 0.0
    %10677 = vmatpush1.msra.mxu0 0.0
    %10678 = vmatprep.subr.mxu0 0.0
    %10679 = vmatpush1.msra.mxu0 0.0
    %10680 = vmatprep.subr.mxu0 0.0
    %10681 = vmatpush1.msra.mxu0 0.0
    %10682 = vmatprep.subr.mxu0 0.0
    %10683 = vmatpush1.msra.mxu0 0.0
    %10684 = vmatprep.subr.mxu0 0.0
    %10685 = vmatpush1.msra.mxu0 0.0
    %10686 = vmatprep.subr.mxu0 0.0
    %10687 = vmatpush1.msra.mxu0 0.0
    %10688 = vmatprep.subr.mxu0 0.0
    %10689 = vmatpush1.msra.mxu0 0.0
    %10690 = vmatprep.subr.mxu0 0.0
    %10691 = vmatpush1.msra.mxu0 0.0
    %10692 = vmatprep.subr.mxu0 0.0
    %10693 = vmatpush1.msra.mxu0 0.0
    %10694 = vmatprep.subr.mxu0 0.0
    %10695 = vmatpush1.msra.mxu0 0.0
    %10696 = vmatprep.subr.mxu0 0.0
    %10697 = vmatpush1.msra.mxu0 0.0
    %10698 = vmatprep.subr.mxu0 0.0
    %10699 = vmatpush1.msra.mxu0 0.0
    %10700 = vmatprep.subr.mxu0 0.0
    %10701 = vmatpush1.msra.mxu0 0.0
    %10702 = vmatprep.subr.mxu0 0.0
    %10703 = vmatpush1.msra.mxu0 0.0
    %10704 = vmatprep.subr.mxu0 0.0
    %10705 = vmatpush1.msra.mxu0 0.0
    %10706 = vmatprep.subr.mxu0 0.0
    %10707 = vmatpush1.msra.mxu0 0.0
    %10708 = vmatprep.subr.mxu0 0.0
    %10709 = vmatpush1.msra.mxu0 0.0
    %10710 = vmatprep.subr.mxu0 0.0
    %10711 = vmatpush1.msra.mxu0 0.0
    %10712 = vmatprep.subr.mxu0 0.0
    %10713 = vmatpush1.msra.mxu0 0.0
    %10714 = vmatprep.subr.mxu0 0.0
    %10715 = vmatpush1.msra.mxu0 0.0
    %10716 = vmatprep.subr.mxu0 0.0
    %10717 = vmatpush1.msra.mxu0 0.0
    %10718 = vmatprep.subr.mxu0 0.0
    %10719 = vmatpush1.msra.mxu0 0.0
    %10720 = vmatprep.subr.mxu0 0.0
    %10721 = vmatpush1.msra.mxu0 0.0
    %10722 = vmatprep.subr.mxu0 0.0
    %10723 = vmatpush1.msra.mxu0 0.0
    %10724 = vmatprep.subr.mxu0 0.0
    %10725 = vmatpush1.msra.mxu0 0.0
    %10726 = vmatprep.subr.mxu0 0.0
    %10727 = vmatpush1.msra.mxu0 0.0
    %10728 = vmatprep.subr.mxu0 0.0
    %10729 = vmatpush1.msra.mxu0 0.0
    %10730 = vmatprep.mubr.f32.mxu0 0.0
    %10731 = vmatmul.mubr.f32.gmra.mrb[0].mxu0 %v10522
    %v10732 = vpop.f32.mrb[0].mxu0
    %v10733 = vadd.f32 %v10500, %v10732
    %v10734 = vpop.f32.mrb[0].mxu0
    %v10735 = vadd.f32 %v10504, %v10734
    %10736 = vdwg.mxu0
    %10737 = vmatprep.subr.mxu0 %v10478
    %10738 = vmatpush1.msra.mxu0 %v10477
    %10739 = vmatprep.subr.mxu0 0.0
    %10740 = vmatpush1.msra.mxu0 0.0
    %10741 = vmatprep.subr.mxu0 0.0
    %10742 = vmatpush1.msra.mxu0 0.0
    %10743 = vmatprep.subr.mxu0 0.0
    %10744 = vmatpush1.msra.mxu0 0.0
    %10745 = vmatprep.subr.mxu0 0.0
    %10746 = vmatpush1.msra.mxu0 0.0
    %10747 = vmatprep.subr.mxu0 0.0
    %10748 = vmatpush1.msra.mxu0 0.0
    %10749 = vmatprep.subr.mxu0 0.0
    %10750 = vmatpush1.msra.mxu0 0.0
    %10751 = vmatprep.subr.mxu0 0.0
    %10752 = vmatpush1.msra.mxu0 0.0
    %10753 = vmatprep.subr.mxu0 0.0
    %10754 = vmatpush1.msra.mxu0 0.0
    %10755 = vmatprep.subr.mxu0 0.0
    %10756 = vmatpush1.msra.mxu0 0.0
    %10757 = vmatprep.subr.mxu0 0.0
    %10758 = vmatpush1.msra.mxu0 0.0
    %10759 = vmatprep.subr.mxu0 0.0
    %10760 = vmatpush1.msra.mxu0 0.0
    %10761 = vmatprep.subr.mxu0 0.0
    %10762 = vmatpush1.msra.mxu0 0.0
    %10763 = vmatprep.subr.mxu0 0.0
    %10764 = vmatpush1.msra.mxu0 0.0
    %10765 = vmatprep.subr.mxu0 0.0
    %10766 = vmatpush1.msra.mxu0 0.0
    %10767 = vmatprep.subr.mxu0 0.0
    %10768 = vmatpush1.msra.mxu0 0.0
    %10769 = vmatprep.subr.mxu0 0.0
    %10770 = vmatpush1.msra.mxu0 0.0
    %10771 = vmatprep.subr.mxu0 0.0
    %10772 = vmatpush1.msra.mxu0 0.0
    %10773 = vmatprep.subr.mxu0 0.0
    %10774 = vmatpush1.msra.mxu0 0.0
    %10775 = vmatprep.subr.mxu0 0.0
    %10776 = vmatpush1.msra.mxu0 0.0
    %10777 = vmatprep.subr.mxu0 0.0
    %10778 = vmatpush1.msra.mxu0 0.0
    %10779 = vmatprep.subr.mxu0 0.0
    %10780 = vmatpush1.msra.mxu0 0.0
    %10781 = vmatprep.subr.mxu0 0.0
    %10782 = vmatpush1.msra.mxu0 0.0
    %10783 = vmatprep.subr.mxu0 0.0
    %10784 = vmatpush1.msra.mxu0 0.0
    %10785 = vmatprep.subr.mxu0 0.0
    %10786 = vmatpush1.msra.mxu0 0.0
    %10787 = vmatprep.subr.mxu0 0.0
    %10788 = vmatpush1.msra.mxu0 0.0
    %10789 = vmatprep.subr.mxu0 0.0
    %10790 = vmatpush1.msra.mxu0 0.0
    %10791 = vmatprep.subr.mxu0 0.0
    %10792 = vmatpush1.msra.mxu0 0.0
    %10793 = vmatprep.subr.mxu0 0.0
    %10794 = vmatpush1.msra.mxu0 0.0
    %10795 = vmatprep.subr.mxu0 0.0
    %10796 = vmatpush1.msra.mxu0 0.0
    %10797 = vmatprep.subr.mxu0 0.0
    %10798 = vmatpush1.msra.mxu0 0.0
    %10799 = vmatprep.subr.mxu0 0.0
    %10800 = vmatpush1.msra.mxu0 0.0
    %10801 = vmatprep.mubr.f32.mxu0 0.0
    %10802 = vmatmul.mubr.f32.gmra.mrb[0].mxu0 %v10522
    %v10803 = vpop.f32.mrb[0].mxu0
    %v10804 = vadd.f32 %v10508, %v10803
    %v10805 = vpop.f32.mrb[0].mxu0
    %v10806 = vadd.f32 %v10512, %v10805
    %10807 = vdwg.mxu0
    %v10810 = vunpack.c.l.s4 1983009808
    %v10811 = vunpack.c.0.s8 %v10810
    %v10812 = vlaneseq
    %v10813 = vshrl.u32 %v10812, 7
    %v10814 = vsub.s32 %v10811, %v10813
    %v10815 = vrot.slane %v10470, %v10814
    %v10816 = vcombine.high %v10815, %v10815
    %v10819 = vpack.c.bf16 %v10815, %v10815
    %v10820 = vpack.c.bf16 %v10816, %v10816
    %v10821 = vld [vmem:[#allocation4] sm:$0xff]
    %v10822 = vld [vmem:[#allocation4 + $0x8] sm:$0xff]
    %v10823 = vld [vmem:[#allocation4 + $0x10] sm:$0xff]
    %v10824 = vld [vmem:[#allocation4 + $0x18] sm:$0xff]
    %v10825 = vld [vmem:[#allocation4 + $0x20] sm:$0xff]
    %v10826 = vld [vmem:[#allocation4 + $0x28] sm:$0xff]
    %v10827 = vld [vmem:[#allocation4 + $0x30] sm:$0xff]
    %v10828 = vld [vmem:[#allocation4 + $0x38] sm:$0xff]
    %v10829 = vld [vmem:[#allocation4 + $0x40] sm:$0xff]
    %v10830 = vld [vmem:[#allocation4 + $0x48] sm:$0xff]
    %v10831 = vld [vmem:[#allocation4 + $0x50] sm:$0xff]
    %v10832 = vld [vmem:[#allocation4 + $0x58] sm:$0xff]
    %v10833 = vld [vmem:[#allocation4 + $0x60] sm:$0xff]
    %v10834 = vld [vmem:[#allocation4 + $0x68] sm:$0xff]
    %v10835 = vld [vmem:[#allocation4 + $0x70] sm:$0xff]
    %v10836 = vld [vmem:[#allocation4 + $0x78] sm:$0xff]
    %v10837 = vld [vmem:[#allocation4 + $0x80] sm:$0xff]
    %v10838 = vld [vmem:[#allocation4 + $0x88] sm:$0xff]
    %v10839 = vld [vmem:[#allocation4 + $0x90] sm:$0xff]
    %v10840 = vld [vmem:[#allocation4 + $0x98] sm:$0xff]
    %v10841 = vld [vmem:[#allocation4 + $0xa0] sm:$0xff]
    %v10842 = vld [vmem:[#allocation4 + $0xa8] sm:$0xff]
    %v10843 = vld [vmem:[#allocation4 + $0xb0] sm:$0xff]
    %v10844 = vld [vmem:[#allocation4 + $0xb8] sm:$0xff]
    %v10845 = vld [vmem:[#allocation4 + $0xc0] sm:$0xff]
    %v10846 = vld [vmem:[#allocation4 + $0xc8] sm:$0xff]
    %v10847 = vld [vmem:[#allocation4 + $0xd0] sm:$0xff]
    %v10848 = vld [vmem:[#allocation4 + $0xd8] sm:$0xff]
    %v10849 = vld [vmem:[#allocation4 + $0xe0] sm:$0xff]
    %v10850 = vld [vmem:[#allocation4 + $0xe8] sm:$0xff]
    %v10851 = vld [vmem:[#allocation4 + $0xf0] sm:$0xff]
    %v10852 = vld [vmem:[#allocation4 + $0xf8] sm:$0xff]
    %v10853 = vld [vmem:[#allocation4 + $0x100] sm:$0xff]
    %v10854 = vld [vmem:[#allocation4 + $0x108] sm:$0xff]
    %v10855 = vld [vmem:[#allocation4 + $0x110] sm:$0xff]
    %v10856 = vld [vmem:[#allocation4 + $0x118] sm:$0xff]
    %v10857 = vld [vmem:[#allocation4 + $0x120] sm:$0xff]
    %v10858 = vld [vmem:[#allocation4 + $0x128] sm:$0xff]
    %v10859 = vld [vmem:[#allocation4 + $0x130] sm:$0xff]
    %v10860 = vld [vmem:[#allocation4 + $0x138] sm:$0xff]
    %v10861 = vld [vmem:[#allocation4 + $0x140] sm:$0xff]
    %v10862 = vld [vmem:[#allocation4 + $0x148] sm:$0xff]
    %v10863 = vld [vmem:[#allocation4 + $0x150] sm:$0xff]
    %v10864 = vld [vmem:[#allocation4 + $0x158] sm:$0xff]
    %v10865 = vld [vmem:[#allocation4 + $0x160] sm:$0xff]
    %v10866 = vld [vmem:[#allocation4 + $0x168] sm:$0xff]
    %v10867 = vld [vmem:[#allocation4 + $0x170] sm:$0xff]
    %v10868 = vld [vmem:[#allocation4 + $0x178] sm:$0xff]
    %v10869 = vld [vmem:[#allocation4 + $0x180] sm:$0xff]
    %v10870 = vld [vmem:[#allocation4 + $0x188] sm:$0xff]
    %v10871 = vld [vmem:[#allocation4 + $0x190] sm:$0xff]
    %v10872 = vld [vmem:[#allocation4 + $0x198] sm:$0xff]
    %v10873 = vld [vmem:[#allocation4 + $0x1a0] sm:$0xff]
    %v10874 = vld [vmem:[#allocation4 + $0x1a8] sm:$0xff]
    %v10875 = vld [vmem:[#allocation4 + $0x1b0] sm:$0xff]
    %v10876 = vld [vmem:[#allocation4 + $0x1b8] sm:$0xff]
    %v10877 = vld [vmem:[#allocation4 + $0x1c0] sm:$0xff]
    %v10878 = vld [vmem:[#allocation4 + $0x1c8] sm:$0xff]
    %v10879 = vld [vmem:[#allocation4 + $0x1d0] sm:$0xff]
    %v10880 = vld [vmem:[#allocation4 + $0x1d8] sm:$0xff]
    %v10881 = vld [vmem:[#allocation4 + $0x1e0] sm:$0xff]
    %v10882 = vld [vmem:[#allocation4 + $0x1e8] sm:$0xff]
    %v10883 = vld [vmem:[#allocation4 + $0x1f0] sm:$0xff]
    %v10884 = vld [vmem:[#allocation4 + $0x1f8] sm:$0xff]
    %v10885 = vld [vmem:[#allocation4 + $0x200] sm:$0xff]
    %v10886 = vld [vmem:[#allocation4 + $0x208] sm:$0xff]
    %v10887 = vld [vmem:[#allocation4 + $0x210] sm:$0xff]
    %v10888 = vld [vmem:[#allocation4 + $0x218] sm:$0xff]
    %v10889 = vld [vmem:[#allocation4 + $0x220] sm:$0xff]
    %v10890 = vld [vmem:[#allocation4 + $0x228] sm:$0xff]
    %v10891 = vld [vmem:[#allocation4 + $0x230] sm:$0xff]
    %v10892 = vld [vmem:[#allocation4 + $0x238] sm:$0xff]
    %v10893 = vld [vmem:[#allocation4 + $0x240] sm:$0xff]
    %v10894 = vld [vmem:[#allocation4 + $0x248] sm:$0xff]
    %v10895 = vld [vmem:[#allocation4 + $0x250] sm:$0xff]
    %v10896 = vld [vmem:[#allocation4 + $0x258] sm:$0xff]
    %v10897 = vld [vmem:[#allocation4 + $0x260] sm:$0xff]
    %v10898 = vld [vmem:[#allocation4 + $0x268] sm:$0xff]
    %v10899 = vld [vmem:[#allocation4 + $0x270] sm:$0xff]
    %v10900 = vld [vmem:[#allocation4 + $0x278] sm:$0xff]
    %v10901 = vld [vmem:[#allocation4 + $0x280] sm:$0xff]
    %v10902 = vld [vmem:[#allocation4 + $0x288] sm:$0xff]
    %v10903 = vld [vmem:[#allocation4 + $0x290] sm:$0xff]
    %v10904 = vld [vmem:[#allocation4 + $0x298] sm:$0xff]
    %v10905 = vld [vmem:[#allocation4 + $0x2a0] sm:$0xff]
    %v10906 = vld [vmem:[#allocation4 + $0x2a8] sm:$0xff]
    %v10907 = vld [vmem:[#allocation4 + $0x2b0] sm:$0xff]
    %v10908 = vld [vmem:[#allocation4 + $0x2b8] sm:$0xff]
    %v10909 = vld [vmem:[#allocation4 + $0x2c0] sm:$0xff]
    %v10910 = vld [vmem:[#allocation4 + $0x2c8] sm:$0xff]
    %v10911 = vld [vmem:[#allocation4 + $0x2d0] sm:$0xff]
    %v10912 = vld [vmem:[#allocation4 + $0x2d8] sm:$0xff]
    %v10913 = vld [vmem:[#allocation4 + $0x2e0] sm:$0xff]
    %v10914 = vld [vmem:[#allocation4 + $0x2e8] sm:$0xff]
    %v10915 = vld [vmem:[#allocation4 + $0x2f0] sm:$0xff]
    %v10916 = vld [vmem:[#allocation4 + $0x2f8] sm:$0xff]
    %v10917 = vld [vmem:[#allocation4 + $0x300] sm:$0xff]
    %v10918 = vld [vmem:[#allocation4 + $0x308] sm:$0xff]
    %v10919 = vld [vmem:[#allocation4 + $0x310] sm:$0xff]
    %v10920 = vld [vmem:[#allocation4 + $0x318] sm:$0xff]
    %v10921 = vld [vmem:[#allocation4 + $0x320] sm:$0xff]
    %v10922 = vld [vmem:[#allocation4 + $0x328] sm:$0xff]
    %v10923 = vld [vmem:[#allocation4 + $0x330] sm:$0xff]
    %v10924 = vld [vmem:[#allocation4 + $0x338] sm:$0xff]
    %v10925 = vld [vmem:[#allocation4 + $0x340] sm:$0xff]
    %v10926 = vld [vmem:[#allocation4 + $0x348] sm:$0xff]
    %v10927 = vld [vmem:[#allocation4 + $0x350] sm:$0xff]
    %v10928 = vld [vmem:[#allocation4 + $0x358] sm:$0xff]
    %v10929 = vld [vmem:[#allocation4 + $0x360] sm:$0xff]
    %v10930 = vld [vmem:[#allocation4 + $0x368] sm:$0xff]
    %v10931 = vld [vmem:[#allocation4 + $0x370] sm:$0xff]
    %v10932 = vld [vmem:[#allocation4 + $0x378] sm:$0xff]
    %v10933 = vld [vmem:[#allocation4 + $0x380] sm:$0xff]
    %v10934 = vld [vmem:[#allocation4 + $0x388] sm:$0xff]
    %v10935 = vld [vmem:[#allocation4 + $0x390] sm:$0xff]
    %v10936 = vld [vmem:[#allocation4 + $0x398] sm:$0xff]
    %v10937 = vld [vmem:[#allocation4 + $0x3a0] sm:$0xff]
    %v10938 = vld [vmem:[#allocation4 + $0x3a8] sm:$0xff]
    %v10939 = vld [vmem:[#allocation4 + $0x3b0] sm:$0xff]
    %v10940 = vld [vmem:[#allocation4 + $0x3b8] sm:$0xff]
    %v10941 = vld [vmem:[#allocation4 + $0x3c0] sm:$0xff]
    %v10942 = vld [vmem:[#allocation4 + $0x3c8] sm:$0xff]
    %v10943 = vld [vmem:[#allocation4 + $0x3d0] sm:$0xff]
    %v10944 = vld [vmem:[#allocation4 + $0x3d8] sm:$0xff]
    %v10945 = vld [vmem:[#allocation4 + $0x3e0] sm:$0xff]
    %v10946 = vld [vmem:[#allocation4 + $0x3e8] sm:$0xff]
    %v10947 = vld [vmem:[#allocation4 + $0x3f0] sm:$0xff]
    %v10948 = vld [vmem:[#allocation4 + $0x3f8] sm:$0xff]
    %v11077 = vunpack.c.l.b16 %v10821
    %v11078 = vunpack.c.h.b16 %v10821
    %v11079 = vunpack.c.l.b16 %v10822
    %v11080 = vunpack.c.h.b16 %v10822
    %v11081 = vunpack.c.l.b16 %v10823
    %v11082 = vunpack.c.h.b16 %v10823
    %v11083 = vunpack.c.l.b16 %v10824
    %v11084 = vunpack.c.h.b16 %v10824
    %v11085 = vunpack.c.l.b16 %v10825
    %v11086 = vunpack.c.h.b16 %v10825
    %v11087 = vunpack.c.l.b16 %v10826
    %v11088 = vunpack.c.h.b16 %v10826
    %v11089 = vunpack.c.l.b16 %v10827
    %v11090 = vunpack.c.h.b16 %v10827
    %v11091 = vunpack.c.l.b16 %v10828
    %v11092 = vunpack.c.h.b16 %v10828
    %v11093 = vunpack.c.l.b16 %v10829
    %v11094 = vunpack.c.h.b16 %v10829
    %v11095 = vunpack.c.l.b16 %v10830
    %v11096 = vunpack.c.h.b16 %v10830
    %v11097 = vunpack.c.l.b16 %v10831
    %v11098 = vunpack.c.h.b16 %v10831
    %v11099 = vunpack.c.l.b16 %v10832
    %v11100 = vunpack.c.h.b16 %v10832
    %v11101 = vunpack.c.l.b16 %v10833
    %v11102 = vunpack.c.h.b16 %v10833
    %v11103 = vunpack.c.l.b16 %v10834
    %v11104 = vunpack.c.h.b16 %v10834
    %v11105 = vunpack.c.l.b16 %v10835
    %v11106 = vunpack.c.h.b16 %v10835
    %v11107 = vunpack.c.l.b16 %v10836
    %v11108 = vunpack.c.h.b16 %v10836
    %v11109 = vunpack.c.l.b16 %v10837
    %v11110 = vunpack.c.h.b16 %v10837
    %v11111 = vunpack.c.l.b16 %v10838
    %v11112 = vunpack.c.h.b16 %v10838
    %v11113 = vunpack.c.l.b16 %v10839
    %v11114 = vunpack.c.h.b16 %v10839
    %v11115 = vunpack.c.l.b16 %v10840
    %v11116 = vunpack.c.h.b16 %v10840
    %v11117 = vunpack.c.l.b16 %v10841
    %v11118 = vunpack.c.h.b16 %v10841
    %v11119 = vunpack.c.l.b16 %v10842
    %v11120 = vunpack.c.h.b16 %v10842
    %v11121 = vunpack.c.l.b16 %v10843
    %v11122 = vunpack.c.h.b16 %v10843
    %v11123 = vunpack.c.l.b16 %v10844
    %v11124 = vunpack.c.h.b16 %v10844
    %v11125 = vunpack.c.l.b16 %v10845
    %v11126 = vunpack.c.h.b16 %v10845
    %v11127 = vunpack.c.l.b16 %v10846
    %v11128 = vunpack.c.h.b16 %v10846
    %v11129 = vunpack.c.l.b16 %v10847
    %v11130 = vunpack.c.h.b16 %v10847
    %v11131 = vunpack.c.l.b16 %v10848
    %v11132 = vunpack.c.h.b16 %v10848
    %v11133 = vunpack.c.l.b16 %v10849
    %v11134 = vunpack.c.h.b16 %v10849
    %v11135 = vunpack.c.l.b16 %v10850
    %v11136 = vunpack.c.h.b16 %v10850
    %v11137 = vunpack.c.l.b16 %v10851
    %v11138 = vunpack.c.h.b16 %v10851
    %v11139 = vunpack.c.l.b16 %v10852
    %v11140 = vunpack.c.h.b16 %v10852
    %v11141 = vunpack.c.l.b16 %v10853
    %v11142 = vunpack.c.h.b16 %v10853
    %v11143 = vunpack.c.l.b16 %v10854
    %v11144 = vunpack.c.h.b16 %v10854
    %v11145 = vunpack.c.l.b16 %v10855
    %v11146 = vunpack.c.h.b16 %v10855
    %v11147 = vunpack.c.l.b16 %v10856
    %v11148 = vunpack.c.h.b16 %v10856
    %v11149 = vunpack.c.l.b16 %v10857
    %v11150 = vunpack.c.h.b16 %v10857
    %v11151 = vunpack.c.l.b16 %v10858
    %v11152 = vunpack.c.h.b16 %v10858
    %v11153 = vunpack.c.l.b16 %v10859
    %v11154 = vunpack.c.h.b16 %v10859
    %v11155 = vunpack.c.l.b16 %v10860
    %v11156 = vunpack.c.h.b16 %v10860
    %v11157 = vunpack.c.l.b16 %v10861
    %v11158 = vunpack.c.h.b16 %v10861
    %v11159 = vunpack.c.l.b16 %v10862
    %v11160 = vunpack.c.h.b16 %v10862
    %v11161 = vunpack.c.l.b16 %v10863
    %v11162 = vunpack.c.h.b16 %v10863
    %v11163 = vunpack.c.l.b16 %v10864
    %v11164 = vunpack.c.h.b16 %v10864
    %v11165 = vunpack.c.l.b16 %v10865
    %v11166 = vunpack.c.h.b16 %v10865
    %v11167 = vunpack.c.l.b16 %v10866
    %v11168 = vunpack.c.h.b16 %v10866
    %v11169 = vunpack.c.l.b16 %v10867
    %v11170 = vunpack.c.h.b16 %v10867
    %v11171 = vunpack.c.l.b16 %v10868
    %v11172 = vunpack.c.h.b16 %v10868
    %v11173 = vunpack.c.l.b16 %v10869
    %v11174 = vunpack.c.h.b16 %v10869
    %v11175 = vunpack.c.l.b16 %v10870
    %v11176 = vunpack.c.h.b16 %v10870
    %v11177 = vunpack.c.l.b16 %v10871
    %v11178 = vunpack.c.h.b16 %v10871
    %v11179 = vunpack.c.l.b16 %v10872
    %v11180 = vunpack.c.h.b16 %v10872
    %v11181 = vunpack.c.l.b16 %v10873
    %v11182 = vunpack.c.h.b16 %v10873
    %v11183 = vunpack.c.l.b16 %v10874
    %v11184 = vunpack.c.h.b16 %v10874
    %v11185 = vunpack.c.l.b16 %v10875
    %v11186 = vunpack.c.h.b16 %v10875
    %v11187 = vunpack.c.l.b16 %v10876
    %v11188 = vunpack.c.h.b16 %v10876
    %v11189 = vunpack.c.l.b16 %v10877
    %v11190 = vunpack.c.h.b16 %v10877
    %v11191 = vunpack.c.l.b16 %v10878
    %v11192 = vunpack.c.h.b16 %v10878
    %v11193 = vunpack.c.l.b16 %v10879
    %v11194 = vunpack.c.h.b16 %v10879
    %v11195 = vunpack.c.l.b16 %v10880
    %v11196 = vunpack.c.h.b16 %v10880
    %v11197 = vunpack.c.l.b16 %v10881
    %v11198 = vunpack.c.h.b16 %v10881
    %v11199 = vunpack.c.l.b16 %v10882
    %v11200 = vunpack.c.h.b16 %v10882
    %v11201 = vunpack.c.l.b16 %v10883
    %v11202 = vunpack.c.h.b16 %v10883
    %v11203 = vunpack.c.l.b16 %v10884
    %v11204 = vunpack.c.h.b16 %v10884
    %v11205 = vunpack.c.l.b16 %v10885
    %v11206 = vunpack.c.h.b16 %v10885
    %v11207 = vunpack.c.l.b16 %v10886
    %v11208 = vunpack.c.h.b16 %v10886
    %v11209 = vunpack.c.l.b16 %v10887
    %v11210 = vunpack.c.h.b16 %v10887
    %v11211 = vunpack.c.l.b16 %v10888
    %v11212 = vunpack.c.h.b16 %v10888
    %v11213 = vunpack.c.l.b16 %v10889
    %v11214 = vunpack.c.h.b16 %v10889
    %v11215 = vunpack.c.l.b16 %v10890
    %v11216 = vunpack.c.h.b16 %v10890
    %v11217 = vunpack.c.l.b16 %v10891
    %v11218 = vunpack.c.h.b16 %v10891
    %v11219 = vunpack.c.l.b16 %v10892
    %v11220 = vunpack.c.h.b16 %v10892
    %v11221 = vunpack.c.l.b16 %v10893
    %v11222 = vunpack.c.h.b16 %v10893
    %v11223 = vunpack.c.l.b16 %v10894
    %v11224 = vunpack.c.h.b16 %v10894
    %v11225 = vunpack.c.l.b16 %v10895
    %v11226 = vunpack.c.h.b16 %v10895
    %v11227 = vunpack.c.l.b16 %v10896
    %v11228 = vunpack.c.h.b16 %v10896
    %v11229 = vunpack.c.l.b16 %v10897
    %v11230 = vunpack.c.h.b16 %v10897
    %v11231 = vunpack.c.l.b16 %v10898
    %v11232 = vunpack.c.h.b16 %v10898
    %v11233 = vunpack.c.l.b16 %v10899
    %v11234 = vunpack.c.h.b16 %v10899
    %v11235 = vunpack.c.l.b16 %v10900
    %v11236 = vunpack.c.h.b16 %v10900
    %v11237 = vunpack.c.l.b16 %v10901
    %v11238 = vunpack.c.h.b16 %v10901
    %v11239 = vunpack.c.l.b16 %v10902
    %v11240 = vunpack.c.h.b16 %v10902
    %v11241 = vunpack.c.l.b16 %v10903
    %v11242 = vunpack.c.h.b16 %v10903
    %v11243 = vunpack.c.l.b16 %v10904
    %v11244 = vunpack.c.h.b16 %v10904
    %v11245 = vunpack.c.l.b16 %v10905
    %v11246 = vunpack.c.h.b16 %v10905
    %v11247 = vunpack.c.l.b16 %v10906
    %v11248 = vunpack.c.h.b16 %v10906
    %v11249 = vunpack.c.l.b16 %v10907
    %v11250 = vunpack.c.h.b16 %v10907
    %v11251 = vunpack.c.l.b16 %v10908
    %v11252 = vunpack.c.h.b16 %v10908
    %v11253 = vunpack.c.l.b16 %v10909
    %v11254 = vunpack.c.h.b16 %v10909
    %v11255 = vunpack.c.l.b16 %v10910
    %v11256 = vunpack.c.h.b16 %v10910
    %v11257 = vunpack.c.l.b16 %v10911
    %v11258 = vunpack.c.h.b16 %v10911
    %v11259 = vunpack.c.l.b16 %v10912
    %v11260 = vunpack.c.h.b16 %v10912
    %v11261 = vunpack.c.l.b16 %v10913
    %v11262 = vunpack.c.h.b16 %v10913
    %v11263 = vunpack.c.l.b16 %v10914
    %v11264 = vunpack.c.h.b16 %v10914
    %v11265 = vunpack.c.l.b16 %v10915
    %v11266 = vunpack.c.h.b16 %v10915
    %v11267 = vunpack.c.l.b16 %v10916
    %v11268 = vunpack.c.h.b16 %v10916
    %v11269 = vunpack.c.l.b16 %v10917
    %v11270 = vunpack.c.h.b16 %v10917
    %v11271 = vunpack.c.l.b16 %v10918
    %v11272 = vunpack.c.h.b16 %v10918
    %v11273 = vunpack.c.l.b16 %v10919
    %v11274 = vunpack.c.h.b16 %v10919
    %v11275 = vunpack.c.l.b16 %v10920
    %v11276 = vunpack.c.h.b16 %v10920
    %v11277 = vunpack.c.l.b16 %v10921
    %v11278 = vunpack.c.h.b16 %v10921
    %v11279 = vunpack.c.l.b16 %v10922
    %v11280 = vunpack.c.h.b16 %v10922
    %v11281 = vunpack.c.l.b16 %v10923
    %v11282 = vunpack.c.h.b16 %v10923
    %v11283 = vunpack.c.l.b16 %v10924
    %v11284 = vunpack.c.h.b16 %v10924
    %v11285 = vunpack.c.l.b16 %v10925
    %v11286 = vunpack.c.h.b16 %v10925
    %v11287 = vunpack.c.l.b16 %v10926
    %v11288 = vunpack.c.h.b16 %v10926
    %v11289 = vunpack.c.l.b16 %v10927
    %v11290 = vunpack.c.h.b16 %v10927
    %v11291 = vunpack.c.l.b16 %v10928
    %v11292 = vunpack.c.h.b16 %v10928
    %v11293 = vunpack.c.l.b16 %v10929
    %v11294 = vunpack.c.h.b16 %v10929
    %v11295 = vunpack.c.l.b16 %v10930
    %v11296 = vunpack.c.h.b16 %v10930
    %v11297 = vunpack.c.l.b16 %v10931
    %v11298 = vunpack.c.h.b16 %v10931
    %v11299 = vunpack.c.l.b16 %v10932
    %v11300 = vunpack.c.h.b16 %v10932
    %v11301 = vunpack.c.l.b16 %v10933
    %v11302 = vunpack.c.h.b16 %v10933
    %v11303 = vunpack.c.l.b16 %v10934
    %v11304 = vunpack.c.h.b16 %v10934
    %v11305 = vunpack.c.l.b16 %v10935
    %v11306 = vunpack.c.h.b16 %v10935
    %v11307 = vunpack.c.l.b16 %v10936
    %v11308 = vunpack.c.h.b16 %v10936
    %v11309 = vunpack.c.l.b16 %v10937
    %v11310 = vunpack.c.h.b16 %v10937
    %v11311 = vunpack.c.l.b16 %v10938
    %v11312 = vunpack.c.h.b16 %v10938
    %v11313 = vunpack.c.l.b16 %v10939
    %v11314 = vunpack.c.h.b16 %v10939
    %v11315 = vunpack.c.l.b16 %v10940
    %v11316 = vunpack.c.h.b16 %v10940
    %v11317 = vunpack.c.l.b16 %v10941
    %v11318 = vunpack.c.h.b16 %v10941
    %v11319 = vunpack.c.l.b16 %v10942
    %v11320 = vunpack.c.h.b16 %v10942
    %v11321 = vunpack.c.l.b16 %v10943
    %v11322 = vunpack.c.h.b16 %v10943
    %v11323 = vunpack.c.l.b16 %v10944
    %v11324 = vunpack.c.h.b16 %v10944
    %v11325 = vunpack.c.l.b16 %v10945
    %v11326 = vunpack.c.h.b16 %v10945
    %v11327 = vunpack.c.l.b16 %v10946
    %v11328 = vunpack.c.h.b16 %v10946
    %v11329 = vunpack.c.l.b16 %v10947
    %v11330 = vunpack.c.h.b16 %v10947
    %v11331 = vunpack.c.l.b16 %v10948
    %v11332 = vunpack.c.h.b16 %v10948
    %v11333 = vpack.c.b16 %v11085, %v11077
    %v11334 = vpack.c.b16 %v11086, %v11078
    %v11335 = vpack.c.b16 %v11087, %v11079
    %v11336 = vpack.c.b16 %v11088, %v11080
    %v11337 = vpack.c.b16 %v11089, %v11081
    %v11338 = vpack.c.b16 %v11090, %v11082
    %v11339 = vpack.c.b16 %v11091, %v11083
    %v11340 = vpack.c.b16 %v11092, %v11084
    %v11341 = vpack.c.b16 %v11101, %v11093
    %v11342 = vpack.c.b16 %v11102, %v11094
    %v11343 = vpack.c.b16 %v11103, %v11095
    %v11344 = vpack.c.b16 %v11104, %v11096
    %v11345 = vpack.c.b16 %v11105, %v11097
    %v11346 = vpack.c.b16 %v11106, %v11098
    %v11347 = vpack.c.b16 %v11107, %v11099
    %v11348 = vpack.c.b16 %v11108, %v11100
    %v11349 = vpack.c.b16 %v11117, %v11109
    %v11350 = vpack.c.b16 %v11118, %v11110
    %v11351 = vpack.c.b16 %v11119, %v11111
    %v11352 = vpack.c.b16 %v11120, %v11112
    %v11353 = vpack.c.b16 %v11121, %v11113
    %v11354 = vpack.c.b16 %v11122, %v11114
    %v11355 = vpack.c.b16 %v11123, %v11115
    %v11356 = vpack.c.b16 %v11124, %v11116
    %v11357 = vpack.c.b16 %v11133, %v11125
    %v11358 = vpack.c.b16 %v11134, %v11126
    %v11359 = vpack.c.b16 %v11135, %v11127
    %v11360 = vpack.c.b16 %v11136, %v11128
    %v11361 = vpack.c.b16 %v11137, %v11129
    %v11362 = vpack.c.b16 %v11138, %v11130
    %v11363 = vpack.c.b16 %v11139, %v11131
    %v11364 = vpack.c.b16 %v11140, %v11132
    %v11365 = vpack.c.b16 %v11149, %v11141
    %v11366 = vpack.c.b16 %v11150, %v11142
    %v11367 = vpack.c.b16 %v11151, %v11143
    %v11368 = vpack.c.b16 %v11152, %v11144
    %v11369 = vpack.c.b16 %v11153, %v11145
    %v11370 = vpack.c.b16 %v11154, %v11146
    %v11371 = vpack.c.b16 %v11155, %v11147
    %v11372 = vpack.c.b16 %v11156, %v11148
    %v11373 = vpack.c.b16 %v11165, %v11157
    %v11374 = vpack.c.b16 %v11166, %v11158
    %v11375 = vpack.c.b16 %v11167, %v11159
    %v11376 = vpack.c.b16 %v11168, %v11160
    %v11377 = vpack.c.b16 %v11169, %v11161
    %v11378 = vpack.c.b16 %v11170, %v11162
    %v11379 = vpack.c.b16 %v11171, %v11163
    %v11380 = vpack.c.b16 %v11172, %v11164
    %v11381 = vpack.c.b16 %v11181, %v11173
    %v11382 = vpack.c.b16 %v11182, %v11174
    %v11383 = vpack.c.b16 %v11183, %v11175
    %v11384 = vpack.c.b16 %v11184, %v11176
    %v11385 = vpack.c.b16 %v11185, %v11177
    %v11386 = vpack.c.b16 %v11186, %v11178
    %v11387 = vpack.c.b16 %v11187, %v11179
    %v11388 = vpack.c.b16 %v11188, %v11180
    %v11389 = vpack.c.b16 %v11197, %v11189
    %v11390 = vpack.c.b16 %v11198, %v11190
    %v11391 = vpack.c.b16 %v11199, %v11191
    %v11392 = vpack.c.b16 %v11200, %v11192
    %v11393 = vpack.c.b16 %v11201, %v11193
    %v11394 = vpack.c.b16 %v11202, %v11194
    %v11395 = vpack.c.b16 %v11203, %v11195
    %v11396 = vpack.c.b16 %v11204, %v11196
    %v11397 = vpack.c.b16 %v11213, %v11205
    %v11398 = vpack.c.b16 %v11214, %v11206
    %v11399 = vpack.c.b16 %v11215, %v11207
    %v11400 = vpack.c.b16 %v11216, %v11208
    %v11401 = vpack.c.b16 %v11217, %v11209
    %v11402 = vpack.c.b16 %v11218, %v11210
    %v11403 = vpack.c.b16 %v11219, %v11211
    %v11404 = vpack.c.b16 %v11220, %v11212
    %v11405 = vpack.c.b16 %v11229, %v11221
    %v11406 = vpack.c.b16 %v11230, %v11222
    %v11407 = vpack.c.b16 %v11231, %v11223
    %v11408 = vpack.c.b16 %v11232, %v11224
    %v11409 = vpack.c.b16 %v11233, %v11225
    %v11410 = vpack.c.b16 %v11234, %v11226
    %v11411 = vpack.c.b16 %v11235, %v11227
    %v11412 = vpack.c.b16 %v11236, %v11228
    %v11413 = vpack.c.b16 %v11245, %v11237
    %v11414 = vpack.c.b16 %v11246, %v11238
    %v11415 = vpack.c.b16 %v11247, %v11239
    %v11416 = vpack.c.b16 %v11248, %v11240
    %v11417 = vpack.c.b16 %v11249, %v11241
    %v11418 = vpack.c.b16 %v11250, %v11242
    %v11419 = vpack.c.b16 %v11251, %v11243
    %v11420 = vpack.c.b16 %v11252, %v11244
    %v11421 = vpack.c.b16 %v11261, %v11253
    %v11422 = vpack.c.b16 %v11262, %v11254
    %v11423 = vpack.c.b16 %v11263, %v11255
    %v11424 = vpack.c.b16 %v11264, %v11256
    %v11425 = vpack.c.b16 %v11265, %v11257
    %v11426 = vpack.c.b16 %v11266, %v11258
    %v11427 = vpack.c.b16 %v11267, %v11259
    %v11428 = vpack.c.b16 %v11268, %v11260
    %v11429 = vpack.c.b16 %v11277, %v11269
    %v11430 = vpack.c.b16 %v11278, %v11270
    %v11431 = vpack.c.b16 %v11279, %v11271
    %v11432 = vpack.c.b16 %v11280, %v11272
    %v11433 = vpack.c.b16 %v11281, %v11273
    %v11434 = vpack.c.b16 %v11282, %v11274
    %v11435 = vpack.c.b16 %v11283, %v11275
    %v11436 = vpack.c.b16 %v11284, %v11276
    %v11437 = vpack.c.b16 %v11293, %v11285
    %v11438 = vpack.c.b16 %v11294, %v11286
    %v11439 = vpack.c.b16 %v11295, %v11287
    %v11440 = vpack.c.b16 %v11296, %v11288
    %v11441 = vpack.c.b16 %v11297, %v11289
    %v11442 = vpack.c.b16 %v11298, %v11290
    %v11443 = vpack.c.b16 %v11299, %v11291
    %v11444 = vpack.c.b16 %v11300, %v11292
    %v11445 = vpack.c.b16 %v11309, %v11301
    %v11446 = vpack.c.b16 %v11310, %v11302
    %v11447 = vpack.c.b16 %v11311, %v11303
    %v11448 = vpack.c.b16 %v11312, %v11304
    %v11449 = vpack.c.b16 %v11313, %v11305
    %v11450 = vpack.c.b16 %v11314, %v11306
    %v11451 = vpack.c.b16 %v11315, %v11307
    %v11452 = vpack.c.b16 %v11316, %v11308
    %v11453 = vpack.c.b16 %v11325, %v11317
    %v11454 = vpack.c.b16 %v11326, %v11318
    %v11455 = vpack.c.b16 %v11327, %v11319
    %v11456 = vpack.c.b16 %v11328, %v11320
    %v11457 = vpack.c.b16 %v11329, %v11321
    %v11458 = vpack.c.b16 %v11330, %v11322
    %v11459 = vpack.c.b16 %v11331, %v11323
    %v11460 = vpack.c.b16 %v11332, %v11324
    %11589 = vmatprep.subr.bf16.mxu0 %v11334
    %11590 = vmatpush1.bf16.msra.mxu0 %v11333
    %11591 = vmatprep.subr.bf16.mxu0 %v11342
    %11592 = vmatpush1.bf16.msra.mxu0 %v11341
    %11593 = vmatprep.subr.bf16.mxu0 %v11350
    %11594 = vmatpush1.bf16.msra.mxu0 %v11349
    %11595 = vmatprep.subr.bf16.mxu0 %v11358
    %11596 = vmatpush1.bf16.msra.mxu0 %v11357
    %11597 = vmatprep.subr.bf16.mxu0 %v11366
    %11598 = vmatpush1.bf16.msra.mxu0 %v11365
    %11599 = vmatprep.subr.bf16.mxu0 %v11374
    %11600 = vmatpush1.bf16.msra.mxu0 %v11373
    %11601 = vmatprep.subr.bf16.mxu0 %v11382
    %11602 = vmatpush1.bf16.msra.mxu0 %v11381
    %11603 = vmatprep.subr.bf16.mxu0 %v11390
    %11604 = vmatpush1.bf16.msra.mxu0 %v11389
    %11605 = vmatprep.subr.bf16.mxu0 %v11398
    %11606 = vmatpush1.bf16.msra.mxu0 %v11397
    %11607 = vmatprep.subr.bf16.mxu0 %v11406
    %11608 = vmatpush1.bf16.msra.mxu0 %v11405
    %11609 = vmatprep.subr.bf16.mxu0 %v11414
    %11610 = vmatpush1.bf16.msra.mxu0 %v11413
    %11611 = vmatprep.subr.bf16.mxu0 %v11422
    %11612 = vmatpush1.bf16.msra.mxu0 %v11421
    %11613 = vmatprep.subr.bf16.mxu0 %v11430
    %11614 = vmatpush1.bf16.msra.mxu0 %v11429
    %11615 = vmatprep.subr.bf16.mxu0 %v11438
    %11616 = vmatpush1.bf16.msra.mxu0 %v11437
    %11617 = vmatprep.subr.bf16.mxu0 %v11446
    %11618 = vmatpush1.bf16.msra.mxu0 %v11445
    %11619 = vmatprep.subr.bf16.mxu0 %v11454
    %11620 = vmatpush1.bf16.msra.mxu0 %v11453
    %11621 = vmatprep.mubr.bf16.mxu0 %v10820
    %11622 = vmatmul.mubr.bf16.gmra.mrb[0].mxu0 %v10819
    %v11623 = vpop.f32.mrb[0].mxu0
    %v11624 = vadd.f32 0.0, %v11623
    %v11625 = vpop.f32.mrb[0].mxu0
    %v11626 = vadd.f32 0.0, %v11625
    %v11627 = vpop.f32.mrb[0].mxu0
    %v11628 = vpop.f32.mrb[0].mxu0
    %11629 = vdwg.mxu0
    %11630 = vmatprep.subr.bf16.mxu0 %v11336
    %11631 = vmatpush1.bf16.msra.mxu0 %v11335
    %11632 = vmatprep.subr.bf16.mxu0 %v11344
    %11633 = vmatpush1.bf16.msra.mxu0 %v11343
    %11634 = vmatprep.subr.bf16.mxu0 %v11352
    %11635 = vmatpush1.bf16.msra.mxu0 %v11351
    %11636 = vmatprep.subr.bf16.mxu0 %v11360
    %11637 = vmatpush1.bf16.msra.mxu0 %v11359
    %11638 = vmatprep.subr.bf16.mxu0 %v11368
    %11639 = vmatpush1.bf16.msra.mxu0 %v11367
    %11640 = vmatprep.subr.bf16.mxu0 %v11376
    %11641 = vmatpush1.bf16.msra.mxu0 %v11375
    %11642 = vmatprep.subr.bf16.mxu0 %v11384
    %11643 = vmatpush1.bf16.msra.mxu0 %v11383
    %11644 = vmatprep.subr.bf16.mxu0 %v11392
    %11645 = vmatpush1.bf16.msra.mxu0 %v11391
    %11646 = vmatprep.subr.bf16.mxu0 %v11400
    %11647 = vmatpush1.bf16.msra.mxu0 %v11399
    %11648 = vmatprep.subr.bf16.mxu0 %v11408
    %11649 = vmatpush1.bf16.msra.mxu0 %v11407
    %11650 = vmatprep.subr.bf16.mxu0 %v11416
    %11651 = vmatpush1.bf16.msra.mxu0 %v11415
    %11652 = vmatprep.subr.bf16.mxu0 %v11424
    %11653 = vmatpush1.bf16.msra.mxu0 %v11423
    %11654 = vmatprep.subr.bf16.mxu0 %v11432
    %11655 = vmatpush1.bf16.msra.mxu0 %v11431
    %11656 = vmatprep.subr.bf16.mxu0 %v11440
    %11657 = vmatpush1.bf16.msra.mxu0 %v11439
    %11658 = vmatprep.subr.bf16.mxu0 %v11448
    %11659 = vmatpush1.bf16.msra.mxu0 %v11447
    %11660 = vmatprep.subr.bf16.mxu0 %v11456
    %11661 = vmatpush1.bf16.msra.mxu0 %v11455
    %11662 = vmatprep.mubr.bf16.mxu0 %v10820
    %11663 = vmatmul.mubr.bf16.gmra.mrb[0].mxu0 %v10819
    %v11664 = vpop.f32.mrb[0].mxu0
    %v11665 = vadd.f32 0.0, %v11664
    %v11666 = vpop.f32.mrb[0].mxu0
    %v11667 = vadd.f32 0.0, %v11666
    %v11668 = vpop.f32.mrb[0].mxu0
    %v11669 = vpop.f32.mrb[0].mxu0
    %11670 = vdwg.mxu0
    %11671 = vmatprep.subr.bf16.mxu0 %v11338
    %11672 = vmatpush1.bf16.msra.mxu0 %v11337
    %11673 = vmatprep.subr.bf16.mxu0 %v11346
    %11674 = vmatpush1.bf16.msra.mxu0 %v11345
    %11675 = vmatprep.subr.bf16.mxu0 %v11354
    %11676 = vmatpush1.bf16.msra.mxu0 %v11353
    %11677 = vmatprep.subr.bf16.mxu0 %v11362
    %11678 = vmatpush1.bf16.msra.mxu0 %v11361
    %11679 = vmatprep.subr.bf16.mxu0 %v11370
    %11680 = vmatpush1.bf16.msra.mxu0 %v11369
    %11681 = vmatprep.subr.bf16.mxu0 %v11378
    %11682 = vmatpush1.bf16.msra.mxu0 %v11377
    %11683 = vmatprep.subr.bf16.mxu0 %v11386
    %11684 = vmatpush1.bf16.msra.mxu0 %v11385
    %11685 = vmatprep.subr.bf16.mxu0 %v11394
    %11686 = vmatpush1.bf16.msra.mxu0 %v11393
    %11687 = vmatprep.subr.bf16.mxu0 %v11402
    %11688 = vmatpush1.bf16.msra.mxu0 %v11401
    %11689 = vmatprep.subr.bf16.mxu0 %v11410
    %11690 = vmatpush1.bf16.msra.mxu0 %v11409
    %11691 = vmatprep.subr.bf16.mxu0 %v11418
    %11692 = vmatpush1.bf16.msra.mxu0 %v11417
    %11693 = vmatprep.subr.bf16.mxu0 %v11426
    %11694 = vmatpush1.bf16.msra.mxu0 %v11425
    %11695 = vmatprep.subr.bf16.mxu0 %v11434
    %11696 = vmatpush1.bf16.msra.mxu0 %v11433
    %11697 = vmatprep.subr.bf16.mxu0 %v11442
    %11698 = vmatpush1.bf16.msra.mxu0 %v11441
    %11699 = vmatprep.subr.bf16.mxu0 %v11450
    %11700 = vmatpush1.bf16.msra.mxu0 %v11449
    %11701 = vmatprep.subr.bf16.mxu0 %v11458
    %11702 = vmatpush1.bf16.msra.mxu0 %v11457
    %11703 = vmatprep.mubr.bf16.mxu0 %v10820
    %11704 = vmatmul.mubr.bf16.gmra.mrb[0].mxu0 %v10819
    %v11705 = vpop.f32.mrb[0].mxu0
    %v11706 = vadd.f32 0.0, %v11705
    %v11707 = vpop.f32.mrb[0].mxu0
    %v11708 = vadd.f32 0.0, %v11707
    %v11709 = vpop.f32.mrb[0].mxu0
    %v11710 = vpop.f32.mrb[0].mxu0
    %11711 = vdwg.mxu0
    %11712 = vmatprep.subr.bf16.mxu0 %v11340
    %11713 = vmatpush1.bf16.msra.mxu0 %v11339
    %11714 = vmatprep.subr.bf16.mxu0 %v11348
    %11715 = vmatpush1.bf16.msra.mxu0 %v11347
    %11716 = vmatprep.subr.bf16.mxu0 %v11356
    %11717 = vmatpush1.bf16.msra.mxu0 %v11355
    %11718 = vmatprep.subr.bf16.mxu0 %v11364
    %11719 = vmatpush1.bf16.msra.mxu0 %v11363
    %11720 = vmatprep.subr.bf16.mxu0 %v11372
    %11721 = vmatpush1.bf16.msra.mxu0 %v11371
    %11722 = vmatprep.subr.bf16.mxu0 %v11380
    %11723 = vmatpush1.bf16.msra.mxu0 %v11379
    %11724 = vmatprep.subr.bf16.mxu0 %v11388
    %11725 = vmatpush1.bf16.msra.mxu0 %v11387
    %11726 = vmatprep.subr.bf16.mxu0 %v11396
    %11727 = vmatpush1.bf16.msra.mxu0 %v11395
    %11728 = vmatprep.subr.bf16.mxu0 %v11404
    %11729 = vmatpush1.bf16.msra.mxu0 %v11403
    %11730 = vmatprep.subr.bf16.mxu0 %v11412
    %11731 = vmatpush1.bf16.msra.mxu0 %v11411
    %11732 = vmatprep.subr.bf16.mxu0 %v11420
    %11733 = vmatpush1.bf16.msra.mxu0 %v11419
    %11734 = vmatprep.subr.bf16.mxu0 %v11428
    %11735 = vmatpush1.bf16.msra.mxu0 %v11427
    %11736 = vmatprep.subr.bf16.mxu0 %v11436
    %11737 = vmatpush1.bf16.msra.mxu0 %v11435
    %11738 = vmatprep.subr.bf16.mxu0 %v11444
    %11739 = vmatpush1.bf16.msra.mxu0 %v11443
    %11740 = vmatprep.subr.bf16.mxu0 %v11452
    %11741 = vmatpush1.bf16.msra.mxu0 %v11451
    %11742 = vmatprep.subr.bf16.mxu0 %v11460
    %11743 = vmatpush1.bf16.msra.mxu0 %v11459
    %11744 = vmatprep.mubr.bf16.mxu0 %v10820
    %11745 = vmatmul.mubr.bf16.gmra.mrb[0].mxu0 %v10819
    %v11746 = vpop.f32.mrb[0].mxu0
    %v11747 = vadd.f32 0.0, %v11746
    %v11748 = vpop.f32.mrb[0].mxu0
    %v11749 = vadd.f32 0.0, %v11748
    %v11750 = vpop.f32.mrb[0].mxu0
    %v11751 = vpop.f32.mrb[0].mxu0
    %11752 = vdwg.mxu0
    %v11753 = vadd.f32 %v10591, %v11624
    %v11754 = vadd.f32 %v10593, %v11626
    %v11755 = vadd.f32 %v10662, %v11665
    %v11756 = vadd.f32 %v10664, %v11667
    %v11757 = vadd.f32 %v10733, %v11706
    %v11758 = vadd.f32 %v10735, %v11708
    %v11759 = vadd.f32 %v10804, %v11747
    %v11760 = vadd.f32 %v10806, %v11749
    %v11761 = vxor.u32 %v11753, 2147483648
    %v11762 = vxor.u32 %v11754, 2147483648
    %v11763 = vmul.f32 %v11761, 1.442695
    %v11764 = vpow.pop %v11763
    %v11765 = vmul.f32 %v11762, 1.442695
    %v11766 = vpow.pop %v11765
    %v11767 = vadd.f32 %v11764, 1.0
    %v11768 = vadd.f32 %v11766, 1.0
    %v11769 = vrcp.pop %v11767
    %v11770 = vmul.f32 1.0, %v11769
    %v11771 = vrcp.pop %v11768
    %v11772 = vmul.f32 1.0, %v11771
    %v11773 = vxor.u32 %v11755, 2147483648
    %v11774 = vxor.u32 %v11756, 2147483648
    %v11775 = vmul.f32 %v11773, 1.442695
    %v11776 = vpow.pop %v11775
    %v11777 = vmul.f32 %v11774, 1.442695
    %v11778 = vpow.pop %v11777
    %v11779 = vadd.f32 %v11776, 1.0
    %v11780 = vadd.f32 %v11778, 1.0
    %v11781 = vrcp.pop %v11779
    %v11782 = vmul.f32 1.0, %v11781
    %v11783 = vrcp.pop %v11780
    %v11784 = vmul.f32 1.0, %v11783
    %v11785 = vtanh.pop %v11757
    %v11786 = vtanh.pop %v11758
    %v11787 = vxor.u32 %v11759, 2147483648
    %v11788 = vxor.u32 %v11760, 2147483648
    %v11789 = vmul.f32 %v11787, 1.442695
    %v11790 = vpow.pop %v11789
    %v11791 = vmul.f32 %v11788, 1.442695
    %v11792 = vpow.pop %v11791
    %v11793 = vadd.f32 %v11790, 1.0
    %v11794 = vadd.f32 %v11792, 1.0
    %v11795 = vrcp.pop %v11793
    %v11796 = vmul.f32 1.0, %v11795
    %v11797 = vrcp.pop %v11794
    %v11798 = vmul.f32 1.0, %v11797
    %v11799 = vld [vmem:[#allocation3] sm:$0xf]
    %v11802 = vunpack.c.l.s4 1983009808
    %v11803 = vunpack.c.0.s8 %v11802
    %v11804 = vlaneseq
    %v11805 = vshrl.u32 %v11804, 7
    %v11806 = vsub.s32 %v11803, %v11805
    %v11807 = vrot.slane %v11799, %v11806
    %v11808 = vcombine.high %v11807, %v11807
    %v11811 = vmul.f32 %v11782, %v11807
    %v11812 = vmul.f32 %v11784, %v11808
    %v11813 = vmul.f32 %v11770, %v11785
    %v11814 = vmul.f32 %v11772, %v11786
    %v11815 = vadd.f32 %v11811, %v11813
    %v11816 = vadd.f32 %v11812, %v11814
    %v11817 = vtanh.pop %v11815
    %v11818 = vtanh.pop %v11816
    %v11819 = vmul.f32 %v11796, %v11817
    %v11820 = vmul.f32 %v11798, %v11818
    %v11823 = vcombine.low %v11815, %v11816
    %v11825 = vunpack.c.l.s4 1983009808
    %v11826 = vunpack.c.0.s8 %v11825
    %v11827 = vlaneseq
    %v11828 = vshrl.u32 %v11827, 7
    %v11829 = vsub.s32 %v11826, %v11828
    %v11830 = vrot.slane %v11823, %v11829
    %11832 = vst [vmem:[#allocation3] sm:$0xf] %v11830
    %v11835 = vcombine.low %v11819, %v11820
    %v11837 = vunpack.c.l.s4 1983009808
    %v11838 = vunpack.c.0.s8 %v11837
    %v11839 = vlaneseq
    %v11840 = vshrl.u32 %v11839, 7
    %v11841 = vsub.s32 %v11838, %v11840
    %v11842 = vrot.slane %v11835, %v11841
    %11844 = vst [vmem:[#allocation2] sm:$0xf] %v11842
    %v11845 = vld [vmem:[#allocation6] sm:$0xff]
    %v11846 = vld [vmem:[#allocation6 + $0x8] sm:$0xff]
    %v11847 = vld [vmem:[#allocation6 + $0x10] sm:$0xff]
    %v11848 = vld [vmem:[#allocation6 + $0x18] sm:$0xff]
    %v11849 = vld [vmem:[#allocation6 + $0x20] sm:$0xff]
    %v11850 = vld [vmem:[#allocation6 + $0x28] sm:$0xff]
    %v11851 = vld [vmem:[#allocation6 + $0x30] sm:$0xff]
    %v11852 = vld [vmem:[#allocation6 + $0x38] sm:$0xff]
    %v11853 = vld [vmem:[#allocation6 + $0x40] sm:$0xff]
    %v11854 = vld [vmem:[#allocation6 + $0x48] sm:$0xff]
    %v11855 = vld [vmem:[#allocation6 + $0x50] sm:$0xff]
    %v11856 = vld [vmem:[#allocation6 + $0x58] sm:$0xff]
    %v11857 = vld [vmem:[#allocation6 + $0x60] sm:$0xff]
    %v11858 = vld [vmem:[#allocation6 + $0x68] sm:$0xff]
    %v11859 = vld [vmem:[#allocation6 + $0x70] sm:$0xff]
    %v11860 = vld [vmem:[#allocation6 + $0x78] sm:$0xff]
    %v11861 = vld [vmem:[#allocation6 + $0x80] sm:$0xff]
    %v11862 = vld [vmem:[#allocation6 + $0x88] sm:$0xff]
    %v11863 = vld [vmem:[#allocation6 + $0x90] sm:$0xff]
    %v11864 = vld [vmem:[#allocation6 + $0x98] sm:$0xff]
    %v11865 = vld [vmem:[#allocation6 + $0xa0] sm:$0xff]
    %v11866 = vld [vmem:[#allocation6 + $0xa8] sm:$0xff]
    %v11867 = vld [vmem:[#allocation6 + $0xb0] sm:$0xff]
    %v11868 = vld [vmem:[#allocation6 + $0xb8] sm:$0xff]
    %v11869 = vld [vmem:[#allocation6 + $0xc0] sm:$0xff]
    %v11870 = vld [vmem:[#allocation6 + $0xc8] sm:$0xff]
    %v11871 = vld [vmem:[#allocation6 + $0xd0] sm:$0xff]
    %v11872 = vld [vmem:[#allocation6 + $0xd8] sm:$0xff]
    %v11873 = vld [vmem:[#allocation6 + $0xe0] sm:$0xff]
    %v11874 = vld [vmem:[#allocation6 + $0xe8] sm:$0xff]
    %v11875 = vld [vmem:[#allocation6 + $0xf0] sm:$0xff]
    %v11876 = vld [vmem:[#allocation6 + $0xf8] sm:$0xff]
    %v11877 = vld [vmem:[%s5] sm:$0x1]
    %v11879 = vlaneseq
    %v11880 = vshrl.u32 %v11879, 7
    %v11881 = vsub.s32 0, %v11880
    %v11882 = vrot.slane %v11877, %v11881
    %11884 = vmatprep.subr.mxu0 0.0
    %11885 = vmatpush1.msra.mxu0 %v11845
    %11886 = vmatprep.subr.mxu0 0.0
    %11887 = vmatpush1.msra.mxu0 %v11846
    %11888 = vmatprep.subr.mxu0 0.0
    %11889 = vmatpush1.msra.mxu0 %v11847
    %11890 = vmatprep.subr.mxu0 0.0
    %11891 = vmatpush1.msra.mxu0 %v11848
    %11892 = vmatprep.subr.mxu0 0.0
    %11893 = vmatpush1.msra.mxu0 %v11849
    %11894 = vmatprep.subr.mxu0 0.0
    %11895 = vmatpush1.msra.mxu0 %v11850
    %11896 = vmatprep.subr.mxu0 0.0
    %11897 = vmatpush1.msra.mxu0 %v11851
    %11898 = vmatprep.subr.mxu0 0.0
    %11899 = vmatpush1.msra.mxu0 %v11852
    %11900 = vmatprep.subr.mxu0 0.0
    %11901 = vmatpush1.msra.mxu0 %v11853
    %11902 = vmatprep.subr.mxu0 0.0
    %11903 = vmatpush1.msra.mxu0 %v11854
    %11904 = vmatprep.subr.mxu0 0.0
    %11905 = vmatpush1.msra.mxu0 %v11855
    %11906 = vmatprep.subr.mxu0 0.0
    %11907 = vmatpush1.msra.mxu0 %v11856
    %11908 = vmatprep.subr.mxu0 0.0
    %11909 = vmatpush1.msra.mxu0 %v11857
    %11910 = vmatprep.subr.mxu0 0.0
    %11911 = vmatpush1.msra.mxu0 %v11858
    %11912 = vmatprep.subr.mxu0 0.0
    %11913 = vmatpush1.msra.mxu0 %v11859
    %11914 = vmatprep.subr.mxu0 0.0
    %11915 = vmatpush1.msra.mxu0 %v11860
    %11916 = vmatprep.subr.mxu0 0.0
    %11917 = vmatpush1.msra.mxu0 %v11861
    %11918 = vmatprep.subr.mxu0 0.0
    %11919 = vmatpush1.msra.mxu0 %v11862
    %11920 = vmatprep.subr.mxu0 0.0
    %11921 = vmatpush1.msra.mxu0 %v11863
    %11922 = vmatprep.subr.mxu0 0.0
    %11923 = vmatpush1.msra.mxu0 %v11864
    %11924 = vmatprep.subr.mxu0 0.0
    %11925 = vmatpush1.msra.mxu0 %v11865
    %11926 = vmatprep.subr.mxu0 0.0
    %11927 = vmatpush1.msra.mxu0 %v11866
    %11928 = vmatprep.subr.mxu0 0.0
    %11929 = vmatpush1.msra.mxu0 %v11867
    %11930 = vmatprep.subr.mxu0 0.0
    %11931 = vmatpush1.msra.mxu0 %v11868
    %11932 = vmatprep.subr.mxu0 0.0
    %11933 = vmatpush1.msra.mxu0 %v11869
    %11934 = vmatprep.subr.mxu0 0.0
    %11935 = vmatpush1.msra.mxu0 %v11870
    %11936 = vmatprep.subr.mxu0 0.0
    %11937 = vmatpush1.msra.mxu0 %v11871
    %11938 = vmatprep.subr.mxu0 0.0
    %11939 = vmatpush1.msra.mxu0 %v11872
    %11940 = vmatprep.subr.mxu0 0.0
    %11941 = vmatpush1.msra.mxu0 %v11873
    %11942 = vmatprep.subr.mxu0 0.0
    %11943 = vmatpush1.msra.mxu0 %v11874
    %11944 = vmatprep.subr.mxu0 0.0
    %11945 = vmatpush1.msra.mxu0 %v11875
    %11946 = vmatprep.subr.mxu0 0.0
    %11947 = vmatpush1.msra.mxu0 %v11876
    %11948 = vmatprep.mubr.f32.mxu0 %v11820
    %11949 = vmatmul.mubr.f32.gmra.mrb[0].mxu0 %v11819
    %v11950 = vpop.f32.mrb[0].mxu0
    %v11951 = vadd.f32 %v11882, %v11950
    %v11952 = vpop.f32.mrb[0].mxu0
    %11953 = vdwg.mxu0
    %s11954 = scalar_lea.vmem %s6, 14
    %11955 = vst [vmem:[%s11954] sm:$0x3] %v11951
    // Predicated region
    $region34: #{net_forward.1} parent=1 // pred_check
      _
    $region35: #{net_forward.1} parent=1 // pred_check_branch
      %11957 = sbr.rel (0) target = $region37
    $region36: #{net_forward.1} parent=1 // pred_region
      _
    $region37: #{net_forward.1} parent=1 // pred_fallthru
      _
    // Predicated region
    $region38: #{net_forward.1} parent=1 // pred_check
      _
    $region39: #{net_forward.1} parent=1 // pred_check_branch
      %11959 = sbr.rel (0) target = $region41
    $region40: #{net_forward.1} parent=1 // pred_region
      _
    $region41: #{net_forward.1} parent=1 // pred_fallthru
      _
    %11960 = vsyncpa [#allocation5], 1
    %11961 = vsyncpa [#allocation7], 1

</llo_original>
